<compile_context>
chip_gen: v5e
topology: v5e:2x2
jax: 0.10.0
libtpu: 0.0.40
codegen_flags: <defaults>
</compile_context>

<pallas_src>
import jax
import jax.numpy as jnp
from jax.experimental import pallas as pl
from jax.experimental.pallas import tpu as pltpu

BATCH = 64      # module-level batch_size in the PyTorch spec
T = 4           # seq_len produced by expand(batch_size, 4, 128)
IN = 128
H = 128
OUT = 10
OUT_PAD = 128   # lane-dense padded output width (10 rounds up to one 128-lane tile anyway)

_GATE_PERM = [0, 1, 3, 2]   # PyTorch (i, f, g, o) -> packed (i, f, o, g)


def decoder_kernel(x_ref, wih0_ref, b0_ref, wfused_ref, b1_ref,
                   wout_ref, bout_ref, out_ref, gx0_ref, h1all_ref):
    B = x_ref.shape[0]
    f32 = jnp.float32
    bf16 = jnp.bfloat16

    # Time-invariant layer-0 input projection (x identical every timestep due to
    # `expand`). Stored to VMEM scratch so it doesn't pin ~32 vregs across the
    # unrolled recurrence; reloaded per phase (3 vld slots/cycle make this cheap).
    gx0_ref[...] = (jnp.dot(x_ref[...].astype(bf16), wih0_ref[...],
                            preferred_element_type=f32) + b0_ref[...])

    def gates_to_state(gates, c):
        # Gates pre-permuted at pack time to (i, f, o, g): one wide sigmoid over
        # 3H lanes (single EUP stream), one tanh over the last H lanes.
        s = jax.nn.sigmoid(gates[:, :3 * H])
        i = s[:, :H]
        f = s[:, H:2 * H]
        o = s[:, 2 * H:3 * H]
        g = jnp.tanh(gates[:, 3 * H:])
        c_new = f * c + i * g
        return o * jnp.tanh(c_new), c_new

    zeros = jnp.zeros((B, H), f32)

    # ---------------- layer-skewed recurrence ----------------
    # Phase 0: h0_{-1} = 0, so layer-0 gates at t=0 are exactly gx0 (no matmul).
    h0, c0 = gates_to_state(gx0_ref[...], zeros)
    h1, c1 = zeros, zeros                                 # layer-1 state at t = -1

    # Phases s = 1..T-1: one block-diagonal matmul yields layer-0 gates for time
    # s and layer-1 gates for time s-1; the two layers' EUP/VPU work then overlap
    # with no serial MXU dependency inside the phase.
    #   lhs = [h0_{s-1} | h1_{s-2}]                 (B, 2H)
    #   rhs = [[Whh0^T, Wih1^T], [0, Whh1^T]]       (2H, 8H)
    for s in range(1, T):
        lhs = jnp.concatenate([h0, h1], axis=-1).astype(bf16)
        fused = jnp.dot(lhs, wfused_ref[...], preferred_element_type=f32)   # (B, 8H)
        gates1 = fused[:, 4 * H:] + b1_ref[...]           # layer-1 gates, time s-1
        h0, c0 = gates_to_state(gx0_ref[...] + fused[:, :4 * H], c0)        # time s
        h1, c1 = gates_to_state(gates1, c1)                                 # time s-1
        h1all_ref[(s - 1) * B:s * B, :] = h1              # time-major VMEM scratch

    # Final phase: only layer-1 gates for t = T-1 (use just the W1cat half of rhs).
    lhs = jnp.concatenate([h0, h1], axis=-1).astype(bf16)
    gates1 = jnp.dot(lhs, wfused_ref[:, 4 * H:], preferred_element_type=f32) + b1_ref[...]
    h1, c1 = gates_to_state(gates1, c1)
    h1all_ref[(T - 1) * B:, :] = h1

    # Deferred output projection: one (T*B, H) @ (H, 128) matmul and a single
    # lane-dense unmasked (T*B, 128) store. OUT is zero-padded to 128; the
    # wrapper slices [:, :10] and transposes to (B, T, 10).
    logits = jnp.dot(h1all_ref[...].astype(bf16), wout_ref[...],
                     preferred_element_type=f32) + bout_ref[...]
    out_ref[...] = logits


@jax.jit
def decoder_forward(x, packed):
    wih0T, b0, wfused, b1, woutp, boutp = packed
    B = x.shape[0]
    assert B % 8 == 0
    out2d = pl.pallas_call(
        decoder_kernel,
        out_shape=jax.ShapeDtypeStruct((T * B, OUT_PAD), jnp.float32),
        # Whole problem fits comfortably in VMEM -> single grid-less invocation,
        # every operand fully VMEM-resident (no tiling, no multi-core batch split).
        in_specs=[pl.BlockSpec(memory_space=pltpu.MemorySpace.VMEM)] * 7,
        out_specs=pl.BlockSpec(memory_space=pltpu.MemorySpace.VMEM),
        scratch_shapes=[
            pltpu.VMEM((B, 4 * H), jnp.float32),     # gx0: hoisted input projection
            pltpu.VMEM((T * B, H), jnp.float32),     # per-timestep h1, time-major
        ],
    )(x, wih0T, b0, wfused, b1, woutp, boutp)
    # (T*B, 128) time-major -> (B, T, 10): cheap wrapper-side layout plumbing.
    return out2d.reshape(T, B, OUT_PAD).transpose(1, 0, 2)[:, :, :OUT]


# ----------------------------- parameters -----------------------------------

def init_raw_params(key):
    """PyTorch-default U(-1/sqrt(H), 1/sqrt(H)) init, PyTorch tensor layouts."""
    k = 1.0 / (H ** 0.5)
    keys = jax.random.split(key, 10)

    def u(kk, shape):
        return jax.random.uniform(kk, shape, jnp.float32, -k, k)

    return dict(
        wih0=u(keys[0], (4 * H, IN)), whh0=u(keys[1], (4 * H, H)),
        bih0=u(keys[2], (4 * H,)),    bhh0=u(keys[3], (4 * H,)),
        wih1=u(keys[4], (4 * H, H)),  whh1=u(keys[5], (4 * H, H)),
        bih1=u(keys[6], (4 * H,)),    bhh1=u(keys[7], (4 * H,)),
        wout=u(keys[8], (OUT, H)),    bout=u(keys[9], (OUT,)),
    )


def _perm_gate_rows(w):   # (4H, K): permute the four H-row gate chunks
    return w.reshape(4, H, -1)[jnp.array(_GATE_PERM)].reshape(4 * H, -1)


def _perm_gate_vec(b):    # (4H,)
    return b.reshape(4, H)[jnp.array(_GATE_PERM)].reshape(4 * H)


def pack_params(raw):
    """Host-side packing: gate-order permutation, bias folding, block-diagonal
    fusion of layer-1 input+recurrent weights with layer-0 recurrent weights,
    bf16 matmul weights (f32 biases), OUT zero-padded to 128 lanes."""
    wih0 = _perm_gate_rows(raw["wih0"]); whh0 = _perm_gate_rows(raw["whh0"])
    wih1 = _perm_gate_rows(raw["wih1"]); whh1 = _perm_gate_rows(raw["whh1"])
    b0 = (_perm_gate_vec(raw["bih0"]) + _perm_gate_vec(raw["bhh0"]))[None, :]
    b1 = (_perm_gate_vec(raw["bih1"]) + _perm_gate_vec(raw["bhh1"]))[None, :]

    wih0T = wih0.T.astype(jnp.bfloat16)                                    # (IN, 4H)
    # Block-diagonal fused weight for the skewed step:
    #   [h0_{s-1} | h1_{s-2}] @ [[Whh0^T, Wih1^T], [0, Whh1^T]] = [gates0_s | gates1_{s-1}]
    top = jnp.concatenate([whh0.T, wih1.T], axis=1)                        # (H, 8H)
    bot = jnp.concatenate([jnp.zeros((H, 4 * H), jnp.float32), whh1.T], axis=1)
    wfused = jnp.concatenate([top, bot], axis=0).astype(jnp.bfloat16)      # (2H, 8H)

    woutp = jnp.zeros((H, OUT_PAD), jnp.float32).at[:, :OUT].set(raw["wout"].T)
    boutp = jnp.zeros((1, OUT_PAD), jnp.float32).at[0, :OUT].set(raw["bout"])
    return (wih0T, b0, wfused, b1, woutp.astype(jnp.bfloat16), boutp)


# ------------------------------ reference ------------------------------------

def reference(x, raw):
    """Straightforward per-step, per-layer reimplementation of the PyTorch forward
    (no skew / fusion / gate permutation), using the same bf16-rounded matmul
    operands and f32 accumulation as the kernel, so the check validates all
    packing and scheduling to f32-association tolerance."""
    bf16 = jnp.bfloat16

    def dot(a, b):
        return jnp.dot(a.astype(bf16), b.astype(bf16), preferred_element_type=jnp.float32)

    def cell(inp, h, c, wih, whh, bih, bhh):
        gates = dot(inp, wih.T) + dot(h, whh.T) + bih + bhh
        i = jax.nn.sigmoid(gates[:, :H])
        f = jax.nn.sigmoid(gates[:, H:2 * H])
        g = jnp.tanh(gates[:, 2 * H:3 * H])
        o = jax.nn.sigmoid(gates[:, 3 * H:])
        c2 = f * c + i * g
        return o * jnp.tanh(c2), c2

    B = x.shape[0]
    h0 = c0 = h1 = c1 = jnp.zeros((B, H), jnp.float32)
    outs = []
    for _ in range(T):                       # x repeated every timestep (expand)
        h0, c0 = cell(x, h0, c0, raw["wih0"], raw["whh0"], raw["bih0"], raw["bhh0"])
        h1, c1 = cell(h0, h1, c1, raw["wih1"], raw["whh1"], raw["bih1"], raw["bhh1"])
        outs.append(dot(h1, raw["wout"].T) + raw["bout"])
    return jnp.stack(outs, axis=1)           # (B, T, OUT)


if __name__ == "__main__":
    key = jax.random.PRNGKey(0)
    kx, kp = jax.random.split(key)
    # The module's expand(batch_size, 4, 128) implies x is (64, 128): one 128-d
    # vector per batch row, repeated across the 4 timesteps.
    x = jax.random.normal(kx, (BATCH, IN), jnp.float32)
    raw = init_raw_params(kp)
    packed = pack_params(raw)

    out = jax.block_until_ready(decoder_forward(x, packed))
    assert out.shape == (BATCH, T, OUT), out.shape

    ref = reference(x, raw)
    err = float(jnp.max(jnp.abs(out - ref)))
    assert err < 2e-3, err

    print("KERNEL_OK")
</pallas_src>

<mosaic_0001>
module attributes {stable_mosaic.version = 11 : i64} {
  func.func @decoder_kernel(%arg0: memref<64x128xf32, #tpu.memory_space<vmem>>, %arg1: memref<128x512xbf16, #tpu.memory_space<vmem>>, %arg2: memref<1x512xf32, #tpu.memory_space<vmem>>, %arg3: memref<256x1024xbf16, #tpu.memory_space<vmem>>, %arg4: memref<1x512xf32, #tpu.memory_space<vmem>>, %arg5: memref<128x128xbf16, #tpu.memory_space<vmem>>, %arg6: memref<1x128xf32, #tpu.memory_space<vmem>>, %arg7: memref<256x128xf32, #tpu.memory_space<vmem>>, %arg8: memref<64x512xf32, #tpu.memory_space<vmem>>, %arg9: memref<256x128xf32, #tpu.memory_space<vmem>>) attributes {dimension_semantics = [], scalar_prefetch = 0 : i64, scratch_operands = 2 : i64, tpu.core_type = #tpu.core_type<tc>} {
    %c0 = arith.constant 0 : index
    %c0_0 = arith.constant 0 : index
    %0 = vector.load %arg0[%c0, %c0_0] : memref<64x128xf32, #tpu.memory_space<vmem>>, vector<64x128xf32>
    %1 = arith.truncf %0 : vector<64x128xf32> to vector<64x128xbf16>
    %c0_1 = arith.constant 0 : index
    %c0_2 = arith.constant 0 : index
    %2 = vector.load %arg1[%c0_1, %c0_2] : memref<128x512xbf16, #tpu.memory_space<vmem>>, vector<128x512xbf16>
    %cst = arith.constant dense<0.000000e+00> : vector<64x512xf32>
    %3 = tpu.matmul %1, %2, %cst {dimension_numbers = #tpu.dot_dimension_numbers<[1], [0], [0], [1], [0, 0, 1, 1], [], []>} : vector<64x128xbf16>, vector<128x512xbf16>, vector<64x512xf32> -> vector<64x512xf32>
    %c0_3 = arith.constant 0 : index
    %c0_4 = arith.constant 0 : index
    %4 = vector.load %arg2[%c0_3, %c0_4] : memref<1x512xf32, #tpu.memory_space<vmem>>, vector<1x512xf32>
    %5 = vector.broadcast %4 : vector<1x512xf32> to vector<64x512xf32>
    %6 = arith.addf %3, %5 : vector<64x512xf32>
    %c0_5 = arith.constant 0 : index
    %c0_6 = arith.constant 0 : index
    %7 = vector.load %arg8[%c0_5, %c0_6] : memref<64x512xf32, #tpu.memory_space<vmem>>, vector<64x512xf32>
    tpu.vector_store %arg8[%c0_5, %c0_6], %6 {strides = array<i32>} : memref<64x512xf32, #tpu.memory_space<vmem>>, vector<64x512xf32>,
    %cst_7 = arith.constant 0.000000e+00 : f32
    %8 = vector.broadcast %cst_7 : f32 to vector<64x128xf32>
    %c0_8 = arith.constant 0 : index
    %c0_9 = arith.constant 0 : index
    %9 = vector.load %arg8[%c0_8, %c0_9] : memref<64x512xf32, #tpu.memory_space<vmem>>, vector<64x512xf32>
    %10 = vector.extract_strided_slice %9 {offsets = [0, 0], sizes = [64, 384], strides = [1, 1]} : vector<64x512xf32> to vector<64x384xf32>
    %11 = arith.negf %10 : vector<64x384xf32>
    %12 = math.exp %11 : vector<64x384xf32>
    %cst_10 = arith.constant 1.000000e+00 : f32
    %13 = vector.broadcast %cst_10 : f32 to vector<64x384xf32>
    %14 = arith.addf %13, %12 : vector<64x384xf32>
    %15 = arith.divf %13, %14 : vector<64x384xf32>
    %16 = vector.extract_strided_slice %15 {offsets = [0, 0], sizes = [64, 128], strides = [1, 1]} : vector<64x384xf32> to vector<64x128xf32>
    %17 = vector.extract_strided_slice %15 {offsets = [0, 128], sizes = [64, 128], strides = [1, 1]} : vector<64x384xf32> to vector<64x128xf32>
    %18 = vector.extract_strided_slice %15 {offsets = [0, 256], sizes = [64, 128], strides = [1, 1]} : vector<64x384xf32> to vector<64x128xf32>
    %19 = vector.extract_strided_slice %9 {offsets = [0, 384], sizes = [64, 128], strides = [1, 1]} : vector<64x512xf32> to vector<64x128xf32>
    %20 = math.tanh %19 : vector<64x128xf32>
    %21 = arith.mulf %17, %8 : vector<64x128xf32>
    %22 = arith.mulf %16, %20 : vector<64x128xf32>
    %23 = arith.addf %21, %22 : vector<64x128xf32>
    %24 = math.tanh %23 : vector<64x128xf32>
    %25 = arith.mulf %18, %24 : vector<64x128xf32>
    %26 = tpu.concatenate %25, %8 in 1 : vector<64x128xf32>, vector<64x128xf32> -> vector<64x256xf32>
    %27 = arith.truncf %26 : vector<64x256xf32> to vector<64x256xbf16>
    %c0_11 = arith.constant 0 : index
    %c0_12 = arith.constant 0 : index
    %28 = vector.load %arg3[%c0_11, %c0_12] : memref<256x1024xbf16, #tpu.memory_space<vmem>>, vector<256x1024xbf16>
    %cst_13 = arith.constant dense<0.000000e+00> : vector<64x1024xf32>
    %29 = tpu.matmul %27, %28, %cst_13 {dimension_numbers = #tpu.dot_dimension_numbers<[1], [0], [0], [1], [0, 0, 1, 1], [], []>} : vector<64x256xbf16>, vector<256x1024xbf16>, vector<64x1024xf32> -> vector<64x1024xf32>
    %30 = vector.extract_strided_slice %29 {offsets = [0, 512], sizes = [64, 512], strides = [1, 1]} : vector<64x1024xf32> to vector<64x512xf32>
    %c0_14 = arith.constant 0 : index
    %c0_15 = arith.constant 0 : index
    %31 = vector.load %arg4[%c0_14, %c0_15] : memref<1x512xf32, #tpu.memory_space<vmem>>, vector<1x512xf32>
    %32 = vector.broadcast %31 : vector<1x512xf32> to vector<64x512xf32>
    %33 = arith.addf %30, %32 : vector<64x512xf32>
    %c0_16 = arith.constant 0 : index
    %c0_17 = arith.constant 0 : index
    %34 = vector.load %arg8[%c0_16, %c0_17] : memref<64x512xf32, #tpu.memory_space<vmem>>, vector<64x512xf32>
    %35 = vector.extract_strided_slice %29 {offsets = [0, 0], sizes = [64, 512], strides = [1, 1]} : vector<64x1024xf32> to vector<64x512xf32>
    %36 = arith.addf %34, %35 : vector<64x512xf32>
    %37 = vector.extract_strided_slice %36 {offsets = [0, 0], sizes = [64, 384], strides = [1, 1]} : vector<64x512xf32> to vector<64x384xf32>
    %38 = arith.negf %37 : vector<64x384xf32>
    %39 = math.exp %38 : vector<64x384xf32>
    %cst_18 = arith.constant 1.000000e+00 : f32
    %40 = vector.broadcast %cst_18 : f32 to vector<64x384xf32>
    %41 = arith.addf %40, %39 : vector<64x384xf32>
    %42 = arith.divf %40, %41 : vector<64x384xf32>
    %43 = vector.extract_strided_slice %42 {offsets = [0, 0], sizes = [64, 128], strides = [1, 1]} : vector<64x384xf32> to vector<64x128xf32>
    %44 = vector.extract_strided_slice %42 {offsets = [0, 128], sizes = [64, 128], strides = [1, 1]} : vector<64x384xf32> to vector<64x128xf32>
    %45 = vector.extract_strided_slice %42 {offsets = [0, 256], sizes = [64, 128], strides = [1, 1]} : vector<64x384xf32> to vector<64x128xf32>
    %46 = vector.extract_strided_slice %36 {offsets = [0, 384], sizes = [64, 128], strides = [1, 1]} : vector<64x512xf32> to vector<64x128xf32>
    %47 = math.tanh %46 : vector<64x128xf32>
    %48 = arith.mulf %44, %23 : vector<64x128xf32>
    %49 = arith.mulf %43, %47 : vector<64x128xf32>
    %50 = arith.addf %48, %49 : vector<64x128xf32>
    %51 = math.tanh %50 : vector<64x128xf32>
    %52 = arith.mulf %45, %51 : vector<64x128xf32>
    %53 = vector.extract_strided_slice %33 {offsets = [0, 0], sizes = [64, 384], strides = [1, 1]} : vector<64x512xf32> to vector<64x384xf32>
    %54 = arith.negf %53 : vector<64x384xf32>
    %55 = math.exp %54 : vector<64x384xf32>
    %cst_19 = arith.constant 1.000000e+00 : f32
    %56 = vector.broadcast %cst_19 : f32 to vector<64x384xf32>
    %57 = arith.addf %56, %55 : vector<64x384xf32>
    %58 = arith.divf %56, %57 : vector<64x384xf32>
    %59 = vector.extract_strided_slice %58 {offsets = [0, 0], sizes = [64, 128], strides = [1, 1]} : vector<64x384xf32> to vector<64x128xf32>
    %60 = vector.extract_strided_slice %58 {offsets = [0, 128], sizes = [64, 128], strides = [1, 1]} : vector<64x384xf32> to vector<64x128xf32>
    %61 = vector.extract_strided_slice %58 {offsets = [0, 256], sizes = [64, 128], strides = [1, 1]} : vector<64x384xf32> to vector<64x128xf32>
    %62 = vector.extract_strided_slice %33 {offsets = [0, 384], sizes = [64, 128], strides = [1, 1]} : vector<64x512xf32> to vector<64x128xf32>
    %63 = math.tanh %62 : vector<64x128xf32>
    %64 = arith.mulf %60, %8 : vector<64x128xf32>
    %65 = arith.mulf %59, %63 : vector<64x128xf32>
    %66 = arith.addf %64, %65 : vector<64x128xf32>
    %67 = math.tanh %66 : vector<64x128xf32>
    %68 = arith.mulf %61, %67 : vector<64x128xf32>
    %c0_20 = arith.constant 0 : index
    %c0_21 = arith.constant 0 : index
    %69 = vector.load %arg9[%c0_20, %c0_21] : memref<256x128xf32, #tpu.memory_space<vmem>>, vector<64x128xf32>
    tpu.vector_store %arg9[%c0_20, %c0_21], %68 {strides = array<i32>} : memref<256x128xf32, #tpu.memory_space<vmem>>, vector<64x128xf32>,
    %70 = tpu.concatenate %52, %68 in 1 : vector<64x128xf32>, vector<64x128xf32> -> vector<64x256xf32>
    %71 = arith.truncf %70 : vector<64x256xf32> to vector<64x256xbf16>
    %c0_22 = arith.constant 0 : index
    %c0_23 = arith.constant 0 : index
    %72 = vector.load %arg3[%c0_22, %c0_23] : memref<256x1024xbf16, #tpu.memory_space<vmem>>, vector<256x1024xbf16>
    %cst_24 = arith.constant dense<0.000000e+00> : vector<64x1024xf32>
    %73 = tpu.matmul %71, %72, %cst_24 {dimension_numbers = #tpu.dot_dimension_numbers<[1], [0], [0], [1], [0, 0, 1, 1], [], []>} : vector<64x256xbf16>, vector<256x1024xbf16>, vector<64x1024xf32> -> vector<64x1024xf32>
    %74 = vector.extract_strided_slice %73 {offsets = [0, 512], sizes = [64, 512], strides = [1, 1]} : vector<64x1024xf32> to vector<64x512xf32>
    %c0_25 = arith.constant 0 : index
    %c0_26 = arith.constant 0 : index
    %75 = vector.load %arg4[%c0_25, %c0_26] : memref<1x512xf32, #tpu.memory_space<vmem>>, vector<1x512xf32>
    %76 = vector.broadcast %75 : vector<1x512xf32> to vector<64x512xf32>
    %77 = arith.addf %74, %76 : vector<64x512xf32>
    %c0_27 = arith.constant 0 : index
    %c0_28 = arith.constant 0 : index
    %78 = vector.load %arg8[%c0_27, %c0_28] : memref<64x512xf32, #tpu.memory_space<vmem>>, vector<64x512xf32>
    %79 = vector.extract_strided_slice %73 {offsets = [0, 0], sizes = [64, 512], strides = [1, 1]} : vector<64x1024xf32> to vector<64x512xf32>
    %80 = arith.addf %78, %79 : vector<64x512xf32>
    %81 = vector.extract_strided_slice %80 {offsets = [0, 0], sizes = [64, 384], strides = [1, 1]} : vector<64x512xf32> to vector<64x384xf32>
    %82 = arith.negf %81 : vector<64x384xf32>
    %83 = math.exp %82 : vector<64x384xf32>
    %cst_29 = arith.constant 1.000000e+00 : f32
    %84 = vector.broadcast %cst_29 : f32 to vector<64x384xf32>
    %85 = arith.addf %84, %83 : vector<64x384xf32>
    %86 = arith.divf %84, %85 : vector<64x384xf32>
    %87 = vector.extract_strided_slice %86 {offsets = [0, 0], sizes = [64, 128], strides = [1, 1]} : vector<64x384xf32> to vector<64x128xf32>
    %88 = vector.extract_strided_slice %86 {offsets = [0, 128], sizes = [64, 128], strides = [1, 1]} : vector<64x384xf32> to vector<64x128xf32>
    %89 = vector.extract_strided_slice %86 {offsets = [0, 256], sizes = [64, 128], strides = [1, 1]} : vector<64x384xf32> to vector<64x128xf32>
    %90 = vector.extract_strided_slice %80 {offsets = [0, 384], sizes = [64, 128], strides = [1, 1]} : vector<64x512xf32> to vector<64x128xf32>
    %91 = math.tanh %90 : vector<64x128xf32>
    %92 = arith.mulf %88, %50 : vector<64x128xf32>
    %93 = arith.mulf %87, %91 : vector<64x128xf32>
    %94 = arith.addf %92, %93 : vector<64x128xf32>
    %95 = math.tanh %94 : vector<64x128xf32>
    %96 = arith.mulf %89, %95 : vector<64x128xf32>
    %97 = vector.extract_strided_slice %77 {offsets = [0, 0], sizes = [64, 384], strides = [1, 1]} : vector<64x512xf32> to vector<64x384xf32>
    %98 = arith.negf %97 : vector<64x384xf32>
    %99 = math.exp %98 : vector<64x384xf32>
    %cst_30 = arith.constant 1.000000e+00 : f32
    %100 = vector.broadcast %cst_30 : f32 to vector<64x384xf32>
    %101 = arith.addf %100, %99 : vector<64x384xf32>
    %102 = arith.divf %100, %101 : vector<64x384xf32>
    %103 = vector.extract_strided_slice %102 {offsets = [0, 0], sizes = [64, 128], strides = [1, 1]} : vector<64x384xf32> to vector<64x128xf32>
    %104 = vector.extract_strided_slice %102 {offsets = [0, 128], sizes = [64, 128], strides = [1, 1]} : vector<64x384xf32> to vector<64x128xf32>
    %105 = vector.extract_strided_slice %102 {offsets = [0, 256], sizes = [64, 128], strides = [1, 1]} : vector<64x384xf32> to vector<64x128xf32>
    %106 = vector.extract_strided_slice %77 {offsets = [0, 384], sizes = [64, 128], strides = [1, 1]} : vector<64x512xf32> to vector<64x128xf32>
    %107 = math.tanh %106 : vector<64x128xf32>
    %108 = arith.mulf %104, %66 : vector<64x128xf32>
    %109 = arith.mulf %103, %107 : vector<64x128xf32>
    %110 = arith.addf %108, %109 : vector<64x128xf32>
    %111 = math.tanh %110 : vector<64x128xf32>
    %112 = arith.mulf %105, %111 : vector<64x128xf32>
    %c64 = arith.constant 64 : index
    %c0_31 = arith.constant 0 : index
    %113 = vector.load %arg9[%c64, %c0_31] : memref<256x128xf32, #tpu.memory_space<vmem>>, vector<64x128xf32>
    tpu.vector_store %arg9[%c64, %c0_31], %112 {strides = array<i32>} : memref<256x128xf32, #tpu.memory_space<vmem>>, vector<64x128xf32>,
    %114 = tpu.concatenate %96, %112 in 1 : vector<64x128xf32>, vector<64x128xf32> -> vector<64x256xf32>
    %115 = arith.truncf %114 : vector<64x256xf32> to vector<64x256xbf16>
    %c0_32 = arith.constant 0 : index
    %c0_33 = arith.constant 0 : index
    %116 = vector.load %arg3[%c0_32, %c0_33] : memref<256x1024xbf16, #tpu.memory_space<vmem>>, vector<256x1024xbf16>
    %cst_34 = arith.constant dense<0.000000e+00> : vector<64x1024xf32>
    %117 = tpu.matmul %115, %116, %cst_34 {dimension_numbers = #tpu.dot_dimension_numbers<[1], [0], [0], [1], [0, 0, 1, 1], [], []>} : vector<64x256xbf16>, vector<256x1024xbf16>, vector<64x1024xf32> -> vector<64x1024xf32>
    %118 = vector.extract_strided_slice %117 {offsets = [0, 512], sizes = [64, 512], strides = [1, 1]} : vector<64x1024xf32> to vector<64x512xf32>
    %c0_35 = arith.constant 0 : index
    %c0_36 = arith.constant 0 : index
    %119 = vector.load %arg4[%c0_35, %c0_36] : memref<1x512xf32, #tpu.memory_space<vmem>>, vector<1x512xf32>
    %120 = vector.broadcast %119 : vector<1x512xf32> to vector<64x512xf32>
    %121 = arith.addf %118, %120 : vector<64x512xf32>
    %c0_37 = arith.constant 0 : index
    %c0_38 = arith.constant 0 : index
    %122 = vector.load %arg8[%c0_37, %c0_38] : memref<64x512xf32, #tpu.memory_space<vmem>>, vector<64x512xf32>
    %123 = vector.extract_strided_slice %117 {offsets = [0, 0], sizes = [64, 512], strides = [1, 1]} : vector<64x1024xf32> to vector<64x512xf32>
    %124 = arith.addf %122, %123 : vector<64x512xf32>
    %125 = vector.extract_strided_slice %124 {offsets = [0, 0], sizes = [64, 384], strides = [1, 1]} : vector<64x512xf32> to vector<64x384xf32>
    %126 = arith.negf %125 : vector<64x384xf32>
    %127 = math.exp %126 : vector<64x384xf32>
    %cst_39 = arith.constant 1.000000e+00 : f32
    %128 = vector.broadcast %cst_39 : f32 to vector<64x384xf32>
    %129 = arith.addf %128, %127 : vector<64x384xf32>
    %130 = arith.divf %128, %129 : vector<64x384xf32>
    %131 = vector.extract_strided_slice %130 {offsets = [0, 0], sizes = [64, 128], strides = [1, 1]} : vector<64x384xf32> to vector<64x128xf32>
    %132 = vector.extract_strided_slice %130 {offsets = [0, 128], sizes = [64, 128], strides = [1, 1]} : vector<64x384xf32> to vector<64x128xf32>
    %133 = vector.extract_strided_slice %130 {offsets = [0, 256], sizes = [64, 128], strides = [1, 1]} : vector<64x384xf32> to vector<64x128xf32>
    %134 = vector.extract_strided_slice %124 {offsets = [0, 384], sizes = [64, 128], strides = [1, 1]} : vector<64x512xf32> to vector<64x128xf32>
    %135 = math.tanh %134 : vector<64x128xf32>
    %136 = arith.mulf %132, %94 : vector<64x128xf32>
    %137 = arith.mulf %131, %135 : vector<64x128xf32>
    %138 = arith.addf %136, %137 : vector<64x128xf32>
    %139 = math.tanh %138 : vector<64x128xf32>
    %140 = arith.mulf %133, %139 : vector<64x128xf32>
    %141 = vector.extract_strided_slice %121 {offsets = [0, 0], sizes = [64, 384], strides = [1, 1]} : vector<64x512xf32> to vector<64x384xf32>
    %142 = arith.negf %141 : vector<64x384xf32>
    %143 = math.exp %142 : vector<64x384xf32>
    %cst_40 = arith.constant 1.000000e+00 : f32
    %144 = vector.broadcast %cst_40 : f32 to vector<64x384xf32>
    %145 = arith.addf %144, %143 : vector<64x384xf32>
    %146 = arith.divf %144, %145 : vector<64x384xf32>
    %147 = vector.extract_strided_slice %146 {offsets = [0, 0], sizes = [64, 128], strides = [1, 1]} : vector<64x384xf32> to vector<64x128xf32>
    %148 = vector.extract_strided_slice %146 {offsets = [0, 128], sizes = [64, 128], strides = [1, 1]} : vector<64x384xf32> to vector<64x128xf32>
    %149 = vector.extract_strided_slice %146 {offsets = [0, 256], sizes = [64, 128], strides = [1, 1]} : vector<64x384xf32> to vector<64x128xf32>
    %150 = vector.extract_strided_slice %121 {offsets = [0, 384], sizes = [64, 128], strides = [1, 1]} : vector<64x512xf32> to vector<64x128xf32>
    %151 = math.tanh %150 : vector<64x128xf32>
    %152 = arith.mulf %148, %110 : vector<64x128xf32>
    %153 = arith.mulf %147, %151 : vector<64x128xf32>
    %154 = arith.addf %152, %153 : vector<64x128xf32>
    %155 = math.tanh %154 : vector<64x128xf32>
    %156 = arith.mulf %149, %155 : vector<64x128xf32>
    %c128 = arith.constant 128 : index
    %c0_41 = arith.constant 0 : index
    %157 = vector.load %arg9[%c128, %c0_41] : memref<256x128xf32, #tpu.memory_space<vmem>>, vector<64x128xf32>
    tpu.vector_store %arg9[%c128, %c0_41], %156 {strides = array<i32>} : memref<256x128xf32, #tpu.memory_space<vmem>>, vector<64x128xf32>,
    %158 = tpu.concatenate %140, %156 in 1 : vector<64x128xf32>, vector<64x128xf32> -> vector<64x256xf32>
    %159 = arith.truncf %158 : vector<64x256xf32> to vector<64x256xbf16>
    %c0_42 = arith.constant 0 : index
    %c512 = arith.constant 512 : index
    %160 = vector.load %arg3[%c0_42, %c512] : memref<256x1024xbf16, #tpu.memory_space<vmem>>, vector<256x512xbf16>
    %cst_43 = arith.constant dense<0.000000e+00> : vector<64x512xf32>
    %161 = tpu.matmul %159, %160, %cst_43 {dimension_numbers = #tpu.dot_dimension_numbers<[1], [0], [0], [1], [0, 0, 1, 1], [], []>} : vector<64x256xbf16>, vector<256x512xbf16>, vector<64x512xf32> -> vector<64x512xf32>
    %c0_44 = arith.constant 0 : index
    %c0_45 = arith.constant 0 : index
    %162 = vector.load %arg4[%c0_44, %c0_45] : memref<1x512xf32, #tpu.memory_space<vmem>>, vector<1x512xf32>
    %163 = vector.broadcast %162 : vector<1x512xf32> to vector<64x512xf32>
    %164 = arith.addf %161, %163 : vector<64x512xf32>
    %165 = vector.extract_strided_slice %164 {offsets = [0, 0], sizes = [64, 384], strides = [1, 1]} : vector<64x512xf32> to vector<64x384xf32>
    %166 = arith.negf %165 : vector<64x384xf32>
    %167 = math.exp %166 : vector<64x384xf32>
    %cst_46 = arith.constant 1.000000e+00 : f32
    %168 = vector.broadcast %cst_46 : f32 to vector<64x384xf32>
    %169 = arith.addf %168, %167 : vector<64x384xf32>
    %170 = arith.divf %168, %169 : vector<64x384xf32>
    %171 = vector.extract_strided_slice %170 {offsets = [0, 0], sizes = [64, 128], strides = [1, 1]} : vector<64x384xf32> to vector<64x128xf32>
    %172 = vector.extract_strided_slice %170 {offsets = [0, 128], sizes = [64, 128], strides = [1, 1]} : vector<64x384xf32> to vector<64x128xf32>
    %173 = vector.extract_strided_slice %170 {offsets = [0, 256], sizes = [64, 128], strides = [1, 1]} : vector<64x384xf32> to vector<64x128xf32>
    %174 = vector.extract_strided_slice %164 {offsets = [0, 384], sizes = [64, 128], strides = [1, 1]} : vector<64x512xf32> to vector<64x128xf32>
    %175 = math.tanh %174 : vector<64x128xf32>
    %176 = arith.mulf %172, %154 : vector<64x128xf32>
    %177 = arith.mulf %171, %175 : vector<64x128xf32>
    %178 = arith.addf %176, %177 : vector<64x128xf32>
    %179 = math.tanh %178 : vector<64x128xf32>
    %180 = arith.mulf %173, %179 : vector<64x128xf32>
    %c192 = arith.constant 192 : index
    %c0_47 = arith.constant 0 : index
    %181 = vector.load %arg9[%c192, %c0_47] : memref<256x128xf32, #tpu.memory_space<vmem>>, vector<64x128xf32>
    tpu.vector_store %arg9[%c192, %c0_47], %180 {strides = array<i32>} : memref<256x128xf32, #tpu.memory_space<vmem>>, vector<64x128xf32>,
    %c0_48 = arith.constant 0 : index
    %c0_49 = arith.constant 0 : index
    %182 = vector.load %arg9[%c0_48, %c0_49] : memref<256x128xf32, #tpu.memory_space<vmem>>, vector<256x128xf32>
    %183 = arith.truncf %182 : vector<256x128xf32> to vector<256x128xbf16>
    %c0_50 = arith.constant 0 : index
    %c0_51 = arith.constant 0 : index
    %184 = vector.load %arg5[%c0_50, %c0_51] : memref<128x128xbf16, #tpu.memory_space<vmem>>, vector<128x128xbf16>
    %cst_52 = arith.constant dense<0.000000e+00> : vector<256x128xf32>
    %185 = tpu.matmul %183, %184, %cst_52 {dimension_numbers = #tpu.dot_dimension_numbers<[1], [0], [0], [1], [0, 0, 1, 1], [], []>} : vector<256x128xbf16>, vector<128x128xbf16>, vector<256x128xf32> -> vector<256x128xf32>
    %c0_53 = arith.constant 0 : index
    %c0_54 = arith.constant 0 : index
    %186 = vector.load %arg6[%c0_53, %c0_54] : memref<1x128xf32, #tpu.memory_space<vmem>>, vector<1x128xf32>
    %187 = vector.broadcast %186 : vector<1x128xf32> to vector<256x128xf32>
    %188 = arith.addf %185, %187 : vector<256x128xf32>
    %c0_55 = arith.constant 0 : index
    %c0_56 = arith.constant 0 : index
    %189 = vector.load %arg7[%c0_55, %c0_56] : memref<256x128xf32, #tpu.memory_space<vmem>>, vector<256x128xf32>
    tpu.vector_store %arg7[%c0_55, %c0_56], %188 {strides = array<i32>} : memref<256x128xf32, #tpu.memory_space<vmem>>, vector<256x128xf32>,
    return
  }
}

</mosaic_0001>

<llo_original>
// kernel: decoder_forward.1
$region0: #{decoder_forward.1}
  #allocation0 [shape = 'u32[]', space=smem, size = 0x4, offset = 0x4, fixed_abs, tag = 'smem constant byte address 0x4 - core index']
  #allocation1 [shape = 'u32[72,128]{1,0:T(1,128)}', space=vmem, size = 0x9000, scoped, tag = 'internal scratch']
  #allocation2 [shape = 'f32[64,512]{1,0:T(8,128)}', space=vmem, size = 0x20000, scoped, tag = 'scratch operand']
  #allocation3 [shape = 'f32[256,128]{1,0:T(8,128)}', space=vmem, size = 0x20000, scoped, tag = 'scratch operand']
  %s0 = inlined_call_operand.hbm [shape: f32[64,128], index: 0, kind: input, shape index: {}]
  %s1 = inlined_call_operand.hbm [shape: bf16[128,512], index: 1, kind: input, shape index: {}]
  %s2 = inlined_call_operand.hbm [shape: f32[1,512], index: 2, kind: input, shape index: {}]
  %s3 = inlined_call_operand.hbm [shape: bf16[256,1024], index: 3, kind: input, shape index: {}]
  %s4 = inlined_call_operand.hbm [shape: f32[1,512], index: 4, kind: input, shape index: {}]
  %s5 = inlined_call_operand.hbm [shape: bf16[128,128], index: 5, kind: input, shape index: {}]
  %s6 = inlined_call_operand.vmem [shape: f32[1,128], index: 6, kind: input, shape index: {}]
  %s7 = inlined_call_operand.vmem [shape: f32[256,128], index: 7, kind: output, shape index: {}]
  %s8 = sld [smem:[#allocation0]]
  $region62: #{decoder_forward.1} parent=0
    _
  %s10 = ssub.s32 1, %s8
  %s11 = scalar_select 0, %s10, %s8
  $region1: #{decoder_forward.1} parent=0
    #allocation4 [shape = 'u8[32768]{0}', space=vmem, size = 0x8000, scoped, tag = 'input window, operand 0, single buffered']
    #allocation5 [shape = 's32[1]{0}', space=sflag, size = 0x4, scoped, tag = 'scoped memory for decoder_forward.1']
    #allocation6 [shape = 'u8[131072]{0}', space=vmem, size = 0x20000, scoped, tag = 'input window, operand 1, single buffered']
    #allocation7 [shape = 's32[1]{0}', space=sflag, size = 0x4, scoped, tag = 'scoped memory for decoder_forward.1']
    #allocation8 [shape = 'u8[2048]{0}', space=vmem, size = 0x800, scoped, tag = 'input window, operand 2, single buffered']
    #allocation9 [shape = 'u8[524288]{0}', space=vmem, size = 0x80000, scoped, tag = 'input window, operand 3, single buffered']
    #allocation10 [shape = 's32[1]{0}', space=sflag, size = 0x4, scoped, tag = 'scoped memory for decoder_forward.1']
    #allocation11 [shape = 'u8[2048]{0}', space=vmem, size = 0x800, scoped, tag = 'input window, operand 4, single buffered']
    #allocation12 [shape = 'u8[32768]{0}', space=vmem, size = 0x8000, scoped, tag = 'input window, operand 5, single buffered']
    #allocation13 [shape = 's32[1]{0}', space=sflag, size = 0x4, scoped, tag = 'scoped memory for decoder_forward.1']
    %12 = vsyncpa [#allocation5], 0
    %13 = vsyncpa [#allocation7], 0
    %14 = vsyncpa [#allocation10], 0
    %15 = vsyncpa [#allocation13], 0
    // Predicated region
    $region2: #{decoder_forward.1} parent=1 // pred_check
      _
    $region3: #{decoder_forward.1} parent=1 // pred_check_branch
      %17 = sbr.rel (0) target = $region5
    $region4: #{decoder_forward.1} parent=1 // pred_region
      %19 = vsyncadd [#allocation5], 0
      %s20 = sshll.u32 %s0, 4
      %s21 = int_to_ptr.hbm [resolvable:$true] %s20
      %s22 = sshll.u32 [#allocation4], 4
      %s23 = int_to_ptr.vmem [resolvable:$true] %s22
      %28 = dma.hbm_to_vmem [thread:$0]  %s21, 1024, %s23, [#allocation5], 128, 128, 8
    $region5: #{decoder_forward.1} parent=1 // pred_fallthru
      _
    // Predicated region
    $region6: #{decoder_forward.1} parent=1 // pred_check
      _
    $region7: #{decoder_forward.1} parent=1 // pred_check_branch
      %30 = sbr.rel (0) target = $region9
    $region8: #{decoder_forward.1} parent=1 // pred_region
      %32 = vsyncadd [#allocation7], 0
      %s33 = sshll.u32 %s1, 4
      %s34 = int_to_ptr.hbm [resolvable:$true] %s33
      %s35 = sshll.u32 [#allocation6], 4
      %s36 = int_to_ptr.vmem [resolvable:$true] %s35
      %41 = dma.hbm_to_vmem [thread:$0]  %s34, 4096, %s36, [#allocation7], 256, 256, 16
    $region9: #{decoder_forward.1} parent=1 // pred_fallthru
      _
    // Predicated region
    $region10: #{decoder_forward.1} parent=1 // pred_check
      _
    $region11: #{decoder_forward.1} parent=1 // pred_check_branch
      %43 = sbr.rel (0) target = $region13
    $region12: #{decoder_forward.1} parent=1 // pred_region
      %45 = vsyncadd [#allocation7], 0
      %s47 = sshll.u32 %s2, 4
      %s48 = int_to_ptr.hbm [resolvable:$true] %s47
      %s49 = sshll.u32 [#allocation8], 4
      %s50 = int_to_ptr.vmem [resolvable:$true] %s49
      %52 = dma.hbm_to_vmem [thread:$0]  %s48, 64, %s50, [#allocation7]
    $region13: #{decoder_forward.1} parent=1 // pred_fallthru
      _
    // Predicated region
    $region14: #{decoder_forward.1} parent=1 // pred_check
      _
    $region15: #{decoder_forward.1} parent=1 // pred_check_branch
      %54 = sbr.rel (0) target = $region17
    $region16: #{decoder_forward.1} parent=1 // pred_region
      %56 = vsyncadd [#allocation10], 0
      %s57 = sshll.u32 %s3, 4
      %s58 = int_to_ptr.hbm [resolvable:$true] %s57
      %s59 = sshll.u32 [#allocation9], 4
      %s60 = int_to_ptr.vmem [resolvable:$true] %s59
      %65 = dma.hbm_to_vmem [thread:$0]  %s58, 16384, %s60, [#allocation10], 512, 512, 32
    $region17: #{decoder_forward.1} parent=1 // pred_fallthru
      _
    // Predicated region
    $region18: #{decoder_forward.1} parent=1 // pred_check
      _
    $region19: #{decoder_forward.1} parent=1 // pred_check_branch
      %67 = sbr.rel (0) target = $region21
    $region20: #{decoder_forward.1} parent=1 // pred_region
      %69 = vsyncadd [#allocation10], 0
      %s71 = sshll.u32 %s4, 4
      %s72 = int_to_ptr.hbm [resolvable:$true] %s71
      %s73 = sshll.u32 [#allocation11], 4
      %s74 = int_to_ptr.vmem [resolvable:$true] %s73
      %76 = dma.hbm_to_vmem [thread:$0]  %s72, 64, %s74, [#allocation10]
    $region21: #{decoder_forward.1} parent=1 // pred_fallthru
      _
    // Predicated region
    $region22: #{decoder_forward.1} parent=1 // pred_check
      _
    $region23: #{decoder_forward.1} parent=1 // pred_check_branch
      %78 = sbr.rel (0) target = $region25
    $region24: #{decoder_forward.1} parent=1 // pred_region
      %80 = vsyncadd [#allocation13], 0
      %s81 = sshll.u32 %s5, 4
      %s82 = int_to_ptr.hbm [resolvable:$true] %s81
      %s83 = sshll.u32 [#allocation12], 4
      %s84 = int_to_ptr.vmem [resolvable:$true] %s83
      %89 = dma.hbm_to_vmem [thread:$0]  %s82, 1024, %s84, [#allocation13], 64, 64, 4
    $region25: #{decoder_forward.1} parent=1 // pred_fallthru
      _
    // Predicated region
    $region26: #{decoder_forward.1} parent=1 // pred_check
      _
    $region27: #{decoder_forward.1} parent=1 // pred_check_branch
      %91 = sbr.rel (0) target = $region29
    $region28: #{decoder_forward.1} parent=1 // pred_region
      _
    $region29: #{decoder_forward.1} parent=1 // pred_fallthru
      _
    // Predicated region
    $region30: #{decoder_forward.1} parent=1 // pred_check
      _
    $region31: #{decoder_forward.1} parent=1 // pred_check_branch
      %93 = sbr.rel (0) target = $region33
    $region32: #{decoder_forward.1} parent=1 // pred_region
      %95 = dma.done [#allocation5], 1024
    $region33: #{decoder_forward.1} parent=1 // pred_fallthru
      _
    // Predicated region
    $region34: #{decoder_forward.1} parent=1 // pred_check
      _
    $region35: #{decoder_forward.1} parent=1 // pred_check_branch
      %97 = sbr.rel (0) target = $region37
    $region36: #{decoder_forward.1} parent=1 // pred_region
      %99 = dma.done [#allocation7], 4096
    $region37: #{decoder_forward.1} parent=1 // pred_fallthru
      _
    // Predicated region
    $region38: #{decoder_forward.1} parent=1 // pred_check
      _
    $region39: #{decoder_forward.1} parent=1 // pred_check_branch
      %101 = sbr.rel (0) target = $region41
    $region40: #{decoder_forward.1} parent=1 // pred_region
      %103 = dma.done [#allocation7], 64
    $region41: #{decoder_forward.1} parent=1 // pred_fallthru
      _
    // Predicated region
    $region42: #{decoder_forward.1} parent=1 // pred_check
      _
    $region43: #{decoder_forward.1} parent=1 // pred_check_branch
      %105 = sbr.rel (0) target = $region45
    $region44: #{decoder_forward.1} parent=1 // pred_region
      %107 = dma.done [#allocation10], 16384
    $region45: #{decoder_forward.1} parent=1 // pred_fallthru
      _
    // Predicated region
    $region46: #{decoder_forward.1} parent=1 // pred_check
      _
    $region47: #{decoder_forward.1} parent=1 // pred_check_branch
      %109 = sbr.rel (0) target = $region49
    $region48: #{decoder_forward.1} parent=1 // pred_region
      %111 = dma.done [#allocation10], 64
    $region49: #{decoder_forward.1} parent=1 // pred_fallthru
      _
    // Predicated region
    $region50: #{decoder_forward.1} parent=1 // pred_check
      _
    $region51: #{decoder_forward.1} parent=1 // pred_check_branch
      %113 = sbr.rel (0) target = $region53
    $region52: #{decoder_forward.1} parent=1 // pred_region
      %115 = dma.done [#allocation13], 1024
    $region53: #{decoder_forward.1} parent=1 // pred_fallthru
      _
    %v116 = vld [vmem:[#allocation4] sm:$0xff]
    %v117 = vld [vmem:[#allocation4 + $0x8] sm:$0xff]
    %v118 = vld [vmem:[#allocation4 + $0x10] sm:$0xff]
    %v119 = vld [vmem:[#allocation4 + $0x18] sm:$0xff]
    %v120 = vld [vmem:[#allocation4 + $0x20] sm:$0xff]
    %v121 = vld [vmem:[#allocation4 + $0x28] sm:$0xff]
    %v122 = vld [vmem:[#allocation4 + $0x30] sm:$0xff]
    %v123 = vld [vmem:[#allocation4 + $0x38] sm:$0xff]
    %v124 = vpack.c.bf16 %v117, %v116
    %v125 = vpack.c.bf16 %v119, %v118
    %v126 = vpack.c.bf16 %v121, %v120
    %v127 = vpack.c.bf16 %v123, %v122
    %v128 = vld [vmem:[#allocation6] sm:$0xff]
    %v129 = vld [vmem:[#allocation6 + $0x8] sm:$0xff]
    %v130 = vld [vmem:[#allocation6 + $0x10] sm:$0xff]
    %v131 = vld [vmem:[#allocation6 + $0x18] sm:$0xff]
    %v132 = vld [vmem:[#allocation6 + $0x20] sm:$0xff]
    %v133 = vld [vmem:[#allocation6 + $0x28] sm:$0xff]
    %v134 = vld [vmem:[#allocation6 + $0x30] sm:$0xff]
    %v135 = vld [vmem:[#allocation6 + $0x38] sm:$0xff]
    %v136 = vld [vmem:[#allocation6 + $0x40] sm:$0xff]
    %v137 = vld [vmem:[#allocation6 + $0x48] sm:$0xff]
    %v138 = vld [vmem:[#allocation6 + $0x50] sm:$0xff]
    %v139 = vld [vmem:[#allocation6 + $0x58] sm:$0xff]
    %v140 = vld [vmem:[#allocation6 + $0x60] sm:$0xff]
    %v141 = vld [vmem:[#allocation6 + $0x68] sm:$0xff]
    %v142 = vld [vmem:[#allocation6 + $0x70] sm:$0xff]
    %v143 = vld [vmem:[#allocation6 + $0x78] sm:$0xff]
    %v144 = vld [vmem:[#allocation6 + $0x80] sm:$0xff]
    %v145 = vld [vmem:[#allocation6 + $0x88] sm:$0xff]
    %v146 = vld [vmem:[#allocation6 + $0x90] sm:$0xff]
    %v147 = vld [vmem:[#allocation6 + $0x98] sm:$0xff]
    %v148 = vld [vmem:[#allocation6 + $0xa0] sm:$0xff]
    %v149 = vld [vmem:[#allocation6 + $0xa8] sm:$0xff]
    %v150 = vld [vmem:[#allocation6 + $0xb0] sm:$0xff]
    %v151 = vld [vmem:[#allocation6 + $0xb8] sm:$0xff]
    %v152 = vld [vmem:[#allocation6 + $0xc0] sm:$0xff]
    %v153 = vld [vmem:[#allocation6 + $0xc8] sm:$0xff]
    %v154 = vld [vmem:[#allocation6 + $0xd0] sm:$0xff]
    %v155 = vld [vmem:[#allocation6 + $0xd8] sm:$0xff]
    %v156 = vld [vmem:[#allocation6 + $0xe0] sm:$0xff]
    %v157 = vld [vmem:[#allocation6 + $0xe8] sm:$0xff]
    %v158 = vld [vmem:[#allocation6 + $0xf0] sm:$0xff]
    %v159 = vld [vmem:[#allocation6 + $0xf8] sm:$0xff]
    %v160 = vld [vmem:[#allocation8] sm:$0xf]
    %v162 = vperm.slane %v160, 0
    %v163 = vperm.slane %v160, 1
    %v164 = vperm.slane %v160, 2
    %v165 = vperm.slane %v160, 3
    %v202 = vunpack.c.l.b16 %v128
    %v203 = vunpack.c.h.b16 %v128
    %v204 = vunpack.c.l.b16 %v129
    %v205 = vunpack.c.h.b16 %v129
    %v206 = vunpack.c.l.b16 %v130
    %v207 = vunpack.c.h.b16 %v130
    %v208 = vunpack.c.l.b16 %v131
    %v209 = vunpack.c.h.b16 %v131
    %v210 = vunpack.c.l.b16 %v132
    %v211 = vunpack.c.h.b16 %v132
    %v212 = vunpack.c.l.b16 %v133
    %v213 = vunpack.c.h.b16 %v133
    %v214 = vunpack.c.l.b16 %v134
    %v215 = vunpack.c.h.b16 %v134
    %v216 = vunpack.c.l.b16 %v135
    %v217 = vunpack.c.h.b16 %v135
    %v218 = vunpack.c.l.b16 %v136
    %v219 = vunpack.c.h.b16 %v136
    %v220 = vunpack.c.l.b16 %v137
    %v221 = vunpack.c.h.b16 %v137
    %v222 = vunpack.c.l.b16 %v138
    %v223 = vunpack.c.h.b16 %v138
    %v224 = vunpack.c.l.b16 %v139
    %v225 = vunpack.c.h.b16 %v139
    %v226 = vunpack.c.l.b16 %v140
    %v227 = vunpack.c.h.b16 %v140
    %v228 = vunpack.c.l.b16 %v141
    %v229 = vunpack.c.h.b16 %v141
    %v230 = vunpack.c.l.b16 %v142
    %v231 = vunpack.c.h.b16 %v142
    %v232 = vunpack.c.l.b16 %v143
    %v233 = vunpack.c.h.b16 %v143
    %v234 = vunpack.c.l.b16 %v144
    %v235 = vunpack.c.h.b16 %v144
    %v236 = vunpack.c.l.b16 %v145
    %v237 = vunpack.c.h.b16 %v145
    %v238 = vunpack.c.l.b16 %v146
    %v239 = vunpack.c.h.b16 %v146
    %v240 = vunpack.c.l.b16 %v147
    %v241 = vunpack.c.h.b16 %v147
    %v242 = vunpack.c.l.b16 %v148
    %v243 = vunpack.c.h.b16 %v148
    %v244 = vunpack.c.l.b16 %v149
    %v245 = vunpack.c.h.b16 %v149
    %v246 = vunpack.c.l.b16 %v150
    %v247 = vunpack.c.h.b16 %v150
    %v248 = vunpack.c.l.b16 %v151
    %v249 = vunpack.c.h.b16 %v151
    %v250 = vunpack.c.l.b16 %v152
    %v251 = vunpack.c.h.b16 %v152
    %v252 = vunpack.c.l.b16 %v153
    %v253 = vunpack.c.h.b16 %v153
    %v254 = vunpack.c.l.b16 %v154
    %v255 = vunpack.c.h.b16 %v154
    %v256 = vunpack.c.l.b16 %v155
    %v257 = vunpack.c.h.b16 %v155
    %v258 = vunpack.c.l.b16 %v156
    %v259 = vunpack.c.h.b16 %v156
    %v260 = vunpack.c.l.b16 %v157
    %v261 = vunpack.c.h.b16 %v157
    %v262 = vunpack.c.l.b16 %v158
    %v263 = vunpack.c.h.b16 %v158
    %v264 = vunpack.c.l.b16 %v159
    %v265 = vunpack.c.h.b16 %v159
    %v266 = vpack.c.b16 %v206, %v202
    %v267 = vpack.c.b16 %v207, %v203
    %v268 = vpack.c.b16 %v208, %v204
    %v269 = vpack.c.b16 %v209, %v205
    %v270 = vpack.c.b16 %v214, %v210
    %v271 = vpack.c.b16 %v215, %v211
    %v272 = vpack.c.b16 %v216, %v212
    %v273 = vpack.c.b16 %v217, %v213
    %v274 = vpack.c.b16 %v222, %v218
    %v275 = vpack.c.b16 %v223, %v219
    %v276 = vpack.c.b16 %v224, %v220
    %v277 = vpack.c.b16 %v225, %v221
    %v278 = vpack.c.b16 %v230, %v226
    %v279 = vpack.c.b16 %v231, %v227
    %v280 = vpack.c.b16 %v232, %v228
    %v281 = vpack.c.b16 %v233, %v229
    %v282 = vpack.c.b16 %v238, %v234
    %v283 = vpack.c.b16 %v239, %v235
    %v284 = vpack.c.b16 %v240, %v236
    %v285 = vpack.c.b16 %v241, %v237
    %v286 = vpack.c.b16 %v246, %v242
    %v287 = vpack.c.b16 %v247, %v243
    %v288 = vpack.c.b16 %v248, %v244
    %v289 = vpack.c.b16 %v249, %v245
    %v290 = vpack.c.b16 %v254, %v250
    %v291 = vpack.c.b16 %v255, %v251
    %v292 = vpack.c.b16 %v256, %v252
    %v293 = vpack.c.b16 %v257, %v253
    %v294 = vpack.c.b16 %v262, %v258
    %v295 = vpack.c.b16 %v263, %v259
    %v296 = vpack.c.b16 %v264, %v260
    %v297 = vpack.c.b16 %v265, %v261
    %330 = vmatpush.bf16.msra.mxu0 %v294
    %331 = vmatpush.bf16.msra.mxu0 %v290
    %332 = vmatpush.bf16.msra.mxu0 %v286
    %333 = vmatpush.bf16.msra.mxu0 %v282
    %334 = vmatpush.bf16.msra.mxu0 %v278
    %335 = vmatpush.bf16.msra.mxu0 %v274
    %336 = vmatpush.bf16.msra.mxu0 %v270
    %337 = vmatpush.bf16.msra.mxu0 %v266
    %338 = vmatmul.bf16.gmra.mxu0 %v124
    %v339 = vpop.f32.mrf.mxu0
    %v340 = vadd.f32 %v162, %v339
    %v341 = vpop.f32.mrf.mxu0
    %v342 = vadd.f32 %v162, %v341
    %343 = vmatmul.bf16.gmra.mxu0 %v125
    %v344 = vpop.f32.mrf.mxu0
    %v345 = vadd.f32 %v162, %v344
    %v346 = vpop.f32.mrf.mxu0
    %v347 = vadd.f32 %v162, %v346
    %348 = vmatmul.bf16.gmra.mxu0 %v126
    %v349 = vpop.f32.mrf.mxu0
    %v350 = vadd.f32 %v162, %v349
    %v351 = vpop.f32.mrf.mxu0
    %v352 = vadd.f32 %v162, %v351
    %353 = vmatmul.bf16.gmra.mxu0 %v127
    %v354 = vpop.f32.mrf.mxu0
    %v355 = vadd.f32 %v162, %v354
    %v356 = vpop.f32.mrf.mxu0
    %v357 = vadd.f32 %v162, %v356
    %358 = vdwg.mxu0
    %359 = vmatpush.bf16.msra.mxu0 %v295
    %360 = vmatpush.bf16.msra.mxu0 %v291
    %361 = vmatpush.bf16.msra.mxu0 %v287
    %362 = vmatpush.bf16.msra.mxu0 %v283
    %363 = vmatpush.bf16.msra.mxu0 %v279
    %364 = vmatpush.bf16.msra.mxu0 %v275
    %365 = vmatpush.bf16.msra.mxu0 %v271
    %366 = vmatpush.bf16.msra.mxu0 %v267
    %367 = vmatmul.bf16.gmra.mxu0 %v124
    %v368 = vpop.f32.mrf.mxu0
    %v369 = vadd.f32 %v163, %v368
    %v370 = vpop.f32.mrf.mxu0
    %v371 = vadd.f32 %v163, %v370
    %372 = vmatmul.bf16.gmra.mxu0 %v125
    %v373 = vpop.f32.mrf.mxu0
    %v374 = vadd.f32 %v163, %v373
    %v375 = vpop.f32.mrf.mxu0
    %v376 = vadd.f32 %v163, %v375
    %377 = vmatmul.bf16.gmra.mxu0 %v126
    %v378 = vpop.f32.mrf.mxu0
    %v379 = vadd.f32 %v163, %v378
    %v380 = vpop.f32.mrf.mxu0
    %v381 = vadd.f32 %v163, %v380
    %382 = vmatmul.bf16.gmra.mxu0 %v127
    %v383 = vpop.f32.mrf.mxu0
    %v384 = vadd.f32 %v163, %v383
    %v385 = vpop.f32.mrf.mxu0
    %v386 = vadd.f32 %v163, %v385
    %387 = vdwg.mxu0
    %388 = vmatpush.bf16.msra.mxu0 %v296
    %389 = vmatpush.bf16.msra.mxu0 %v292
    %390 = vmatpush.bf16.msra.mxu0 %v288
    %391 = vmatpush.bf16.msra.mxu0 %v284
    %392 = vmatpush.bf16.msra.mxu0 %v280
    %393 = vmatpush.bf16.msra.mxu0 %v276
    %394 = vmatpush.bf16.msra.mxu0 %v272
    %395 = vmatpush.bf16.msra.mxu0 %v268
    %396 = vmatmul.bf16.gmra.mxu0 %v124
    %v397 = vpop.f32.mrf.mxu0
    %v398 = vadd.f32 %v164, %v397
    %v399 = vpop.f32.mrf.mxu0
    %v400 = vadd.f32 %v164, %v399
    %401 = vmatmul.bf16.gmra.mxu0 %v125
    %v402 = vpop.f32.mrf.mxu0
    %v403 = vadd.f32 %v164, %v402
    %v404 = vpop.f32.mrf.mxu0
    %v405 = vadd.f32 %v164, %v404
    %406 = vmatmul.bf16.gmra.mxu0 %v126
    %v407 = vpop.f32.mrf.mxu0
    %v408 = vadd.f32 %v164, %v407
    %v409 = vpop.f32.mrf.mxu0
    %v410 = vadd.f32 %v164, %v409
    %411 = vmatmul.bf16.gmra.mxu0 %v127
    %v412 = vpop.f32.mrf.mxu0
    %v413 = vadd.f32 %v164, %v412
    %v414 = vpop.f32.mrf.mxu0
    %v415 = vadd.f32 %v164, %v414
    %416 = vdwg.mxu0
    %417 = vmatpush.bf16.msra.mxu0 %v297
    %418 = vmatpush.bf16.msra.mxu0 %v293
    %419 = vmatpush.bf16.msra.mxu0 %v289
    %420 = vmatpush.bf16.msra.mxu0 %v285
    %421 = vmatpush.bf16.msra.mxu0 %v281
    %422 = vmatpush.bf16.msra.mxu0 %v277
    %423 = vmatpush.bf16.msra.mxu0 %v273
    %424 = vmatpush.bf16.msra.mxu0 %v269
    %425 = vmatmul.bf16.gmra.mxu0 %v124
    %v426 = vpop.f32.mrf.mxu0
    %v427 = vadd.f32 %v165, %v426
    %v428 = vpop.f32.mrf.mxu0
    %v429 = vadd.f32 %v165, %v428
    %430 = vmatmul.bf16.gmra.mxu0 %v125
    %v431 = vpop.f32.mrf.mxu0
    %v432 = vadd.f32 %v165, %v431
    %v433 = vpop.f32.mrf.mxu0
    %v434 = vadd.f32 %v165, %v433
    %435 = vmatmul.bf16.gmra.mxu0 %v126
    %v436 = vpop.f32.mrf.mxu0
    %v437 = vadd.f32 %v165, %v436
    %v438 = vpop.f32.mrf.mxu0
    %v439 = vadd.f32 %v165, %v438
    %440 = vmatmul.bf16.gmra.mxu0 %v127
    %v441 = vpop.f32.mrf.mxu0
    %v442 = vadd.f32 %v165, %v441
    %v443 = vpop.f32.mrf.mxu0
    %v444 = vadd.f32 %v165, %v443
    %445 = vdwg.mxu0
    %446 = vst [vmem:[#allocation2] sm:$0xff] %v340
    %447 = vst [vmem:[#allocation2 + $0x8] sm:$0xff] %v369
    %448 = vst [vmem:[#allocation2 + $0x10] sm:$0xff] %v398
    %449 = vst [vmem:[#allocation2 + $0x18] sm:$0xff] %v427
    %450 = vst [vmem:[#allocation2 + $0x20] sm:$0xff] %v342
    %451 = vst [vmem:[#allocation2 + $0x28] sm:$0xff] %v371
    %452 = vst [vmem:[#allocation2 + $0x30] sm:$0xff] %v400
    %453 = vst [vmem:[#allocation2 + $0x38] sm:$0xff] %v429
    %454 = vst [vmem:[#allocation2 + $0x40] sm:$0xff] %v345
    %455 = vst [vmem:[#allocation2 + $0x48] sm:$0xff] %v374
    %456 = vst [vmem:[#allocation2 + $0x50] sm:$0xff] %v403
    %457 = vst [vmem:[#allocation2 + $0x58] sm:$0xff] %v432
    %458 = vst [vmem:[#allocation2 + $0x60] sm:$0xff] %v347
    %459 = vst [vmem:[#allocation2 + $0x68] sm:$0xff] %v376
    %460 = vst [vmem:[#allocation2 + $0x70] sm:$0xff] %v405
    %461 = vst [vmem:[#allocation2 + $0x78] sm:$0xff] %v434
    %462 = vst [vmem:[#allocation2 + $0x80] sm:$0xff] %v350
    %463 = vst [vmem:[#allocation2 + $0x88] sm:$0xff] %v379
    %464 = vst [vmem:[#allocation2 + $0x90] sm:$0xff] %v408
    %465 = vst [vmem:[#allocation2 + $0x98] sm:$0xff] %v437
    %466 = vst [vmem:[#allocation2 + $0xa0] sm:$0xff] %v352
    %467 = vst [vmem:[#allocation2 + $0xa8] sm:$0xff] %v381
    %468 = vst [vmem:[#allocation2 + $0xb0] sm:$0xff] %v410
    %469 = vst [vmem:[#allocation2 + $0xb8] sm:$0xff] %v439
    %470 = vst [vmem:[#allocation2 + $0xc0] sm:$0xff] %v355
    %471 = vst [vmem:[#allocation2 + $0xc8] sm:$0xff] %v384
    %472 = vst [vmem:[#allocation2 + $0xd0] sm:$0xff] %v413
    %473 = vst [vmem:[#allocation2 + $0xd8] sm:$0xff] %v442
    %474 = vst [vmem:[#allocation2 + $0xe0] sm:$0xff] %v357
    %475 = vst [vmem:[#allocation2 + $0xe8] sm:$0xff] %v386
    %476 = vst [vmem:[#allocation2 + $0xf0] sm:$0xff] %v415
    %477 = vst [vmem:[#allocation2 + $0xf8] sm:$0xff] %v444
    %v478 = vld [vmem:[#allocation2] sm:$0xff]
    %v479 = vld [vmem:[#allocation2 + $0x8] sm:$0xff]
    %v480 = vld [vmem:[#allocation2 + $0x10] sm:$0xff]
    %v481 = vld [vmem:[#allocation2 + $0x18] sm:$0xff]
    %v482 = vld [vmem:[#allocation2 + $0x20] sm:$0xff]
    %v483 = vld [vmem:[#allocation2 + $0x28] sm:$0xff]
    %v484 = vld [vmem:[#allocation2 + $0x30] sm:$0xff]
    %v485 = vld [vmem:[#allocation2 + $0x38] sm:$0xff]
    %v486 = vld [vmem:[#allocation2 + $0x40] sm:$0xff]
    %v487 = vld [vmem:[#allocation2 + $0x48] sm:$0xff]
    %v488 = vld [vmem:[#allocation2 + $0x50] sm:$0xff]
    %v489 = vld [vmem:[#allocation2 + $0x58] sm:$0xff]
    %v490 = vld [vmem:[#allocation2 + $0x60] sm:$0xff]
    %v491 = vld [vmem:[#allocation2 + $0x68] sm:$0xff]
    %v492 = vld [vmem:[#allocation2 + $0x70] sm:$0xff]
    %v493 = vld [vmem:[#allocation2 + $0x78] sm:$0xff]
    %v494 = vld [vmem:[#allocation2 + $0x80] sm:$0xff]
    %v495 = vld [vmem:[#allocation2 + $0x88] sm:$0xff]
    %v496 = vld [vmem:[#allocation2 + $0x90] sm:$0xff]
    %v497 = vld [vmem:[#allocation2 + $0x98] sm:$0xff]
    %v498 = vld [vmem:[#allocation2 + $0xa0] sm:$0xff]
    %v499 = vld [vmem:[#allocation2 + $0xa8] sm:$0xff]
    %v500 = vld [vmem:[#allocation2 + $0xb0] sm:$0xff]
    %v501 = vld [vmem:[#allocation2 + $0xb8] sm:$0xff]
    %v502 = vld [vmem:[#allocation2 + $0xc0] sm:$0xff]
    %v503 = vld [vmem:[#allocation2 + $0xc8] sm:$0xff]
    %v504 = vld [vmem:[#allocation2 + $0xd0] sm:$0xff]
    %v505 = vld [vmem:[#allocation2 + $0xd8] sm:$0xff]
    %v506 = vld [vmem:[#allocation2 + $0xe0] sm:$0xff]
    %v507 = vld [vmem:[#allocation2 + $0xe8] sm:$0xff]
    %v508 = vld [vmem:[#allocation2 + $0xf0] sm:$0xff]
    %v509 = vld [vmem:[#allocation2 + $0xf8] sm:$0xff]
    %v510 = vxor.u32 %v478, 2147483648
    %v511 = vxor.u32 %v479, 2147483648
    %v512 = vxor.u32 %v480, 2147483648
    %v513 = vxor.u32 %v482, 2147483648
    %v514 = vxor.u32 %v483, 2147483648
    %v515 = vxor.u32 %v484, 2147483648
    %v516 = vxor.u32 %v486, 2147483648
    %v517 = vxor.u32 %v487, 2147483648
    %v518 = vxor.u32 %v488, 2147483648
    %v519 = vxor.u32 %v490, 2147483648
    %v520 = vxor.u32 %v491, 2147483648
    %v521 = vxor.u32 %v492, 2147483648
    %v522 = vxor.u32 %v494, 2147483648
    %v523 = vxor.u32 %v495, 2147483648
    %v524 = vxor.u32 %v496, 2147483648
    %v525 = vxor.u32 %v498, 2147483648
    %v526 = vxor.u32 %v499, 2147483648
    %v527 = vxor.u32 %v500, 2147483648
    %v528 = vxor.u32 %v502, 2147483648
    %v529 = vxor.u32 %v503, 2147483648
    %v530 = vxor.u32 %v504, 2147483648
    %v531 = vxor.u32 %v506, 2147483648
    %v532 = vxor.u32 %v507, 2147483648
    %v533 = vxor.u32 %v508, 2147483648
    %v534 = vmul.f32 %v510, 1.442695
    %v535 = vpow.pop %v534
    %v536 = vmul.f32 %v511, 1.442695
    %v537 = vpow.pop %v536
    %v538 = vmul.f32 %v512, 1.442695
    %v539 = vpow.pop %v538
    %v540 = vmul.f32 %v513, 1.442695
    %v541 = vpow.pop %v540
    %v542 = vmul.f32 %v514, 1.442695
    %v543 = vpow.pop %v542
    %v544 = vmul.f32 %v515, 1.442695
    %v545 = vpow.pop %v544
    %v546 = vmul.f32 %v516, 1.442695
    %v547 = vpow.pop %v546
    %v548 = vmul.f32 %v517, 1.442695
    %v549 = vpow.pop %v548
    %v550 = vmul.f32 %v518, 1.442695
    %v551 = vpow.pop %v550
    %v552 = vmul.f32 %v519, 1.442695
    %v553 = vpow.pop %v552
    %v554 = vmul.f32 %v520, 1.442695
    %v555 = vpow.pop %v554
    %v556 = vmul.f32 %v521, 1.442695
    %v557 = vpow.pop %v556
    %v558 = vmul.f32 %v522, 1.442695
    %v559 = vpow.pop %v558
    %v560 = vmul.f32 %v523, 1.442695
    %v561 = vpow.pop %v560
    %v562 = vmul.f32 %v524, 1.442695
    %v563 = vpow.pop %v562
    %v564 = vmul.f32 %v525, 1.442695
    %v565 = vpow.pop %v564
    %v566 = vmul.f32 %v526, 1.442695
    %v567 = vpow.pop %v566
    %v568 = vmul.f32 %v527, 1.442695
    %v569 = vpow.pop %v568
    %v570 = vmul.f32 %v528, 1.442695
    %v571 = vpow.pop %v570
    %v572 = vmul.f32 %v529, 1.442695
    %v573 = vpow.pop %v572
    %v574 = vmul.f32 %v530, 1.442695
    %v575 = vpow.pop %v574
    %v576 = vmul.f32 %v531, 1.442695
    %v577 = vpow.pop %v576
    %v578 = vmul.f32 %v532, 1.442695
    %v579 = vpow.pop %v578
    %v580 = vmul.f32 %v533, 1.442695
    %v581 = vpow.pop %v580
    %v582 = vadd.f32 %v535, 1.0
    %v583 = vadd.f32 %v537, 1.0
    %v584 = vadd.f32 %v539, 1.0
    %v585 = vadd.f32 %v541, 1.0
    %v586 = vadd.f32 %v543, 1.0
    %v587 = vadd.f32 %v545, 1.0
    %v588 = vadd.f32 %v547, 1.0
    %v589 = vadd.f32 %v549, 1.0
    %v590 = vadd.f32 %v551, 1.0
    %v591 = vadd.f32 %v553, 1.0
    %v592 = vadd.f32 %v555, 1.0
    %v593 = vadd.f32 %v557, 1.0
    %v594 = vadd.f32 %v559, 1.0
    %v595 = vadd.f32 %v561, 1.0
    %v596 = vadd.f32 %v563, 1.0
    %v597 = vadd.f32 %v565, 1.0
    %v598 = vadd.f32 %v567, 1.0
    %v599 = vadd.f32 %v569, 1.0
    %v600 = vadd.f32 %v571, 1.0
    %v601 = vadd.f32 %v573, 1.0
    %v602 = vadd.f32 %v575, 1.0
    %v603 = vadd.f32 %v577, 1.0
    %v604 = vadd.f32 %v579, 1.0
    %v605 = vadd.f32 %v581, 1.0
    %v606 = vrcp.pop %v582
    %v607 = vmul.f32 %v582, %v606
    %v608 = vsub.f32 1.0, %v607
    %v609 = vmul.f32 %v606, %v608
    %v610 = vadd.f32 %v606, %v609
    %vm611 = vweird.f32 %v582
    %vm612 = vweird.f32 %v606
    %vm613 = vmor %vm611, %vm612
    %v614 = vsel %vm613, %v606, %v610
    %v615 = vand.u32 2147483647, %v582
    %vm616 = vcmp.eq.f32.partialorder %v615, 8.507059e+37
    %v617 = vand.u32 %v582, 2147483648
    %v618 = vor.u32 1.1754944e-38, %v617
    %v619 = vsel %vm616, %v618, %v614
    %v620 = vmul.f32 1.0, %v619
    %v621 = vrcp.pop %v583
    %v622 = vmul.f32 %v583, %v621
    %v623 = vsub.f32 1.0, %v622
    %v624 = vmul.f32 %v621, %v623
    %v625 = vadd.f32 %v621, %v624
    %vm626 = vweird.f32 %v583
    %vm627 = vweird.f32 %v621
    %vm628 = vmor %vm626, %vm627
    %v629 = vsel %vm628, %v621, %v625
    %v630 = vand.u32 2147483647, %v583
    %vm631 = vcmp.eq.f32.partialorder %v630, 8.507059e+37
    %v632 = vand.u32 %v583, 2147483648
    %v633 = vor.u32 1.1754944e-38, %v632
    %v634 = vsel %vm631, %v633, %v629
    %v635 = vmul.f32 1.0, %v634
    %v636 = vrcp.pop %v584
    %v637 = vmul.f32 %v584, %v636
    %v638 = vsub.f32 1.0, %v637
    %v639 = vmul.f32 %v636, %v638
    %v640 = vadd.f32 %v636, %v639
    %vm641 = vweird.f32 %v584
    %vm642 = vweird.f32 %v636
    %vm643 = vmor %vm641, %vm642
    %v644 = vsel %vm643, %v636, %v640
    %v645 = vand.u32 2147483647, %v584
    %vm646 = vcmp.eq.f32.partialorder %v645, 8.507059e+37
    %v647 = vand.u32 %v584, 2147483648
    %v648 = vor.u32 1.1754944e-38, %v647
    %v649 = vsel %vm646, %v648, %v644
    %v650 = vmul.f32 1.0, %v649
    %v651 = vrcp.pop %v585
    %v652 = vmul.f32 %v585, %v651
    %v653 = vsub.f32 1.0, %v652
    %v654 = vmul.f32 %v651, %v653
    %v655 = vadd.f32 %v651, %v654
    %vm656 = vweird.f32 %v585
    %vm657 = vweird.f32 %v651
    %vm658 = vmor %vm656, %vm657
    %v659 = vsel %vm658, %v651, %v655
    %v660 = vand.u32 2147483647, %v585
    %vm661 = vcmp.eq.f32.partialorder %v660, 8.507059e+37
    %v662 = vand.u32 %v585, 2147483648
    %v663 = vor.u32 1.1754944e-38, %v662
    %v664 = vsel %vm661, %v663, %v659
    %v665 = vmul.f32 1.0, %v664
    %v666 = vrcp.pop %v586
    %v667 = vmul.f32 %v586, %v666
    %v668 = vsub.f32 1.0, %v667
    %v669 = vmul.f32 %v666, %v668
    %v670 = vadd.f32 %v666, %v669
    %vm671 = vweird.f32 %v586
    %vm672 = vweird.f32 %v666
    %vm673 = vmor %vm671, %vm672
    %v674 = vsel %vm673, %v666, %v670
    %v675 = vand.u32 2147483647, %v586
    %vm676 = vcmp.eq.f32.partialorder %v675, 8.507059e+37
    %v677 = vand.u32 %v586, 2147483648
    %v678 = vor.u32 1.1754944e-38, %v677
    %v679 = vsel %vm676, %v678, %v674
    %v680 = vmul.f32 1.0, %v679
    %v681 = vrcp.pop %v587
    %v682 = vmul.f32 %v587, %v681
    %v683 = vsub.f32 1.0, %v682
    %v684 = vmul.f32 %v681, %v683
    %v685 = vadd.f32 %v681, %v684
    %vm686 = vweird.f32 %v587
    %vm687 = vweird.f32 %v681
    %vm688 = vmor %vm686, %vm687
    %v689 = vsel %vm688, %v681, %v685
    %v690 = vand.u32 2147483647, %v587
    %vm691 = vcmp.eq.f32.partialorder %v690, 8.507059e+37
    %v692 = vand.u32 %v587, 2147483648
    %v693 = vor.u32 1.1754944e-38, %v692
    %v694 = vsel %vm691, %v693, %v689
    %v695 = vmul.f32 1.0, %v694
    %v696 = vrcp.pop %v588
    %v697 = vmul.f32 %v588, %v696
    %v698 = vsub.f32 1.0, %v697
    %v699 = vmul.f32 %v696, %v698
    %v700 = vadd.f32 %v696, %v699
    %vm701 = vweird.f32 %v588
    %vm702 = vweird.f32 %v696
    %vm703 = vmor %vm701, %vm702
    %v704 = vsel %vm703, %v696, %v700
    %v705 = vand.u32 2147483647, %v588
    %vm706 = vcmp.eq.f32.partialorder %v705, 8.507059e+37
    %v707 = vand.u32 %v588, 2147483648
    %v708 = vor.u32 1.1754944e-38, %v707
    %v709 = vsel %vm706, %v708, %v704
    %v710 = vmul.f32 1.0, %v709
    %v711 = vrcp.pop %v589
    %v712 = vmul.f32 %v589, %v711
    %v713 = vsub.f32 1.0, %v712
    %v714 = vmul.f32 %v711, %v713
    %v715 = vadd.f32 %v711, %v714
    %vm716 = vweird.f32 %v589
    %vm717 = vweird.f32 %v711
    %vm718 = vmor %vm716, %vm717
    %v719 = vsel %vm718, %v711, %v715
    %v720 = vand.u32 2147483647, %v589
    %vm721 = vcmp.eq.f32.partialorder %v720, 8.507059e+37
    %v722 = vand.u32 %v589, 2147483648
    %v723 = vor.u32 1.1754944e-38, %v722
    %v724 = vsel %vm721, %v723, %v719
    %v725 = vmul.f32 1.0, %v724
    %v726 = vrcp.pop %v590
    %v727 = vmul.f32 %v590, %v726
    %v728 = vsub.f32 1.0, %v727
    %v729 = vmul.f32 %v726, %v728
    %v730 = vadd.f32 %v726, %v729
    %vm731 = vweird.f32 %v590
    %vm732 = vweird.f32 %v726
    %vm733 = vmor %vm731, %vm732
    %v734 = vsel %vm733, %v726, %v730
    %v735 = vand.u32 2147483647, %v590
    %vm736 = vcmp.eq.f32.partialorder %v735, 8.507059e+37
    %v737 = vand.u32 %v590, 2147483648
    %v738 = vor.u32 1.1754944e-38, %v737
    %v739 = vsel %vm736, %v738, %v734
    %v740 = vmul.f32 1.0, %v739
    %v741 = vrcp.pop %v591
    %v742 = vmul.f32 %v591, %v741
    %v743 = vsub.f32 1.0, %v742
    %v744 = vmul.f32 %v741, %v743
    %v745 = vadd.f32 %v741, %v744
    %vm746 = vweird.f32 %v591
    %vm747 = vweird.f32 %v741
    %vm748 = vmor %vm746, %vm747
    %v749 = vsel %vm748, %v741, %v745
    %v750 = vand.u32 2147483647, %v591
    %vm751 = vcmp.eq.f32.partialorder %v750, 8.507059e+37
    %v752 = vand.u32 %v591, 2147483648
    %v753 = vor.u32 1.1754944e-38, %v752
    %v754 = vsel %vm751, %v753, %v749
    %v755 = vmul.f32 1.0, %v754
    %v756 = vrcp.pop %v592
    %v757 = vmul.f32 %v592, %v756
    %v758 = vsub.f32 1.0, %v757
    %v759 = vmul.f32 %v756, %v758
    %v760 = vadd.f32 %v756, %v759
    %vm761 = vweird.f32 %v592
    %vm762 = vweird.f32 %v756
    %vm763 = vmor %vm761, %vm762
    %v764 = vsel %vm763, %v756, %v760
    %v765 = vand.u32 2147483647, %v592
    %vm766 = vcmp.eq.f32.partialorder %v765, 8.507059e+37
    %v767 = vand.u32 %v592, 2147483648
    %v768 = vor.u32 1.1754944e-38, %v767
    %v769 = vsel %vm766, %v768, %v764
    %v770 = vmul.f32 1.0, %v769
    %v771 = vrcp.pop %v593
    %v772 = vmul.f32 %v593, %v771
    %v773 = vsub.f32 1.0, %v772
    %v774 = vmul.f32 %v771, %v773
    %v775 = vadd.f32 %v771, %v774
    %vm776 = vweird.f32 %v593
    %vm777 = vweird.f32 %v771
    %vm778 = vmor %vm776, %vm777
    %v779 = vsel %vm778, %v771, %v775
    %v780 = vand.u32 2147483647, %v593
    %vm781 = vcmp.eq.f32.partialorder %v780, 8.507059e+37
    %v782 = vand.u32 %v593, 2147483648
    %v783 = vor.u32 1.1754944e-38, %v782
    %v784 = vsel %vm781, %v783, %v779
    %v785 = vmul.f32 1.0, %v784
    %v786 = vrcp.pop %v594
    %v787 = vmul.f32 %v594, %v786
    %v788 = vsub.f32 1.0, %v787
    %v789 = vmul.f32 %v786, %v788
    %v790 = vadd.f32 %v786, %v789
    %vm791 = vweird.f32 %v594
    %vm792 = vweird.f32 %v786
    %vm793 = vmor %vm791, %vm792
    %v794 = vsel %vm793, %v786, %v790
    %v795 = vand.u32 2147483647, %v594
    %vm796 = vcmp.eq.f32.partialorder %v795, 8.507059e+37
    %v797 = vand.u32 %v594, 2147483648
    %v798 = vor.u32 1.1754944e-38, %v797
    %v799 = vsel %vm796, %v798, %v794
    %v800 = vmul.f32 1.0, %v799
    %v801 = vrcp.pop %v595
    %v802 = vmul.f32 %v595, %v801
    %v803 = vsub.f32 1.0, %v802
    %v804 = vmul.f32 %v801, %v803
    %v805 = vadd.f32 %v801, %v804
    %vm806 = vweird.f32 %v595
    %vm807 = vweird.f32 %v801
    %vm808 = vmor %vm806, %vm807
    %v809 = vsel %vm808, %v801, %v805
    %v810 = vand.u32 2147483647, %v595
    %vm811 = vcmp.eq.f32.partialorder %v810, 8.507059e+37
    %v812 = vand.u32 %v595, 2147483648
    %v813 = vor.u32 1.1754944e-38, %v812
    %v814 = vsel %vm811, %v813, %v809
    %v815 = vmul.f32 1.0, %v814
    %v816 = vrcp.pop %v596
    %v817 = vmul.f32 %v596, %v816
    %v818 = vsub.f32 1.0, %v817
    %v819 = vmul.f32 %v816, %v818
    %v820 = vadd.f32 %v816, %v819
    %vm821 = vweird.f32 %v596
    %vm822 = vweird.f32 %v816
    %vm823 = vmor %vm821, %vm822
    %v824 = vsel %vm823, %v816, %v820
    %v825 = vand.u32 2147483647, %v596
    %vm826 = vcmp.eq.f32.partialorder %v825, 8.507059e+37
    %v827 = vand.u32 %v596, 2147483648
    %v828 = vor.u32 1.1754944e-38, %v827
    %v829 = vsel %vm826, %v828, %v824
    %v830 = vmul.f32 1.0, %v829
    %v831 = vrcp.pop %v597
    %v832 = vmul.f32 %v597, %v831
    %v833 = vsub.f32 1.0, %v832
    %v834 = vmul.f32 %v831, %v833
    %v835 = vadd.f32 %v831, %v834
    %vm836 = vweird.f32 %v597
    %vm837 = vweird.f32 %v831
    %vm838 = vmor %vm836, %vm837
    %v839 = vsel %vm838, %v831, %v835
    %v840 = vand.u32 2147483647, %v597
    %vm841 = vcmp.eq.f32.partialorder %v840, 8.507059e+37
    %v842 = vand.u32 %v597, 2147483648
    %v843 = vor.u32 1.1754944e-38, %v842
    %v844 = vsel %vm841, %v843, %v839
    %v845 = vmul.f32 1.0, %v844
    %v846 = vrcp.pop %v598
    %v847 = vmul.f32 %v598, %v846
    %v848 = vsub.f32 1.0, %v847
    %v849 = vmul.f32 %v846, %v848
    %v850 = vadd.f32 %v846, %v849
    %vm851 = vweird.f32 %v598
    %vm852 = vweird.f32 %v846
    %vm853 = vmor %vm851, %vm852
    %v854 = vsel %vm853, %v846, %v850
    %v855 = vand.u32 2147483647, %v598
    %vm856 = vcmp.eq.f32.partialorder %v855, 8.507059e+37
    %v857 = vand.u32 %v598, 2147483648
    %v858 = vor.u32 1.1754944e-38, %v857
    %v859 = vsel %vm856, %v858, %v854
    %v860 = vmul.f32 1.0, %v859
    %v861 = vrcp.pop %v599
    %v862 = vmul.f32 %v599, %v861
    %v863 = vsub.f32 1.0, %v862
    %v864 = vmul.f32 %v861, %v863
    %v865 = vadd.f32 %v861, %v864
    %vm866 = vweird.f32 %v599
    %vm867 = vweird.f32 %v861
    %vm868 = vmor %vm866, %vm867
    %v869 = vsel %vm868, %v861, %v865
    %v870 = vand.u32 2147483647, %v599
    %vm871 = vcmp.eq.f32.partialorder %v870, 8.507059e+37
    %v872 = vand.u32 %v599, 2147483648
    %v873 = vor.u32 1.1754944e-38, %v872
    %v874 = vsel %vm871, %v873, %v869
    %v875 = vmul.f32 1.0, %v874
    %v876 = vrcp.pop %v600
    %v877 = vmul.f32 %v600, %v876
    %v878 = vsub.f32 1.0, %v877
    %v879 = vmul.f32 %v876, %v878
    %v880 = vadd.f32 %v876, %v879
    %vm881 = vweird.f32 %v600
    %vm882 = vweird.f32 %v876
    %vm883 = vmor %vm881, %vm882
    %v884 = vsel %vm883, %v876, %v880
    %v885 = vand.u32 2147483647, %v600
    %vm886 = vcmp.eq.f32.partialorder %v885, 8.507059e+37
    %v887 = vand.u32 %v600, 2147483648
    %v888 = vor.u32 1.1754944e-38, %v887
    %v889 = vsel %vm886, %v888, %v884
    %v890 = vmul.f32 1.0, %v889
    %v891 = vrcp.pop %v601
    %v892 = vmul.f32 %v601, %v891
    %v893 = vsub.f32 1.0, %v892
    %v894 = vmul.f32 %v891, %v893
    %v895 = vadd.f32 %v891, %v894
    %vm896 = vweird.f32 %v601
    %vm897 = vweird.f32 %v891
    %vm898 = vmor %vm896, %vm897
    %v899 = vsel %vm898, %v891, %v895
    %v900 = vand.u32 2147483647, %v601
    %vm901 = vcmp.eq.f32.partialorder %v900, 8.507059e+37
    %v902 = vand.u32 %v601, 2147483648
    %v903 = vor.u32 1.1754944e-38, %v902
    %v904 = vsel %vm901, %v903, %v899
    %v905 = vmul.f32 1.0, %v904
    %v906 = vrcp.pop %v602
    %v907 = vmul.f32 %v602, %v906
    %v908 = vsub.f32 1.0, %v907
    %v909 = vmul.f32 %v906, %v908
    %v910 = vadd.f32 %v906, %v909
    %vm911 = vweird.f32 %v602
    %vm912 = vweird.f32 %v906
    %vm913 = vmor %vm911, %vm912
    %v914 = vsel %vm913, %v906, %v910
    %v915 = vand.u32 2147483647, %v602
    %vm916 = vcmp.eq.f32.partialorder %v915, 8.507059e+37
    %v917 = vand.u32 %v602, 2147483648
    %v918 = vor.u32 1.1754944e-38, %v917
    %v919 = vsel %vm916, %v918, %v914
    %v920 = vmul.f32 1.0, %v919
    %v921 = vrcp.pop %v603
    %v922 = vmul.f32 %v603, %v921
    %v923 = vsub.f32 1.0, %v922
    %v924 = vmul.f32 %v921, %v923
    %v925 = vadd.f32 %v921, %v924
    %vm926 = vweird.f32 %v603
    %vm927 = vweird.f32 %v921
    %vm928 = vmor %vm926, %vm927
    %v929 = vsel %vm928, %v921, %v925
    %v930 = vand.u32 2147483647, %v603
    %vm931 = vcmp.eq.f32.partialorder %v930, 8.507059e+37
    %v932 = vand.u32 %v603, 2147483648
    %v933 = vor.u32 1.1754944e-38, %v932
    %v934 = vsel %vm931, %v933, %v929
    %v935 = vmul.f32 1.0, %v934
    %v936 = vrcp.pop %v604
    %v937 = vmul.f32 %v604, %v936
    %v938 = vsub.f32 1.0, %v937
    %v939 = vmul.f32 %v936, %v938
    %v940 = vadd.f32 %v936, %v939
    %vm941 = vweird.f32 %v604
    %vm942 = vweird.f32 %v936
    %vm943 = vmor %vm941, %vm942
    %v944 = vsel %vm943, %v936, %v940
    %v945 = vand.u32 2147483647, %v604
    %vm946 = vcmp.eq.f32.partialorder %v945, 8.507059e+37
    %v947 = vand.u32 %v604, 2147483648
    %v948 = vor.u32 1.1754944e-38, %v947
    %v949 = vsel %vm946, %v948, %v944
    %v950 = vmul.f32 1.0, %v949
    %v951 = vrcp.pop %v605
    %v952 = vmul.f32 %v605, %v951
    %v953 = vsub.f32 1.0, %v952
    %v954 = vmul.f32 %v951, %v953
    %v955 = vadd.f32 %v951, %v954
    %vm956 = vweird.f32 %v605
    %vm957 = vweird.f32 %v951
    %vm958 = vmor %vm956, %vm957
    %v959 = vsel %vm958, %v951, %v955
    %v960 = vand.u32 2147483647, %v605
    %vm961 = vcmp.eq.f32.partialorder %v960, 8.507059e+37
    %v962 = vand.u32 %v605, 2147483648
    %v963 = vor.u32 1.1754944e-38, %v962
    %v964 = vsel %vm961, %v963, %v959
    %v965 = vmul.f32 1.0, %v964
    %v966 = vtanh.pop %v481
    %v967 = vtanh.pop %v485
    %v968 = vtanh.pop %v489
    %v969 = vtanh.pop %v493
    %v970 = vtanh.pop %v497
    %v971 = vtanh.pop %v501
    %v972 = vtanh.pop %v505
    %v973 = vtanh.pop %v509
    %v974 = vmul.f32 %v635, 0.0
    %v975 = vmul.f32 %v680, 0.0
    %v976 = vmul.f32 %v725, 0.0
    %v977 = vmul.f32 %v770, 0.0
    %v978 = vmul.f32 %v815, 0.0
    %v979 = vmul.f32 %v860, 0.0
    %v980 = vmul.f32 %v905, 0.0
    %v981 = vmul.f32 %v950, 0.0
    %v982 = vmul.f32 %v620, %v966
    %v983 = vmul.f32 %v665, %v967
    %v984 = vmul.f32 %v710, %v968
    %v985 = vmul.f32 %v755, %v969
    %v986 = vmul.f32 %v800, %v970
    %v987 = vmul.f32 %v845, %v971
    %v988 = vmul.f32 %v890, %v972
    %v989 = vmul.f32 %v935, %v973
    %v990 = vadd.f32 %v974, %v982
    %v991 = vadd.f32 %v975, %v983
    %v992 = vadd.f32 %v976, %v984
    %v993 = vadd.f32 %v977, %v985
    %v994 = vadd.f32 %v978, %v986
    %v995 = vadd.f32 %v979, %v987
    %v996 = vadd.f32 %v980, %v988
    %v997 = vadd.f32 %v981, %v989
    %v998 = vtanh.pop %v990
    %v999 = vtanh.pop %v991
    %v1000 = vtanh.pop %v992
    %v1001 = vtanh.pop %v993
    %v1002 = vtanh.pop %v994
    %v1003 = vtanh.pop %v995
    %v1004 = vtanh.pop %v996
    %v1005 = vtanh.pop %v997
    %v1006 = vmul.f32 %v650, %v998
    %v1007 = vmul.f32 %v695, %v999
    %v1008 = vmul.f32 %v740, %v1000
    %v1009 = vmul.f32 %v785, %v1001
    %v1010 = vmul.f32 %v830, %v1002
    %v1011 = vmul.f32 %v875, %v1003
    %v1012 = vmul.f32 %v920, %v1004
    %v1013 = vmul.f32 %v965, %v1005
    %v1014 = vpack.c.bf16 %v1007, %v1006
    %v1015 = vpack.c.bf16 0.0, 0.0
    %v1016 = vpack.c.bf16 %v1009, %v1008
    %v1017 = vpack.c.bf16 %v1011, %v1010
    %v1018 = vpack.c.bf16 %v1013, %v1012
    %v1019 = vld [vmem:[#allocation9] sm:$0xff]
    %v1020 = vld [vmem:[#allocation9 + $0x8] sm:$0xff]
    %v1021 = vld [vmem:[#allocation9 + $0x10] sm:$0xff]
    %v1022 = vld [vmem:[#allocation9 + $0x18] sm:$0xff]
    %v1023 = vld [vmem:[#allocation9 + $0x20] sm:$0xff]
    %v1024 = vld [vmem:[#allocation9 + $0x28] sm:$0xff]
    %v1025 = vld [vmem:[#allocation9 + $0x30] sm:$0xff]
    %v1026 = vld [vmem:[#allocation9 + $0x38] sm:$0xff]
    %v1027 = vld [vmem:[#allocation9 + $0x40] sm:$0xff]
    %v1028 = vld [vmem:[#allocation9 + $0x48] sm:$0xff]
    %v1029 = vld [vmem:[#allocation9 + $0x50] sm:$0xff]
    %v1030 = vld [vmem:[#allocation9 + $0x58] sm:$0xff]
    %v1031 = vld [vmem:[#allocation9 + $0x60] sm:$0xff]
    %v1032 = vld [vmem:[#allocation9 + $0x68] sm:$0xff]
    %v1033 = vld [vmem:[#allocation9 + $0x70] sm:$0xff]
    %v1034 = vld [vmem:[#allocation9 + $0x78] sm:$0xff]
    %v1035 = vld [vmem:[#allocation9 + $0x80] sm:$0xff]
    %v1036 = vld [vmem:[#allocation9 + $0x88] sm:$0xff]
    %v1037 = vld [vmem:[#allocation9 + $0x90] sm:$0xff]
    %v1038 = vld [vmem:[#allocation9 + $0x98] sm:$0xff]
    %v1039 = vld [vmem:[#allocation9 + $0xa0] sm:$0xff]
    %v1040 = vld [vmem:[#allocation9 + $0xa8] sm:$0xff]
    %v1041 = vld [vmem:[#allocation9 + $0xb0] sm:$0xff]
    %v1042 = vld [vmem:[#allocation9 + $0xb8] sm:$0xff]
    %v1043 = vld [vmem:[#allocation9 + $0xc0] sm:$0xff]
    %v1044 = vld [vmem:[#allocation9 + $0xc8] sm:$0xff]
    %v1045 = vld [vmem:[#allocation9 + $0xd0] sm:$0xff]
    %v1046 = vld [vmem:[#allocation9 + $0xd8] sm:$0xff]
    %v1047 = vld [vmem:[#allocation9 + $0xe0] sm:$0xff]
    %v1048 = vld [vmem:[#allocation9 + $0xe8] sm:$0xff]
    %v1049 = vld [vmem:[#allocation9 + $0xf0] sm:$0xff]
    %v1050 = vld [vmem:[#allocation9 + $0xf8] sm:$0xff]
    %v1051 = vld [vmem:[#allocation9 + $0x100] sm:$0xff]
    %v1052 = vld [vmem:[#allocation9 + $0x108] sm:$0xff]
    %v1053 = vld [vmem:[#allocation9 + $0x110] sm:$0xff]
    %v1054 = vld [vmem:[#allocation9 + $0x118] sm:$0xff]
    %v1055 = vld [vmem:[#allocation9 + $0x120] sm:$0xff]
    %v1056 = vld [vmem:[#allocation9 + $0x128] sm:$0xff]
    %v1057 = vld [vmem:[#allocation9 + $0x130] sm:$0xff]
    %v1058 = vld [vmem:[#allocation9 + $0x138] sm:$0xff]
    %v1059 = vld [vmem:[#allocation9 + $0x140] sm:$0xff]
    %v1060 = vld [vmem:[#allocation9 + $0x148] sm:$0xff]
    %v1061 = vld [vmem:[#allocation9 + $0x150] sm:$0xff]
    %v1062 = vld [vmem:[#allocation9 + $0x158] sm:$0xff]
    %v1063 = vld [vmem:[#allocation9 + $0x160] sm:$0xff]
    %v1064 = vld [vmem:[#allocation9 + $0x168] sm:$0xff]
    %v1065 = vld [vmem:[#allocation9 + $0x170] sm:$0xff]
    %v1066 = vld [vmem:[#allocation9 + $0x178] sm:$0xff]
    %v1067 = vld [vmem:[#allocation9 + $0x180] sm:$0xff]
    %v1068 = vld [vmem:[#allocation9 + $0x188] sm:$0xff]
    %v1069 = vld [vmem:[#allocation9 + $0x190] sm:$0xff]
    %v1070 = vld [vmem:[#allocation9 + $0x198] sm:$0xff]
    %v1071 = vld [vmem:[#allocation9 + $0x1a0] sm:$0xff]
    %v1072 = vld [vmem:[#allocation9 + $0x1a8] sm:$0xff]
    %v1073 = vld [vmem:[#allocation9 + $0x1b0] sm:$0xff]
    %v1074 = vld [vmem:[#allocation9 + $0x1b8] sm:$0xff]
    %v1075 = vld [vmem:[#allocation9 + $0x1c0] sm:$0xff]
    %v1076 = vld [vmem:[#allocation9 + $0x1c8] sm:$0xff]
    %v1077 = vld [vmem:[#allocation9 + $0x1d0] sm:$0xff]
    %v1078 = vld [vmem:[#allocation9 + $0x1d8] sm:$0xff]
    %v1079 = vld [vmem:[#allocation9 + $0x1e0] sm:$0xff]
    %v1080 = vld [vmem:[#allocation9 + $0x1e8] sm:$0xff]
    %v1081 = vld [vmem:[#allocation9 + $0x1f0] sm:$0xff]
    %v1082 = vld [vmem:[#allocation9 + $0x1f8] sm:$0xff]
    %v1083 = vld [vmem:[#allocation9 + $0x200] sm:$0xff]
    %v1084 = vld [vmem:[#allocation9 + $0x208] sm:$0xff]
    %v1085 = vld [vmem:[#allocation9 + $0x210] sm:$0xff]
    %v1086 = vld [vmem:[#allocation9 + $0x218] sm:$0xff]
    %v1087 = vld [vmem:[#allocation9 + $0x220] sm:$0xff]
    %v1088 = vld [vmem:[#allocation9 + $0x228] sm:$0xff]
    %v1089 = vld [vmem:[#allocation9 + $0x230] sm:$0xff]
    %v1090 = vld [vmem:[#allocation9 + $0x238] sm:$0xff]
    %v1091 = vld [vmem:[#allocation9 + $0x240] sm:$0xff]
    %v1092 = vld [vmem:[#allocation9 + $0x248] sm:$0xff]
    %v1093 = vld [vmem:[#allocation9 + $0x250] sm:$0xff]
    %v1094 = vld [vmem:[#allocation9 + $0x258] sm:$0xff]
    %v1095 = vld [vmem:[#allocation9 + $0x260] sm:$0xff]
    %v1096 = vld [vmem:[#allocation9 + $0x268] sm:$0xff]
    %v1097 = vld [vmem:[#allocation9 + $0x270] sm:$0xff]
    %v1098 = vld [vmem:[#allocation9 + $0x278] sm:$0xff]
    %v1099 = vld [vmem:[#allocation9 + $0x280] sm:$0xff]
    %v1100 = vld [vmem:[#allocation9 + $0x288] sm:$0xff]
    %v1101 = vld [vmem:[#allocation9 + $0x290] sm:$0xff]
    %v1102 = vld [vmem:[#allocation9 + $0x298] sm:$0xff]
    %v1103 = vld [vmem:[#allocation9 + $0x2a0] sm:$0xff]
    %v1104 = vld [vmem:[#allocation9 + $0x2a8] sm:$0xff]
    %v1105 = vld [vmem:[#allocation9 + $0x2b0] sm:$0xff]
    %v1106 = vld [vmem:[#allocation9 + $0x2b8] sm:$0xff]
    %v1107 = vld [vmem:[#allocation9 + $0x2c0] sm:$0xff]
    %v1108 = vld [vmem:[#allocation9 + $0x2c8] sm:$0xff]
    %v1109 = vld [vmem:[#allocation9 + $0x2d0] sm:$0xff]
    %v1110 = vld [vmem:[#allocation9 + $0x2d8] sm:$0xff]
    %v1111 = vld [vmem:[#allocation9 + $0x2e0] sm:$0xff]
    %v1112 = vld [vmem:[#allocation9 + $0x2e8] sm:$0xff]
    %v1113 = vld [vmem:[#allocation9 + $0x2f0] sm:$0xff]
    %v1114 = vld [vmem:[#allocation9 + $0x2f8] sm:$0xff]
    %v1115 = vld [vmem:[#allocation9 + $0x300] sm:$0xff]
    %v1116 = vld [vmem:[#allocation9 + $0x308] sm:$0xff]
    %v1117 = vld [vmem:[#allocation9 + $0x310] sm:$0xff]
    %v1118 = vld [vmem:[#allocation9 + $0x318] sm:$0xff]
    %v1119 = vld [vmem:[#allocation9 + $0x320] sm:$0xff]
    %v1120 = vld [vmem:[#allocation9 + $0x328] sm:$0xff]
    %v1121 = vld [vmem:[#allocation9 + $0x330] sm:$0xff]
    %v1122 = vld [vmem:[#allocation9 + $0x338] sm:$0xff]
    %v1123 = vld [vmem:[#allocation9 + $0x340] sm:$0xff]
    %v1124 = vld [vmem:[#allocation9 + $0x348] sm:$0xff]
    %v1125 = vld [vmem:[#allocation9 + $0x350] sm:$0xff]
    %v1126 = vld [vmem:[#allocation9 + $0x358] sm:$0xff]
    %v1127 = vld [vmem:[#allocation9 + $0x360] sm:$0xff]
    %v1128 = vld [vmem:[#allocation9 + $0x368] sm:$0xff]
    %v1129 = vld [vmem:[#allocation9 + $0x370] sm:$0xff]
    %v1130 = vld [vmem:[#allocation9 + $0x378] sm:$0xff]
    %v1131 = vld [vmem:[#allocation9 + $0x380] sm:$0xff]
    %v1132 = vld [vmem:[#allocation9 + $0x388] sm:$0xff]
    %v1133 = vld [vmem:[#allocation9 + $0x390] sm:$0xff]
    %v1134 = vld [vmem:[#allocation9 + $0x398] sm:$0xff]
    %v1135 = vld [vmem:[#allocation9 + $0x3a0] sm:$0xff]
    %v1136 = vld [vmem:[#allocation9 + $0x3a8] sm:$0xff]
    %v1137 = vld [vmem:[#allocation9 + $0x3b0] sm:$0xff]
    %v1138 = vld [vmem:[#allocation9 + $0x3b8] sm:$0xff]
    %v1139 = vld [vmem:[#allocation9 + $0x3c0] sm:$0xff]
    %v1140 = vld [vmem:[#allocation9 + $0x3c8] sm:$0xff]
    %v1141 = vld [vmem:[#allocation9 + $0x3d0] sm:$0xff]
    %v1142 = vld [vmem:[#allocation9 + $0x3d8] sm:$0xff]
    %v1143 = vld [vmem:[#allocation9 + $0x3e0] sm:$0xff]
    %v1144 = vld [vmem:[#allocation9 + $0x3e8] sm:$0xff]
    %v1145 = vld [vmem:[#allocation9 + $0x3f0] sm:$0xff]
    %v1146 = vld [vmem:[#allocation9 + $0x3f8] sm:$0xff]
    %v1275 = vunpack.c.l.b16 %v1019
    %v1276 = vunpack.c.h.b16 %v1019
    %v1277 = vunpack.c.l.b16 %v1020
    %v1278 = vunpack.c.h.b16 %v1020
    %v1279 = vunpack.c.l.b16 %v1021
    %v1280 = vunpack.c.h.b16 %v1021
    %v1281 = vunpack.c.l.b16 %v1022
    %v1282 = vunpack.c.h.b16 %v1022
    %v1283 = vunpack.c.l.b16 %v1023
    %v1284 = vunpack.c.h.b16 %v1023
    %v1285 = vunpack.c.l.b16 %v1024
    %v1286 = vunpack.c.h.b16 %v1024
    %v1287 = vunpack.c.l.b16 %v1025
    %v1288 = vunpack.c.h.b16 %v1025
    %v1289 = vunpack.c.l.b16 %v1026
    %v1290 = vunpack.c.h.b16 %v1026
    %v1291 = vunpack.c.l.b16 %v1027
    %v1292 = vunpack.c.h.b16 %v1027
    %v1293 = vunpack.c.l.b16 %v1028
    %v1294 = vunpack.c.h.b16 %v1028
    %v1295 = vunpack.c.l.b16 %v1029
    %v1296 = vunpack.c.h.b16 %v1029
    %v1297 = vunpack.c.l.b16 %v1030
    %v1298 = vunpack.c.h.b16 %v1030
    %v1299 = vunpack.c.l.b16 %v1031
    %v1300 = vunpack.c.h.b16 %v1031
    %v1301 = vunpack.c.l.b16 %v1032
    %v1302 = vunpack.c.h.b16 %v1032
    %v1303 = vunpack.c.l.b16 %v1033
    %v1304 = vunpack.c.h.b16 %v1033
    %v1305 = vunpack.c.l.b16 %v1034
    %v1306 = vunpack.c.h.b16 %v1034
    %v1307 = vunpack.c.l.b16 %v1035
    %v1308 = vunpack.c.h.b16 %v1035
    %v1309 = vunpack.c.l.b16 %v1036
    %v1310 = vunpack.c.h.b16 %v1036
    %v1311 = vunpack.c.l.b16 %v1037
    %v1312 = vunpack.c.h.b16 %v1037
    %v1313 = vunpack.c.l.b16 %v1038
    %v1314 = vunpack.c.h.b16 %v1038
    %v1315 = vunpack.c.l.b16 %v1039
    %v1316 = vunpack.c.h.b16 %v1039
    %v1317 = vunpack.c.l.b16 %v1040
    %v1318 = vunpack.c.h.b16 %v1040
    %v1319 = vunpack.c.l.b16 %v1041
    %v1320 = vunpack.c.h.b16 %v1041
    %v1321 = vunpack.c.l.b16 %v1042
    %v1322 = vunpack.c.h.b16 %v1042
    %v1323 = vunpack.c.l.b16 %v1043
    %v1324 = vunpack.c.h.b16 %v1043
    %v1325 = vunpack.c.l.b16 %v1044
    %v1326 = vunpack.c.h.b16 %v1044
    %v1327 = vunpack.c.l.b16 %v1045
    %v1328 = vunpack.c.h.b16 %v1045
    %v1329 = vunpack.c.l.b16 %v1046
    %v1330 = vunpack.c.h.b16 %v1046
    %v1331 = vunpack.c.l.b16 %v1047
    %v1332 = vunpack.c.h.b16 %v1047
    %v1333 = vunpack.c.l.b16 %v1048
    %v1334 = vunpack.c.h.b16 %v1048
    %v1335 = vunpack.c.l.b16 %v1049
    %v1336 = vunpack.c.h.b16 %v1049
    %v1337 = vunpack.c.l.b16 %v1050
    %v1338 = vunpack.c.h.b16 %v1050
    %v1339 = vunpack.c.l.b16 %v1051
    %v1340 = vunpack.c.h.b16 %v1051
    %v1341 = vunpack.c.l.b16 %v1052
    %v1342 = vunpack.c.h.b16 %v1052
    %v1343 = vunpack.c.l.b16 %v1053
    %v1344 = vunpack.c.h.b16 %v1053
    %v1345 = vunpack.c.l.b16 %v1054
    %v1346 = vunpack.c.h.b16 %v1054
    %v1347 = vunpack.c.l.b16 %v1055
    %v1348 = vunpack.c.h.b16 %v1055
    %v1349 = vunpack.c.l.b16 %v1056
    %v1350 = vunpack.c.h.b16 %v1056
    %v1351 = vunpack.c.l.b16 %v1057
    %v1352 = vunpack.c.h.b16 %v1057
    %v1353 = vunpack.c.l.b16 %v1058
    %v1354 = vunpack.c.h.b16 %v1058
    %v1355 = vunpack.c.l.b16 %v1059
    %v1356 = vunpack.c.h.b16 %v1059
    %v1357 = vunpack.c.l.b16 %v1060
    %v1358 = vunpack.c.h.b16 %v1060
    %v1359 = vunpack.c.l.b16 %v1061
    %v1360 = vunpack.c.h.b16 %v1061
    %v1361 = vunpack.c.l.b16 %v1062
    %v1362 = vunpack.c.h.b16 %v1062
    %v1363 = vunpack.c.l.b16 %v1063
    %v1364 = vunpack.c.h.b16 %v1063
    %v1365 = vunpack.c.l.b16 %v1064
    %v1366 = vunpack.c.h.b16 %v1064
    %v1367 = vunpack.c.l.b16 %v1065
    %v1368 = vunpack.c.h.b16 %v1065
    %v1369 = vunpack.c.l.b16 %v1066
    %v1370 = vunpack.c.h.b16 %v1066
    %v1371 = vunpack.c.l.b16 %v1067
    %v1372 = vunpack.c.h.b16 %v1067
    %v1373 = vunpack.c.l.b16 %v1068
    %v1374 = vunpack.c.h.b16 %v1068
    %v1375 = vunpack.c.l.b16 %v1069
    %v1376 = vunpack.c.h.b16 %v1069
    %v1377 = vunpack.c.l.b16 %v1070
    %v1378 = vunpack.c.h.b16 %v1070
    %v1379 = vunpack.c.l.b16 %v1071
    %v1380 = vunpack.c.h.b16 %v1071
    %v1381 = vunpack.c.l.b16 %v1072
    %v1382 = vunpack.c.h.b16 %v1072
    %v1383 = vunpack.c.l.b16 %v1073
    %v1384 = vunpack.c.h.b16 %v1073
    %v1385 = vunpack.c.l.b16 %v1074
    %v1386 = vunpack.c.h.b16 %v1074
    %v1387 = vunpack.c.l.b16 %v1075
    %v1388 = vunpack.c.h.b16 %v1075
    %v1389 = vunpack.c.l.b16 %v1076
    %v1390 = vunpack.c.h.b16 %v1076
    %v1391 = vunpack.c.l.b16 %v1077
    %v1392 = vunpack.c.h.b16 %v1077
    %v1393 = vunpack.c.l.b16 %v1078
    %v1394 = vunpack.c.h.b16 %v1078
    %v1395 = vunpack.c.l.b16 %v1079
    %v1396 = vunpack.c.h.b16 %v1079
    %v1397 = vunpack.c.l.b16 %v1080
    %v1398 = vunpack.c.h.b16 %v1080
    %v1399 = vunpack.c.l.b16 %v1081
    %v1400 = vunpack.c.h.b16 %v1081
    %v1401 = vunpack.c.l.b16 %v1082
    %v1402 = vunpack.c.h.b16 %v1082
    %v1403 = vunpack.c.l.b16 %v1083
    %v1404 = vunpack.c.h.b16 %v1083
    %v1405 = vunpack.c.l.b16 %v1084
    %v1406 = vunpack.c.h.b16 %v1084
    %v1407 = vunpack.c.l.b16 %v1085
    %v1408 = vunpack.c.h.b16 %v1085
    %v1409 = vunpack.c.l.b16 %v1086
    %v1410 = vunpack.c.h.b16 %v1086
    %v1411 = vunpack.c.l.b16 %v1087
    %v1412 = vunpack.c.h.b16 %v1087
    %v1413 = vunpack.c.l.b16 %v1088
    %v1414 = vunpack.c.h.b16 %v1088
    %v1415 = vunpack.c.l.b16 %v1089
    %v1416 = vunpack.c.h.b16 %v1089
    %v1417 = vunpack.c.l.b16 %v1090
    %v1418 = vunpack.c.h.b16 %v1090
    %v1419 = vunpack.c.l.b16 %v1091
    %v1420 = vunpack.c.h.b16 %v1091
    %v1421 = vunpack.c.l.b16 %v1092
    %v1422 = vunpack.c.h.b16 %v1092
    %v1423 = vunpack.c.l.b16 %v1093
    %v1424 = vunpack.c.h.b16 %v1093
    %v1425 = vunpack.c.l.b16 %v1094
    %v1426 = vunpack.c.h.b16 %v1094
    %v1427 = vunpack.c.l.b16 %v1095
    %v1428 = vunpack.c.h.b16 %v1095
    %v1429 = vunpack.c.l.b16 %v1096
    %v1430 = vunpack.c.h.b16 %v1096
    %v1431 = vunpack.c.l.b16 %v1097
    %v1432 = vunpack.c.h.b16 %v1097
    %v1433 = vunpack.c.l.b16 %v1098
    %v1434 = vunpack.c.h.b16 %v1098
    %v1435 = vunpack.c.l.b16 %v1099
    %v1436 = vunpack.c.h.b16 %v1099
    %v1437 = vunpack.c.l.b16 %v1100
    %v1438 = vunpack.c.h.b16 %v1100
    %v1439 = vunpack.c.l.b16 %v1101
    %v1440 = vunpack.c.h.b16 %v1101
    %v1441 = vunpack.c.l.b16 %v1102
    %v1442 = vunpack.c.h.b16 %v1102
    %v1443 = vunpack.c.l.b16 %v1103
    %v1444 = vunpack.c.h.b16 %v1103
    %v1445 = vunpack.c.l.b16 %v1104
    %v1446 = vunpack.c.h.b16 %v1104
    %v1447 = vunpack.c.l.b16 %v1105
    %v1448 = vunpack.c.h.b16 %v1105
    %v1449 = vunpack.c.l.b16 %v1106
    %v1450 = vunpack.c.h.b16 %v1106
    %v1451 = vunpack.c.l.b16 %v1107
    %v1452 = vunpack.c.h.b16 %v1107
    %v1453 = vunpack.c.l.b16 %v1108
    %v1454 = vunpack.c.h.b16 %v1108
    %v1455 = vunpack.c.l.b16 %v1109
    %v1456 = vunpack.c.h.b16 %v1109
    %v1457 = vunpack.c.l.b16 %v1110
    %v1458 = vunpack.c.h.b16 %v1110
    %v1459 = vunpack.c.l.b16 %v1111
    %v1460 = vunpack.c.h.b16 %v1111
    %v1461 = vunpack.c.l.b16 %v1112
    %v1462 = vunpack.c.h.b16 %v1112
    %v1463 = vunpack.c.l.b16 %v1113
    %v1464 = vunpack.c.h.b16 %v1113
    %v1465 = vunpack.c.l.b16 %v1114
    %v1466 = vunpack.c.h.b16 %v1114
    %v1467 = vunpack.c.l.b16 %v1115
    %v1468 = vunpack.c.h.b16 %v1115
    %v1469 = vunpack.c.l.b16 %v1116
    %v1470 = vunpack.c.h.b16 %v1116
    %v1471 = vunpack.c.l.b16 %v1117
    %v1472 = vunpack.c.h.b16 %v1117
    %v1473 = vunpack.c.l.b16 %v1118
    %v1474 = vunpack.c.h.b16 %v1118
    %v1475 = vunpack.c.l.b16 %v1119
    %v1476 = vunpack.c.h.b16 %v1119
    %v1477 = vunpack.c.l.b16 %v1120
    %v1478 = vunpack.c.h.b16 %v1120
    %v1479 = vunpack.c.l.b16 %v1121
    %v1480 = vunpack.c.h.b16 %v1121
    %v1481 = vunpack.c.l.b16 %v1122
    %v1482 = vunpack.c.h.b16 %v1122
    %v1483 = vunpack.c.l.b16 %v1123
    %v1484 = vunpack.c.h.b16 %v1123
    %v1485 = vunpack.c.l.b16 %v1124
    %v1486 = vunpack.c.h.b16 %v1124
    %v1487 = vunpack.c.l.b16 %v1125
    %v1488 = vunpack.c.h.b16 %v1125
    %v1489 = vunpack.c.l.b16 %v1126
    %v1490 = vunpack.c.h.b16 %v1126
    %v1491 = vunpack.c.l.b16 %v1127
    %v1492 = vunpack.c.h.b16 %v1127
    %v1493 = vunpack.c.l.b16 %v1128
    %v1494 = vunpack.c.h.b16 %v1128
    %v1495 = vunpack.c.l.b16 %v1129
    %v1496 = vunpack.c.h.b16 %v1129
    %v1497 = vunpack.c.l.b16 %v1130
    %v1498 = vunpack.c.h.b16 %v1130
    %v1499 = vunpack.c.l.b16 %v1131
    %v1500 = vunpack.c.h.b16 %v1131
    %v1501 = vunpack.c.l.b16 %v1132
    %v1502 = vunpack.c.h.b16 %v1132
    %v1503 = vunpack.c.l.b16 %v1133
    %v1504 = vunpack.c.h.b16 %v1133
    %v1505 = vunpack.c.l.b16 %v1134
    %v1506 = vunpack.c.h.b16 %v1134
    %v1507 = vunpack.c.l.b16 %v1135
    %v1508 = vunpack.c.h.b16 %v1135
    %v1509 = vunpack.c.l.b16 %v1136
    %v1510 = vunpack.c.h.b16 %v1136
    %v1511 = vunpack.c.l.b16 %v1137
    %v1512 = vunpack.c.h.b16 %v1137
    %v1513 = vunpack.c.l.b16 %v1138
    %v1514 = vunpack.c.h.b16 %v1138
    %v1515 = vunpack.c.l.b16 %v1139
    %v1516 = vunpack.c.h.b16 %v1139
    %v1517 = vunpack.c.l.b16 %v1140
    %v1518 = vunpack.c.h.b16 %v1140
    %v1519 = vunpack.c.l.b16 %v1141
    %v1520 = vunpack.c.h.b16 %v1141
    %v1521 = vunpack.c.l.b16 %v1142
    %v1522 = vunpack.c.h.b16 %v1142
    %v1523 = vunpack.c.l.b16 %v1143
    %v1524 = vunpack.c.h.b16 %v1143
    %v1525 = vunpack.c.l.b16 %v1144
    %v1526 = vunpack.c.h.b16 %v1144
    %v1527 = vunpack.c.l.b16 %v1145
    %v1528 = vunpack.c.h.b16 %v1145
    %v1529 = vunpack.c.l.b16 %v1146
    %v1530 = vunpack.c.h.b16 %v1146
    %v1531 = vpack.c.b16 %v1283, %v1275
    %v1532 = vpack.c.b16 %v1284, %v1276
    %v1533 = vpack.c.b16 %v1285, %v1277
    %v1534 = vpack.c.b16 %v1286, %v1278
    %v1535 = vpack.c.b16 %v1287, %v1279
    %v1536 = vpack.c.b16 %v1288, %v1280
    %v1537 = vpack.c.b16 %v1289, %v1281
    %v1538 = vpack.c.b16 %v1290, %v1282
    %v1539 = vpack.c.b16 %v1299, %v1291
    %v1540 = vpack.c.b16 %v1300, %v1292
    %v1541 = vpack.c.b16 %v1301, %v1293
    %v1542 = vpack.c.b16 %v1302, %v1294
    %v1543 = vpack.c.b16 %v1303, %v1295
    %v1544 = vpack.c.b16 %v1304, %v1296
    %v1545 = vpack.c.b16 %v1305, %v1297
    %v1546 = vpack.c.b16 %v1306, %v1298
    %v1547 = vpack.c.b16 %v1315, %v1307
    %v1548 = vpack.c.b16 %v1316, %v1308
    %v1549 = vpack.c.b16 %v1317, %v1309
    %v1550 = vpack.c.b16 %v1318, %v1310
    %v1551 = vpack.c.b16 %v1319, %v1311
    %v1552 = vpack.c.b16 %v1320, %v1312
    %v1553 = vpack.c.b16 %v1321, %v1313
    %v1554 = vpack.c.b16 %v1322, %v1314
    %v1555 = vpack.c.b16 %v1331, %v1323
    %v1556 = vpack.c.b16 %v1332, %v1324
    %v1557 = vpack.c.b16 %v1333, %v1325
    %v1558 = vpack.c.b16 %v1334, %v1326
    %v1559 = vpack.c.b16 %v1335, %v1327
    %v1560 = vpack.c.b16 %v1336, %v1328
    %v1561 = vpack.c.b16 %v1337, %v1329
    %v1562 = vpack.c.b16 %v1338, %v1330
    %v1563 = vpack.c.b16 %v1347, %v1339
    %v1564 = vpack.c.b16 %v1348, %v1340
    %v1565 = vpack.c.b16 %v1349, %v1341
    %v1566 = vpack.c.b16 %v1350, %v1342
    %v1567 = vpack.c.b16 %v1351, %v1343
    %v1568 = vpack.c.b16 %v1352, %v1344
    %v1569 = vpack.c.b16 %v1353, %v1345
    %v1570 = vpack.c.b16 %v1354, %v1346
    %v1571 = vpack.c.b16 %v1363, %v1355
    %v1572 = vpack.c.b16 %v1364, %v1356
    %v1573 = vpack.c.b16 %v1365, %v1357
    %v1574 = vpack.c.b16 %v1366, %v1358
    %v1575 = vpack.c.b16 %v1367, %v1359
    %v1576 = vpack.c.b16 %v1368, %v1360
    %v1577 = vpack.c.b16 %v1369, %v1361
    %v1578 = vpack.c.b16 %v1370, %v1362
    %v1579 = vpack.c.b16 %v1379, %v1371
    %v1580 = vpack.c.b16 %v1380, %v1372
    %v1581 = vpack.c.b16 %v1381, %v1373
    %v1582 = vpack.c.b16 %v1382, %v1374
    %v1583 = vpack.c.b16 %v1383, %v1375
    %v1584 = vpack.c.b16 %v1384, %v1376
    %v1585 = vpack.c.b16 %v1385, %v1377
    %v1586 = vpack.c.b16 %v1386, %v1378
    %v1587 = vpack.c.b16 %v1395, %v1387
    %v1588 = vpack.c.b16 %v1396, %v1388
    %v1589 = vpack.c.b16 %v1397, %v1389
    %v1590 = vpack.c.b16 %v1398, %v1390
    %v1591 = vpack.c.b16 %v1399, %v1391
    %v1592 = vpack.c.b16 %v1400, %v1392
    %v1593 = vpack.c.b16 %v1401, %v1393
    %v1594 = vpack.c.b16 %v1402, %v1394
    %v1595 = vpack.c.b16 %v1411, %v1403
    %v1596 = vpack.c.b16 %v1412, %v1404
    %v1597 = vpack.c.b16 %v1413, %v1405
    %v1598 = vpack.c.b16 %v1414, %v1406
    %v1599 = vpack.c.b16 %v1415, %v1407
    %v1600 = vpack.c.b16 %v1416, %v1408
    %v1601 = vpack.c.b16 %v1417, %v1409
    %v1602 = vpack.c.b16 %v1418, %v1410
    %v1603 = vpack.c.b16 %v1427, %v1419
    %v1604 = vpack.c.b16 %v1428, %v1420
    %v1605 = vpack.c.b16 %v1429, %v1421
    %v1606 = vpack.c.b16 %v1430, %v1422
    %v1607 = vpack.c.b16 %v1431, %v1423
    %v1608 = vpack.c.b16 %v1432, %v1424
    %v1609 = vpack.c.b16 %v1433, %v1425
    %v1610 = vpack.c.b16 %v1434, %v1426
    %v1611 = vpack.c.b16 %v1443, %v1435
    %v1612 = vpack.c.b16 %v1444, %v1436
    %v1613 = vpack.c.b16 %v1445, %v1437
    %v1614 = vpack.c.b16 %v1446, %v1438
    %v1615 = vpack.c.b16 %v1447, %v1439
    %v1616 = vpack.c.b16 %v1448, %v1440
    %v1617 = vpack.c.b16 %v1449, %v1441
    %v1618 = vpack.c.b16 %v1450, %v1442
    %v1619 = vpack.c.b16 %v1459, %v1451
    %v1620 = vpack.c.b16 %v1460, %v1452
    %v1621 = vpack.c.b16 %v1461, %v1453
    %v1622 = vpack.c.b16 %v1462, %v1454
    %v1623 = vpack.c.b16 %v1463, %v1455
    %v1624 = vpack.c.b16 %v1464, %v1456
    %v1625 = vpack.c.b16 %v1465, %v1457
    %v1626 = vpack.c.b16 %v1466, %v1458
    %v1627 = vpack.c.b16 %v1475, %v1467
    %v1628 = vpack.c.b16 %v1476, %v1468
    %v1629 = vpack.c.b16 %v1477, %v1469
    %v1630 = vpack.c.b16 %v1478, %v1470
    %v1631 = vpack.c.b16 %v1479, %v1471
    %v1632 = vpack.c.b16 %v1480, %v1472
    %v1633 = vpack.c.b16 %v1481, %v1473
    %v1634 = vpack.c.b16 %v1482, %v1474
    %v1635 = vpack.c.b16 %v1491, %v1483
    %v1636 = vpack.c.b16 %v1492, %v1484
    %v1637 = vpack.c.b16 %v1493, %v1485
    %v1638 = vpack.c.b16 %v1494, %v1486
    %v1639 = vpack.c.b16 %v1495, %v1487
    %v1640 = vpack.c.b16 %v1496, %v1488
    %v1641 = vpack.c.b16 %v1497, %v1489
    %v1642 = vpack.c.b16 %v1498, %v1490
    %v1643 = vpack.c.b16 %v1507, %v1499
    %v1644 = vpack.c.b16 %v1508, %v1500
    %v1645 = vpack.c.b16 %v1509, %v1501
    %v1646 = vpack.c.b16 %v1510, %v1502
    %v1647 = vpack.c.b16 %v1511, %v1503
    %v1648 = vpack.c.b16 %v1512, %v1504
    %v1649 = vpack.c.b16 %v1513, %v1505
    %v1650 = vpack.c.b16 %v1514, %v1506
    %v1651 = vpack.c.b16 %v1523, %v1515
    %v1652 = vpack.c.b16 %v1524, %v1516
    %v1653 = vpack.c.b16 %v1525, %v1517
    %v1654 = vpack.c.b16 %v1526, %v1518
    %v1655 = vpack.c.b16 %v1527, %v1519
    %v1656 = vpack.c.b16 %v1528, %v1520
    %v1657 = vpack.c.b16 %v1529, %v1521
    %v1658 = vpack.c.b16 %v1530, %v1522
    %1787 = vmatpush.bf16.msra.mxu0 %v1587
    %1788 = vmatpush.bf16.msra.mxu0 %v1579
    %1789 = vmatpush.bf16.msra.mxu0 %v1571
    %1790 = vmatpush.bf16.msra.mxu0 %v1563
    %1791 = vmatpush.bf16.msra.mxu0 %v1555
    %1792 = vmatpush.bf16.msra.mxu0 %v1547
    %1793 = vmatpush.bf16.msra.mxu0 %v1539
    %1794 = vmatpush.bf16.msra.mxu0 %v1531
    %1795 = vmatmul.bf16.gmra.mxu0 %v1014
    %v1796 = vpop.f32.mrf.mxu0
    %v1797 = vadd.f32 0.0, %v1796
    %v1798 = vpop.f32.mrf.mxu0
    %v1799 = vadd.f32 0.0, %v1798
    %1800 = vmatmul.bf16.gmra.mxu0 %v1016
    %v1801 = vpop.f32.mrf.mxu0
    %v1802 = vadd.f32 0.0, %v1801
    %v1803 = vpop.f32.mrf.mxu0
    %v1804 = vadd.f32 0.0, %v1803
    %1805 = vmatmul.bf16.gmra.mxu0 %v1017
    %v1806 = vpop.f32.mrf.mxu0
    %v1807 = vadd.f32 0.0, %v1806
    %v1808 = vpop.f32.mrf.mxu0
    %v1809 = vadd.f32 0.0, %v1808
    %1810 = vmatmul.bf16.gmra.mxu0 %v1018
    %v1811 = vpop.f32.mrf.mxu0
    %v1812 = vadd.f32 0.0, %v1811
    %v1813 = vpop.f32.mrf.mxu0
    %v1814 = vadd.f32 0.0, %v1813
    %1815 = vdwg.mxu0
    %1816 = vmatpush.bf16.msra.mxu0 %v1651
    %1817 = vmatpush.bf16.msra.mxu0 %v1643
    %1818 = vmatpush.bf16.msra.mxu0 %v1635
    %1819 = vmatpush.bf16.msra.mxu0 %v1627
    %1820 = vmatpush.bf16.msra.mxu0 %v1619
    %1821 = vmatpush.bf16.msra.mxu0 %v1611
    %1822 = vmatpush.bf16.msra.mxu0 %v1603
    %1823 = vmatpush.bf16.msra.mxu0 %v1595
    %1824 = vmatmul.bf16.gmra.mxu0 %v1015
    %v1825 = vpop.f32.mrf.mxu0
    %v1826 = vadd.f32 %v1797, %v1825
    %v1827 = vpop.f32.mrf.mxu0
    %v1828 = vadd.f32 %v1799, %v1827
    %1829 = vmatmul.bf16.gmra.mxu0 %v1015
    %v1830 = vpop.f32.mrf.mxu0
    %v1831 = vadd.f32 %v1802, %v1830
    %v1832 = vpop.f32.mrf.mxu0
    %v1833 = vadd.f32 %v1804, %v1832
    %1834 = vmatmul.bf16.gmra.mxu0 %v1015
    %v1835 = vpop.f32.mrf.mxu0
    %v1836 = vadd.f32 %v1807, %v1835
    %v1837 = vpop.f32.mrf.mxu0
    %v1838 = vadd.f32 %v1809, %v1837
    %1839 = vmatmul.bf16.gmra.mxu0 %v1015
    %v1840 = vpop.f32.mrf.mxu0
    %v1841 = vadd.f32 %v1812, %v1840
    %v1842 = vpop.f32.mrf.mxu0
    %v1843 = vadd.f32 %v1814, %v1842
    %1844 = vdwg.mxu0
    %1845 = vmatpush.bf16.msra.mxu0 %v1588
    %1846 = vmatpush.bf16.msra.mxu0 %v1580
    %1847 = vmatpush.bf16.msra.mxu0 %v1572
    %1848 = vmatpush.bf16.msra.mxu0 %v1564
    %1849 = vmatpush.bf16.msra.mxu0 %v1556
    %1850 = vmatpush.bf16.msra.mxu0 %v1548
    %1851 = vmatpush.bf16.msra.mxu0 %v1540
    %1852 = vmatpush.bf16.msra.mxu0 %v1532
    %1853 = vmatmul.bf16.gmra.mxu0 %v1014
    %v1854 = vpop.f32.mrf.mxu0
    %v1855 = vadd.f32 0.0, %v1854
    %v1856 = vpop.f32.mrf.mxu0
    %v1857 = vadd.f32 0.0, %v1856
    %1858 = vmatmul.bf16.gmra.mxu0 %v1016
    %v1859 = vpop.f32.mrf.mxu0
    %v1860 = vadd.f32 0.0, %v1859
    %v1861 = vpop.f32.mrf.mxu0
    %v1862 = vadd.f32 0.0, %v1861
    %1863 = vmatmul.bf16.gmra.mxu0 %v1017
    %v1864 = vpop.f32.mrf.mxu0
    %v1865 = vadd.f32 0.0, %v1864
    %v1866 = vpop.f32.mrf.mxu0
    %v1867 = vadd.f32 0.0, %v1866
    %1868 = vmatmul.bf16.gmra.mxu0 %v1018
    %v1869 = vpop.f32.mrf.mxu0
    %v1870 = vadd.f32 0.0, %v1869
    %v1871 = vpop.f32.mrf.mxu0
    %v1872 = vadd.f32 0.0, %v1871
    %1873 = vdwg.mxu0
    %1874 = vmatpush.bf16.msra.mxu0 %v1652
    %1875 = vmatpush.bf16.msra.mxu0 %v1644
    %1876 = vmatpush.bf16.msra.mxu0 %v1636
    %1877 = vmatpush.bf16.msra.mxu0 %v1628
    %1878 = vmatpush.bf16.msra.mxu0 %v1620
    %1879 = vmatpush.bf16.msra.mxu0 %v1612
    %1880 = vmatpush.bf16.msra.mxu0 %v1604
    %1881 = vmatpush.bf16.msra.mxu0 %v1596
    %1882 = vmatmul.bf16.gmra.mxu0 %v1015
    %v1883 = vpop.f32.mrf.mxu0
    %v1884 = vadd.f32 %v1855, %v1883
    %v1885 = vpop.f32.mrf.mxu0
    %v1886 = vadd.f32 %v1857, %v1885
    %1887 = vmatmul.bf16.gmra.mxu0 %v1015
    %v1888 = vpop.f32.mrf.mxu0
    %v1889 = vadd.f32 %v1860, %v1888
    %v1890 = vpop.f32.mrf.mxu0
    %v1891 = vadd.f32 %v1862, %v1890
    %1892 = vmatmul.bf16.gmra.mxu0 %v1015
    %v1893 = vpop.f32.mrf.mxu0
    %v1894 = vadd.f32 %v1865, %v1893
    %v1895 = vpop.f32.mrf.mxu0
    %v1896 = vadd.f32 %v1867, %v1895
    %1897 = vmatmul.bf16.gmra.mxu0 %v1015
    %v1898 = vpop.f32.mrf.mxu0
    %v1899 = vadd.f32 %v1870, %v1898
    %v1900 = vpop.f32.mrf.mxu0
    %v1901 = vadd.f32 %v1872, %v1900
    %1902 = vdwg.mxu0
    %1903 = vmatpush.bf16.msra.mxu0 %v1589
    %1904 = vmatpush.bf16.msra.mxu0 %v1581
    %1905 = vmatpush.bf16.msra.mxu0 %v1573
    %1906 = vmatpush.bf16.msra.mxu0 %v1565
    %1907 = vmatpush.bf16.msra.mxu0 %v1557
    %1908 = vmatpush.bf16.msra.mxu0 %v1549
    %1909 = vmatpush.bf16.msra.mxu0 %v1541
    %1910 = vmatpush.bf16.msra.mxu0 %v1533
    %1911 = vmatmul.bf16.gmra.mxu0 %v1014
    %v1912 = vpop.f32.mrf.mxu0
    %v1913 = vadd.f32 0.0, %v1912
    %v1914 = vpop.f32.mrf.mxu0
    %v1915 = vadd.f32 0.0, %v1914
    %1916 = vmatmul.bf16.gmra.mxu0 %v1016
    %v1917 = vpop.f32.mrf.mxu0
    %v1918 = vadd.f32 0.0, %v1917
    %v1919 = vpop.f32.mrf.mxu0
    %v1920 = vadd.f32 0.0, %v1919
    %1921 = vmatmul.bf16.gmra.mxu0 %v1017
    %v1922 = vpop.f32.mrf.mxu0
    %v1923 = vadd.f32 0.0, %v1922
    %v1924 = vpop.f32.mrf.mxu0
    %v1925 = vadd.f32 0.0, %v1924
    %1926 = vmatmul.bf16.gmra.mxu0 %v1018
    %v1927 = vpop.f32.mrf.mxu0
    %v1928 = vadd.f32 0.0, %v1927
    %v1929 = vpop.f32.mrf.mxu0
    %v1930 = vadd.f32 0.0, %v1929
    %1931 = vdwg.mxu0
    %1932 = vmatpush.bf16.msra.mxu0 %v1653
    %1933 = vmatpush.bf16.msra.mxu0 %v1645
    %1934 = vmatpush.bf16.msra.mxu0 %v1637
    %1935 = vmatpush.bf16.msra.mxu0 %v1629
    %1936 = vmatpush.bf16.msra.mxu0 %v1621
    %1937 = vmatpush.bf16.msra.mxu0 %v1613
    %1938 = vmatpush.bf16.msra.mxu0 %v1605
    %1939 = vmatpush.bf16.msra.mxu0 %v1597
    %1940 = vmatmul.bf16.gmra.mxu0 %v1015
    %v1941 = vpop.f32.mrf.mxu0
    %v1942 = vadd.f32 %v1913, %v1941
    %v1943 = vpop.f32.mrf.mxu0
    %v1944 = vadd.f32 %v1915, %v1943
    %1945 = vmatmul.bf16.gmra.mxu0 %v1015
    %v1946 = vpop.f32.mrf.mxu0
    %v1947 = vadd.f32 %v1918, %v1946
    %v1948 = vpop.f32.mrf.mxu0
    %v1949 = vadd.f32 %v1920, %v1948
    %1950 = vmatmul.bf16.gmra.mxu0 %v1015
    %v1951 = vpop.f32.mrf.mxu0
    %v1952 = vadd.f32 %v1923, %v1951
    %v1953 = vpop.f32.mrf.mxu0
    %v1954 = vadd.f32 %v1925, %v1953
    %1955 = vmatmul.bf16.gmra.mxu0 %v1015
    %v1956 = vpop.f32.mrf.mxu0
    %v1957 = vadd.f32 %v1928, %v1956
    %v1958 = vpop.f32.mrf.mxu0
    %v1959 = vadd.f32 %v1930, %v1958
    %1960 = vdwg.mxu0
    %1961 = vmatpush.bf16.msra.mxu0 %v1590
    %1962 = vmatpush.bf16.msra.mxu0 %v1582
    %1963 = vmatpush.bf16.msra.mxu0 %v1574
    %1964 = vmatpush.bf16.msra.mxu0 %v1566
    %1965 = vmatpush.bf16.msra.mxu0 %v1558
    %1966 = vmatpush.bf16.msra.mxu0 %v1550
    %1967 = vmatpush.bf16.msra.mxu0 %v1542
    %1968 = vmatpush.bf16.msra.mxu0 %v1534
    %1969 = vmatmul.bf16.gmra.mxu0 %v1014
    %v1970 = vpop.f32.mrf.mxu0
    %v1971 = vadd.f32 0.0, %v1970
    %v1972 = vpop.f32.mrf.mxu0
    %v1973 = vadd.f32 0.0, %v1972
    %1974 = vmatmul.bf16.gmra.mxu0 %v1016
    %v1975 = vpop.f32.mrf.mxu0
    %v1976 = vadd.f32 0.0, %v1975
    %v1977 = vpop.f32.mrf.mxu0
    %v1978 = vadd.f32 0.0, %v1977
    %1979 = vmatmul.bf16.gmra.mxu0 %v1017
    %v1980 = vpop.f32.mrf.mxu0
    %v1981 = vadd.f32 0.0, %v1980
    %v1982 = vpop.f32.mrf.mxu0
    %v1983 = vadd.f32 0.0, %v1982
    %1984 = vmatmul.bf16.gmra.mxu0 %v1018
    %v1985 = vpop.f32.mrf.mxu0
    %v1986 = vadd.f32 0.0, %v1985
    %v1987 = vpop.f32.mrf.mxu0
    %v1988 = vadd.f32 0.0, %v1987
    %1989 = vdwg.mxu0
    %1990 = vmatpush.bf16.msra.mxu0 %v1654
    %1991 = vmatpush.bf16.msra.mxu0 %v1646
    %1992 = vmatpush.bf16.msra.mxu0 %v1638
    %1993 = vmatpush.bf16.msra.mxu0 %v1630
    %1994 = vmatpush.bf16.msra.mxu0 %v1622
    %1995 = vmatpush.bf16.msra.mxu0 %v1614
    %1996 = vmatpush.bf16.msra.mxu0 %v1606
    %1997 = vmatpush.bf16.msra.mxu0 %v1598
    %1998 = vmatmul.bf16.gmra.mxu0 %v1015
    %v1999 = vpop.f32.mrf.mxu0
    %v2000 = vadd.f32 %v1971, %v1999
    %v2001 = vpop.f32.mrf.mxu0
    %v2002 = vadd.f32 %v1973, %v2001
    %2003 = vmatmul.bf16.gmra.mxu0 %v1015
    %v2004 = vpop.f32.mrf.mxu0
    %v2005 = vadd.f32 %v1976, %v2004
    %v2006 = vpop.f32.mrf.mxu0
    %v2007 = vadd.f32 %v1978, %v2006
    %2008 = vmatmul.bf16.gmra.mxu0 %v1015
    %v2009 = vpop.f32.mrf.mxu0
    %v2010 = vadd.f32 %v1981, %v2009
    %v2011 = vpop.f32.mrf.mxu0
    %v2012 = vadd.f32 %v1983, %v2011
    %2013 = vmatmul.bf16.gmra.mxu0 %v1015
    %v2014 = vpop.f32.mrf.mxu0
    %v2015 = vadd.f32 %v1986, %v2014
    %v2016 = vpop.f32.mrf.mxu0
    %v2017 = vadd.f32 %v1988, %v2016
    %2018 = vdwg.mxu0
    %2019 = vmatpush.bf16.msra.mxu0 %v1591
    %2020 = vmatpush.bf16.msra.mxu0 %v1583
    %2021 = vmatpush.bf16.msra.mxu0 %v1575
    %2022 = vmatpush.bf16.msra.mxu0 %v1567
    %2023 = vmatpush.bf16.msra.mxu0 %v1559
    %2024 = vmatpush.bf16.msra.mxu0 %v1551
    %2025 = vmatpush.bf16.msra.mxu0 %v1543
    %2026 = vmatpush.bf16.msra.mxu0 %v1535
    %2027 = vmatmul.bf16.gmra.mxu0 %v1014
    %v2028 = vpop.f32.mrf.mxu0
    %v2029 = vadd.f32 0.0, %v2028
    %v2030 = vpop.f32.mrf.mxu0
    %v2031 = vadd.f32 0.0, %v2030
    %2032 = vmatmul.bf16.gmra.mxu0 %v1016
    %v2033 = vpop.f32.mrf.mxu0
    %v2034 = vadd.f32 0.0, %v2033
    %v2035 = vpop.f32.mrf.mxu0
    %v2036 = vadd.f32 0.0, %v2035
    %2037 = vmatmul.bf16.gmra.mxu0 %v1017
    %v2038 = vpop.f32.mrf.mxu0
    %v2039 = vadd.f32 0.0, %v2038
    %v2040 = vpop.f32.mrf.mxu0
    %v2041 = vadd.f32 0.0, %v2040
    %2042 = vmatmul.bf16.gmra.mxu0 %v1018
    %v2043 = vpop.f32.mrf.mxu0
    %v2044 = vadd.f32 0.0, %v2043
    %v2045 = vpop.f32.mrf.mxu0
    %v2046 = vadd.f32 0.0, %v2045
    %2047 = vdwg.mxu0
    %2048 = vmatpush.bf16.msra.mxu0 %v1655
    %2049 = vmatpush.bf16.msra.mxu0 %v1647
    %2050 = vmatpush.bf16.msra.mxu0 %v1639
    %2051 = vmatpush.bf16.msra.mxu0 %v1631
    %2052 = vmatpush.bf16.msra.mxu0 %v1623
    %2053 = vmatpush.bf16.msra.mxu0 %v1615
    %2054 = vmatpush.bf16.msra.mxu0 %v1607
    %2055 = vmatpush.bf16.msra.mxu0 %v1599
    %2056 = vmatmul.bf16.gmra.mxu0 %v1015
    %v2057 = vpop.f32.mrf.mxu0
    %v2058 = vadd.f32 %v2029, %v2057
    %v2059 = vpop.f32.mrf.mxu0
    %v2060 = vadd.f32 %v2031, %v2059
    %2061 = vmatmul.bf16.gmra.mxu0 %v1015
    %v2062 = vpop.f32.mrf.mxu0
    %v2063 = vadd.f32 %v2034, %v2062
    %v2064 = vpop.f32.mrf.mxu0
    %v2065 = vadd.f32 %v2036, %v2064
    %2066 = vmatmul.bf16.gmra.mxu0 %v1015
    %v2067 = vpop.f32.mrf.mxu0
    %v2068 = vadd.f32 %v2039, %v2067
    %v2069 = vpop.f32.mrf.mxu0
    %v2070 = vadd.f32 %v2041, %v2069
    %2071 = vmatmul.bf16.gmra.mxu0 %v1015
    %v2072 = vpop.f32.mrf.mxu0
    %v2073 = vadd.f32 %v2044, %v2072
    %v2074 = vpop.f32.mrf.mxu0
    %v2075 = vadd.f32 %v2046, %v2074
    %2076 = vdwg.mxu0
    %2077 = vmatpush.bf16.msra.mxu0 %v1592
    %2078 = vmatpush.bf16.msra.mxu0 %v1584
    %2079 = vmatpush.bf16.msra.mxu0 %v1576
    %2080 = vmatpush.bf16.msra.mxu0 %v1568
    %2081 = vmatpush.bf16.msra.mxu0 %v1560
    %2082 = vmatpush.bf16.msra.mxu0 %v1552
    %2083 = vmatpush.bf16.msra.mxu0 %v1544
    %2084 = vmatpush.bf16.msra.mxu0 %v1536
    %2085 = vmatmul.bf16.gmra.mxu0 %v1014
    %v2086 = vpop.f32.mrf.mxu0
    %v2087 = vadd.f32 0.0, %v2086
    %v2088 = vpop.f32.mrf.mxu0
    %v2089 = vadd.f32 0.0, %v2088
    %2090 = vmatmul.bf16.gmra.mxu0 %v1016
    %v2091 = vpop.f32.mrf.mxu0
    %v2092 = vadd.f32 0.0, %v2091
    %v2093 = vpop.f32.mrf.mxu0
    %v2094 = vadd.f32 0.0, %v2093
    %2095 = vmatmul.bf16.gmra.mxu0 %v1017
    %v2096 = vpop.f32.mrf.mxu0
    %v2097 = vadd.f32 0.0, %v2096
    %v2098 = vpop.f32.mrf.mxu0
    %v2099 = vadd.f32 0.0, %v2098
    %2100 = vmatmul.bf16.gmra.mxu0 %v1018
    %v2101 = vpop.f32.mrf.mxu0
    %v2102 = vadd.f32 0.0, %v2101
    %v2103 = vpop.f32.mrf.mxu0
    %v2104 = vadd.f32 0.0, %v2103
    %2105 = vdwg.mxu0
    %2106 = vmatpush.bf16.msra.mxu0 %v1656
    %2107 = vmatpush.bf16.msra.mxu0 %v1648
    %2108 = vmatpush.bf16.msra.mxu0 %v1640
    %2109 = vmatpush.bf16.msra.mxu0 %v1632
    %2110 = vmatpush.bf16.msra.mxu0 %v1624
    %2111 = vmatpush.bf16.msra.mxu0 %v1616
    %2112 = vmatpush.bf16.msra.mxu0 %v1608
    %2113 = vmatpush.bf16.msra.mxu0 %v1600
    %2114 = vmatmul.bf16.gmra.mxu0 %v1015
    %v2115 = vpop.f32.mrf.mxu0
    %v2116 = vadd.f32 %v2087, %v2115
    %v2117 = vpop.f32.mrf.mxu0
    %v2118 = vadd.f32 %v2089, %v2117
    %2119 = vmatmul.bf16.gmra.mxu0 %v1015
    %v2120 = vpop.f32.mrf.mxu0
    %v2121 = vadd.f32 %v2092, %v2120
    %v2122 = vpop.f32.mrf.mxu0
    %v2123 = vadd.f32 %v2094, %v2122
    %2124 = vmatmul.bf16.gmra.mxu0 %v1015
    %v2125 = vpop.f32.mrf.mxu0
    %v2126 = vadd.f32 %v2097, %v2125
    %v2127 = vpop.f32.mrf.mxu0
    %v2128 = vadd.f32 %v2099, %v2127
    %2129 = vmatmul.bf16.gmra.mxu0 %v1015
    %v2130 = vpop.f32.mrf.mxu0
    %v2131 = vadd.f32 %v2102, %v2130
    %v2132 = vpop.f32.mrf.mxu0
    %v2133 = vadd.f32 %v2104, %v2132
    %2134 = vdwg.mxu0
    %2135 = vmatpush.bf16.msra.mxu0 %v1593
    %2136 = vmatpush.bf16.msra.mxu0 %v1585
    %2137 = vmatpush.bf16.msra.mxu0 %v1577
    %2138 = vmatpush.bf16.msra.mxu0 %v1569
    %2139 = vmatpush.bf16.msra.mxu0 %v1561
    %2140 = vmatpush.bf16.msra.mxu0 %v1553
    %2141 = vmatpush.bf16.msra.mxu0 %v1545
    %2142 = vmatpush.bf16.msra.mxu0 %v1537
    %2143 = vmatmul.bf16.gmra.mxu0 %v1014
    %v2144 = vpop.f32.mrf.mxu0
    %v2145 = vadd.f32 0.0, %v2144
    %v2146 = vpop.f32.mrf.mxu0
    %v2147 = vadd.f32 0.0, %v2146
    %2148 = vmatmul.bf16.gmra.mxu0 %v1016
    %v2149 = vpop.f32.mrf.mxu0
    %v2150 = vadd.f32 0.0, %v2149
    %v2151 = vpop.f32.mrf.mxu0
    %v2152 = vadd.f32 0.0, %v2151
    %2153 = vmatmul.bf16.gmra.mxu0 %v1017
    %v2154 = vpop.f32.mrf.mxu0
    %v2155 = vadd.f32 0.0, %v2154
    %v2156 = vpop.f32.mrf.mxu0
    %v2157 = vadd.f32 0.0, %v2156
    %2158 = vmatmul.bf16.gmra.mxu0 %v1018
    %v2159 = vpop.f32.mrf.mxu0
    %v2160 = vadd.f32 0.0, %v2159
    %v2161 = vpop.f32.mrf.mxu0
    %v2162 = vadd.f32 0.0, %v2161
    %2163 = vdwg.mxu0
    %2164 = vmatpush.bf16.msra.mxu0 %v1657
    %2165 = vmatpush.bf16.msra.mxu0 %v1649
    %2166 = vmatpush.bf16.msra.mxu0 %v1641
    %2167 = vmatpush.bf16.msra.mxu0 %v1633
    %2168 = vmatpush.bf16.msra.mxu0 %v1625
    %2169 = vmatpush.bf16.msra.mxu0 %v1617
    %2170 = vmatpush.bf16.msra.mxu0 %v1609
    %2171 = vmatpush.bf16.msra.mxu0 %v1601
    %2172 = vmatmul.bf16.gmra.mxu0 %v1015
    %v2173 = vpop.f32.mrf.mxu0
    %v2174 = vadd.f32 %v2145, %v2173
    %v2175 = vpop.f32.mrf.mxu0
    %v2176 = vadd.f32 %v2147, %v2175
    %2177 = vmatmul.bf16.gmra.mxu0 %v1015
    %v2178 = vpop.f32.mrf.mxu0
    %v2179 = vadd.f32 %v2150, %v2178
    %v2180 = vpop.f32.mrf.mxu0
    %v2181 = vadd.f32 %v2152, %v2180
    %2182 = vmatmul.bf16.gmra.mxu0 %v1015
    %v2183 = vpop.f32.mrf.mxu0
    %v2184 = vadd.f32 %v2155, %v2183
    %v2185 = vpop.f32.mrf.mxu0
    %v2186 = vadd.f32 %v2157, %v2185
    %2187 = vmatmul.bf16.gmra.mxu0 %v1015
    %v2188 = vpop.f32.mrf.mxu0
    %v2189 = vadd.f32 %v2160, %v2188
    %v2190 = vpop.f32.mrf.mxu0
    %v2191 = vadd.f32 %v2162, %v2190
    %2192 = vdwg.mxu0
    %2193 = vmatpush.bf16.msra.mxu0 %v1594
    %2194 = vmatpush.bf16.msra.mxu0 %v1586
    %2195 = vmatpush.bf16.msra.mxu0 %v1578
    %2196 = vmatpush.bf16.msra.mxu0 %v1570
    %2197 = vmatpush.bf16.msra.mxu0 %v1562
    %2198 = vmatpush.bf16.msra.mxu0 %v1554
    %2199 = vmatpush.bf16.msra.mxu0 %v1546
    %2200 = vmatpush.bf16.msra.mxu0 %v1538
    %2201 = vmatmul.bf16.gmra.mxu0 %v1014
    %v2202 = vpop.f32.mrf.mxu0
    %v2203 = vadd.f32 0.0, %v2202
    %v2204 = vpop.f32.mrf.mxu0
    %v2205 = vadd.f32 0.0, %v2204
    %2206 = vmatmul.bf16.gmra.mxu0 %v1016
    %v2207 = vpop.f32.mrf.mxu0
    %v2208 = vadd.f32 0.0, %v2207
    %v2209 = vpop.f32.mrf.mxu0
    %v2210 = vadd.f32 0.0, %v2209
    %2211 = vmatmul.bf16.gmra.mxu0 %v1017
    %v2212 = vpop.f32.mrf.mxu0
    %v2213 = vadd.f32 0.0, %v2212
    %v2214 = vpop.f32.mrf.mxu0
    %v2215 = vadd.f32 0.0, %v2214
    %2216 = vmatmul.bf16.gmra.mxu0 %v1018
    %v2217 = vpop.f32.mrf.mxu0
    %v2218 = vadd.f32 0.0, %v2217
    %v2219 = vpop.f32.mrf.mxu0
    %v2220 = vadd.f32 0.0, %v2219
    %2221 = vdwg.mxu0
    %2222 = vmatpush.bf16.msra.mxu0 %v1658
    %2223 = vmatpush.bf16.msra.mxu0 %v1650
    %2224 = vmatpush.bf16.msra.mxu0 %v1642
    %2225 = vmatpush.bf16.msra.mxu0 %v1634
    %2226 = vmatpush.bf16.msra.mxu0 %v1626
    %2227 = vmatpush.bf16.msra.mxu0 %v1618
    %2228 = vmatpush.bf16.msra.mxu0 %v1610
    %2229 = vmatpush.bf16.msra.mxu0 %v1602
    %2230 = vmatmul.bf16.gmra.mxu0 %v1015
    %v2231 = vpop.f32.mrf.mxu0
    %v2232 = vadd.f32 %v2203, %v2231
    %v2233 = vpop.f32.mrf.mxu0
    %v2234 = vadd.f32 %v2205, %v2233
    %2235 = vmatmul.bf16.gmra.mxu0 %v1015
    %v2236 = vpop.f32.mrf.mxu0
    %v2237 = vadd.f32 %v2208, %v2236
    %v2238 = vpop.f32.mrf.mxu0
    %v2239 = vadd.f32 %v2210, %v2238
    %2240 = vmatmul.bf16.gmra.mxu0 %v1015
    %v2241 = vpop.f32.mrf.mxu0
    %v2242 = vadd.f32 %v2213, %v2241
    %v2243 = vpop.f32.mrf.mxu0
    %v2244 = vadd.f32 %v2215, %v2243
    %2245 = vmatmul.bf16.gmra.mxu0 %v1015
    %v2246 = vpop.f32.mrf.mxu0
    %v2247 = vadd.f32 %v2218, %v2246
    %v2248 = vpop.f32.mrf.mxu0
    %v2249 = vadd.f32 %v2220, %v2248
    %2250 = vdwg.mxu0
    %v2251 = vld [vmem:[#allocation11] sm:$0xf]
    %v2253 = vperm.slane %v2251, 0
    %v2254 = vperm.slane %v2251, 1
    %v2255 = vperm.slane %v2251, 2
    %v2256 = vperm.slane %v2251, 3
    %v2261 = vadd.f32 %v2058, %v2253
    %v2262 = vadd.f32 %v2116, %v2254
    %v2263 = vadd.f32 %v2174, %v2255
    %v2264 = vadd.f32 %v2232, %v2256
    %v2265 = vadd.f32 %v2060, %v2253
    %v2266 = vadd.f32 %v2118, %v2254
    %v2267 = vadd.f32 %v2176, %v2255
    %v2268 = vadd.f32 %v2234, %v2256
    %v2269 = vadd.f32 %v2063, %v2253
    %v2270 = vadd.f32 %v2121, %v2254
    %v2271 = vadd.f32 %v2179, %v2255
    %v2272 = vadd.f32 %v2237, %v2256
    %v2273 = vadd.f32 %v2065, %v2253
    %v2274 = vadd.f32 %v2123, %v2254
    %v2275 = vadd.f32 %v2181, %v2255
    %v2276 = vadd.f32 %v2239, %v2256
    %v2277 = vadd.f32 %v2068, %v2253
    %v2278 = vadd.f32 %v2126, %v2254
    %v2279 = vadd.f32 %v2184, %v2255
    %v2280 = vadd.f32 %v2242, %v2256
    %v2281 = vadd.f32 %v2070, %v2253
    %v2282 = vadd.f32 %v2128, %v2254
    %v2283 = vadd.f32 %v2186, %v2255
    %v2284 = vadd.f32 %v2244, %v2256
    %v2285 = vadd.f32 %v2073, %v2253
    %v2286 = vadd.f32 %v2131, %v2254
    %v2287 = vadd.f32 %v2189, %v2255
    %v2288 = vadd.f32 %v2247, %v2256
    %v2289 = vadd.f32 %v2075, %v2253
    %v2290 = vadd.f32 %v2133, %v2254
    %v2291 = vadd.f32 %v2191, %v2255
    %v2292 = vadd.f32 %v2249, %v2256
    %v2293 = vadd.f32 %v478, %v1826
    %v2294 = vadd.f32 %v479, %v1884
    %v2295 = vadd.f32 %v480, %v1942
    %v2296 = vadd.f32 %v481, %v2000
    %v2297 = vadd.f32 %v482, %v1828
    %v2298 = vadd.f32 %v483, %v1886
    %v2299 = vadd.f32 %v484, %v1944
    %v2300 = vadd.f32 %v485, %v2002
    %v2301 = vadd.f32 %v486, %v1831
    %v2302 = vadd.f32 %v487, %v1889
    %v2303 = vadd.f32 %v488, %v1947
    %v2304 = vadd.f32 %v489, %v2005
    %v2305 = vadd.f32 %v490, %v1833
    %v2306 = vadd.f32 %v491, %v1891
    %v2307 = vadd.f32 %v492, %v1949
    %v2308 = vadd.f32 %v493, %v2007
    %v2309 = vadd.f32 %v494, %v1836
    %v2310 = vadd.f32 %v495, %v1894
    %v2311 = vadd.f32 %v496, %v1952
    %v2312 = vadd.f32 %v497, %v2010
    %v2313 = vadd.f32 %v498, %v1838
    %v2314 = vadd.f32 %v499, %v1896
    %v2315 = vadd.f32 %v500, %v1954
    %v2316 = vadd.f32 %v501, %v2012
    %v2317 = vadd.f32 %v502, %v1841
    %v2318 = vadd.f32 %v503, %v1899
    %v2319 = vadd.f32 %v504, %v1957
    %v2320 = vadd.f32 %v505, %v2015
    %v2321 = vadd.f32 %v506, %v1843
    %v2322 = vadd.f32 %v507, %v1901
    %v2323 = vadd.f32 %v508, %v1959
    %v2324 = vadd.f32 %v509, %v2017
    %v2325 = vxor.u32 %v2293, 2147483648
    %v2326 = vxor.u32 %v2294, 2147483648
    %v2327 = vxor.u32 %v2295, 2147483648
    %v2328 = vxor.u32 %v2297, 2147483648
    %v2329 = vxor.u32 %v2298, 2147483648
    %v2330 = vxor.u32 %v2299, 2147483648
    %v2331 = vxor.u32 %v2301, 2147483648
    %v2332 = vxor.u32 %v2302, 2147483648
    %v2333 = vxor.u32 %v2303, 2147483648
    %v2334 = vxor.u32 %v2305, 2147483648
    %v2335 = vxor.u32 %v2306, 2147483648
    %v2336 = vxor.u32 %v2307, 2147483648
    %v2337 = vxor.u32 %v2309, 2147483648
    %v2338 = vxor.u32 %v2310, 2147483648
    %v2339 = vxor.u32 %v2311, 2147483648
    %v2340 = vxor.u32 %v2313, 2147483648
    %v2341 = vxor.u32 %v2314, 2147483648
    %v2342 = vxor.u32 %v2315, 2147483648
    %v2343 = vxor.u32 %v2317, 2147483648
    %v2344 = vxor.u32 %v2318, 2147483648
    %v2345 = vxor.u32 %v2319, 2147483648
    %v2346 = vxor.u32 %v2321, 2147483648
    %v2347 = vxor.u32 %v2322, 2147483648
    %v2348 = vxor.u32 %v2323, 2147483648
    %v2349 = vmul.f32 %v2325, 1.442695
    %v2350 = vpow.pop %v2349
    %v2351 = vmul.f32 %v2326, 1.442695
    %v2352 = vpow.pop %v2351
    %v2353 = vmul.f32 %v2327, 1.442695
    %v2354 = vpow.pop %v2353
    %v2355 = vmul.f32 %v2328, 1.442695
    %v2356 = vpow.pop %v2355
    %v2357 = vmul.f32 %v2329, 1.442695
    %v2358 = vpow.pop %v2357
    %v2359 = vmul.f32 %v2330, 1.442695
    %v2360 = vpow.pop %v2359
    %v2361 = vmul.f32 %v2331, 1.442695
    %v2362 = vpow.pop %v2361
    %v2363 = vmul.f32 %v2332, 1.442695
    %v2364 = vpow.pop %v2363
    %v2365 = vmul.f32 %v2333, 1.442695
    %v2366 = vpow.pop %v2365
    %v2367 = vmul.f32 %v2334, 1.442695
    %v2368 = vpow.pop %v2367
    %v2369 = vmul.f32 %v2335, 1.442695
    %v2370 = vpow.pop %v2369
    %v2371 = vmul.f32 %v2336, 1.442695
    %v2372 = vpow.pop %v2371
    %v2373 = vmul.f32 %v2337, 1.442695
    %v2374 = vpow.pop %v2373
    %v2375 = vmul.f32 %v2338, 1.442695
    %v2376 = vpow.pop %v2375
    %v2377 = vmul.f32 %v2339, 1.442695
    %v2378 = vpow.pop %v2377
    %v2379 = vmul.f32 %v2340, 1.442695
    %v2380 = vpow.pop %v2379
    %v2381 = vmul.f32 %v2341, 1.442695
    %v2382 = vpow.pop %v2381
    %v2383 = vmul.f32 %v2342, 1.442695
    %v2384 = vpow.pop %v2383
    %v2385 = vmul.f32 %v2343, 1.442695
    %v2386 = vpow.pop %v2385
    %v2387 = vmul.f32 %v2344, 1.442695
    %v2388 = vpow.pop %v2387
    %v2389 = vmul.f32 %v2345, 1.442695
    %v2390 = vpow.pop %v2389
    %v2391 = vmul.f32 %v2346, 1.442695
    %v2392 = vpow.pop %v2391
    %v2393 = vmul.f32 %v2347, 1.442695
    %v2394 = vpow.pop %v2393
    %v2395 = vmul.f32 %v2348, 1.442695
    %v2396 = vpow.pop %v2395
    %v2397 = vadd.f32 %v2350, 1.0
    %v2398 = vadd.f32 %v2352, 1.0
    %v2399 = vadd.f32 %v2354, 1.0
    %v2400 = vadd.f32 %v2356, 1.0
    %v2401 = vadd.f32 %v2358, 1.0
    %v2402 = vadd.f32 %v2360, 1.0
    %v2403 = vadd.f32 %v2362, 1.0
    %v2404 = vadd.f32 %v2364, 1.0
    %v2405 = vadd.f32 %v2366, 1.0
    %v2406 = vadd.f32 %v2368, 1.0
    %v2407 = vadd.f32 %v2370, 1.0
    %v2408 = vadd.f32 %v2372, 1.0
    %v2409 = vadd.f32 %v2374, 1.0
    %v2410 = vadd.f32 %v2376, 1.0
    %v2411 = vadd.f32 %v2378, 1.0
    %v2412 = vadd.f32 %v2380, 1.0
    %v2413 = vadd.f32 %v2382, 1.0
    %v2414 = vadd.f32 %v2384, 1.0
    %v2415 = vadd.f32 %v2386, 1.0
    %v2416 = vadd.f32 %v2388, 1.0
    %v2417 = vadd.f32 %v2390, 1.0
    %v2418 = vadd.f32 %v2392, 1.0
    %v2419 = vadd.f32 %v2394, 1.0
    %v2420 = vadd.f32 %v2396, 1.0
    %v2421 = vrcp.pop %v2397
    %v2422 = vmul.f32 %v2397, %v2421
    %v2423 = vsub.f32 1.0, %v2422
    %v2424 = vmul.f32 %v2421, %v2423
    %v2425 = vadd.f32 %v2421, %v2424
    %vm2426 = vweird.f32 %v2397
    %vm2427 = vweird.f32 %v2421
    %vm2428 = vmor %vm2426, %vm2427
    %v2429 = vsel %vm2428, %v2421, %v2425
    %v2430 = vand.u32 2147483647, %v2397
    %vm2431 = vcmp.eq.f32.partialorder %v2430, 8.507059e+37
    %v2432 = vand.u32 %v2397, 2147483648
    %v2433 = vor.u32 1.1754944e-38, %v2432
    %v2434 = vsel %vm2431, %v2433, %v2429
    %v2435 = vmul.f32 1.0, %v2434
    %v2436 = vrcp.pop %v2398
    %v2437 = vmul.f32 %v2398, %v2436
    %v2438 = vsub.f32 1.0, %v2437
    %v2439 = vmul.f32 %v2436, %v2438
    %v2440 = vadd.f32 %v2436, %v2439
    %vm2441 = vweird.f32 %v2398
    %vm2442 = vweird.f32 %v2436
    %vm2443 = vmor %vm2441, %vm2442
    %v2444 = vsel %vm2443, %v2436, %v2440
    %v2445 = vand.u32 2147483647, %v2398
    %vm2446 = vcmp.eq.f32.partialorder %v2445, 8.507059e+37
    %v2447 = vand.u32 %v2398, 2147483648
    %v2448 = vor.u32 1.1754944e-38, %v2447
    %v2449 = vsel %vm2446, %v2448, %v2444
    %v2450 = vmul.f32 1.0, %v2449
    %v2451 = vrcp.pop %v2399
    %v2452 = vmul.f32 %v2399, %v2451
    %v2453 = vsub.f32 1.0, %v2452
    %v2454 = vmul.f32 %v2451, %v2453
    %v2455 = vadd.f32 %v2451, %v2454
    %vm2456 = vweird.f32 %v2399
    %vm2457 = vweird.f32 %v2451
    %vm2458 = vmor %vm2456, %vm2457
    %v2459 = vsel %vm2458, %v2451, %v2455
    %v2460 = vand.u32 2147483647, %v2399
    %vm2461 = vcmp.eq.f32.partialorder %v2460, 8.507059e+37
    %v2462 = vand.u32 %v2399, 2147483648
    %v2463 = vor.u32 1.1754944e-38, %v2462
    %v2464 = vsel %vm2461, %v2463, %v2459
    %v2465 = vmul.f32 1.0, %v2464
    %v2466 = vrcp.pop %v2400
    %v2467 = vmul.f32 %v2400, %v2466
    %v2468 = vsub.f32 1.0, %v2467
    %v2469 = vmul.f32 %v2466, %v2468
    %v2470 = vadd.f32 %v2466, %v2469
    %vm2471 = vweird.f32 %v2400
    %vm2472 = vweird.f32 %v2466
    %vm2473 = vmor %vm2471, %vm2472
    %v2474 = vsel %vm2473, %v2466, %v2470
    %v2475 = vand.u32 2147483647, %v2400
    %vm2476 = vcmp.eq.f32.partialorder %v2475, 8.507059e+37
    %v2477 = vand.u32 %v2400, 2147483648
    %v2478 = vor.u32 1.1754944e-38, %v2477
    %v2479 = vsel %vm2476, %v2478, %v2474
    %v2480 = vmul.f32 1.0, %v2479
    %v2481 = vrcp.pop %v2401
    %v2482 = vmul.f32 %v2401, %v2481
    %v2483 = vsub.f32 1.0, %v2482
    %v2484 = vmul.f32 %v2481, %v2483
    %v2485 = vadd.f32 %v2481, %v2484
    %vm2486 = vweird.f32 %v2401
    %vm2487 = vweird.f32 %v2481
    %vm2488 = vmor %vm2486, %vm2487
    %v2489 = vsel %vm2488, %v2481, %v2485
    %v2490 = vand.u32 2147483647, %v2401
    %vm2491 = vcmp.eq.f32.partialorder %v2490, 8.507059e+37
    %v2492 = vand.u32 %v2401, 2147483648
    %v2493 = vor.u32 1.1754944e-38, %v2492
    %v2494 = vsel %vm2491, %v2493, %v2489
    %v2495 = vmul.f32 1.0, %v2494
    %v2496 = vrcp.pop %v2402
    %v2497 = vmul.f32 %v2402, %v2496
    %v2498 = vsub.f32 1.0, %v2497
    %v2499 = vmul.f32 %v2496, %v2498
    %v2500 = vadd.f32 %v2496, %v2499
    %vm2501 = vweird.f32 %v2402
    %vm2502 = vweird.f32 %v2496
    %vm2503 = vmor %vm2501, %vm2502
    %v2504 = vsel %vm2503, %v2496, %v2500
    %v2505 = vand.u32 2147483647, %v2402
    %vm2506 = vcmp.eq.f32.partialorder %v2505, 8.507059e+37
    %v2507 = vand.u32 %v2402, 2147483648
    %v2508 = vor.u32 1.1754944e-38, %v2507
    %v2509 = vsel %vm2506, %v2508, %v2504
    %v2510 = vmul.f32 1.0, %v2509
    %v2511 = vrcp.pop %v2403
    %v2512 = vmul.f32 %v2403, %v2511
    %v2513 = vsub.f32 1.0, %v2512
    %v2514 = vmul.f32 %v2511, %v2513
    %v2515 = vadd.f32 %v2511, %v2514
    %vm2516 = vweird.f32 %v2403
    %vm2517 = vweird.f32 %v2511
    %vm2518 = vmor %vm2516, %vm2517
    %v2519 = vsel %vm2518, %v2511, %v2515
    %v2520 = vand.u32 2147483647, %v2403
    %vm2521 = vcmp.eq.f32.partialorder %v2520, 8.507059e+37
    %v2522 = vand.u32 %v2403, 2147483648
    %v2523 = vor.u32 1.1754944e-38, %v2522
    %v2524 = vsel %vm2521, %v2523, %v2519
    %v2525 = vmul.f32 1.0, %v2524
    %v2526 = vrcp.pop %v2404
    %v2527 = vmul.f32 %v2404, %v2526
    %v2528 = vsub.f32 1.0, %v2527
    %v2529 = vmul.f32 %v2526, %v2528
    %v2530 = vadd.f32 %v2526, %v2529
    %vm2531 = vweird.f32 %v2404
    %vm2532 = vweird.f32 %v2526
    %vm2533 = vmor %vm2531, %vm2532
    %v2534 = vsel %vm2533, %v2526, %v2530
    %v2535 = vand.u32 2147483647, %v2404
    %vm2536 = vcmp.eq.f32.partialorder %v2535, 8.507059e+37
    %v2537 = vand.u32 %v2404, 2147483648
    %v2538 = vor.u32 1.1754944e-38, %v2537
    %v2539 = vsel %vm2536, %v2538, %v2534
    %v2540 = vmul.f32 1.0, %v2539
    %v2541 = vrcp.pop %v2405
    %v2542 = vmul.f32 %v2405, %v2541
    %v2543 = vsub.f32 1.0, %v2542
    %v2544 = vmul.f32 %v2541, %v2543
    %v2545 = vadd.f32 %v2541, %v2544
    %vm2546 = vweird.f32 %v2405
    %vm2547 = vweird.f32 %v2541
    %vm2548 = vmor %vm2546, %vm2547
    %v2549 = vsel %vm2548, %v2541, %v2545
    %v2550 = vand.u32 2147483647, %v2405
    %vm2551 = vcmp.eq.f32.partialorder %v2550, 8.507059e+37
    %v2552 = vand.u32 %v2405, 2147483648
    %v2553 = vor.u32 1.1754944e-38, %v2552
    %v2554 = vsel %vm2551, %v2553, %v2549
    %v2555 = vmul.f32 1.0, %v2554
    %v2556 = vrcp.pop %v2406
    %v2557 = vmul.f32 %v2406, %v2556
    %v2558 = vsub.f32 1.0, %v2557
    %v2559 = vmul.f32 %v2556, %v2558
    %v2560 = vadd.f32 %v2556, %v2559
    %vm2561 = vweird.f32 %v2406
    %vm2562 = vweird.f32 %v2556
    %vm2563 = vmor %vm2561, %vm2562
    %v2564 = vsel %vm2563, %v2556, %v2560
    %v2565 = vand.u32 2147483647, %v2406
    %vm2566 = vcmp.eq.f32.partialorder %v2565, 8.507059e+37
    %v2567 = vand.u32 %v2406, 2147483648
    %v2568 = vor.u32 1.1754944e-38, %v2567
    %v2569 = vsel %vm2566, %v2568, %v2564
    %v2570 = vmul.f32 1.0, %v2569
    %v2571 = vrcp.pop %v2407
    %v2572 = vmul.f32 %v2407, %v2571
    %v2573 = vsub.f32 1.0, %v2572
    %v2574 = vmul.f32 %v2571, %v2573
    %v2575 = vadd.f32 %v2571, %v2574
    %vm2576 = vweird.f32 %v2407
    %vm2577 = vweird.f32 %v2571
    %vm2578 = vmor %vm2576, %vm2577
    %v2579 = vsel %vm2578, %v2571, %v2575
    %v2580 = vand.u32 2147483647, %v2407
    %vm2581 = vcmp.eq.f32.partialorder %v2580, 8.507059e+37
    %v2582 = vand.u32 %v2407, 2147483648
    %v2583 = vor.u32 1.1754944e-38, %v2582
    %v2584 = vsel %vm2581, %v2583, %v2579
    %v2585 = vmul.f32 1.0, %v2584
    %v2586 = vrcp.pop %v2408
    %v2587 = vmul.f32 %v2408, %v2586
    %v2588 = vsub.f32 1.0, %v2587
    %v2589 = vmul.f32 %v2586, %v2588
    %v2590 = vadd.f32 %v2586, %v2589
    %vm2591 = vweird.f32 %v2408
    %vm2592 = vweird.f32 %v2586
    %vm2593 = vmor %vm2591, %vm2592
    %v2594 = vsel %vm2593, %v2586, %v2590
    %v2595 = vand.u32 2147483647, %v2408
    %vm2596 = vcmp.eq.f32.partialorder %v2595, 8.507059e+37
    %v2597 = vand.u32 %v2408, 2147483648
    %v2598 = vor.u32 1.1754944e-38, %v2597
    %v2599 = vsel %vm2596, %v2598, %v2594
    %v2600 = vmul.f32 1.0, %v2599
    %v2601 = vrcp.pop %v2409
    %v2602 = vmul.f32 %v2409, %v2601
    %v2603 = vsub.f32 1.0, %v2602
    %v2604 = vmul.f32 %v2601, %v2603
    %v2605 = vadd.f32 %v2601, %v2604
    %vm2606 = vweird.f32 %v2409
    %vm2607 = vweird.f32 %v2601
    %vm2608 = vmor %vm2606, %vm2607
    %v2609 = vsel %vm2608, %v2601, %v2605
    %v2610 = vand.u32 2147483647, %v2409
    %vm2611 = vcmp.eq.f32.partialorder %v2610, 8.507059e+37
    %v2612 = vand.u32 %v2409, 2147483648
    %v2613 = vor.u32 1.1754944e-38, %v2612
    %v2614 = vsel %vm2611, %v2613, %v2609
    %v2615 = vmul.f32 1.0, %v2614
    %v2616 = vrcp.pop %v2410
    %v2617 = vmul.f32 %v2410, %v2616
    %v2618 = vsub.f32 1.0, %v2617
    %v2619 = vmul.f32 %v2616, %v2618
    %v2620 = vadd.f32 %v2616, %v2619
    %vm2621 = vweird.f32 %v2410
    %vm2622 = vweird.f32 %v2616
    %vm2623 = vmor %vm2621, %vm2622
    %v2624 = vsel %vm2623, %v2616, %v2620
    %v2625 = vand.u32 2147483647, %v2410
    %vm2626 = vcmp.eq.f32.partialorder %v2625, 8.507059e+37
    %v2627 = vand.u32 %v2410, 2147483648
    %v2628 = vor.u32 1.1754944e-38, %v2627
    %v2629 = vsel %vm2626, %v2628, %v2624
    %v2630 = vmul.f32 1.0, %v2629
    %v2631 = vrcp.pop %v2411
    %v2632 = vmul.f32 %v2411, %v2631
    %v2633 = vsub.f32 1.0, %v2632
    %v2634 = vmul.f32 %v2631, %v2633
    %v2635 = vadd.f32 %v2631, %v2634
    %vm2636 = vweird.f32 %v2411
    %vm2637 = vweird.f32 %v2631
    %vm2638 = vmor %vm2636, %vm2637
    %v2639 = vsel %vm2638, %v2631, %v2635
    %v2640 = vand.u32 2147483647, %v2411
    %vm2641 = vcmp.eq.f32.partialorder %v2640, 8.507059e+37
    %v2642 = vand.u32 %v2411, 2147483648
    %v2643 = vor.u32 1.1754944e-38, %v2642
    %v2644 = vsel %vm2641, %v2643, %v2639
    %v2645 = vmul.f32 1.0, %v2644
    %v2646 = vrcp.pop %v2412
    %v2647 = vmul.f32 %v2412, %v2646
    %v2648 = vsub.f32 1.0, %v2647
    %v2649 = vmul.f32 %v2646, %v2648
    %v2650 = vadd.f32 %v2646, %v2649
    %vm2651 = vweird.f32 %v2412
    %vm2652 = vweird.f32 %v2646
    %vm2653 = vmor %vm2651, %vm2652
    %v2654 = vsel %vm2653, %v2646, %v2650
    %v2655 = vand.u32 2147483647, %v2412
    %vm2656 = vcmp.eq.f32.partialorder %v2655, 8.507059e+37
    %v2657 = vand.u32 %v2412, 2147483648
    %v2658 = vor.u32 1.1754944e-38, %v2657
    %v2659 = vsel %vm2656, %v2658, %v2654
    %v2660 = vmul.f32 1.0, %v2659
    %v2661 = vrcp.pop %v2413
    %v2662 = vmul.f32 %v2413, %v2661
    %v2663 = vsub.f32 1.0, %v2662
    %v2664 = vmul.f32 %v2661, %v2663
    %v2665 = vadd.f32 %v2661, %v2664
    %vm2666 = vweird.f32 %v2413
    %vm2667 = vweird.f32 %v2661
    %vm2668 = vmor %vm2666, %vm2667
    %v2669 = vsel %vm2668, %v2661, %v2665
    %v2670 = vand.u32 2147483647, %v2413
    %vm2671 = vcmp.eq.f32.partialorder %v2670, 8.507059e+37
    %v2672 = vand.u32 %v2413, 2147483648
    %v2673 = vor.u32 1.1754944e-38, %v2672
    %v2674 = vsel %vm2671, %v2673, %v2669
    %v2675 = vmul.f32 1.0, %v2674
    %v2676 = vrcp.pop %v2414
    %v2677 = vmul.f32 %v2414, %v2676
    %v2678 = vsub.f32 1.0, %v2677
    %v2679 = vmul.f32 %v2676, %v2678
    %v2680 = vadd.f32 %v2676, %v2679
    %vm2681 = vweird.f32 %v2414
    %vm2682 = vweird.f32 %v2676
    %vm2683 = vmor %vm2681, %vm2682
    %v2684 = vsel %vm2683, %v2676, %v2680
    %v2685 = vand.u32 2147483647, %v2414
    %vm2686 = vcmp.eq.f32.partialorder %v2685, 8.507059e+37
    %v2687 = vand.u32 %v2414, 2147483648
    %v2688 = vor.u32 1.1754944e-38, %v2687
    %v2689 = vsel %vm2686, %v2688, %v2684
    %v2690 = vmul.f32 1.0, %v2689
    %v2691 = vrcp.pop %v2415
    %v2692 = vmul.f32 %v2415, %v2691
    %v2693 = vsub.f32 1.0, %v2692
    %v2694 = vmul.f32 %v2691, %v2693
    %v2695 = vadd.f32 %v2691, %v2694
    %vm2696 = vweird.f32 %v2415
    %vm2697 = vweird.f32 %v2691
    %vm2698 = vmor %vm2696, %vm2697
    %v2699 = vsel %vm2698, %v2691, %v2695
    %v2700 = vand.u32 2147483647, %v2415
    %vm2701 = vcmp.eq.f32.partialorder %v2700, 8.507059e+37
    %v2702 = vand.u32 %v2415, 2147483648
    %v2703 = vor.u32 1.1754944e-38, %v2702
    %v2704 = vsel %vm2701, %v2703, %v2699
    %v2705 = vmul.f32 1.0, %v2704
    %v2706 = vrcp.pop %v2416
    %v2707 = vmul.f32 %v2416, %v2706
    %v2708 = vsub.f32 1.0, %v2707
    %v2709 = vmul.f32 %v2706, %v2708
    %v2710 = vadd.f32 %v2706, %v2709
    %vm2711 = vweird.f32 %v2416
    %vm2712 = vweird.f32 %v2706
    %vm2713 = vmor %vm2711, %vm2712
    %v2714 = vsel %vm2713, %v2706, %v2710
    %v2715 = vand.u32 2147483647, %v2416
    %vm2716 = vcmp.eq.f32.partialorder %v2715, 8.507059e+37
    %v2717 = vand.u32 %v2416, 2147483648
    %v2718 = vor.u32 1.1754944e-38, %v2717
    %v2719 = vsel %vm2716, %v2718, %v2714
    %v2720 = vmul.f32 1.0, %v2719
    %v2721 = vrcp.pop %v2417
    %v2722 = vmul.f32 %v2417, %v2721
    %v2723 = vsub.f32 1.0, %v2722
    %v2724 = vmul.f32 %v2721, %v2723
    %v2725 = vadd.f32 %v2721, %v2724
    %vm2726 = vweird.f32 %v2417
    %vm2727 = vweird.f32 %v2721
    %vm2728 = vmor %vm2726, %vm2727
    %v2729 = vsel %vm2728, %v2721, %v2725
    %v2730 = vand.u32 2147483647, %v2417
    %vm2731 = vcmp.eq.f32.partialorder %v2730, 8.507059e+37
    %v2732 = vand.u32 %v2417, 2147483648
    %v2733 = vor.u32 1.1754944e-38, %v2732
    %v2734 = vsel %vm2731, %v2733, %v2729
    %v2735 = vmul.f32 1.0, %v2734
    %v2736 = vrcp.pop %v2418
    %v2737 = vmul.f32 %v2418, %v2736
    %v2738 = vsub.f32 1.0, %v2737
    %v2739 = vmul.f32 %v2736, %v2738
    %v2740 = vadd.f32 %v2736, %v2739
    %vm2741 = vweird.f32 %v2418
    %vm2742 = vweird.f32 %v2736
    %vm2743 = vmor %vm2741, %vm2742
    %v2744 = vsel %vm2743, %v2736, %v2740
    %v2745 = vand.u32 2147483647, %v2418
    %vm2746 = vcmp.eq.f32.partialorder %v2745, 8.507059e+37
    %v2747 = vand.u32 %v2418, 2147483648
    %v2748 = vor.u32 1.1754944e-38, %v2747
    %v2749 = vsel %vm2746, %v2748, %v2744
    %v2750 = vmul.f32 1.0, %v2749
    %v2751 = vrcp.pop %v2419
    %v2752 = vmul.f32 %v2419, %v2751
    %v2753 = vsub.f32 1.0, %v2752
    %v2754 = vmul.f32 %v2751, %v2753
    %v2755 = vadd.f32 %v2751, %v2754
    %vm2756 = vweird.f32 %v2419
    %vm2757 = vweird.f32 %v2751
    %vm2758 = vmor %vm2756, %vm2757
    %v2759 = vsel %vm2758, %v2751, %v2755
    %v2760 = vand.u32 2147483647, %v2419
    %vm2761 = vcmp.eq.f32.partialorder %v2760, 8.507059e+37
    %v2762 = vand.u32 %v2419, 2147483648
    %v2763 = vor.u32 1.1754944e-38, %v2762
    %v2764 = vsel %vm2761, %v2763, %v2759
    %v2765 = vmul.f32 1.0, %v2764
    %v2766 = vrcp.pop %v2420
    %v2767 = vmul.f32 %v2420, %v2766
    %v2768 = vsub.f32 1.0, %v2767
    %v2769 = vmul.f32 %v2766, %v2768
    %v2770 = vadd.f32 %v2766, %v2769
    %vm2771 = vweird.f32 %v2420
    %vm2772 = vweird.f32 %v2766
    %vm2773 = vmor %vm2771, %vm2772
    %v2774 = vsel %vm2773, %v2766, %v2770
    %v2775 = vand.u32 2147483647, %v2420
    %vm2776 = vcmp.eq.f32.partialorder %v2775, 8.507059e+37
    %v2777 = vand.u32 %v2420, 2147483648
    %v2778 = vor.u32 1.1754944e-38, %v2777
    %v2779 = vsel %vm2776, %v2778, %v2774
    %v2780 = vmul.f32 1.0, %v2779
    %v2781 = vtanh.pop %v2296
    %v2782 = vtanh.pop %v2300
    %v2783 = vtanh.pop %v2304
    %v2784 = vtanh.pop %v2308
    %v2785 = vtanh.pop %v2312
    %v2786 = vtanh.pop %v2316
    %v2787 = vtanh.pop %v2320
    %v2788 = vtanh.pop %v2324
    %v2789 = vmul.f32 %v2450, %v990
    %v2790 = vmul.f32 %v2495, %v991
    %v2791 = vmul.f32 %v2540, %v992
    %v2792 = vmul.f32 %v2585, %v993
    %v2793 = vmul.f32 %v2630, %v994
    %v2794 = vmul.f32 %v2675, %v995
    %v2795 = vmul.f32 %v2720, %v996
    %v2796 = vmul.f32 %v2765, %v997
    %v2797 = vmul.f32 %v2435, %v2781
    %v2798 = vmul.f32 %v2480, %v2782
    %v2799 = vmul.f32 %v2525, %v2783
    %v2800 = vmul.f32 %v2570, %v2784
    %v2801 = vmul.f32 %v2615, %v2785
    %v2802 = vmul.f32 %v2660, %v2786
    %v2803 = vmul.f32 %v2705, %v2787
    %v2804 = vmul.f32 %v2750, %v2788
    %v2805 = vadd.f32 %v2789, %v2797
    %v2806 = vadd.f32 %v2790, %v2798
    %v2807 = vadd.f32 %v2791, %v2799
    %v2808 = vadd.f32 %v2792, %v2800
    %v2809 = vadd.f32 %v2793, %v2801
    %v2810 = vadd.f32 %v2794, %v2802
    %v2811 = vadd.f32 %v2795, %v2803
    %v2812 = vadd.f32 %v2796, %v2804
    %v2813 = vtanh.pop %v2805
    %v2814 = vtanh.pop %v2806
    %v2815 = vtanh.pop %v2807
    %v2816 = vtanh.pop %v2808
    %v2817 = vtanh.pop %v2809
    %v2818 = vtanh.pop %v2810
    %v2819 = vtanh.pop %v2811
    %v2820 = vtanh.pop %v2812
    %v2821 = vmul.f32 %v2465, %v2813
    %v2822 = vmul.f32 %v2510, %v2814
    %v2823 = vmul.f32 %v2555, %v2815
    %v2824 = vmul.f32 %v2600, %v2816
    %v2825 = vmul.f32 %v2645, %v2817
    %v2826 = vmul.f32 %v2690, %v2818
    %v2827 = vmul.f32 %v2735, %v2819
    %v2828 = vmul.f32 %v2780, %v2820
    %v2829 = vxor.u32 %v2261, 2147483648
    %v2830 = vxor.u32 %v2262, 2147483648
    %v2831 = vxor.u32 %v2263, 2147483648
    %v2832 = vxor.u32 %v2265, 2147483648
    %v2833 = vxor.u32 %v2266, 2147483648
    %v2834 = vxor.u32 %v2267, 2147483648
    %v2835 = vxor.u32 %v2269, 2147483648
    %v2836 = vxor.u32 %v2270, 2147483648
    %v2837 = vxor.u32 %v2271, 2147483648
    %v2838 = vxor.u32 %v2273, 2147483648
    %v2839 = vxor.u32 %v2274, 2147483648
    %v2840 = vxor.u32 %v2275, 2147483648
    %v2841 = vxor.u32 %v2277, 2147483648
    %v2842 = vxor.u32 %v2278, 2147483648
    %v2843 = vxor.u32 %v2279, 2147483648
    %v2844 = vxor.u32 %v2281, 2147483648
    %v2845 = vxor.u32 %v2282, 2147483648
    %v2846 = vxor.u32 %v2283, 2147483648
    %v2847 = vxor.u32 %v2285, 2147483648
    %v2848 = vxor.u32 %v2286, 2147483648
    %v2849 = vxor.u32 %v2287, 2147483648
    %v2850 = vxor.u32 %v2289, 2147483648
    %v2851 = vxor.u32 %v2290, 2147483648
    %v2852 = vxor.u32 %v2291, 2147483648
    %v2853 = vmul.f32 %v2829, 1.442695
    %v2854 = vpow.pop %v2853
    %v2855 = vmul.f32 %v2830, 1.442695
    %v2856 = vpow.pop %v2855
    %v2857 = vmul.f32 %v2831, 1.442695
    %v2858 = vpow.pop %v2857
    %v2859 = vmul.f32 %v2832, 1.442695
    %v2860 = vpow.pop %v2859
    %v2861 = vmul.f32 %v2833, 1.442695
    %v2862 = vpow.pop %v2861
    %v2863 = vmul.f32 %v2834, 1.442695
    %v2864 = vpow.pop %v2863
    %v2865 = vmul.f32 %v2835, 1.442695
    %v2866 = vpow.pop %v2865
    %v2867 = vmul.f32 %v2836, 1.442695
    %v2868 = vpow.pop %v2867
    %v2869 = vmul.f32 %v2837, 1.442695
    %v2870 = vpow.pop %v2869
    %v2871 = vmul.f32 %v2838, 1.442695
    %v2872 = vpow.pop %v2871
    %v2873 = vmul.f32 %v2839, 1.442695
    %v2874 = vpow.pop %v2873
    %v2875 = vmul.f32 %v2840, 1.442695
    %v2876 = vpow.pop %v2875
    %v2877 = vmul.f32 %v2841, 1.442695
    %v2878 = vpow.pop %v2877
    %v2879 = vmul.f32 %v2842, 1.442695
    %v2880 = vpow.pop %v2879
    %v2881 = vmul.f32 %v2843, 1.442695
    %v2882 = vpow.pop %v2881
    %v2883 = vmul.f32 %v2844, 1.442695
    %v2884 = vpow.pop %v2883
    %v2885 = vmul.f32 %v2845, 1.442695
    %v2886 = vpow.pop %v2885
    %v2887 = vmul.f32 %v2846, 1.442695
    %v2888 = vpow.pop %v2887
    %v2889 = vmul.f32 %v2847, 1.442695
    %v2890 = vpow.pop %v2889
    %v2891 = vmul.f32 %v2848, 1.442695
    %v2892 = vpow.pop %v2891
    %v2893 = vmul.f32 %v2849, 1.442695
    %v2894 = vpow.pop %v2893
    %v2895 = vmul.f32 %v2850, 1.442695
    %v2896 = vpow.pop %v2895
    %v2897 = vmul.f32 %v2851, 1.442695
    %v2898 = vpow.pop %v2897
    %v2899 = vmul.f32 %v2852, 1.442695
    %v2900 = vpow.pop %v2899
    %v2901 = vadd.f32 %v2854, 1.0
    %v2902 = vadd.f32 %v2856, 1.0
    %v2903 = vadd.f32 %v2858, 1.0
    %v2904 = vadd.f32 %v2860, 1.0
    %v2905 = vadd.f32 %v2862, 1.0
    %v2906 = vadd.f32 %v2864, 1.0
    %v2907 = vadd.f32 %v2866, 1.0
    %v2908 = vadd.f32 %v2868, 1.0
    %v2909 = vadd.f32 %v2870, 1.0
    %v2910 = vadd.f32 %v2872, 1.0
    %v2911 = vadd.f32 %v2874, 1.0
    %v2912 = vadd.f32 %v2876, 1.0
    %v2913 = vadd.f32 %v2878, 1.0
    %v2914 = vadd.f32 %v2880, 1.0
    %v2915 = vadd.f32 %v2882, 1.0
    %v2916 = vadd.f32 %v2884, 1.0
    %v2917 = vadd.f32 %v2886, 1.0
    %v2918 = vadd.f32 %v2888, 1.0
    %v2919 = vadd.f32 %v2890, 1.0
    %v2920 = vadd.f32 %v2892, 1.0
    %v2921 = vadd.f32 %v2894, 1.0
    %v2922 = vadd.f32 %v2896, 1.0
    %v2923 = vadd.f32 %v2898, 1.0
    %v2924 = vadd.f32 %v2900, 1.0
    %v2925 = vrcp.pop %v2901
    %v2926 = vmul.f32 %v2901, %v2925
    %v2927 = vsub.f32 1.0, %v2926
    %v2928 = vmul.f32 %v2925, %v2927
    %v2929 = vadd.f32 %v2925, %v2928
    %vm2930 = vweird.f32 %v2901
    %vm2931 = vweird.f32 %v2925
    %vm2932 = vmor %vm2930, %vm2931
    %v2933 = vsel %vm2932, %v2925, %v2929
    %v2934 = vand.u32 2147483647, %v2901
    %vm2935 = vcmp.eq.f32.partialorder %v2934, 8.507059e+37
    %v2936 = vand.u32 %v2901, 2147483648
    %v2937 = vor.u32 1.1754944e-38, %v2936
    %v2938 = vsel %vm2935, %v2937, %v2933
    %v2939 = vmul.f32 1.0, %v2938
    %v2940 = vrcp.pop %v2902
    %v2941 = vmul.f32 %v2902, %v2940
    %v2942 = vsub.f32 1.0, %v2941
    %v2943 = vmul.f32 %v2940, %v2942
    %v2944 = vadd.f32 %v2940, %v2943
    %vm2945 = vweird.f32 %v2902
    %vm2946 = vweird.f32 %v2940
    %vm2947 = vmor %vm2945, %vm2946
    %v2948 = vsel %vm2947, %v2940, %v2944
    %v2949 = vand.u32 2147483647, %v2902
    %vm2950 = vcmp.eq.f32.partialorder %v2949, 8.507059e+37
    %v2951 = vand.u32 %v2902, 2147483648
    %v2952 = vor.u32 1.1754944e-38, %v2951
    %v2953 = vsel %vm2950, %v2952, %v2948
    %v2954 = vmul.f32 1.0, %v2953
    %v2955 = vrcp.pop %v2903
    %v2956 = vmul.f32 %v2903, %v2955
    %v2957 = vsub.f32 1.0, %v2956
    %v2958 = vmul.f32 %v2955, %v2957
    %v2959 = vadd.f32 %v2955, %v2958
    %vm2960 = vweird.f32 %v2903
    %vm2961 = vweird.f32 %v2955
    %vm2962 = vmor %vm2960, %vm2961
    %v2963 = vsel %vm2962, %v2955, %v2959
    %v2964 = vand.u32 2147483647, %v2903
    %vm2965 = vcmp.eq.f32.partialorder %v2964, 8.507059e+37
    %v2966 = vand.u32 %v2903, 2147483648
    %v2967 = vor.u32 1.1754944e-38, %v2966
    %v2968 = vsel %vm2965, %v2967, %v2963
    %v2969 = vmul.f32 1.0, %v2968
    %v2970 = vrcp.pop %v2904
    %v2971 = vmul.f32 %v2904, %v2970
    %v2972 = vsub.f32 1.0, %v2971
    %v2973 = vmul.f32 %v2970, %v2972
    %v2974 = vadd.f32 %v2970, %v2973
    %vm2975 = vweird.f32 %v2904
    %vm2976 = vweird.f32 %v2970
    %vm2977 = vmor %vm2975, %vm2976
    %v2978 = vsel %vm2977, %v2970, %v2974
    %v2979 = vand.u32 2147483647, %v2904
    %vm2980 = vcmp.eq.f32.partialorder %v2979, 8.507059e+37
    %v2981 = vand.u32 %v2904, 2147483648
    %v2982 = vor.u32 1.1754944e-38, %v2981
    %v2983 = vsel %vm2980, %v2982, %v2978
    %v2984 = vmul.f32 1.0, %v2983
    %v2985 = vrcp.pop %v2905
    %v2986 = vmul.f32 %v2905, %v2985
    %v2987 = vsub.f32 1.0, %v2986
    %v2988 = vmul.f32 %v2985, %v2987
    %v2989 = vadd.f32 %v2985, %v2988
    %vm2990 = vweird.f32 %v2905
    %vm2991 = vweird.f32 %v2985
    %vm2992 = vmor %vm2990, %vm2991
    %v2993 = vsel %vm2992, %v2985, %v2989
    %v2994 = vand.u32 2147483647, %v2905
    %vm2995 = vcmp.eq.f32.partialorder %v2994, 8.507059e+37
    %v2996 = vand.u32 %v2905, 2147483648
    %v2997 = vor.u32 1.1754944e-38, %v2996
    %v2998 = vsel %vm2995, %v2997, %v2993
    %v2999 = vmul.f32 1.0, %v2998
    %v3000 = vrcp.pop %v2906
    %v3001 = vmul.f32 %v2906, %v3000
    %v3002 = vsub.f32 1.0, %v3001
    %v3003 = vmul.f32 %v3000, %v3002
    %v3004 = vadd.f32 %v3000, %v3003
    %vm3005 = vweird.f32 %v2906
    %vm3006 = vweird.f32 %v3000
    %vm3007 = vmor %vm3005, %vm3006
    %v3008 = vsel %vm3007, %v3000, %v3004
    %v3009 = vand.u32 2147483647, %v2906
    %vm3010 = vcmp.eq.f32.partialorder %v3009, 8.507059e+37
    %v3011 = vand.u32 %v2906, 2147483648
    %v3012 = vor.u32 1.1754944e-38, %v3011
    %v3013 = vsel %vm3010, %v3012, %v3008
    %v3014 = vmul.f32 1.0, %v3013
    %v3015 = vrcp.pop %v2907
    %v3016 = vmul.f32 %v2907, %v3015
    %v3017 = vsub.f32 1.0, %v3016
    %v3018 = vmul.f32 %v3015, %v3017
    %v3019 = vadd.f32 %v3015, %v3018
    %vm3020 = vweird.f32 %v2907
    %vm3021 = vweird.f32 %v3015
    %vm3022 = vmor %vm3020, %vm3021
    %v3023 = vsel %vm3022, %v3015, %v3019
    %v3024 = vand.u32 2147483647, %v2907
    %vm3025 = vcmp.eq.f32.partialorder %v3024, 8.507059e+37
    %v3026 = vand.u32 %v2907, 2147483648
    %v3027 = vor.u32 1.1754944e-38, %v3026
    %v3028 = vsel %vm3025, %v3027, %v3023
    %v3029 = vmul.f32 1.0, %v3028
    %v3030 = vrcp.pop %v2908
    %v3031 = vmul.f32 %v2908, %v3030
    %v3032 = vsub.f32 1.0, %v3031
    %v3033 = vmul.f32 %v3030, %v3032
    %v3034 = vadd.f32 %v3030, %v3033
    %vm3035 = vweird.f32 %v2908
    %vm3036 = vweird.f32 %v3030
    %vm3037 = vmor %vm3035, %vm3036
    %v3038 = vsel %vm3037, %v3030, %v3034
    %v3039 = vand.u32 2147483647, %v2908
    %vm3040 = vcmp.eq.f32.partialorder %v3039, 8.507059e+37
    %v3041 = vand.u32 %v2908, 2147483648
    %v3042 = vor.u32 1.1754944e-38, %v3041
    %v3043 = vsel %vm3040, %v3042, %v3038
    %v3044 = vmul.f32 1.0, %v3043
    %v3045 = vrcp.pop %v2909
    %v3046 = vmul.f32 %v2909, %v3045
    %v3047 = vsub.f32 1.0, %v3046
    %v3048 = vmul.f32 %v3045, %v3047
    %v3049 = vadd.f32 %v3045, %v3048
    %vm3050 = vweird.f32 %v2909
    %vm3051 = vweird.f32 %v3045
    %vm3052 = vmor %vm3050, %vm3051
    %v3053 = vsel %vm3052, %v3045, %v3049
    %v3054 = vand.u32 2147483647, %v2909
    %vm3055 = vcmp.eq.f32.partialorder %v3054, 8.507059e+37
    %v3056 = vand.u32 %v2909, 2147483648
    %v3057 = vor.u32 1.1754944e-38, %v3056
    %v3058 = vsel %vm3055, %v3057, %v3053
    %v3059 = vmul.f32 1.0, %v3058
    %v3060 = vrcp.pop %v2910
    %v3061 = vmul.f32 %v2910, %v3060
    %v3062 = vsub.f32 1.0, %v3061
    %v3063 = vmul.f32 %v3060, %v3062
    %v3064 = vadd.f32 %v3060, %v3063
    %vm3065 = vweird.f32 %v2910
    %vm3066 = vweird.f32 %v3060
    %vm3067 = vmor %vm3065, %vm3066
    %v3068 = vsel %vm3067, %v3060, %v3064
    %v3069 = vand.u32 2147483647, %v2910
    %vm3070 = vcmp.eq.f32.partialorder %v3069, 8.507059e+37
    %v3071 = vand.u32 %v2910, 2147483648
    %v3072 = vor.u32 1.1754944e-38, %v3071
    %v3073 = vsel %vm3070, %v3072, %v3068
    %v3074 = vmul.f32 1.0, %v3073
    %v3075 = vrcp.pop %v2911
    %v3076 = vmul.f32 %v2911, %v3075
    %v3077 = vsub.f32 1.0, %v3076
    %v3078 = vmul.f32 %v3075, %v3077
    %v3079 = vadd.f32 %v3075, %v3078
    %vm3080 = vweird.f32 %v2911
    %vm3081 = vweird.f32 %v3075
    %vm3082 = vmor %vm3080, %vm3081
    %v3083 = vsel %vm3082, %v3075, %v3079
    %v3084 = vand.u32 2147483647, %v2911
    %vm3085 = vcmp.eq.f32.partialorder %v3084, 8.507059e+37
    %v3086 = vand.u32 %v2911, 2147483648
    %v3087 = vor.u32 1.1754944e-38, %v3086
    %v3088 = vsel %vm3085, %v3087, %v3083
    %v3089 = vmul.f32 1.0, %v3088
    %v3090 = vrcp.pop %v2912
    %v3091 = vmul.f32 %v2912, %v3090
    %v3092 = vsub.f32 1.0, %v3091
    %v3093 = vmul.f32 %v3090, %v3092
    %v3094 = vadd.f32 %v3090, %v3093
    %vm3095 = vweird.f32 %v2912
    %vm3096 = vweird.f32 %v3090
    %vm3097 = vmor %vm3095, %vm3096
    %v3098 = vsel %vm3097, %v3090, %v3094
    %v3099 = vand.u32 2147483647, %v2912
    %vm3100 = vcmp.eq.f32.partialorder %v3099, 8.507059e+37
    %v3101 = vand.u32 %v2912, 2147483648
    %v3102 = vor.u32 1.1754944e-38, %v3101
    %v3103 = vsel %vm3100, %v3102, %v3098
    %v3104 = vmul.f32 1.0, %v3103
    %v3105 = vrcp.pop %v2913
    %v3106 = vmul.f32 %v2913, %v3105
    %v3107 = vsub.f32 1.0, %v3106
    %v3108 = vmul.f32 %v3105, %v3107
    %v3109 = vadd.f32 %v3105, %v3108
    %vm3110 = vweird.f32 %v2913
    %vm3111 = vweird.f32 %v3105
    %vm3112 = vmor %vm3110, %vm3111
    %v3113 = vsel %vm3112, %v3105, %v3109
    %v3114 = vand.u32 2147483647, %v2913
    %vm3115 = vcmp.eq.f32.partialorder %v3114, 8.507059e+37
    %v3116 = vand.u32 %v2913, 2147483648
    %v3117 = vor.u32 1.1754944e-38, %v3116
    %v3118 = vsel %vm3115, %v3117, %v3113
    %v3119 = vmul.f32 1.0, %v3118
    %v3120 = vrcp.pop %v2914
    %v3121 = vmul.f32 %v2914, %v3120
    %v3122 = vsub.f32 1.0, %v3121
    %v3123 = vmul.f32 %v3120, %v3122
    %v3124 = vadd.f32 %v3120, %v3123
    %vm3125 = vweird.f32 %v2914
    %vm3126 = vweird.f32 %v3120
    %vm3127 = vmor %vm3125, %vm3126
    %v3128 = vsel %vm3127, %v3120, %v3124
    %v3129 = vand.u32 2147483647, %v2914
    %vm3130 = vcmp.eq.f32.partialorder %v3129, 8.507059e+37
    %v3131 = vand.u32 %v2914, 2147483648
    %v3132 = vor.u32 1.1754944e-38, %v3131
    %v3133 = vsel %vm3130, %v3132, %v3128
    %v3134 = vmul.f32 1.0, %v3133
    %v3135 = vrcp.pop %v2915
    %v3136 = vmul.f32 %v2915, %v3135
    %v3137 = vsub.f32 1.0, %v3136
    %v3138 = vmul.f32 %v3135, %v3137
    %v3139 = vadd.f32 %v3135, %v3138
    %vm3140 = vweird.f32 %v2915
    %vm3141 = vweird.f32 %v3135
    %vm3142 = vmor %vm3140, %vm3141
    %v3143 = vsel %vm3142, %v3135, %v3139
    %v3144 = vand.u32 2147483647, %v2915
    %vm3145 = vcmp.eq.f32.partialorder %v3144, 8.507059e+37
    %v3146 = vand.u32 %v2915, 2147483648
    %v3147 = vor.u32 1.1754944e-38, %v3146
    %v3148 = vsel %vm3145, %v3147, %v3143
    %v3149 = vmul.f32 1.0, %v3148
    %v3150 = vrcp.pop %v2916
    %v3151 = vmul.f32 %v2916, %v3150
    %v3152 = vsub.f32 1.0, %v3151
    %v3153 = vmul.f32 %v3150, %v3152
    %v3154 = vadd.f32 %v3150, %v3153
    %vm3155 = vweird.f32 %v2916
    %vm3156 = vweird.f32 %v3150
    %vm3157 = vmor %vm3155, %vm3156
    %v3158 = vsel %vm3157, %v3150, %v3154
    %v3159 = vand.u32 2147483647, %v2916
    %vm3160 = vcmp.eq.f32.partialorder %v3159, 8.507059e+37
    %v3161 = vand.u32 %v2916, 2147483648
    %v3162 = vor.u32 1.1754944e-38, %v3161
    %v3163 = vsel %vm3160, %v3162, %v3158
    %v3164 = vmul.f32 1.0, %v3163
    %v3165 = vrcp.pop %v2917
    %v3166 = vmul.f32 %v2917, %v3165
    %v3167 = vsub.f32 1.0, %v3166
    %v3168 = vmul.f32 %v3165, %v3167
    %v3169 = vadd.f32 %v3165, %v3168
    %vm3170 = vweird.f32 %v2917
    %vm3171 = vweird.f32 %v3165
    %vm3172 = vmor %vm3170, %vm3171
    %v3173 = vsel %vm3172, %v3165, %v3169
    %v3174 = vand.u32 2147483647, %v2917
    %vm3175 = vcmp.eq.f32.partialorder %v3174, 8.507059e+37
    %v3176 = vand.u32 %v2917, 2147483648
    %v3177 = vor.u32 1.1754944e-38, %v3176
    %v3178 = vsel %vm3175, %v3177, %v3173
    %v3179 = vmul.f32 1.0, %v3178
    %v3180 = vrcp.pop %v2918
    %v3181 = vmul.f32 %v2918, %v3180
    %v3182 = vsub.f32 1.0, %v3181
    %v3183 = vmul.f32 %v3180, %v3182
    %v3184 = vadd.f32 %v3180, %v3183
    %vm3185 = vweird.f32 %v2918
    %vm3186 = vweird.f32 %v3180
    %vm3187 = vmor %vm3185, %vm3186
    %v3188 = vsel %vm3187, %v3180, %v3184
    %v3189 = vand.u32 2147483647, %v2918
    %vm3190 = vcmp.eq.f32.partialorder %v3189, 8.507059e+37
    %v3191 = vand.u32 %v2918, 2147483648
    %v3192 = vor.u32 1.1754944e-38, %v3191
    %v3193 = vsel %vm3190, %v3192, %v3188
    %v3194 = vmul.f32 1.0, %v3193
    %v3195 = vrcp.pop %v2919
    %v3196 = vmul.f32 %v2919, %v3195
    %v3197 = vsub.f32 1.0, %v3196
    %v3198 = vmul.f32 %v3195, %v3197
    %v3199 = vadd.f32 %v3195, %v3198
    %vm3200 = vweird.f32 %v2919
    %vm3201 = vweird.f32 %v3195
    %vm3202 = vmor %vm3200, %vm3201
    %v3203 = vsel %vm3202, %v3195, %v3199
    %v3204 = vand.u32 2147483647, %v2919
    %vm3205 = vcmp.eq.f32.partialorder %v3204, 8.507059e+37
    %v3206 = vand.u32 %v2919, 2147483648
    %v3207 = vor.u32 1.1754944e-38, %v3206
    %v3208 = vsel %vm3205, %v3207, %v3203
    %v3209 = vmul.f32 1.0, %v3208
    %v3210 = vrcp.pop %v2920
    %v3211 = vmul.f32 %v2920, %v3210
    %v3212 = vsub.f32 1.0, %v3211
    %v3213 = vmul.f32 %v3210, %v3212
    %v3214 = vadd.f32 %v3210, %v3213
    %vm3215 = vweird.f32 %v2920
    %vm3216 = vweird.f32 %v3210
    %vm3217 = vmor %vm3215, %vm3216
    %v3218 = vsel %vm3217, %v3210, %v3214
    %v3219 = vand.u32 2147483647, %v2920
    %vm3220 = vcmp.eq.f32.partialorder %v3219, 8.507059e+37
    %v3221 = vand.u32 %v2920, 2147483648
    %v3222 = vor.u32 1.1754944e-38, %v3221
    %v3223 = vsel %vm3220, %v3222, %v3218
    %v3224 = vmul.f32 1.0, %v3223
    %v3225 = vrcp.pop %v2921
    %v3226 = vmul.f32 %v2921, %v3225
    %v3227 = vsub.f32 1.0, %v3226
    %v3228 = vmul.f32 %v3225, %v3227
    %v3229 = vadd.f32 %v3225, %v3228
    %vm3230 = vweird.f32 %v2921
    %vm3231 = vweird.f32 %v3225
    %vm3232 = vmor %vm3230, %vm3231
    %v3233 = vsel %vm3232, %v3225, %v3229
    %v3234 = vand.u32 2147483647, %v2921
    %vm3235 = vcmp.eq.f32.partialorder %v3234, 8.507059e+37
    %v3236 = vand.u32 %v2921, 2147483648
    %v3237 = vor.u32 1.1754944e-38, %v3236
    %v3238 = vsel %vm3235, %v3237, %v3233
    %v3239 = vmul.f32 1.0, %v3238
    %v3240 = vrcp.pop %v2922
    %v3241 = vmul.f32 %v2922, %v3240
    %v3242 = vsub.f32 1.0, %v3241
    %v3243 = vmul.f32 %v3240, %v3242
    %v3244 = vadd.f32 %v3240, %v3243
    %vm3245 = vweird.f32 %v2922
    %vm3246 = vweird.f32 %v3240
    %vm3247 = vmor %vm3245, %vm3246
    %v3248 = vsel %vm3247, %v3240, %v3244
    %v3249 = vand.u32 2147483647, %v2922
    %vm3250 = vcmp.eq.f32.partialorder %v3249, 8.507059e+37
    %v3251 = vand.u32 %v2922, 2147483648
    %v3252 = vor.u32 1.1754944e-38, %v3251
    %v3253 = vsel %vm3250, %v3252, %v3248
    %v3254 = vmul.f32 1.0, %v3253
    %v3255 = vrcp.pop %v2923
    %v3256 = vmul.f32 %v2923, %v3255
    %v3257 = vsub.f32 1.0, %v3256
    %v3258 = vmul.f32 %v3255, %v3257
    %v3259 = vadd.f32 %v3255, %v3258
    %vm3260 = vweird.f32 %v2923
    %vm3261 = vweird.f32 %v3255
    %vm3262 = vmor %vm3260, %vm3261
    %v3263 = vsel %vm3262, %v3255, %v3259
    %v3264 = vand.u32 2147483647, %v2923
    %vm3265 = vcmp.eq.f32.partialorder %v3264, 8.507059e+37
    %v3266 = vand.u32 %v2923, 2147483648
    %v3267 = vor.u32 1.1754944e-38, %v3266
    %v3268 = vsel %vm3265, %v3267, %v3263
    %v3269 = vmul.f32 1.0, %v3268
    %v3270 = vrcp.pop %v2924
    %v3271 = vmul.f32 %v2924, %v3270
    %v3272 = vsub.f32 1.0, %v3271
    %v3273 = vmul.f32 %v3270, %v3272
    %v3274 = vadd.f32 %v3270, %v3273
    %vm3275 = vweird.f32 %v2924
    %vm3276 = vweird.f32 %v3270
    %vm3277 = vmor %vm3275, %vm3276
    %v3278 = vsel %vm3277, %v3270, %v3274
    %v3279 = vand.u32 2147483647, %v2924
    %vm3280 = vcmp.eq.f32.partialorder %v3279, 8.507059e+37
    %v3281 = vand.u32 %v2924, 2147483648
    %v3282 = vor.u32 1.1754944e-38, %v3281
    %v3283 = vsel %vm3280, %v3282, %v3278
    %v3284 = vmul.f32 1.0, %v3283
    %v3285 = vtanh.pop %v2264
    %v3286 = vtanh.pop %v2268
    %v3287 = vtanh.pop %v2272
    %v3288 = vtanh.pop %v2276
    %v3289 = vtanh.pop %v2280
    %v3290 = vtanh.pop %v2284
    %v3291 = vtanh.pop %v2288
    %v3292 = vtanh.pop %v2292
    %v3293 = vmul.f32 %v2954, 0.0
    %v3294 = vmul.f32 %v2999, 0.0
    %v3295 = vmul.f32 %v3044, 0.0
    %v3296 = vmul.f32 %v3089, 0.0
    %v3297 = vmul.f32 %v3134, 0.0
    %v3298 = vmul.f32 %v3179, 0.0
    %v3299 = vmul.f32 %v3224, 0.0
    %v3300 = vmul.f32 %v3269, 0.0
    %v3301 = vmul.f32 %v2939, %v3285
    %v3302 = vmul.f32 %v2984, %v3286
    %v3303 = vmul.f32 %v3029, %v3287
    %v3304 = vmul.f32 %v3074, %v3288
    %v3305 = vmul.f32 %v3119, %v3289
    %v3306 = vmul.f32 %v3164, %v3290
    %v3307 = vmul.f32 %v3209, %v3291
    %v3308 = vmul.f32 %v3254, %v3292
    %v3309 = vadd.f32 %v3293, %v3301
    %v3310 = vadd.f32 %v3294, %v3302
    %v3311 = vadd.f32 %v3295, %v3303
    %v3312 = vadd.f32 %v3296, %v3304
    %v3313 = vadd.f32 %v3297, %v3305
    %v3314 = vadd.f32 %v3298, %v3306
    %v3315 = vadd.f32 %v3299, %v3307
    %v3316 = vadd.f32 %v3300, %v3308
    %v3317 = vtanh.pop %v3309
    %v3318 = vtanh.pop %v3310
    %v3319 = vtanh.pop %v3311
    %v3320 = vtanh.pop %v3312
    %v3321 = vtanh.pop %v3313
    %v3322 = vtanh.pop %v3314
    %v3323 = vtanh.pop %v3315
    %v3324 = vtanh.pop %v3316
    %v3325 = vmul.f32 %v2969, %v3317
    %v3326 = vmul.f32 %v3014, %v3318
    %v3327 = vmul.f32 %v3059, %v3319
    %v3328 = vmul.f32 %v3104, %v3320
    %v3329 = vmul.f32 %v3149, %v3321
    %v3330 = vmul.f32 %v3194, %v3322
    %v3331 = vmul.f32 %v3239, %v3323
    %v3332 = vmul.f32 %v3284, %v3324
    %3333 = vst [vmem:[#allocation3] sm:$0xff] %v3325
    %3334 = vst [vmem:[#allocation3 + $0x8] sm:$0xff] %v3326
    %3335 = vst [vmem:[#allocation3 + $0x10] sm:$0xff] %v3327
    %3336 = vst [vmem:[#allocation3 + $0x18] sm:$0xff] %v3328
    %3337 = vst [vmem:[#allocation3 + $0x20] sm:$0xff] %v3329
    %3338 = vst [vmem:[#allocation3 + $0x28] sm:$0xff] %v3330
    %3339 = vst [vmem:[#allocation3 + $0x30] sm:$0xff] %v3331
    %3340 = vst [vmem:[#allocation3 + $0x38] sm:$0xff] %v3332
    %v3341 = vpack.c.bf16 %v2822, %v2821
    %v3342 = vpack.c.bf16 %v3326, %v3325
    %v3343 = vpack.c.bf16 %v2824, %v2823
    %v3344 = vpack.c.bf16 %v3328, %v3327
    %v3345 = vpack.c.bf16 %v2826, %v2825
    %v3346 = vpack.c.bf16 %v3330, %v3329
    %v3347 = vpack.c.bf16 %v2828, %v2827
    %v3348 = vpack.c.bf16 %v3332, %v3331
    %v3349 = vld [vmem:[#allocation9] sm:$0xff]
    %v3350 = vld [vmem:[#allocation9 + $0x8] sm:$0xff]
    %v3351 = vld [vmem:[#allocation9 + $0x10] sm:$0xff]
    %v3352 = vld [vmem:[#allocation9 + $0x18] sm:$0xff]
    %v3353 = vld [vmem:[#allocation9 + $0x20] sm:$0xff]
    %v3354 = vld [vmem:[#allocation9 + $0x28] sm:$0xff]
    %v3355 = vld [vmem:[#allocation9 + $0x30] sm:$0xff]
    %v3356 = vld [vmem:[#allocation9 + $0x38] sm:$0xff]
    %v3357 = vld [vmem:[#allocation9 + $0x40] sm:$0xff]
    %v3358 = vld [vmem:[#allocation9 + $0x48] sm:$0xff]
    %v3359 = vld [vmem:[#allocation9 + $0x50] sm:$0xff]
    %v3360 = vld [vmem:[#allocation9 + $0x58] sm:$0xff]
    %v3361 = vld [vmem:[#allocation9 + $0x60] sm:$0xff]
    %v3362 = vld [vmem:[#allocation9 + $0x68] sm:$0xff]
    %v3363 = vld [vmem:[#allocation9 + $0x70] sm:$0xff]
    %v3364 = vld [vmem:[#allocation9 + $0x78] sm:$0xff]
    %v3365 = vld [vmem:[#allocation9 + $0x80] sm:$0xff]
    %v3366 = vld [vmem:[#allocation9 + $0x88] sm:$0xff]
    %v3367 = vld [vmem:[#allocation9 + $0x90] sm:$0xff]
    %v3368 = vld [vmem:[#allocation9 + $0x98] sm:$0xff]
    %v3369 = vld [vmem:[#allocation9 + $0xa0] sm:$0xff]
    %v3370 = vld [vmem:[#allocation9 + $0xa8] sm:$0xff]
    %v3371 = vld [vmem:[#allocation9 + $0xb0] sm:$0xff]
    %v3372 = vld [vmem:[#allocation9 + $0xb8] sm:$0xff]
    %v3373 = vld [vmem:[#allocation9 + $0xc0] sm:$0xff]
    %v3374 = vld [vmem:[#allocation9 + $0xc8] sm:$0xff]
    %v3375 = vld [vmem:[#allocation9 + $0xd0] sm:$0xff]
    %v3376 = vld [vmem:[#allocation9 + $0xd8] sm:$0xff]
    %v3377 = vld [vmem:[#allocation9 + $0xe0] sm:$0xff]
    %v3378 = vld [vmem:[#allocation9 + $0xe8] sm:$0xff]
    %v3379 = vld [vmem:[#allocation9 + $0xf0] sm:$0xff]
    %v3380 = vld [vmem:[#allocation9 + $0xf8] sm:$0xff]
    %v3381 = vld [vmem:[#allocation9 + $0x100] sm:$0xff]
    %v3382 = vld [vmem:[#allocation9 + $0x108] sm:$0xff]
    %v3383 = vld [vmem:[#allocation9 + $0x110] sm:$0xff]
    %v3384 = vld [vmem:[#allocation9 + $0x118] sm:$0xff]
    %v3385 = vld [vmem:[#allocation9 + $0x120] sm:$0xff]
    %v3386 = vld [vmem:[#allocation9 + $0x128] sm:$0xff]
    %v3387 = vld [vmem:[#allocation9 + $0x130] sm:$0xff]
    %v3388 = vld [vmem:[#allocation9 + $0x138] sm:$0xff]
    %v3389 = vld [vmem:[#allocation9 + $0x140] sm:$0xff]
    %v3390 = vld [vmem:[#allocation9 + $0x148] sm:$0xff]
    %v3391 = vld [vmem:[#allocation9 + $0x150] sm:$0xff]
    %v3392 = vld [vmem:[#allocation9 + $0x158] sm:$0xff]
    %v3393 = vld [vmem:[#allocation9 + $0x160] sm:$0xff]
    %v3394 = vld [vmem:[#allocation9 + $0x168] sm:$0xff]
    %v3395 = vld [vmem:[#allocation9 + $0x170] sm:$0xff]
    %v3396 = vld [vmem:[#allocation9 + $0x178] sm:$0xff]
    %v3397 = vld [vmem:[#allocation9 + $0x180] sm:$0xff]
    %v3398 = vld [vmem:[#allocation9 + $0x188] sm:$0xff]
    %v3399 = vld [vmem:[#allocation9 + $0x190] sm:$0xff]
    %v3400 = vld [vmem:[#allocation9 + $0x198] sm:$0xff]
    %v3401 = vld [vmem:[#allocation9 + $0x1a0] sm:$0xff]
    %v3402 = vld [vmem:[#allocation9 + $0x1a8] sm:$0xff]
    %v3403 = vld [vmem:[#allocation9 + $0x1b0] sm:$0xff]
    %v3404 = vld [vmem:[#allocation9 + $0x1b8] sm:$0xff]
    %v3405 = vld [vmem:[#allocation9 + $0x1c0] sm:$0xff]
    %v3406 = vld [vmem:[#allocation9 + $0x1c8] sm:$0xff]
    %v3407 = vld [vmem:[#allocation9 + $0x1d0] sm:$0xff]
    %v3408 = vld [vmem:[#allocation9 + $0x1d8] sm:$0xff]
    %v3409 = vld [vmem:[#allocation9 + $0x1e0] sm:$0xff]
    %v3410 = vld [vmem:[#allocation9 + $0x1e8] sm:$0xff]
    %v3411 = vld [vmem:[#allocation9 + $0x1f0] sm:$0xff]
    %v3412 = vld [vmem:[#allocation9 + $0x1f8] sm:$0xff]
    %v3413 = vld [vmem:[#allocation9 + $0x200] sm:$0xff]
    %v3414 = vld [vmem:[#allocation9 + $0x208] sm:$0xff]
    %v3415 = vld [vmem:[#allocation9 + $0x210] sm:$0xff]
    %v3416 = vld [vmem:[#allocation9 + $0x218] sm:$0xff]
    %v3417 = vld [vmem:[#allocation9 + $0x220] sm:$0xff]
    %v3418 = vld [vmem:[#allocation9 + $0x228] sm:$0xff]
    %v3419 = vld [vmem:[#allocation9 + $0x230] sm:$0xff]
    %v3420 = vld [vmem:[#allocation9 + $0x238] sm:$0xff]
    %v3421 = vld [vmem:[#allocation9 + $0x240] sm:$0xff]
    %v3422 = vld [vmem:[#allocation9 + $0x248] sm:$0xff]
    %v3423 = vld [vmem:[#allocation9 + $0x250] sm:$0xff]
    %v3424 = vld [vmem:[#allocation9 + $0x258] sm:$0xff]
    %v3425 = vld [vmem:[#allocation9 + $0x260] sm:$0xff]
    %v3426 = vld [vmem:[#allocation9 + $0x268] sm:$0xff]
    %v3427 = vld [vmem:[#allocation9 + $0x270] sm:$0xff]
    %v3428 = vld [vmem:[#allocation9 + $0x278] sm:$0xff]
    %v3429 = vld [vmem:[#allocation9 + $0x280] sm:$0xff]
    %v3430 = vld [vmem:[#allocation9 + $0x288] sm:$0xff]
    %v3431 = vld [vmem:[#allocation9 + $0x290] sm:$0xff]
    %v3432 = vld [vmem:[#allocation9 + $0x298] sm:$0xff]
    %v3433 = vld [vmem:[#allocation9 + $0x2a0] sm:$0xff]
    %v3434 = vld [vmem:[#allocation9 + $0x2a8] sm:$0xff]
    %v3435 = vld [vmem:[#allocation9 + $0x2b0] sm:$0xff]
    %v3436 = vld [vmem:[#allocation9 + $0x2b8] sm:$0xff]
    %v3437 = vld [vmem:[#allocation9 + $0x2c0] sm:$0xff]
    %v3438 = vld [vmem:[#allocation9 + $0x2c8] sm:$0xff]
    %v3439 = vld [vmem:[#allocation9 + $0x2d0] sm:$0xff]
    %v3440 = vld [vmem:[#allocation9 + $0x2d8] sm:$0xff]
    %v3441 = vld [vmem:[#allocation9 + $0x2e0] sm:$0xff]
    %v3442 = vld [vmem:[#allocation9 + $0x2e8] sm:$0xff]
    %v3443 = vld [vmem:[#allocation9 + $0x2f0] sm:$0xff]
    %v3444 = vld [vmem:[#allocation9 + $0x2f8] sm:$0xff]
    %v3445 = vld [vmem:[#allocation9 + $0x300] sm:$0xff]
    %v3446 = vld [vmem:[#allocation9 + $0x308] sm:$0xff]
    %v3447 = vld [vmem:[#allocation9 + $0x310] sm:$0xff]
    %v3448 = vld [vmem:[#allocation9 + $0x318] sm:$0xff]
    %v3449 = vld [vmem:[#allocation9 + $0x320] sm:$0xff]
    %v3450 = vld [vmem:[#allocation9 + $0x328] sm:$0xff]
    %v3451 = vld [vmem:[#allocation9 + $0x330] sm:$0xff]
    %v3452 = vld [vmem:[#allocation9 + $0x338] sm:$0xff]
    %v3453 = vld [vmem:[#allocation9 + $0x340] sm:$0xff]
    %v3454 = vld [vmem:[#allocation9 + $0x348] sm:$0xff]
    %v3455 = vld [vmem:[#allocation9 + $0x350] sm:$0xff]
    %v3456 = vld [vmem:[#allocation9 + $0x358] sm:$0xff]
    %v3457 = vld [vmem:[#allocation9 + $0x360] sm:$0xff]
    %v3458 = vld [vmem:[#allocation9 + $0x368] sm:$0xff]
    %v3459 = vld [vmem:[#allocation9 + $0x370] sm:$0xff]
    %v3460 = vld [vmem:[#allocation9 + $0x378] sm:$0xff]
    %v3461 = vld [vmem:[#allocation9 + $0x380] sm:$0xff]
    %v3462 = vld [vmem:[#allocation9 + $0x388] sm:$0xff]
    %v3463 = vld [vmem:[#allocation9 + $0x390] sm:$0xff]
    %v3464 = vld [vmem:[#allocation9 + $0x398] sm:$0xff]
    %v3465 = vld [vmem:[#allocation9 + $0x3a0] sm:$0xff]
    %v3466 = vld [vmem:[#allocation9 + $0x3a8] sm:$0xff]
    %v3467 = vld [vmem:[#allocation9 + $0x3b0] sm:$0xff]
    %v3468 = vld [vmem:[#allocation9 + $0x3b8] sm:$0xff]
    %v3469 = vld [vmem:[#allocation9 + $0x3c0] sm:$0xff]
    %v3470 = vld [vmem:[#allocation9 + $0x3c8] sm:$0xff]
    %v3471 = vld [vmem:[#allocation9 + $0x3d0] sm:$0xff]
    %v3472 = vld [vmem:[#allocation9 + $0x3d8] sm:$0xff]
    %v3473 = vld [vmem:[#allocation9 + $0x3e0] sm:$0xff]
    %v3474 = vld [vmem:[#allocation9 + $0x3e8] sm:$0xff]
    %v3475 = vld [vmem:[#allocation9 + $0x3f0] sm:$0xff]
    %v3476 = vld [vmem:[#allocation9 + $0x3f8] sm:$0xff]
    %v3605 = vunpack.c.l.b16 %v3349
    %v3606 = vunpack.c.h.b16 %v3349
    %v3607 = vunpack.c.l.b16 %v3350
    %v3608 = vunpack.c.h.b16 %v3350
    %v3609 = vunpack.c.l.b16 %v3351
    %v3610 = vunpack.c.h.b16 %v3351
    %v3611 = vunpack.c.l.b16 %v3352
    %v3612 = vunpack.c.h.b16 %v3352
    %v3613 = vunpack.c.l.b16 %v3353
    %v3614 = vunpack.c.h.b16 %v3353
    %v3615 = vunpack.c.l.b16 %v3354
    %v3616 = vunpack.c.h.b16 %v3354
    %v3617 = vunpack.c.l.b16 %v3355
    %v3618 = vunpack.c.h.b16 %v3355
    %v3619 = vunpack.c.l.b16 %v3356
    %v3620 = vunpack.c.h.b16 %v3356
    %v3621 = vunpack.c.l.b16 %v3357
    %v3622 = vunpack.c.h.b16 %v3357
    %v3623 = vunpack.c.l.b16 %v3358
    %v3624 = vunpack.c.h.b16 %v3358
    %v3625 = vunpack.c.l.b16 %v3359
    %v3626 = vunpack.c.h.b16 %v3359
    %v3627 = vunpack.c.l.b16 %v3360
    %v3628 = vunpack.c.h.b16 %v3360
    %v3629 = vunpack.c.l.b16 %v3361
    %v3630 = vunpack.c.h.b16 %v3361
    %v3631 = vunpack.c.l.b16 %v3362
    %v3632 = vunpack.c.h.b16 %v3362
    %v3633 = vunpack.c.l.b16 %v3363
    %v3634 = vunpack.c.h.b16 %v3363
    %v3635 = vunpack.c.l.b16 %v3364
    %v3636 = vunpack.c.h.b16 %v3364
    %v3637 = vunpack.c.l.b16 %v3365
    %v3638 = vunpack.c.h.b16 %v3365
    %v3639 = vunpack.c.l.b16 %v3366
    %v3640 = vunpack.c.h.b16 %v3366
    %v3641 = vunpack.c.l.b16 %v3367
    %v3642 = vunpack.c.h.b16 %v3367
    %v3643 = vunpack.c.l.b16 %v3368
    %v3644 = vunpack.c.h.b16 %v3368
    %v3645 = vunpack.c.l.b16 %v3369
    %v3646 = vunpack.c.h.b16 %v3369
    %v3647 = vunpack.c.l.b16 %v3370
    %v3648 = vunpack.c.h.b16 %v3370
    %v3649 = vunpack.c.l.b16 %v3371
    %v3650 = vunpack.c.h.b16 %v3371
    %v3651 = vunpack.c.l.b16 %v3372
    %v3652 = vunpack.c.h.b16 %v3372
    %v3653 = vunpack.c.l.b16 %v3373
    %v3654 = vunpack.c.h.b16 %v3373
    %v3655 = vunpack.c.l.b16 %v3374
    %v3656 = vunpack.c.h.b16 %v3374
    %v3657 = vunpack.c.l.b16 %v3375
    %v3658 = vunpack.c.h.b16 %v3375
    %v3659 = vunpack.c.l.b16 %v3376
    %v3660 = vunpack.c.h.b16 %v3376
    %v3661 = vunpack.c.l.b16 %v3377
    %v3662 = vunpack.c.h.b16 %v3377
    %v3663 = vunpack.c.l.b16 %v3378
    %v3664 = vunpack.c.h.b16 %v3378
    %v3665 = vunpack.c.l.b16 %v3379
    %v3666 = vunpack.c.h.b16 %v3379
    %v3667 = vunpack.c.l.b16 %v3380
    %v3668 = vunpack.c.h.b16 %v3380
    %v3669 = vunpack.c.l.b16 %v3381
    %v3670 = vunpack.c.h.b16 %v3381
    %v3671 = vunpack.c.l.b16 %v3382
    %v3672 = vunpack.c.h.b16 %v3382
    %v3673 = vunpack.c.l.b16 %v3383
    %v3674 = vunpack.c.h.b16 %v3383
    %v3675 = vunpack.c.l.b16 %v3384
    %v3676 = vunpack.c.h.b16 %v3384
    %v3677 = vunpack.c.l.b16 %v3385
    %v3678 = vunpack.c.h.b16 %v3385
    %v3679 = vunpack.c.l.b16 %v3386
    %v3680 = vunpack.c.h.b16 %v3386
    %v3681 = vunpack.c.l.b16 %v3387
    %v3682 = vunpack.c.h.b16 %v3387
    %v3683 = vunpack.c.l.b16 %v3388
    %v3684 = vunpack.c.h.b16 %v3388
    %v3685 = vunpack.c.l.b16 %v3389
    %v3686 = vunpack.c.h.b16 %v3389
    %v3687 = vunpack.c.l.b16 %v3390
    %v3688 = vunpack.c.h.b16 %v3390
    %v3689 = vunpack.c.l.b16 %v3391
    %v3690 = vunpack.c.h.b16 %v3391
    %v3691 = vunpack.c.l.b16 %v3392
    %v3692 = vunpack.c.h.b16 %v3392
    %v3693 = vunpack.c.l.b16 %v3393
    %v3694 = vunpack.c.h.b16 %v3393
    %v3695 = vunpack.c.l.b16 %v3394
    %v3696 = vunpack.c.h.b16 %v3394
    %v3697 = vunpack.c.l.b16 %v3395
    %v3698 = vunpack.c.h.b16 %v3395
    %v3699 = vunpack.c.l.b16 %v3396
    %v3700 = vunpack.c.h.b16 %v3396
    %v3701 = vunpack.c.l.b16 %v3397
    %v3702 = vunpack.c.h.b16 %v3397
    %v3703 = vunpack.c.l.b16 %v3398
    %v3704 = vunpack.c.h.b16 %v3398
    %v3705 = vunpack.c.l.b16 %v3399
    %v3706 = vunpack.c.h.b16 %v3399
    %v3707 = vunpack.c.l.b16 %v3400
    %v3708 = vunpack.c.h.b16 %v3400
    %v3709 = vunpack.c.l.b16 %v3401
    %v3710 = vunpack.c.h.b16 %v3401
    %v3711 = vunpack.c.l.b16 %v3402
    %v3712 = vunpack.c.h.b16 %v3402
    %v3713 = vunpack.c.l.b16 %v3403
    %v3714 = vunpack.c.h.b16 %v3403
    %v3715 = vunpack.c.l.b16 %v3404
    %v3716 = vunpack.c.h.b16 %v3404
    %v3717 = vunpack.c.l.b16 %v3405
    %v3718 = vunpack.c.h.b16 %v3405
    %v3719 = vunpack.c.l.b16 %v3406
    %v3720 = vunpack.c.h.b16 %v3406
    %v3721 = vunpack.c.l.b16 %v3407
    %v3722 = vunpack.c.h.b16 %v3407
    %v3723 = vunpack.c.l.b16 %v3408
    %v3724 = vunpack.c.h.b16 %v3408
    %v3725 = vunpack.c.l.b16 %v3409
    %v3726 = vunpack.c.h.b16 %v3409
    %v3727 = vunpack.c.l.b16 %v3410
    %v3728 = vunpack.c.h.b16 %v3410
    %v3729 = vunpack.c.l.b16 %v3411
    %v3730 = vunpack.c.h.b16 %v3411
    %v3731 = vunpack.c.l.b16 %v3412
    %v3732 = vunpack.c.h.b16 %v3412
    %v3733 = vunpack.c.l.b16 %v3413
    %v3734 = vunpack.c.h.b16 %v3413
    %v3735 = vunpack.c.l.b16 %v3414
    %v3736 = vunpack.c.h.b16 %v3414
    %v3737 = vunpack.c.l.b16 %v3415
    %v3738 = vunpack.c.h.b16 %v3415
    %v3739 = vunpack.c.l.b16 %v3416
    %v3740 = vunpack.c.h.b16 %v3416
    %v3741 = vunpack.c.l.b16 %v3417
    %v3742 = vunpack.c.h.b16 %v3417
    %v3743 = vunpack.c.l.b16 %v3418
    %v3744 = vunpack.c.h.b16 %v3418
    %v3745 = vunpack.c.l.b16 %v3419
    %v3746 = vunpack.c.h.b16 %v3419
    %v3747 = vunpack.c.l.b16 %v3420
    %v3748 = vunpack.c.h.b16 %v3420
    %v3749 = vunpack.c.l.b16 %v3421
    %v3750 = vunpack.c.h.b16 %v3421
    %v3751 = vunpack.c.l.b16 %v3422
    %v3752 = vunpack.c.h.b16 %v3422
    %v3753 = vunpack.c.l.b16 %v3423
    %v3754 = vunpack.c.h.b16 %v3423
    %v3755 = vunpack.c.l.b16 %v3424
    %v3756 = vunpack.c.h.b16 %v3424
    %v3757 = vunpack.c.l.b16 %v3425
    %v3758 = vunpack.c.h.b16 %v3425
    %v3759 = vunpack.c.l.b16 %v3426
    %v3760 = vunpack.c.h.b16 %v3426
    %v3761 = vunpack.c.l.b16 %v3427
    %v3762 = vunpack.c.h.b16 %v3427
    %v3763 = vunpack.c.l.b16 %v3428
    %v3764 = vunpack.c.h.b16 %v3428
    %v3765 = vunpack.c.l.b16 %v3429
    %v3766 = vunpack.c.h.b16 %v3429
    %v3767 = vunpack.c.l.b16 %v3430
    %v3768 = vunpack.c.h.b16 %v3430
    %v3769 = vunpack.c.l.b16 %v3431
    %v3770 = vunpack.c.h.b16 %v3431
    %v3771 = vunpack.c.l.b16 %v3432
    %v3772 = vunpack.c.h.b16 %v3432
    %v3773 = vunpack.c.l.b16 %v3433
    %v3774 = vunpack.c.h.b16 %v3433
    %v3775 = vunpack.c.l.b16 %v3434
    %v3776 = vunpack.c.h.b16 %v3434
    %v3777 = vunpack.c.l.b16 %v3435
    %v3778 = vunpack.c.h.b16 %v3435
    %v3779 = vunpack.c.l.b16 %v3436
    %v3780 = vunpack.c.h.b16 %v3436
    %v3781 = vunpack.c.l.b16 %v3437
    %v3782 = vunpack.c.h.b16 %v3437
    %v3783 = vunpack.c.l.b16 %v3438
    %v3784 = vunpack.c.h.b16 %v3438
    %v3785 = vunpack.c.l.b16 %v3439
    %v3786 = vunpack.c.h.b16 %v3439
    %v3787 = vunpack.c.l.b16 %v3440
    %v3788 = vunpack.c.h.b16 %v3440
    %v3789 = vunpack.c.l.b16 %v3441
    %v3790 = vunpack.c.h.b16 %v3441
    %v3791 = vunpack.c.l.b16 %v3442
    %v3792 = vunpack.c.h.b16 %v3442
    %v3793 = vunpack.c.l.b16 %v3443
    %v3794 = vunpack.c.h.b16 %v3443
    %v3795 = vunpack.c.l.b16 %v3444
    %v3796 = vunpack.c.h.b16 %v3444
    %v3797 = vunpack.c.l.b16 %v3445
    %v3798 = vunpack.c.h.b16 %v3445
    %v3799 = vunpack.c.l.b16 %v3446
    %v3800 = vunpack.c.h.b16 %v3446
    %v3801 = vunpack.c.l.b16 %v3447
    %v3802 = vunpack.c.h.b16 %v3447
    %v3803 = vunpack.c.l.b16 %v3448
    %v3804 = vunpack.c.h.b16 %v3448
    %v3805 = vunpack.c.l.b16 %v3449
    %v3806 = vunpack.c.h.b16 %v3449
    %v3807 = vunpack.c.l.b16 %v3450
    %v3808 = vunpack.c.h.b16 %v3450
    %v3809 = vunpack.c.l.b16 %v3451
    %v3810 = vunpack.c.h.b16 %v3451
    %v3811 = vunpack.c.l.b16 %v3452
    %v3812 = vunpack.c.h.b16 %v3452
    %v3813 = vunpack.c.l.b16 %v3453
    %v3814 = vunpack.c.h.b16 %v3453
    %v3815 = vunpack.c.l.b16 %v3454
    %v3816 = vunpack.c.h.b16 %v3454
    %v3817 = vunpack.c.l.b16 %v3455
    %v3818 = vunpack.c.h.b16 %v3455
    %v3819 = vunpack.c.l.b16 %v3456
    %v3820 = vunpack.c.h.b16 %v3456
    %v3821 = vunpack.c.l.b16 %v3457
    %v3822 = vunpack.c.h.b16 %v3457
    %v3823 = vunpack.c.l.b16 %v3458
    %v3824 = vunpack.c.h.b16 %v3458
    %v3825 = vunpack.c.l.b16 %v3459
    %v3826 = vunpack.c.h.b16 %v3459
    %v3827 = vunpack.c.l.b16 %v3460
    %v3828 = vunpack.c.h.b16 %v3460
    %v3829 = vunpack.c.l.b16 %v3461
    %v3830 = vunpack.c.h.b16 %v3461
    %v3831 = vunpack.c.l.b16 %v3462
    %v3832 = vunpack.c.h.b16 %v3462
    %v3833 = vunpack.c.l.b16 %v3463
    %v3834 = vunpack.c.h.b16 %v3463
    %v3835 = vunpack.c.l.b16 %v3464
    %v3836 = vunpack.c.h.b16 %v3464
    %v3837 = vunpack.c.l.b16 %v3465
    %v3838 = vunpack.c.h.b16 %v3465
    %v3839 = vunpack.c.l.b16 %v3466
    %v3840 = vunpack.c.h.b16 %v3466
    %v3841 = vunpack.c.l.b16 %v3467
    %v3842 = vunpack.c.h.b16 %v3467
    %v3843 = vunpack.c.l.b16 %v3468
    %v3844 = vunpack.c.h.b16 %v3468
    %v3845 = vunpack.c.l.b16 %v3469
    %v3846 = vunpack.c.h.b16 %v3469
    %v3847 = vunpack.c.l.b16 %v3470
    %v3848 = vunpack.c.h.b16 %v3470
    %v3849 = vunpack.c.l.b16 %v3471
    %v3850 = vunpack.c.h.b16 %v3471
    %v3851 = vunpack.c.l.b16 %v3472
    %v3852 = vunpack.c.h.b16 %v3472
    %v3853 = vunpack.c.l.b16 %v3473
    %v3854 = vunpack.c.h.b16 %v3473
    %v3855 = vunpack.c.l.b16 %v3474
    %v3856 = vunpack.c.h.b16 %v3474
    %v3857 = vunpack.c.l.b16 %v3475
    %v3858 = vunpack.c.h.b16 %v3475
    %v3859 = vunpack.c.l.b16 %v3476
    %v3860 = vunpack.c.h.b16 %v3476
    %v3861 = vpack.c.b16 %v3613, %v3605
    %v3862 = vpack.c.b16 %v3614, %v3606
    %v3863 = vpack.c.b16 %v3615, %v3607
    %v3864 = vpack.c.b16 %v3616, %v3608
    %v3865 = vpack.c.b16 %v3617, %v3609
    %v3866 = vpack.c.b16 %v3618, %v3610
    %v3867 = vpack.c.b16 %v3619, %v3611
    %v3868 = vpack.c.b16 %v3620, %v3612
    %v3869 = vpack.c.b16 %v3629, %v3621
    %v3870 = vpack.c.b16 %v3630, %v3622
    %v3871 = vpack.c.b16 %v3631, %v3623
    %v3872 = vpack.c.b16 %v3632, %v3624
    %v3873 = vpack.c.b16 %v3633, %v3625
    %v3874 = vpack.c.b16 %v3634, %v3626
    %v3875 = vpack.c.b16 %v3635, %v3627
    %v3876 = vpack.c.b16 %v3636, %v3628
    %v3877 = vpack.c.b16 %v3645, %v3637
    %v3878 = vpack.c.b16 %v3646, %v3638
    %v3879 = vpack.c.b16 %v3647, %v3639
    %v3880 = vpack.c.b16 %v3648, %v3640
    %v3881 = vpack.c.b16 %v3649, %v3641
    %v3882 = vpack.c.b16 %v3650, %v3642
    %v3883 = vpack.c.b16 %v3651, %v3643
    %v3884 = vpack.c.b16 %v3652, %v3644
    %v3885 = vpack.c.b16 %v3661, %v3653
    %v3886 = vpack.c.b16 %v3662, %v3654
    %v3887 = vpack.c.b16 %v3663, %v3655
    %v3888 = vpack.c.b16 %v3664, %v3656
    %v3889 = vpack.c.b16 %v3665, %v3657
    %v3890 = vpack.c.b16 %v3666, %v3658
    %v3891 = vpack.c.b16 %v3667, %v3659
    %v3892 = vpack.c.b16 %v3668, %v3660
    %v3893 = vpack.c.b16 %v3677, %v3669
    %v3894 = vpack.c.b16 %v3678, %v3670
    %v3895 = vpack.c.b16 %v3679, %v3671
    %v3896 = vpack.c.b16 %v3680, %v3672
    %v3897 = vpack.c.b16 %v3681, %v3673
    %v3898 = vpack.c.b16 %v3682, %v3674
    %v3899 = vpack.c.b16 %v3683, %v3675
    %v3900 = vpack.c.b16 %v3684, %v3676
    %v3901 = vpack.c.b16 %v3693, %v3685
    %v3902 = vpack.c.b16 %v3694, %v3686
    %v3903 = vpack.c.b16 %v3695, %v3687
    %v3904 = vpack.c.b16 %v3696, %v3688
    %v3905 = vpack.c.b16 %v3697, %v3689
    %v3906 = vpack.c.b16 %v3698, %v3690
    %v3907 = vpack.c.b16 %v3699, %v3691
    %v3908 = vpack.c.b16 %v3700, %v3692
    %v3909 = vpack.c.b16 %v3709, %v3701
    %v3910 = vpack.c.b16 %v3710, %v3702
    %v3911 = vpack.c.b16 %v3711, %v3703
    %v3912 = vpack.c.b16 %v3712, %v3704
    %v3913 = vpack.c.b16 %v3713, %v3705
    %v3914 = vpack.c.b16 %v3714, %v3706
    %v3915 = vpack.c.b16 %v3715, %v3707
    %v3916 = vpack.c.b16 %v3716, %v3708
    %v3917 = vpack.c.b16 %v3725, %v3717
    %v3918 = vpack.c.b16 %v3726, %v3718
    %v3919 = vpack.c.b16 %v3727, %v3719
    %v3920 = vpack.c.b16 %v3728, %v3720
    %v3921 = vpack.c.b16 %v3729, %v3721
    %v3922 = vpack.c.b16 %v3730, %v3722
    %v3923 = vpack.c.b16 %v3731, %v3723
    %v3924 = vpack.c.b16 %v3732, %v3724
    %v3925 = vpack.c.b16 %v3741, %v3733
    %v3926 = vpack.c.b16 %v3742, %v3734
    %v3927 = vpack.c.b16 %v3743, %v3735
    %v3928 = vpack.c.b16 %v3744, %v3736
    %v3929 = vpack.c.b16 %v3745, %v3737
    %v3930 = vpack.c.b16 %v3746, %v3738
    %v3931 = vpack.c.b16 %v3747, %v3739
    %v3932 = vpack.c.b16 %v3748, %v3740
    %v3933 = vpack.c.b16 %v3757, %v3749
    %v3934 = vpack.c.b16 %v3758, %v3750
    %v3935 = vpack.c.b16 %v3759, %v3751
    %v3936 = vpack.c.b16 %v3760, %v3752
    %v3937 = vpack.c.b16 %v3761, %v3753
    %v3938 = vpack.c.b16 %v3762, %v3754
    %v3939 = vpack.c.b16 %v3763, %v3755
    %v3940 = vpack.c.b16 %v3764, %v3756
    %v3941 = vpack.c.b16 %v3773, %v3765
    %v3942 = vpack.c.b16 %v3774, %v3766
    %v3943 = vpack.c.b16 %v3775, %v3767
    %v3944 = vpack.c.b16 %v3776, %v3768
    %v3945 = vpack.c.b16 %v3777, %v3769
    %v3946 = vpack.c.b16 %v3778, %v3770
    %v3947 = vpack.c.b16 %v3779, %v3771
    %v3948 = vpack.c.b16 %v3780, %v3772
    %v3949 = vpack.c.b16 %v3789, %v3781
    %v3950 = vpack.c.b16 %v3790, %v3782
    %v3951 = vpack.c.b16 %v3791, %v3783
    %v3952 = vpack.c.b16 %v3792, %v3784
    %v3953 = vpack.c.b16 %v3793, %v3785
    %v3954 = vpack.c.b16 %v3794, %v3786
    %v3955 = vpack.c.b16 %v3795, %v3787
    %v3956 = vpack.c.b16 %v3796, %v3788
    %v3957 = vpack.c.b16 %v3805, %v3797
    %v3958 = vpack.c.b16 %v3806, %v3798
    %v3959 = vpack.c.b16 %v3807, %v3799
    %v3960 = vpack.c.b16 %v3808, %v3800
    %v3961 = vpack.c.b16 %v3809, %v3801
    %v3962 = vpack.c.b16 %v3810, %v3802
    %v3963 = vpack.c.b16 %v3811, %v3803
    %v3964 = vpack.c.b16 %v3812, %v3804
    %v3965 = vpack.c.b16 %v3821, %v3813
    %v3966 = vpack.c.b16 %v3822, %v3814
    %v3967 = vpack.c.b16 %v3823, %v3815
    %v3968 = vpack.c.b16 %v3824, %v3816
    %v3969 = vpack.c.b16 %v3825, %v3817
    %v3970 = vpack.c.b16 %v3826, %v3818
    %v3971 = vpack.c.b16 %v3827, %v3819
    %v3972 = vpack.c.b16 %v3828, %v3820
    %v3973 = vpack.c.b16 %v3837, %v3829
    %v3974 = vpack.c.b16 %v3838, %v3830
    %v3975 = vpack.c.b16 %v3839, %v3831
    %v3976 = vpack.c.b16 %v3840, %v3832
    %v3977 = vpack.c.b16 %v3841, %v3833
    %v3978 = vpack.c.b16 %v3842, %v3834
    %v3979 = vpack.c.b16 %v3843, %v3835
    %v3980 = vpack.c.b16 %v3844, %v3836
    %v3981 = vpack.c.b16 %v3853, %v3845
    %v3982 = vpack.c.b16 %v3854, %v3846
    %v3983 = vpack.c.b16 %v3855, %v3847
    %v3984 = vpack.c.b16 %v3856, %v3848
    %v3985 = vpack.c.b16 %v3857, %v3849
    %v3986 = vpack.c.b16 %v3858, %v3850
    %v3987 = vpack.c.b16 %v3859, %v3851
    %v3988 = vpack.c.b16 %v3860, %v3852
    %4117 = vmatpush.bf16.msra.mxu0 %v3917
    %4118 = vmatpush.bf16.msra.mxu0 %v3909
    %4119 = vmatpush.bf16.msra.mxu0 %v3901
    %4120 = vmatpush.bf16.msra.mxu0 %v3893
    %4121 = vmatpush.bf16.msra.mxu0 %v3885
    %4122 = vmatpush.bf16.msra.mxu0 %v3877
    %4123 = vmatpush.bf16.msra.mxu0 %v3869
    %4124 = vmatpush.bf16.msra.mxu0 %v3861
    %4125 = vmatmul.bf16.gmra.mxu0 %v3341
    %v4126 = vpop.f32.mrf.mxu0
    %v4127 = vadd.f32 0.0, %v4126
    %v4128 = vpop.f32.mrf.mxu0
    %v4129 = vadd.f32 0.0, %v4128
    %4130 = vmatmul.bf16.gmra.mxu0 %v3343
    %v4131 = vpop.f32.mrf.mxu0
    %v4132 = vadd.f32 0.0, %v4131
    %v4133 = vpop.f32.mrf.mxu0
    %v4134 = vadd.f32 0.0, %v4133
    %4135 = vmatmul.bf16.gmra.mxu0 %v3345
    %v4136 = vpop.f32.mrf.mxu0
    %v4137 = vadd.f32 0.0, %v4136
    %v4138 = vpop.f32.mrf.mxu0
    %v4139 = vadd.f32 0.0, %v4138
    %4140 = vmatmul.bf16.gmra.mxu0 %v3347
    %v4141 = vpop.f32.mrf.mxu0
    %v4142 = vadd.f32 0.0, %v4141
    %v4143 = vpop.f32.mrf.mxu0
    %v4144 = vadd.f32 0.0, %v4143
    %4145 = vdwg.mxu0
    %4146 = vmatpush.bf16.msra.mxu0 %v3981
    %4147 = vmatpush.bf16.msra.mxu0 %v3973
    %4148 = vmatpush.bf16.msra.mxu0 %v3965
    %4149 = vmatpush.bf16.msra.mxu0 %v3957
    %4150 = vmatpush.bf16.msra.mxu0 %v3949
    %4151 = vmatpush.bf16.msra.mxu0 %v3941
    %4152 = vmatpush.bf16.msra.mxu0 %v3933
    %4153 = vmatpush.bf16.msra.mxu0 %v3925
    %4154 = vmatmul.bf16.gmra.mxu0 %v3342
    %v4155 = vpop.f32.mrf.mxu0
    %v4156 = vadd.f32 %v4127, %v4155
    %v4157 = vpop.f32.mrf.mxu0
    %v4158 = vadd.f32 %v4129, %v4157
    %4159 = vmatmul.bf16.gmra.mxu0 %v3344
    %v4160 = vpop.f32.mrf.mxu0
    %v4161 = vadd.f32 %v4132, %v4160
    %v4162 = vpop.f32.mrf.mxu0
    %v4163 = vadd.f32 %v4134, %v4162
    %4164 = vmatmul.bf16.gmra.mxu0 %v3346
    %v4165 = vpop.f32.mrf.mxu0
    %v4166 = vadd.f32 %v4137, %v4165
    %v4167 = vpop.f32.mrf.mxu0
    %v4168 = vadd.f32 %v4139, %v4167
    %4169 = vmatmul.bf16.gmra.mxu0 %v3348
    %v4170 = vpop.f32.mrf.mxu0
    %v4171 = vadd.f32 %v4142, %v4170
    %v4172 = vpop.f32.mrf.mxu0
    %v4173 = vadd.f32 %v4144, %v4172
    %4174 = vdwg.mxu0
    %4175 = vmatpush.bf16.msra.mxu0 %v3918
    %4176 = vmatpush.bf16.msra.mxu0 %v3910
    %4177 = vmatpush.bf16.msra.mxu0 %v3902
    %4178 = vmatpush.bf16.msra.mxu0 %v3894
    %4179 = vmatpush.bf16.msra.mxu0 %v3886
    %4180 = vmatpush.bf16.msra.mxu0 %v3878
    %4181 = vmatpush.bf16.msra.mxu0 %v3870
    %4182 = vmatpush.bf16.msra.mxu0 %v3862
    %4183 = vmatmul.bf16.gmra.mxu0 %v3341
    %v4184 = vpop.f32.mrf.mxu0
    %v4185 = vadd.f32 0.0, %v4184
    %v4186 = vpop.f32.mrf.mxu0
    %v4187 = vadd.f32 0.0, %v4186
    %4188 = vmatmul.bf16.gmra.mxu0 %v3343
    %v4189 = vpop.f32.mrf.mxu0
    %v4190 = vadd.f32 0.0, %v4189
    %v4191 = vpop.f32.mrf.mxu0
    %v4192 = vadd.f32 0.0, %v4191
    %4193 = vmatmul.bf16.gmra.mxu0 %v3345
    %v4194 = vpop.f32.mrf.mxu0
    %v4195 = vadd.f32 0.0, %v4194
    %v4196 = vpop.f32.mrf.mxu0
    %v4197 = vadd.f32 0.0, %v4196
    %4198 = vmatmul.bf16.gmra.mxu0 %v3347
    %v4199 = vpop.f32.mrf.mxu0
    %v4200 = vadd.f32 0.0, %v4199
    %v4201 = vpop.f32.mrf.mxu0
    %v4202 = vadd.f32 0.0, %v4201
    %4203 = vdwg.mxu0
    %4204 = vmatpush.bf16.msra.mxu0 %v3982
    %4205 = vmatpush.bf16.msra.mxu0 %v3974
    %4206 = vmatpush.bf16.msra.mxu0 %v3966
    %4207 = vmatpush.bf16.msra.mxu0 %v3958
    %4208 = vmatpush.bf16.msra.mxu0 %v3950
    %4209 = vmatpush.bf16.msra.mxu0 %v3942
    %4210 = vmatpush.bf16.msra.mxu0 %v3934
    %4211 = vmatpush.bf16.msra.mxu0 %v3926
    %4212 = vmatmul.bf16.gmra.mxu0 %v3342
    %v4213 = vpop.f32.mrf.mxu0
    %v4214 = vadd.f32 %v4185, %v4213
    %v4215 = vpop.f32.mrf.mxu0
    %v4216 = vadd.f32 %v4187, %v4215
    %4217 = vmatmul.bf16.gmra.mxu0 %v3344
    %v4218 = vpop.f32.mrf.mxu0
    %v4219 = vadd.f32 %v4190, %v4218
    %v4220 = vpop.f32.mrf.mxu0
    %v4221 = vadd.f32 %v4192, %v4220
    %4222 = vmatmul.bf16.gmra.mxu0 %v3346
    %v4223 = vpop.f32.mrf.mxu0
    %v4224 = vadd.f32 %v4195, %v4223
    %v4225 = vpop.f32.mrf.mxu0
    %v4226 = vadd.f32 %v4197, %v4225
    %4227 = vmatmul.bf16.gmra.mxu0 %v3348
    %v4228 = vpop.f32.mrf.mxu0
    %v4229 = vadd.f32 %v4200, %v4228
    %v4230 = vpop.f32.mrf.mxu0
    %v4231 = vadd.f32 %v4202, %v4230
    %4232 = vdwg.mxu0
    %4233 = vmatpush.bf16.msra.mxu0 %v3919
    %4234 = vmatpush.bf16.msra.mxu0 %v3911
    %4235 = vmatpush.bf16.msra.mxu0 %v3903
    %4236 = vmatpush.bf16.msra.mxu0 %v3895
    %4237 = vmatpush.bf16.msra.mxu0 %v3887
    %4238 = vmatpush.bf16.msra.mxu0 %v3879
    %4239 = vmatpush.bf16.msra.mxu0 %v3871
    %4240 = vmatpush.bf16.msra.mxu0 %v3863
    %4241 = vmatmul.bf16.gmra.mxu0 %v3341
    %v4242 = vpop.f32.mrf.mxu0
    %v4243 = vadd.f32 0.0, %v4242
    %v4244 = vpop.f32.mrf.mxu0
    %v4245 = vadd.f32 0.0, %v4244
    %4246 = vmatmul.bf16.gmra.mxu0 %v3343
    %v4247 = vpop.f32.mrf.mxu0
    %v4248 = vadd.f32 0.0, %v4247
    %v4249 = vpop.f32.mrf.mxu0
    %v4250 = vadd.f32 0.0, %v4249
    %4251 = vmatmul.bf16.gmra.mxu0 %v3345
    %v4252 = vpop.f32.mrf.mxu0
    %v4253 = vadd.f32 0.0, %v4252
    %v4254 = vpop.f32.mrf.mxu0
    %v4255 = vadd.f32 0.0, %v4254
    %4256 = vmatmul.bf16.gmra.mxu0 %v3347
    %v4257 = vpop.f32.mrf.mxu0
    %v4258 = vadd.f32 0.0, %v4257
    %v4259 = vpop.f32.mrf.mxu0
    %v4260 = vadd.f32 0.0, %v4259
    %4261 = vdwg.mxu0
    %4262 = vmatpush.bf16.msra.mxu0 %v3983
    %4263 = vmatpush.bf16.msra.mxu0 %v3975
    %4264 = vmatpush.bf16.msra.mxu0 %v3967
    %4265 = vmatpush.bf16.msra.mxu0 %v3959
    %4266 = vmatpush.bf16.msra.mxu0 %v3951
    %4267 = vmatpush.bf16.msra.mxu0 %v3943
    %4268 = vmatpush.bf16.msra.mxu0 %v3935
    %4269 = vmatpush.bf16.msra.mxu0 %v3927
    %4270 = vmatmul.bf16.gmra.mxu0 %v3342
    %v4271 = vpop.f32.mrf.mxu0
    %v4272 = vadd.f32 %v4243, %v4271
    %v4273 = vpop.f32.mrf.mxu0
    %v4274 = vadd.f32 %v4245, %v4273
    %4275 = vmatmul.bf16.gmra.mxu0 %v3344
    %v4276 = vpop.f32.mrf.mxu0
    %v4277 = vadd.f32 %v4248, %v4276
    %v4278 = vpop.f32.mrf.mxu0
    %v4279 = vadd.f32 %v4250, %v4278
    %4280 = vmatmul.bf16.gmra.mxu0 %v3346
    %v4281 = vpop.f32.mrf.mxu0
    %v4282 = vadd.f32 %v4253, %v4281
    %v4283 = vpop.f32.mrf.mxu0
    %v4284 = vadd.f32 %v4255, %v4283
    %4285 = vmatmul.bf16.gmra.mxu0 %v3348
    %v4286 = vpop.f32.mrf.mxu0
    %v4287 = vadd.f32 %v4258, %v4286
    %v4288 = vpop.f32.mrf.mxu0
    %v4289 = vadd.f32 %v4260, %v4288
    %4290 = vdwg.mxu0
    %4291 = vmatpush.bf16.msra.mxu0 %v3920
    %4292 = vmatpush.bf16.msra.mxu0 %v3912
    %4293 = vmatpush.bf16.msra.mxu0 %v3904
    %4294 = vmatpush.bf16.msra.mxu0 %v3896
    %4295 = vmatpush.bf16.msra.mxu0 %v3888
    %4296 = vmatpush.bf16.msra.mxu0 %v3880
    %4297 = vmatpush.bf16.msra.mxu0 %v3872
    %4298 = vmatpush.bf16.msra.mxu0 %v3864
    %4299 = vmatmul.bf16.gmra.mxu0 %v3341
    %v4300 = vpop.f32.mrf.mxu0
    %v4301 = vadd.f32 0.0, %v4300
    %v4302 = vpop.f32.mrf.mxu0
    %v4303 = vadd.f32 0.0, %v4302
    %4304 = vmatmul.bf16.gmra.mxu0 %v3343
    %v4305 = vpop.f32.mrf.mxu0
    %v4306 = vadd.f32 0.0, %v4305
    %v4307 = vpop.f32.mrf.mxu0
    %v4308 = vadd.f32 0.0, %v4307
    %4309 = vmatmul.bf16.gmra.mxu0 %v3345
    %v4310 = vpop.f32.mrf.mxu0
    %v4311 = vadd.f32 0.0, %v4310
    %v4312 = vpop.f32.mrf.mxu0
    %v4313 = vadd.f32 0.0, %v4312
    %4314 = vmatmul.bf16.gmra.mxu0 %v3347
    %v4315 = vpop.f32.mrf.mxu0
    %v4316 = vadd.f32 0.0, %v4315
    %v4317 = vpop.f32.mrf.mxu0
    %v4318 = vadd.f32 0.0, %v4317
    %4319 = vdwg.mxu0
    %4320 = vmatpush.bf16.msra.mxu0 %v3984
    %4321 = vmatpush.bf16.msra.mxu0 %v3976
    %4322 = vmatpush.bf16.msra.mxu0 %v3968
    %4323 = vmatpush.bf16.msra.mxu0 %v3960
    %4324 = vmatpush.bf16.msra.mxu0 %v3952
    %4325 = vmatpush.bf16.msra.mxu0 %v3944
    %4326 = vmatpush.bf16.msra.mxu0 %v3936
    %4327 = vmatpush.bf16.msra.mxu0 %v3928
    %4328 = vmatmul.bf16.gmra.mxu0 %v3342
    %v4329 = vpop.f32.mrf.mxu0
    %v4330 = vadd.f32 %v4301, %v4329
    %v4331 = vpop.f32.mrf.mxu0
    %v4332 = vadd.f32 %v4303, %v4331
    %4333 = vmatmul.bf16.gmra.mxu0 %v3344
    %v4334 = vpop.f32.mrf.mxu0
    %v4335 = vadd.f32 %v4306, %v4334
    %v4336 = vpop.f32.mrf.mxu0
    %v4337 = vadd.f32 %v4308, %v4336
    %4338 = vmatmul.bf16.gmra.mxu0 %v3346
    %v4339 = vpop.f32.mrf.mxu0
    %v4340 = vadd.f32 %v4311, %v4339
    %v4341 = vpop.f32.mrf.mxu0
    %v4342 = vadd.f32 %v4313, %v4341
    %4343 = vmatmul.bf16.gmra.mxu0 %v3348
    %v4344 = vpop.f32.mrf.mxu0
    %v4345 = vadd.f32 %v4316, %v4344
    %v4346 = vpop.f32.mrf.mxu0
    %v4347 = vadd.f32 %v4318, %v4346
    %4348 = vdwg.mxu0
    %4349 = vmatpush.bf16.msra.mxu0 %v3921
    %4350 = vmatpush.bf16.msra.mxu0 %v3913
    %4351 = vmatpush.bf16.msra.mxu0 %v3905
    %4352 = vmatpush.bf16.msra.mxu0 %v3897
    %4353 = vmatpush.bf16.msra.mxu0 %v3889
    %4354 = vmatpush.bf16.msra.mxu0 %v3881
    %4355 = vmatpush.bf16.msra.mxu0 %v3873
    %4356 = vmatpush.bf16.msra.mxu0 %v3865
    %4357 = vmatmul.bf16.gmra.mxu0 %v3341
    %v4358 = vpop.f32.mrf.mxu0
    %v4359 = vadd.f32 0.0, %v4358
    %v4360 = vpop.f32.mrf.mxu0
    %v4361 = vadd.f32 0.0, %v4360
    %4362 = vmatmul.bf16.gmra.mxu0 %v3343
    %v4363 = vpop.f32.mrf.mxu0
    %v4364 = vadd.f32 0.0, %v4363
    %v4365 = vpop.f32.mrf.mxu0
    %v4366 = vadd.f32 0.0, %v4365
    %4367 = vmatmul.bf16.gmra.mxu0 %v3345
    %v4368 = vpop.f32.mrf.mxu0
    %v4369 = vadd.f32 0.0, %v4368
    %v4370 = vpop.f32.mrf.mxu0
    %v4371 = vadd.f32 0.0, %v4370
    %4372 = vmatmul.bf16.gmra.mxu0 %v3347
    %v4373 = vpop.f32.mrf.mxu0
    %v4374 = vadd.f32 0.0, %v4373
    %v4375 = vpop.f32.mrf.mxu0
    %v4376 = vadd.f32 0.0, %v4375
    %4377 = vdwg.mxu0
    %4378 = vmatpush.bf16.msra.mxu0 %v3985
    %4379 = vmatpush.bf16.msra.mxu0 %v3977
    %4380 = vmatpush.bf16.msra.mxu0 %v3969
    %4381 = vmatpush.bf16.msra.mxu0 %v3961
    %4382 = vmatpush.bf16.msra.mxu0 %v3953
    %4383 = vmatpush.bf16.msra.mxu0 %v3945
    %4384 = vmatpush.bf16.msra.mxu0 %v3937
    %4385 = vmatpush.bf16.msra.mxu0 %v3929
    %4386 = vmatmul.bf16.gmra.mxu0 %v3342
    %v4387 = vpop.f32.mrf.mxu0
    %v4388 = vadd.f32 %v4359, %v4387
    %v4389 = vpop.f32.mrf.mxu0
    %v4390 = vadd.f32 %v4361, %v4389
    %4391 = vmatmul.bf16.gmra.mxu0 %v3344
    %v4392 = vpop.f32.mrf.mxu0
    %v4393 = vadd.f32 %v4364, %v4392
    %v4394 = vpop.f32.mrf.mxu0
    %v4395 = vadd.f32 %v4366, %v4394
    %4396 = vmatmul.bf16.gmra.mxu0 %v3346
    %v4397 = vpop.f32.mrf.mxu0
    %v4398 = vadd.f32 %v4369, %v4397
    %v4399 = vpop.f32.mrf.mxu0
    %v4400 = vadd.f32 %v4371, %v4399
    %4401 = vmatmul.bf16.gmra.mxu0 %v3348
    %v4402 = vpop.f32.mrf.mxu0
    %v4403 = vadd.f32 %v4374, %v4402
    %v4404 = vpop.f32.mrf.mxu0
    %v4405 = vadd.f32 %v4376, %v4404
    %4406 = vdwg.mxu0
    %4407 = vmatpush.bf16.msra.mxu0 %v3922
    %4408 = vmatpush.bf16.msra.mxu0 %v3914
    %4409 = vmatpush.bf16.msra.mxu0 %v3906
    %4410 = vmatpush.bf16.msra.mxu0 %v3898
    %4411 = vmatpush.bf16.msra.mxu0 %v3890
    %4412 = vmatpush.bf16.msra.mxu0 %v3882
    %4413 = vmatpush.bf16.msra.mxu0 %v3874
    %4414 = vmatpush.bf16.msra.mxu0 %v3866
    %4415 = vmatmul.bf16.gmra.mxu0 %v3341
    %v4416 = vpop.f32.mrf.mxu0
    %v4417 = vadd.f32 0.0, %v4416
    %v4418 = vpop.f32.mrf.mxu0
    %v4419 = vadd.f32 0.0, %v4418
    %4420 = vmatmul.bf16.gmra.mxu0 %v3343
    %v4421 = vpop.f32.mrf.mxu0
    %v4422 = vadd.f32 0.0, %v4421
    %v4423 = vpop.f32.mrf.mxu0
    %v4424 = vadd.f32 0.0, %v4423
    %4425 = vmatmul.bf16.gmra.mxu0 %v3345
    %v4426 = vpop.f32.mrf.mxu0
    %v4427 = vadd.f32 0.0, %v4426
    %v4428 = vpop.f32.mrf.mxu0
    %v4429 = vadd.f32 0.0, %v4428
    %4430 = vmatmul.bf16.gmra.mxu0 %v3347
    %v4431 = vpop.f32.mrf.mxu0
    %v4432 = vadd.f32 0.0, %v4431
    %v4433 = vpop.f32.mrf.mxu0
    %v4434 = vadd.f32 0.0, %v4433
    %4435 = vdwg.mxu0
    %4436 = vmatpush.bf16.msra.mxu0 %v3986
    %4437 = vmatpush.bf16.msra.mxu0 %v3978
    %4438 = vmatpush.bf16.msra.mxu0 %v3970
    %4439 = vmatpush.bf16.msra.mxu0 %v3962
    %4440 = vmatpush.bf16.msra.mxu0 %v3954
    %4441 = vmatpush.bf16.msra.mxu0 %v3946
    %4442 = vmatpush.bf16.msra.mxu0 %v3938
    %4443 = vmatpush.bf16.msra.mxu0 %v3930
    %4444 = vmatmul.bf16.gmra.mxu0 %v3342
    %v4445 = vpop.f32.mrf.mxu0
    %v4446 = vadd.f32 %v4417, %v4445
    %v4447 = vpop.f32.mrf.mxu0
    %v4448 = vadd.f32 %v4419, %v4447
    %4449 = vmatmul.bf16.gmra.mxu0 %v3344
    %v4450 = vpop.f32.mrf.mxu0
    %v4451 = vadd.f32 %v4422, %v4450
    %v4452 = vpop.f32.mrf.mxu0
    %v4453 = vadd.f32 %v4424, %v4452
    %4454 = vmatmul.bf16.gmra.mxu0 %v3346
    %v4455 = vpop.f32.mrf.mxu0
    %v4456 = vadd.f32 %v4427, %v4455
    %v4457 = vpop.f32.mrf.mxu0
    %v4458 = vadd.f32 %v4429, %v4457
    %4459 = vmatmul.bf16.gmra.mxu0 %v3348
    %v4460 = vpop.f32.mrf.mxu0
    %v4461 = vadd.f32 %v4432, %v4460
    %v4462 = vpop.f32.mrf.mxu0
    %v4463 = vadd.f32 %v4434, %v4462
    %4464 = vdwg.mxu0
    %4465 = vmatpush.bf16.msra.mxu0 %v3923
    %4466 = vmatpush.bf16.msra.mxu0 %v3915
    %4467 = vmatpush.bf16.msra.mxu0 %v3907
    %4468 = vmatpush.bf16.msra.mxu0 %v3899
    %4469 = vmatpush.bf16.msra.mxu0 %v3891
    %4470 = vmatpush.bf16.msra.mxu0 %v3883
    %4471 = vmatpush.bf16.msra.mxu0 %v3875
    %4472 = vmatpush.bf16.msra.mxu0 %v3867
    %4473 = vmatmul.bf16.gmra.mxu0 %v3341
    %v4474 = vpop.f32.mrf.mxu0
    %v4475 = vadd.f32 0.0, %v4474
    %v4476 = vpop.f32.mrf.mxu0
    %v4477 = vadd.f32 0.0, %v4476
    %4478 = vmatmul.bf16.gmra.mxu0 %v3343
    %v4479 = vpop.f32.mrf.mxu0
    %v4480 = vadd.f32 0.0, %v4479
    %v4481 = vpop.f32.mrf.mxu0
    %v4482 = vadd.f32 0.0, %v4481
    %4483 = vmatmul.bf16.gmra.mxu0 %v3345
    %v4484 = vpop.f32.mrf.mxu0
    %v4485 = vadd.f32 0.0, %v4484
    %v4486 = vpop.f32.mrf.mxu0
    %v4487 = vadd.f32 0.0, %v4486
    %4488 = vmatmul.bf16.gmra.mxu0 %v3347
    %v4489 = vpop.f32.mrf.mxu0
    %v4490 = vadd.f32 0.0, %v4489
    %v4491 = vpop.f32.mrf.mxu0
    %v4492 = vadd.f32 0.0, %v4491
    %4493 = vdwg.mxu0
    %4494 = vmatpush.bf16.msra.mxu0 %v3987
    %4495 = vmatpush.bf16.msra.mxu0 %v3979
    %4496 = vmatpush.bf16.msra.mxu0 %v3971
    %4497 = vmatpush.bf16.msra.mxu0 %v3963
    %4498 = vmatpush.bf16.msra.mxu0 %v3955
    %4499 = vmatpush.bf16.msra.mxu0 %v3947
    %4500 = vmatpush.bf16.msra.mxu0 %v3939
    %4501 = vmatpush.bf16.msra.mxu0 %v3931
    %4502 = vmatmul.bf16.gmra.mxu0 %v3342
    %v4503 = vpop.f32.mrf.mxu0
    %v4504 = vadd.f32 %v4475, %v4503
    %v4505 = vpop.f32.mrf.mxu0
    %v4506 = vadd.f32 %v4477, %v4505
    %4507 = vmatmul.bf16.gmra.mxu0 %v3344
    %v4508 = vpop.f32.mrf.mxu0
    %v4509 = vadd.f32 %v4480, %v4508
    %v4510 = vpop.f32.mrf.mxu0
    %v4511 = vadd.f32 %v4482, %v4510
    %4512 = vmatmul.bf16.gmra.mxu0 %v3346
    %v4513 = vpop.f32.mrf.mxu0
    %v4514 = vadd.f32 %v4485, %v4513
    %v4515 = vpop.f32.mrf.mxu0
    %v4516 = vadd.f32 %v4487, %v4515
    %4517 = vmatmul.bf16.gmra.mxu0 %v3348
    %v4518 = vpop.f32.mrf.mxu0
    %v4519 = vadd.f32 %v4490, %v4518
    %v4520 = vpop.f32.mrf.mxu0
    %v4521 = vadd.f32 %v4492, %v4520
    %4522 = vdwg.mxu0
    %4523 = vmatpush.bf16.msra.mxu0 %v3924
    %4524 = vmatpush.bf16.msra.mxu0 %v3916
    %4525 = vmatpush.bf16.msra.mxu0 %v3908
    %4526 = vmatpush.bf16.msra.mxu0 %v3900
    %4527 = vmatpush.bf16.msra.mxu0 %v3892
    %4528 = vmatpush.bf16.msra.mxu0 %v3884
    %4529 = vmatpush.bf16.msra.mxu0 %v3876
    %4530 = vmatpush.bf16.msra.mxu0 %v3868
    %4531 = vmatmul.bf16.gmra.mxu0 %v3341
    %v4532 = vpop.f32.mrf.mxu0
    %v4533 = vadd.f32 0.0, %v4532
    %v4534 = vpop.f32.mrf.mxu0
    %v4535 = vadd.f32 0.0, %v4534
    %4536 = vmatmul.bf16.gmra.mxu0 %v3343
    %v4537 = vpop.f32.mrf.mxu0
    %v4538 = vadd.f32 0.0, %v4537
    %v4539 = vpop.f32.mrf.mxu0
    %v4540 = vadd.f32 0.0, %v4539
    %4541 = vmatmul.bf16.gmra.mxu0 %v3345
    %v4542 = vpop.f32.mrf.mxu0
    %v4543 = vadd.f32 0.0, %v4542
    %v4544 = vpop.f32.mrf.mxu0
    %v4545 = vadd.f32 0.0, %v4544
    %4546 = vmatmul.bf16.gmra.mxu0 %v3347
    %v4547 = vpop.f32.mrf.mxu0
    %v4548 = vadd.f32 0.0, %v4547
    %v4549 = vpop.f32.mrf.mxu0
    %v4550 = vadd.f32 0.0, %v4549
    %4551 = vdwg.mxu0
    %4552 = vmatpush.bf16.msra.mxu0 %v3988
    %4553 = vmatpush.bf16.msra.mxu0 %v3980
    %4554 = vmatpush.bf16.msra.mxu0 %v3972
    %4555 = vmatpush.bf16.msra.mxu0 %v3964
    %4556 = vmatpush.bf16.msra.mxu0 %v3956
    %4557 = vmatpush.bf16.msra.mxu0 %v3948
    %4558 = vmatpush.bf16.msra.mxu0 %v3940
    %4559 = vmatpush.bf16.msra.mxu0 %v3932
    %4560 = vmatmul.bf16.gmra.mxu0 %v3342
    %v4561 = vpop.f32.mrf.mxu0
    %v4562 = vadd.f32 %v4533, %v4561
    %v4563 = vpop.f32.mrf.mxu0
    %v4564 = vadd.f32 %v4535, %v4563
    %4565 = vmatmul.bf16.gmra.mxu0 %v3344
    %v4566 = vpop.f32.mrf.mxu0
    %v4567 = vadd.f32 %v4538, %v4566
    %v4568 = vpop.f32.mrf.mxu0
    %v4569 = vadd.f32 %v4540, %v4568
    %4570 = vmatmul.bf16.gmra.mxu0 %v3346
    %v4571 = vpop.f32.mrf.mxu0
    %v4572 = vadd.f32 %v4543, %v4571
    %v4573 = vpop.f32.mrf.mxu0
    %v4574 = vadd.f32 %v4545, %v4573
    %4575 = vmatmul.bf16.gmra.mxu0 %v3348
    %v4576 = vpop.f32.mrf.mxu0
    %v4577 = vadd.f32 %v4548, %v4576
    %v4578 = vpop.f32.mrf.mxu0
    %v4579 = vadd.f32 %v4550, %v4578
    %4580 = vdwg.mxu0
    %v4581 = vld [vmem:[#allocation11] sm:$0xf]
    %v4583 = vperm.slane %v4581, 0
    %v4584 = vperm.slane %v4581, 1
    %v4585 = vperm.slane %v4581, 2
    %v4586 = vperm.slane %v4581, 3
    %v4591 = vadd.f32 %v4388, %v4583
    %v4592 = vadd.f32 %v4446, %v4584
    %v4593 = vadd.f32 %v4504, %v4585
    %v4594 = vadd.f32 %v4562, %v4586
    %v4595 = vadd.f32 %v4390, %v4583
    %v4596 = vadd.f32 %v4448, %v4584
    %v4597 = vadd.f32 %v4506, %v4585
    %v4598 = vadd.f32 %v4564, %v4586
    %v4599 = vadd.f32 %v4393, %v4583
    %v4600 = vadd.f32 %v4451, %v4584
    %v4601 = vadd.f32 %v4509, %v4585
    %v4602 = vadd.f32 %v4567, %v4586
    %v4603 = vadd.f32 %v4395, %v4583
    %v4604 = vadd.f32 %v4453, %v4584
    %v4605 = vadd.f32 %v4511, %v4585
    %v4606 = vadd.f32 %v4569, %v4586
    %v4607 = vadd.f32 %v4398, %v4583
    %v4608 = vadd.f32 %v4456, %v4584
    %v4609 = vadd.f32 %v4514, %v4585
    %v4610 = vadd.f32 %v4572, %v4586
    %v4611 = vadd.f32 %v4400, %v4583
    %v4612 = vadd.f32 %v4458, %v4584
    %v4613 = vadd.f32 %v4516, %v4585
    %v4614 = vadd.f32 %v4574, %v4586
    %v4615 = vadd.f32 %v4403, %v4583
    %v4616 = vadd.f32 %v4461, %v4584
    %v4617 = vadd.f32 %v4519, %v4585
    %v4618 = vadd.f32 %v4577, %v4586
    %v4619 = vadd.f32 %v4405, %v4583
    %v4620 = vadd.f32 %v4463, %v4584
    %v4621 = vadd.f32 %v4521, %v4585
    %v4622 = vadd.f32 %v4579, %v4586
    %v4623 = vld [vmem:[#allocation2] sm:$0xff]
    %v4624 = vld [vmem:[#allocation2 + $0x8] sm:$0xff]
    %v4625 = vld [vmem:[#allocation2 + $0x10] sm:$0xff]
    %v4626 = vld [vmem:[#allocation2 + $0x18] sm:$0xff]
    %v4627 = vld [vmem:[#allocation2 + $0x20] sm:$0xff]
    %v4628 = vld [vmem:[#allocation2 + $0x28] sm:$0xff]
    %v4629 = vld [vmem:[#allocation2 + $0x30] sm:$0xff]
    %v4630 = vld [vmem:[#allocation2 + $0x38] sm:$0xff]
    %v4631 = vld [vmem:[#allocation2 + $0x40] sm:$0xff]
    %v4632 = vld [vmem:[#allocation2 + $0x48] sm:$0xff]
    %v4633 = vld [vmem:[#allocation2 + $0x50] sm:$0xff]
    %v4634 = vld [vmem:[#allocation2 + $0x58] sm:$0xff]
    %v4635 = vld [vmem:[#allocation2 + $0x60] sm:$0xff]
    %v4636 = vld [vmem:[#allocation2 + $0x68] sm:$0xff]
    %v4637 = vld [vmem:[#allocation2 + $0x70] sm:$0xff]
    %v4638 = vld [vmem:[#allocation2 + $0x78] sm:$0xff]
    %v4639 = vld [vmem:[#allocation2 + $0x80] sm:$0xff]
    %v4640 = vld [vmem:[#allocation2 + $0x88] sm:$0xff]
    %v4641 = vld [vmem:[#allocation2 + $0x90] sm:$0xff]
    %v4642 = vld [vmem:[#allocation2 + $0x98] sm:$0xff]
    %v4643 = vld [vmem:[#allocation2 + $0xa0] sm:$0xff]
    %v4644 = vld [vmem:[#allocation2 + $0xa8] sm:$0xff]
    %v4645 = vld [vmem:[#allocation2 + $0xb0] sm:$0xff]
    %v4646 = vld [vmem:[#allocation2 + $0xb8] sm:$0xff]
    %v4647 = vld [vmem:[#allocation2 + $0xc0] sm:$0xff]
    %v4648 = vld [vmem:[#allocation2 + $0xc8] sm:$0xff]
    %v4649 = vld [vmem:[#allocation2 + $0xd0] sm:$0xff]
    %v4650 = vld [vmem:[#allocation2 + $0xd8] sm:$0xff]
    %v4651 = vld [vmem:[#allocation2 + $0xe0] sm:$0xff]
    %v4652 = vld [vmem:[#allocation2 + $0xe8] sm:$0xff]
    %v4653 = vld [vmem:[#allocation2 + $0xf0] sm:$0xff]
    %v4654 = vld [vmem:[#allocation2 + $0xf8] sm:$0xff]
    %v4655 = vadd.f32 %v4623, %v4156
    %v4656 = vadd.f32 %v4624, %v4214
    %v4657 = vadd.f32 %v4625, %v4272
    %v4658 = vadd.f32 %v4626, %v4330
    %v4659 = vadd.f32 %v4627, %v4158
    %v4660 = vadd.f32 %v4628, %v4216
    %v4661 = vadd.f32 %v4629, %v4274
    %v4662 = vadd.f32 %v4630, %v4332
    %v4663 = vadd.f32 %v4631, %v4161
    %v4664 = vadd.f32 %v4632, %v4219
    %v4665 = vadd.f32 %v4633, %v4277
    %v4666 = vadd.f32 %v4634, %v4335
    %v4667 = vadd.f32 %v4635, %v4163
    %v4668 = vadd.f32 %v4636, %v4221
    %v4669 = vadd.f32 %v4637, %v4279
    %v4670 = vadd.f32 %v4638, %v4337
    %v4671 = vadd.f32 %v4639, %v4166
    %v4672 = vadd.f32 %v4640, %v4224
    %v4673 = vadd.f32 %v4641, %v4282
    %v4674 = vadd.f32 %v4642, %v4340
    %v4675 = vadd.f32 %v4643, %v4168
    %v4676 = vadd.f32 %v4644, %v4226
    %v4677 = vadd.f32 %v4645, %v4284
    %v4678 = vadd.f32 %v4646, %v4342
    %v4679 = vadd.f32 %v4647, %v4171
    %v4680 = vadd.f32 %v4648, %v4229
    %v4681 = vadd.f32 %v4649, %v4287
    %v4682 = vadd.f32 %v4650, %v4345
    %v4683 = vadd.f32 %v4651, %v4173
    %v4684 = vadd.f32 %v4652, %v4231
    %v4685 = vadd.f32 %v4653, %v4289
    %v4686 = vadd.f32 %v4654, %v4347
    %v4687 = vxor.u32 %v4655, 2147483648
    %v4688 = vxor.u32 %v4656, 2147483648
    %v4689 = vxor.u32 %v4657, 2147483648
    %v4690 = vxor.u32 %v4659, 2147483648
    %v4691 = vxor.u32 %v4660, 2147483648
    %v4692 = vxor.u32 %v4661, 2147483648
    %v4693 = vxor.u32 %v4663, 2147483648
    %v4694 = vxor.u32 %v4664, 2147483648
    %v4695 = vxor.u32 %v4665, 2147483648
    %v4696 = vxor.u32 %v4667, 2147483648
    %v4697 = vxor.u32 %v4668, 2147483648
    %v4698 = vxor.u32 %v4669, 2147483648
    %v4699 = vxor.u32 %v4671, 2147483648
    %v4700 = vxor.u32 %v4672, 2147483648
    %v4701 = vxor.u32 %v4673, 2147483648
    %v4702 = vxor.u32 %v4675, 2147483648
    %v4703 = vxor.u32 %v4676, 2147483648
    %v4704 = vxor.u32 %v4677, 2147483648
    %v4705 = vxor.u32 %v4679, 2147483648
    %v4706 = vxor.u32 %v4680, 2147483648
    %v4707 = vxor.u32 %v4681, 2147483648
    %v4708 = vxor.u32 %v4683, 2147483648
    %v4709 = vxor.u32 %v4684, 2147483648
    %v4710 = vxor.u32 %v4685, 2147483648
    %v4711 = vmul.f32 %v4687, 1.442695
    %v4712 = vpow.pop %v4711
    %v4713 = vmul.f32 %v4688, 1.442695
    %v4714 = vpow.pop %v4713
    %v4715 = vmul.f32 %v4689, 1.442695
    %v4716 = vpow.pop %v4715
    %v4717 = vmul.f32 %v4690, 1.442695
    %v4718 = vpow.pop %v4717
    %v4719 = vmul.f32 %v4691, 1.442695
    %v4720 = vpow.pop %v4719
    %v4721 = vmul.f32 %v4692, 1.442695
    %v4722 = vpow.pop %v4721
    %v4723 = vmul.f32 %v4693, 1.442695
    %v4724 = vpow.pop %v4723
    %v4725 = vmul.f32 %v4694, 1.442695
    %v4726 = vpow.pop %v4725
    %v4727 = vmul.f32 %v4695, 1.442695
    %v4728 = vpow.pop %v4727
    %v4729 = vmul.f32 %v4696, 1.442695
    %v4730 = vpow.pop %v4729
    %v4731 = vmul.f32 %v4697, 1.442695
    %v4732 = vpow.pop %v4731
    %v4733 = vmul.f32 %v4698, 1.442695
    %v4734 = vpow.pop %v4733
    %v4735 = vmul.f32 %v4699, 1.442695
    %v4736 = vpow.pop %v4735
    %v4737 = vmul.f32 %v4700, 1.442695
    %v4738 = vpow.pop %v4737
    %v4739 = vmul.f32 %v4701, 1.442695
    %v4740 = vpow.pop %v4739
    %v4741 = vmul.f32 %v4702, 1.442695
    %v4742 = vpow.pop %v4741
    %v4743 = vmul.f32 %v4703, 1.442695
    %v4744 = vpow.pop %v4743
    %v4745 = vmul.f32 %v4704, 1.442695
    %v4746 = vpow.pop %v4745
    %v4747 = vmul.f32 %v4705, 1.442695
    %v4748 = vpow.pop %v4747
    %v4749 = vmul.f32 %v4706, 1.442695
    %v4750 = vpow.pop %v4749
    %v4751 = vmul.f32 %v4707, 1.442695
    %v4752 = vpow.pop %v4751
    %v4753 = vmul.f32 %v4708, 1.442695
    %v4754 = vpow.pop %v4753
    %v4755 = vmul.f32 %v4709, 1.442695
    %v4756 = vpow.pop %v4755
    %v4757 = vmul.f32 %v4710, 1.442695
    %v4758 = vpow.pop %v4757
    %v4759 = vadd.f32 %v4712, 1.0
    %v4760 = vadd.f32 %v4714, 1.0
    %v4761 = vadd.f32 %v4716, 1.0
    %v4762 = vadd.f32 %v4718, 1.0
    %v4763 = vadd.f32 %v4720, 1.0
    %v4764 = vadd.f32 %v4722, 1.0
    %v4765 = vadd.f32 %v4724, 1.0
    %v4766 = vadd.f32 %v4726, 1.0
    %v4767 = vadd.f32 %v4728, 1.0
    %v4768 = vadd.f32 %v4730, 1.0
    %v4769 = vadd.f32 %v4732, 1.0
    %v4770 = vadd.f32 %v4734, 1.0
    %v4771 = vadd.f32 %v4736, 1.0
    %v4772 = vadd.f32 %v4738, 1.0
    %v4773 = vadd.f32 %v4740, 1.0
    %v4774 = vadd.f32 %v4742, 1.0
    %v4775 = vadd.f32 %v4744, 1.0
    %v4776 = vadd.f32 %v4746, 1.0
    %v4777 = vadd.f32 %v4748, 1.0
    %v4778 = vadd.f32 %v4750, 1.0
    %v4779 = vadd.f32 %v4752, 1.0
    %v4780 = vadd.f32 %v4754, 1.0
    %v4781 = vadd.f32 %v4756, 1.0
    %v4782 = vadd.f32 %v4758, 1.0
    %v4783 = vrcp.pop %v4759
    %v4784 = vmul.f32 %v4759, %v4783
    %v4785 = vsub.f32 1.0, %v4784
    %v4786 = vmul.f32 %v4783, %v4785
    %v4787 = vadd.f32 %v4783, %v4786
    %vm4788 = vweird.f32 %v4759
    %vm4789 = vweird.f32 %v4783
    %vm4790 = vmor %vm4788, %vm4789
    %v4791 = vsel %vm4790, %v4783, %v4787
    %v4792 = vand.u32 2147483647, %v4759
    %vm4793 = vcmp.eq.f32.partialorder %v4792, 8.507059e+37
    %v4794 = vand.u32 %v4759, 2147483648
    %v4795 = vor.u32 1.1754944e-38, %v4794
    %v4796 = vsel %vm4793, %v4795, %v4791
    %v4797 = vmul.f32 1.0, %v4796
    %v4798 = vrcp.pop %v4760
    %v4799 = vmul.f32 %v4760, %v4798
    %v4800 = vsub.f32 1.0, %v4799
    %v4801 = vmul.f32 %v4798, %v4800
    %v4802 = vadd.f32 %v4798, %v4801
    %vm4803 = vweird.f32 %v4760
    %vm4804 = vweird.f32 %v4798
    %vm4805 = vmor %vm4803, %vm4804
    %v4806 = vsel %vm4805, %v4798, %v4802
    %v4807 = vand.u32 2147483647, %v4760
    %vm4808 = vcmp.eq.f32.partialorder %v4807, 8.507059e+37
    %v4809 = vand.u32 %v4760, 2147483648
    %v4810 = vor.u32 1.1754944e-38, %v4809
    %v4811 = vsel %vm4808, %v4810, %v4806
    %v4812 = vmul.f32 1.0, %v4811
    %v4813 = vrcp.pop %v4761
    %v4814 = vmul.f32 %v4761, %v4813
    %v4815 = vsub.f32 1.0, %v4814
    %v4816 = vmul.f32 %v4813, %v4815
    %v4817 = vadd.f32 %v4813, %v4816
    %vm4818 = vweird.f32 %v4761
    %vm4819 = vweird.f32 %v4813
    %vm4820 = vmor %vm4818, %vm4819
    %v4821 = vsel %vm4820, %v4813, %v4817
    %v4822 = vand.u32 2147483647, %v4761
    %vm4823 = vcmp.eq.f32.partialorder %v4822, 8.507059e+37
    %v4824 = vand.u32 %v4761, 2147483648
    %v4825 = vor.u32 1.1754944e-38, %v4824
    %v4826 = vsel %vm4823, %v4825, %v4821
    %v4827 = vmul.f32 1.0, %v4826
    %v4828 = vrcp.pop %v4762
    %v4829 = vmul.f32 %v4762, %v4828
    %v4830 = vsub.f32 1.0, %v4829
    %v4831 = vmul.f32 %v4828, %v4830
    %v4832 = vadd.f32 %v4828, %v4831
    %vm4833 = vweird.f32 %v4762
    %vm4834 = vweird.f32 %v4828
    %vm4835 = vmor %vm4833, %vm4834
    %v4836 = vsel %vm4835, %v4828, %v4832
    %v4837 = vand.u32 2147483647, %v4762
    %vm4838 = vcmp.eq.f32.partialorder %v4837, 8.507059e+37
    %v4839 = vand.u32 %v4762, 2147483648
    %v4840 = vor.u32 1.1754944e-38, %v4839
    %v4841 = vsel %vm4838, %v4840, %v4836
    %v4842 = vmul.f32 1.0, %v4841
    %v4843 = vrcp.pop %v4763
    %v4844 = vmul.f32 %v4763, %v4843
    %v4845 = vsub.f32 1.0, %v4844
    %v4846 = vmul.f32 %v4843, %v4845
    %v4847 = vadd.f32 %v4843, %v4846
    %vm4848 = vweird.f32 %v4763
    %vm4849 = vweird.f32 %v4843
    %vm4850 = vmor %vm4848, %vm4849
    %v4851 = vsel %vm4850, %v4843, %v4847
    %v4852 = vand.u32 2147483647, %v4763
    %vm4853 = vcmp.eq.f32.partialorder %v4852, 8.507059e+37
    %v4854 = vand.u32 %v4763, 2147483648
    %v4855 = vor.u32 1.1754944e-38, %v4854
    %v4856 = vsel %vm4853, %v4855, %v4851
    %v4857 = vmul.f32 1.0, %v4856
    %v4858 = vrcp.pop %v4764
    %v4859 = vmul.f32 %v4764, %v4858
    %v4860 = vsub.f32 1.0, %v4859
    %v4861 = vmul.f32 %v4858, %v4860
    %v4862 = vadd.f32 %v4858, %v4861
    %vm4863 = vweird.f32 %v4764
    %vm4864 = vweird.f32 %v4858
    %vm4865 = vmor %vm4863, %vm4864
    %v4866 = vsel %vm4865, %v4858, %v4862
    %v4867 = vand.u32 2147483647, %v4764
    %vm4868 = vcmp.eq.f32.partialorder %v4867, 8.507059e+37
    %v4869 = vand.u32 %v4764, 2147483648
    %v4870 = vor.u32 1.1754944e-38, %v4869
    %v4871 = vsel %vm4868, %v4870, %v4866
    %v4872 = vmul.f32 1.0, %v4871
    %v4873 = vrcp.pop %v4765
    %v4874 = vmul.f32 %v4765, %v4873
    %v4875 = vsub.f32 1.0, %v4874
    %v4876 = vmul.f32 %v4873, %v4875
    %v4877 = vadd.f32 %v4873, %v4876
    %vm4878 = vweird.f32 %v4765
    %vm4879 = vweird.f32 %v4873
    %vm4880 = vmor %vm4878, %vm4879
    %v4881 = vsel %vm4880, %v4873, %v4877
    %v4882 = vand.u32 2147483647, %v4765
    %vm4883 = vcmp.eq.f32.partialorder %v4882, 8.507059e+37
    %v4884 = vand.u32 %v4765, 2147483648
    %v4885 = vor.u32 1.1754944e-38, %v4884
    %v4886 = vsel %vm4883, %v4885, %v4881
    %v4887 = vmul.f32 1.0, %v4886
    %v4888 = vrcp.pop %v4766
    %v4889 = vmul.f32 %v4766, %v4888
    %v4890 = vsub.f32 1.0, %v4889
    %v4891 = vmul.f32 %v4888, %v4890
    %v4892 = vadd.f32 %v4888, %v4891
    %vm4893 = vweird.f32 %v4766
    %vm4894 = vweird.f32 %v4888
    %vm4895 = vmor %vm4893, %vm4894
    %v4896 = vsel %vm4895, %v4888, %v4892
    %v4897 = vand.u32 2147483647, %v4766
    %vm4898 = vcmp.eq.f32.partialorder %v4897, 8.507059e+37
    %v4899 = vand.u32 %v4766, 2147483648
    %v4900 = vor.u32 1.1754944e-38, %v4899
    %v4901 = vsel %vm4898, %v4900, %v4896
    %v4902 = vmul.f32 1.0, %v4901
    %v4903 = vrcp.pop %v4767
    %v4904 = vmul.f32 %v4767, %v4903
    %v4905 = vsub.f32 1.0, %v4904
    %v4906 = vmul.f32 %v4903, %v4905
    %v4907 = vadd.f32 %v4903, %v4906
    %vm4908 = vweird.f32 %v4767
    %vm4909 = vweird.f32 %v4903
    %vm4910 = vmor %vm4908, %vm4909
    %v4911 = vsel %vm4910, %v4903, %v4907
    %v4912 = vand.u32 2147483647, %v4767
    %vm4913 = vcmp.eq.f32.partialorder %v4912, 8.507059e+37
    %v4914 = vand.u32 %v4767, 2147483648
    %v4915 = vor.u32 1.1754944e-38, %v4914
    %v4916 = vsel %vm4913, %v4915, %v4911
    %v4917 = vmul.f32 1.0, %v4916
    %v4918 = vrcp.pop %v4768
    %v4919 = vmul.f32 %v4768, %v4918
    %v4920 = vsub.f32 1.0, %v4919
    %v4921 = vmul.f32 %v4918, %v4920
    %v4922 = vadd.f32 %v4918, %v4921
    %vm4923 = vweird.f32 %v4768
    %vm4924 = vweird.f32 %v4918
    %vm4925 = vmor %vm4923, %vm4924
    %v4926 = vsel %vm4925, %v4918, %v4922
    %v4927 = vand.u32 2147483647, %v4768
    %vm4928 = vcmp.eq.f32.partialorder %v4927, 8.507059e+37
    %v4929 = vand.u32 %v4768, 2147483648
    %v4930 = vor.u32 1.1754944e-38, %v4929
    %v4931 = vsel %vm4928, %v4930, %v4926
    %v4932 = vmul.f32 1.0, %v4931
    %v4933 = vrcp.pop %v4769
    %v4934 = vmul.f32 %v4769, %v4933
    %v4935 = vsub.f32 1.0, %v4934
    %v4936 = vmul.f32 %v4933, %v4935
    %v4937 = vadd.f32 %v4933, %v4936
    %vm4938 = vweird.f32 %v4769
    %vm4939 = vweird.f32 %v4933
    %vm4940 = vmor %vm4938, %vm4939
    %v4941 = vsel %vm4940, %v4933, %v4937
    %v4942 = vand.u32 2147483647, %v4769
    %vm4943 = vcmp.eq.f32.partialorder %v4942, 8.507059e+37
    %v4944 = vand.u32 %v4769, 2147483648
    %v4945 = vor.u32 1.1754944e-38, %v4944
    %v4946 = vsel %vm4943, %v4945, %v4941
    %v4947 = vmul.f32 1.0, %v4946
    %v4948 = vrcp.pop %v4770
    %v4949 = vmul.f32 %v4770, %v4948
    %v4950 = vsub.f32 1.0, %v4949
    %v4951 = vmul.f32 %v4948, %v4950
    %v4952 = vadd.f32 %v4948, %v4951
    %vm4953 = vweird.f32 %v4770
    %vm4954 = vweird.f32 %v4948
    %vm4955 = vmor %vm4953, %vm4954
    %v4956 = vsel %vm4955, %v4948, %v4952
    %v4957 = vand.u32 2147483647, %v4770
    %vm4958 = vcmp.eq.f32.partialorder %v4957, 8.507059e+37
    %v4959 = vand.u32 %v4770, 2147483648
    %v4960 = vor.u32 1.1754944e-38, %v4959
    %v4961 = vsel %vm4958, %v4960, %v4956
    %v4962 = vmul.f32 1.0, %v4961
    %v4963 = vrcp.pop %v4771
    %v4964 = vmul.f32 %v4771, %v4963
    %v4965 = vsub.f32 1.0, %v4964
    %v4966 = vmul.f32 %v4963, %v4965
    %v4967 = vadd.f32 %v4963, %v4966
    %vm4968 = vweird.f32 %v4771
    %vm4969 = vweird.f32 %v4963
    %vm4970 = vmor %vm4968, %vm4969
    %v4971 = vsel %vm4970, %v4963, %v4967
    %v4972 = vand.u32 2147483647, %v4771
    %vm4973 = vcmp.eq.f32.partialorder %v4972, 8.507059e+37
    %v4974 = vand.u32 %v4771, 2147483648
    %v4975 = vor.u32 1.1754944e-38, %v4974
    %v4976 = vsel %vm4973, %v4975, %v4971
    %v4977 = vmul.f32 1.0, %v4976
    %v4978 = vrcp.pop %v4772
    %v4979 = vmul.f32 %v4772, %v4978
    %v4980 = vsub.f32 1.0, %v4979
    %v4981 = vmul.f32 %v4978, %v4980
    %v4982 = vadd.f32 %v4978, %v4981
    %vm4983 = vweird.f32 %v4772
    %vm4984 = vweird.f32 %v4978
    %vm4985 = vmor %vm4983, %vm4984
    %v4986 = vsel %vm4985, %v4978, %v4982
    %v4987 = vand.u32 2147483647, %v4772
    %vm4988 = vcmp.eq.f32.partialorder %v4987, 8.507059e+37
    %v4989 = vand.u32 %v4772, 2147483648
    %v4990 = vor.u32 1.1754944e-38, %v4989
    %v4991 = vsel %vm4988, %v4990, %v4986
    %v4992 = vmul.f32 1.0, %v4991
    %v4993 = vrcp.pop %v4773
    %v4994 = vmul.f32 %v4773, %v4993
    %v4995 = vsub.f32 1.0, %v4994
    %v4996 = vmul.f32 %v4993, %v4995
    %v4997 = vadd.f32 %v4993, %v4996
    %vm4998 = vweird.f32 %v4773
    %vm4999 = vweird.f32 %v4993
    %vm5000 = vmor %vm4998, %vm4999
    %v5001 = vsel %vm5000, %v4993, %v4997
    %v5002 = vand.u32 2147483647, %v4773
    %vm5003 = vcmp.eq.f32.partialorder %v5002, 8.507059e+37
    %v5004 = vand.u32 %v4773, 2147483648
    %v5005 = vor.u32 1.1754944e-38, %v5004
    %v5006 = vsel %vm5003, %v5005, %v5001
    %v5007 = vmul.f32 1.0, %v5006
    %v5008 = vrcp.pop %v4774
    %v5009 = vmul.f32 %v4774, %v5008
    %v5010 = vsub.f32 1.0, %v5009
    %v5011 = vmul.f32 %v5008, %v5010
    %v5012 = vadd.f32 %v5008, %v5011
    %vm5013 = vweird.f32 %v4774
    %vm5014 = vweird.f32 %v5008
    %vm5015 = vmor %vm5013, %vm5014
    %v5016 = vsel %vm5015, %v5008, %v5012
    %v5017 = vand.u32 2147483647, %v4774
    %vm5018 = vcmp.eq.f32.partialorder %v5017, 8.507059e+37
    %v5019 = vand.u32 %v4774, 2147483648
    %v5020 = vor.u32 1.1754944e-38, %v5019
    %v5021 = vsel %vm5018, %v5020, %v5016
    %v5022 = vmul.f32 1.0, %v5021
    %v5023 = vrcp.pop %v4775
    %v5024 = vmul.f32 %v4775, %v5023
    %v5025 = vsub.f32 1.0, %v5024
    %v5026 = vmul.f32 %v5023, %v5025
    %v5027 = vadd.f32 %v5023, %v5026
    %vm5028 = vweird.f32 %v4775
    %vm5029 = vweird.f32 %v5023
    %vm5030 = vmor %vm5028, %vm5029
    %v5031 = vsel %vm5030, %v5023, %v5027
    %v5032 = vand.u32 2147483647, %v4775
    %vm5033 = vcmp.eq.f32.partialorder %v5032, 8.507059e+37
    %v5034 = vand.u32 %v4775, 2147483648
    %v5035 = vor.u32 1.1754944e-38, %v5034
    %v5036 = vsel %vm5033, %v5035, %v5031
    %v5037 = vmul.f32 1.0, %v5036
    %v5038 = vrcp.pop %v4776
    %v5039 = vmul.f32 %v4776, %v5038
    %v5040 = vsub.f32 1.0, %v5039
    %v5041 = vmul.f32 %v5038, %v5040
    %v5042 = vadd.f32 %v5038, %v5041
    %vm5043 = vweird.f32 %v4776
    %vm5044 = vweird.f32 %v5038
    %vm5045 = vmor %vm5043, %vm5044
    %v5046 = vsel %vm5045, %v5038, %v5042
    %v5047 = vand.u32 2147483647, %v4776
    %vm5048 = vcmp.eq.f32.partialorder %v5047, 8.507059e+37
    %v5049 = vand.u32 %v4776, 2147483648
    %v5050 = vor.u32 1.1754944e-38, %v5049
    %v5051 = vsel %vm5048, %v5050, %v5046
    %v5052 = vmul.f32 1.0, %v5051
    %v5053 = vrcp.pop %v4777
    %v5054 = vmul.f32 %v4777, %v5053
    %v5055 = vsub.f32 1.0, %v5054
    %v5056 = vmul.f32 %v5053, %v5055
    %v5057 = vadd.f32 %v5053, %v5056
    %vm5058 = vweird.f32 %v4777
    %vm5059 = vweird.f32 %v5053
    %vm5060 = vmor %vm5058, %vm5059
    %v5061 = vsel %vm5060, %v5053, %v5057
    %v5062 = vand.u32 2147483647, %v4777
    %vm5063 = vcmp.eq.f32.partialorder %v5062, 8.507059e+37
    %v5064 = vand.u32 %v4777, 2147483648
    %v5065 = vor.u32 1.1754944e-38, %v5064
    %v5066 = vsel %vm5063, %v5065, %v5061
    %v5067 = vmul.f32 1.0, %v5066
    %v5068 = vrcp.pop %v4778
    %v5069 = vmul.f32 %v4778, %v5068
    %v5070 = vsub.f32 1.0, %v5069
    %v5071 = vmul.f32 %v5068, %v5070
    %v5072 = vadd.f32 %v5068, %v5071
    %vm5073 = vweird.f32 %v4778
    %vm5074 = vweird.f32 %v5068
    %vm5075 = vmor %vm5073, %vm5074
    %v5076 = vsel %vm5075, %v5068, %v5072
    %v5077 = vand.u32 2147483647, %v4778
    %vm5078 = vcmp.eq.f32.partialorder %v5077, 8.507059e+37
    %v5079 = vand.u32 %v4778, 2147483648
    %v5080 = vor.u32 1.1754944e-38, %v5079
    %v5081 = vsel %vm5078, %v5080, %v5076
    %v5082 = vmul.f32 1.0, %v5081
    %v5083 = vrcp.pop %v4779
    %v5084 = vmul.f32 %v4779, %v5083
    %v5085 = vsub.f32 1.0, %v5084
    %v5086 = vmul.f32 %v5083, %v5085
    %v5087 = vadd.f32 %v5083, %v5086
    %vm5088 = vweird.f32 %v4779
    %vm5089 = vweird.f32 %v5083
    %vm5090 = vmor %vm5088, %vm5089
    %v5091 = vsel %vm5090, %v5083, %v5087
    %v5092 = vand.u32 2147483647, %v4779
    %vm5093 = vcmp.eq.f32.partialorder %v5092, 8.507059e+37
    %v5094 = vand.u32 %v4779, 2147483648
    %v5095 = vor.u32 1.1754944e-38, %v5094
    %v5096 = vsel %vm5093, %v5095, %v5091
    %v5097 = vmul.f32 1.0, %v5096
    %v5098 = vrcp.pop %v4780
    %v5099 = vmul.f32 %v4780, %v5098
    %v5100 = vsub.f32 1.0, %v5099
    %v5101 = vmul.f32 %v5098, %v5100
    %v5102 = vadd.f32 %v5098, %v5101
    %vm5103 = vweird.f32 %v4780
    %vm5104 = vweird.f32 %v5098
    %vm5105 = vmor %vm5103, %vm5104
    %v5106 = vsel %vm5105, %v5098, %v5102
    %v5107 = vand.u32 2147483647, %v4780
    %vm5108 = vcmp.eq.f32.partialorder %v5107, 8.507059e+37
    %v5109 = vand.u32 %v4780, 2147483648
    %v5110 = vor.u32 1.1754944e-38, %v5109
    %v5111 = vsel %vm5108, %v5110, %v5106
    %v5112 = vmul.f32 1.0, %v5111
    %v5113 = vrcp.pop %v4781
    %v5114 = vmul.f32 %v4781, %v5113
    %v5115 = vsub.f32 1.0, %v5114
    %v5116 = vmul.f32 %v5113, %v5115
    %v5117 = vadd.f32 %v5113, %v5116
    %vm5118 = vweird.f32 %v4781
    %vm5119 = vweird.f32 %v5113
    %vm5120 = vmor %vm5118, %vm5119
    %v5121 = vsel %vm5120, %v5113, %v5117
    %v5122 = vand.u32 2147483647, %v4781
    %vm5123 = vcmp.eq.f32.partialorder %v5122, 8.507059e+37
    %v5124 = vand.u32 %v4781, 2147483648
    %v5125 = vor.u32 1.1754944e-38, %v5124
    %v5126 = vsel %vm5123, %v5125, %v5121
    %v5127 = vmul.f32 1.0, %v5126
    %v5128 = vrcp.pop %v4782
    %v5129 = vmul.f32 %v4782, %v5128
    %v5130 = vsub.f32 1.0, %v5129
    %v5131 = vmul.f32 %v5128, %v5130
    %v5132 = vadd.f32 %v5128, %v5131
    %vm5133 = vweird.f32 %v4782
    %vm5134 = vweird.f32 %v5128
    %vm5135 = vmor %vm5133, %vm5134
    %v5136 = vsel %vm5135, %v5128, %v5132
    %v5137 = vand.u32 2147483647, %v4782
    %vm5138 = vcmp.eq.f32.partialorder %v5137, 8.507059e+37
    %v5139 = vand.u32 %v4782, 2147483648
    %v5140 = vor.u32 1.1754944e-38, %v5139
    %v5141 = vsel %vm5138, %v5140, %v5136
    %v5142 = vmul.f32 1.0, %v5141
    %v5143 = vtanh.pop %v4658
    %v5144 = vtanh.pop %v4662
    %v5145 = vtanh.pop %v4666
    %v5146 = vtanh.pop %v4670
    %v5147 = vtanh.pop %v4674
    %v5148 = vtanh.pop %v4678
    %v5149 = vtanh.pop %v4682
    %v5150 = vtanh.pop %v4686
    %v5151 = vmul.f32 %v4812, %v2805
    %v5152 = vmul.f32 %v4857, %v2806
    %v5153 = vmul.f32 %v4902, %v2807
    %v5154 = vmul.f32 %v4947, %v2808
    %v5155 = vmul.f32 %v4992, %v2809
    %v5156 = vmul.f32 %v5037, %v2810
    %v5157 = vmul.f32 %v5082, %v2811
    %v5158 = vmul.f32 %v5127, %v2812
    %v5159 = vmul.f32 %v4797, %v5143
    %v5160 = vmul.f32 %v4842, %v5144
    %v5161 = vmul.f32 %v4887, %v5145
    %v5162 = vmul.f32 %v4932, %v5146
    %v5163 = vmul.f32 %v4977, %v5147
    %v5164 = vmul.f32 %v5022, %v5148
    %v5165 = vmul.f32 %v5067, %v5149
    %v5166 = vmul.f32 %v5112, %v5150
    %v5167 = vadd.f32 %v5151, %v5159
    %v5168 = vadd.f32 %v5152, %v5160
    %v5169 = vadd.f32 %v5153, %v5161
    %v5170 = vadd.f32 %v5154, %v5162
    %v5171 = vadd.f32 %v5155, %v5163
    %v5172 = vadd.f32 %v5156, %v5164
    %v5173 = vadd.f32 %v5157, %v5165
    %v5174 = vadd.f32 %v5158, %v5166
    %v5175 = vtanh.pop %v5167
    %v5176 = vtanh.pop %v5168
    %v5177 = vtanh.pop %v5169
    %v5178 = vtanh.pop %v5170
    %v5179 = vtanh.pop %v5171
    %v5180 = vtanh.pop %v5172
    %v5181 = vtanh.pop %v5173
    %v5182 = vtanh.pop %v5174
    %v5183 = vmul.f32 %v4827, %v5175
    %v5184 = vmul.f32 %v4872, %v5176
    %v5185 = vmul.f32 %v4917, %v5177
    %v5186 = vmul.f32 %v4962, %v5178
    %v5187 = vmul.f32 %v5007, %v5179
    %v5188 = vmul.f32 %v5052, %v5180
    %v5189 = vmul.f32 %v5097, %v5181
    %v5190 = vmul.f32 %v5142, %v5182
    %v5191 = vxor.u32 %v4591, 2147483648
    %v5192 = vxor.u32 %v4592, 2147483648
    %v5193 = vxor.u32 %v4593, 2147483648
    %v5194 = vxor.u32 %v4595, 2147483648
    %v5195 = vxor.u32 %v4596, 2147483648
    %v5196 = vxor.u32 %v4597, 2147483648
    %v5197 = vxor.u32 %v4599, 2147483648
    %v5198 = vxor.u32 %v4600, 2147483648
    %v5199 = vxor.u32 %v4601, 2147483648
    %v5200 = vxor.u32 %v4603, 2147483648
    %v5201 = vxor.u32 %v4604, 2147483648
    %v5202 = vxor.u32 %v4605, 2147483648
    %v5203 = vxor.u32 %v4607, 2147483648
    %v5204 = vxor.u32 %v4608, 2147483648
    %v5205 = vxor.u32 %v4609, 2147483648
    %v5206 = vxor.u32 %v4611, 2147483648
    %v5207 = vxor.u32 %v4612, 2147483648
    %v5208 = vxor.u32 %v4613, 2147483648
    %v5209 = vxor.u32 %v4615, 2147483648
    %v5210 = vxor.u32 %v4616, 2147483648
    %v5211 = vxor.u32 %v4617, 2147483648
    %v5212 = vxor.u32 %v4619, 2147483648
    %v5213 = vxor.u32 %v4620, 2147483648
    %v5214 = vxor.u32 %v4621, 2147483648
    %v5215 = vmul.f32 %v5191, 1.442695
    %v5216 = vpow.pop %v5215
    %v5217 = vmul.f32 %v5192, 1.442695
    %v5218 = vpow.pop %v5217
    %v5219 = vmul.f32 %v5193, 1.442695
    %v5220 = vpow.pop %v5219
    %v5221 = vmul.f32 %v5194, 1.442695
    %v5222 = vpow.pop %v5221
    %v5223 = vmul.f32 %v5195, 1.442695
    %v5224 = vpow.pop %v5223
    %v5225 = vmul.f32 %v5196, 1.442695
    %v5226 = vpow.pop %v5225
    %v5227 = vmul.f32 %v5197, 1.442695
    %v5228 = vpow.pop %v5227
    %v5229 = vmul.f32 %v5198, 1.442695
    %v5230 = vpow.pop %v5229
    %v5231 = vmul.f32 %v5199, 1.442695
    %v5232 = vpow.pop %v5231
    %v5233 = vmul.f32 %v5200, 1.442695
    %v5234 = vpow.pop %v5233
    %v5235 = vmul.f32 %v5201, 1.442695
    %v5236 = vpow.pop %v5235
    %v5237 = vmul.f32 %v5202, 1.442695
    %v5238 = vpow.pop %v5237
    %v5239 = vmul.f32 %v5203, 1.442695
    %v5240 = vpow.pop %v5239
    %v5241 = vmul.f32 %v5204, 1.442695
    %v5242 = vpow.pop %v5241
    %v5243 = vmul.f32 %v5205, 1.442695
    %v5244 = vpow.pop %v5243
    %v5245 = vmul.f32 %v5206, 1.442695
    %v5246 = vpow.pop %v5245
    %v5247 = vmul.f32 %v5207, 1.442695
    %v5248 = vpow.pop %v5247
    %v5249 = vmul.f32 %v5208, 1.442695
    %v5250 = vpow.pop %v5249
    %v5251 = vmul.f32 %v5209, 1.442695
    %v5252 = vpow.pop %v5251
    %v5253 = vmul.f32 %v5210, 1.442695
    %v5254 = vpow.pop %v5253
    %v5255 = vmul.f32 %v5211, 1.442695
    %v5256 = vpow.pop %v5255
    %v5257 = vmul.f32 %v5212, 1.442695
    %v5258 = vpow.pop %v5257
    %v5259 = vmul.f32 %v5213, 1.442695
    %v5260 = vpow.pop %v5259
    %v5261 = vmul.f32 %v5214, 1.442695
    %v5262 = vpow.pop %v5261
    %v5263 = vadd.f32 %v5216, 1.0
    %v5264 = vadd.f32 %v5218, 1.0
    %v5265 = vadd.f32 %v5220, 1.0
    %v5266 = vadd.f32 %v5222, 1.0
    %v5267 = vadd.f32 %v5224, 1.0
    %v5268 = vadd.f32 %v5226, 1.0
    %v5269 = vadd.f32 %v5228, 1.0
    %v5270 = vadd.f32 %v5230, 1.0
    %v5271 = vadd.f32 %v5232, 1.0
    %v5272 = vadd.f32 %v5234, 1.0
    %v5273 = vadd.f32 %v5236, 1.0
    %v5274 = vadd.f32 %v5238, 1.0
    %v5275 = vadd.f32 %v5240, 1.0
    %v5276 = vadd.f32 %v5242, 1.0
    %v5277 = vadd.f32 %v5244, 1.0
    %v5278 = vadd.f32 %v5246, 1.0
    %v5279 = vadd.f32 %v5248, 1.0
    %v5280 = vadd.f32 %v5250, 1.0
    %v5281 = vadd.f32 %v5252, 1.0
    %v5282 = vadd.f32 %v5254, 1.0
    %v5283 = vadd.f32 %v5256, 1.0
    %v5284 = vadd.f32 %v5258, 1.0
    %v5285 = vadd.f32 %v5260, 1.0
    %v5286 = vadd.f32 %v5262, 1.0
    %v5287 = vrcp.pop %v5263
    %v5288 = vmul.f32 %v5263, %v5287
    %v5289 = vsub.f32 1.0, %v5288
    %v5290 = vmul.f32 %v5287, %v5289
    %v5291 = vadd.f32 %v5287, %v5290
    %vm5292 = vweird.f32 %v5263
    %vm5293 = vweird.f32 %v5287
    %vm5294 = vmor %vm5292, %vm5293
    %v5295 = vsel %vm5294, %v5287, %v5291
    %v5296 = vand.u32 2147483647, %v5263
    %vm5297 = vcmp.eq.f32.partialorder %v5296, 8.507059e+37
    %v5298 = vand.u32 %v5263, 2147483648
    %v5299 = vor.u32 1.1754944e-38, %v5298
    %v5300 = vsel %vm5297, %v5299, %v5295
    %v5301 = vmul.f32 1.0, %v5300
    %v5302 = vrcp.pop %v5264
    %v5303 = vmul.f32 %v5264, %v5302
    %v5304 = vsub.f32 1.0, %v5303
    %v5305 = vmul.f32 %v5302, %v5304
    %v5306 = vadd.f32 %v5302, %v5305
    %vm5307 = vweird.f32 %v5264
    %vm5308 = vweird.f32 %v5302
    %vm5309 = vmor %vm5307, %vm5308
    %v5310 = vsel %vm5309, %v5302, %v5306
    %v5311 = vand.u32 2147483647, %v5264
    %vm5312 = vcmp.eq.f32.partialorder %v5311, 8.507059e+37
    %v5313 = vand.u32 %v5264, 2147483648
    %v5314 = vor.u32 1.1754944e-38, %v5313
    %v5315 = vsel %vm5312, %v5314, %v5310
    %v5316 = vmul.f32 1.0, %v5315
    %v5317 = vrcp.pop %v5265
    %v5318 = vmul.f32 %v5265, %v5317
    %v5319 = vsub.f32 1.0, %v5318
    %v5320 = vmul.f32 %v5317, %v5319
    %v5321 = vadd.f32 %v5317, %v5320
    %vm5322 = vweird.f32 %v5265
    %vm5323 = vweird.f32 %v5317
    %vm5324 = vmor %vm5322, %vm5323
    %v5325 = vsel %vm5324, %v5317, %v5321
    %v5326 = vand.u32 2147483647, %v5265
    %vm5327 = vcmp.eq.f32.partialorder %v5326, 8.507059e+37
    %v5328 = vand.u32 %v5265, 2147483648
    %v5329 = vor.u32 1.1754944e-38, %v5328
    %v5330 = vsel %vm5327, %v5329, %v5325
    %v5331 = vmul.f32 1.0, %v5330
    %v5332 = vrcp.pop %v5266
    %v5333 = vmul.f32 %v5266, %v5332
    %v5334 = vsub.f32 1.0, %v5333
    %v5335 = vmul.f32 %v5332, %v5334
    %v5336 = vadd.f32 %v5332, %v5335
    %vm5337 = vweird.f32 %v5266
    %vm5338 = vweird.f32 %v5332
    %vm5339 = vmor %vm5337, %vm5338
    %v5340 = vsel %vm5339, %v5332, %v5336
    %v5341 = vand.u32 2147483647, %v5266
    %vm5342 = vcmp.eq.f32.partialorder %v5341, 8.507059e+37
    %v5343 = vand.u32 %v5266, 2147483648
    %v5344 = vor.u32 1.1754944e-38, %v5343
    %v5345 = vsel %vm5342, %v5344, %v5340
    %v5346 = vmul.f32 1.0, %v5345
    %v5347 = vrcp.pop %v5267
    %v5348 = vmul.f32 %v5267, %v5347
    %v5349 = vsub.f32 1.0, %v5348
    %v5350 = vmul.f32 %v5347, %v5349
    %v5351 = vadd.f32 %v5347, %v5350
    %vm5352 = vweird.f32 %v5267
    %vm5353 = vweird.f32 %v5347
    %vm5354 = vmor %vm5352, %vm5353
    %v5355 = vsel %vm5354, %v5347, %v5351
    %v5356 = vand.u32 2147483647, %v5267
    %vm5357 = vcmp.eq.f32.partialorder %v5356, 8.507059e+37
    %v5358 = vand.u32 %v5267, 2147483648
    %v5359 = vor.u32 1.1754944e-38, %v5358
    %v5360 = vsel %vm5357, %v5359, %v5355
    %v5361 = vmul.f32 1.0, %v5360
    %v5362 = vrcp.pop %v5268
    %v5363 = vmul.f32 %v5268, %v5362
    %v5364 = vsub.f32 1.0, %v5363
    %v5365 = vmul.f32 %v5362, %v5364
    %v5366 = vadd.f32 %v5362, %v5365
    %vm5367 = vweird.f32 %v5268
    %vm5368 = vweird.f32 %v5362
    %vm5369 = vmor %vm5367, %vm5368
    %v5370 = vsel %vm5369, %v5362, %v5366
    %v5371 = vand.u32 2147483647, %v5268
    %vm5372 = vcmp.eq.f32.partialorder %v5371, 8.507059e+37
    %v5373 = vand.u32 %v5268, 2147483648
    %v5374 = vor.u32 1.1754944e-38, %v5373
    %v5375 = vsel %vm5372, %v5374, %v5370
    %v5376 = vmul.f32 1.0, %v5375
    %v5377 = vrcp.pop %v5269
    %v5378 = vmul.f32 %v5269, %v5377
    %v5379 = vsub.f32 1.0, %v5378
    %v5380 = vmul.f32 %v5377, %v5379
    %v5381 = vadd.f32 %v5377, %v5380
    %vm5382 = vweird.f32 %v5269
    %vm5383 = vweird.f32 %v5377
    %vm5384 = vmor %vm5382, %vm5383
    %v5385 = vsel %vm5384, %v5377, %v5381
    %v5386 = vand.u32 2147483647, %v5269
    %vm5387 = vcmp.eq.f32.partialorder %v5386, 8.507059e+37
    %v5388 = vand.u32 %v5269, 2147483648
    %v5389 = vor.u32 1.1754944e-38, %v5388
    %v5390 = vsel %vm5387, %v5389, %v5385
    %v5391 = vmul.f32 1.0, %v5390
    %v5392 = vrcp.pop %v5270
    %v5393 = vmul.f32 %v5270, %v5392
    %v5394 = vsub.f32 1.0, %v5393
    %v5395 = vmul.f32 %v5392, %v5394
    %v5396 = vadd.f32 %v5392, %v5395
    %vm5397 = vweird.f32 %v5270
    %vm5398 = vweird.f32 %v5392
    %vm5399 = vmor %vm5397, %vm5398
    %v5400 = vsel %vm5399, %v5392, %v5396
    %v5401 = vand.u32 2147483647, %v5270
    %vm5402 = vcmp.eq.f32.partialorder %v5401, 8.507059e+37
    %v5403 = vand.u32 %v5270, 2147483648
    %v5404 = vor.u32 1.1754944e-38, %v5403
    %v5405 = vsel %vm5402, %v5404, %v5400
    %v5406 = vmul.f32 1.0, %v5405
    %v5407 = vrcp.pop %v5271
    %v5408 = vmul.f32 %v5271, %v5407
    %v5409 = vsub.f32 1.0, %v5408
    %v5410 = vmul.f32 %v5407, %v5409
    %v5411 = vadd.f32 %v5407, %v5410
    %vm5412 = vweird.f32 %v5271
    %vm5413 = vweird.f32 %v5407
    %vm5414 = vmor %vm5412, %vm5413
    %v5415 = vsel %vm5414, %v5407, %v5411
    %v5416 = vand.u32 2147483647, %v5271
    %vm5417 = vcmp.eq.f32.partialorder %v5416, 8.507059e+37
    %v5418 = vand.u32 %v5271, 2147483648
    %v5419 = vor.u32 1.1754944e-38, %v5418
    %v5420 = vsel %vm5417, %v5419, %v5415
    %v5421 = vmul.f32 1.0, %v5420
    %v5422 = vrcp.pop %v5272
    %v5423 = vmul.f32 %v5272, %v5422
    %v5424 = vsub.f32 1.0, %v5423
    %v5425 = vmul.f32 %v5422, %v5424
    %v5426 = vadd.f32 %v5422, %v5425
    %vm5427 = vweird.f32 %v5272
    %vm5428 = vweird.f32 %v5422
    %vm5429 = vmor %vm5427, %vm5428
    %v5430 = vsel %vm5429, %v5422, %v5426
    %v5431 = vand.u32 2147483647, %v5272
    %vm5432 = vcmp.eq.f32.partialorder %v5431, 8.507059e+37
    %v5433 = vand.u32 %v5272, 2147483648
    %v5434 = vor.u32 1.1754944e-38, %v5433
    %v5435 = vsel %vm5432, %v5434, %v5430
    %v5436 = vmul.f32 1.0, %v5435
    %v5437 = vrcp.pop %v5273
    %v5438 = vmul.f32 %v5273, %v5437
    %v5439 = vsub.f32 1.0, %v5438
    %v5440 = vmul.f32 %v5437, %v5439
    %v5441 = vadd.f32 %v5437, %v5440
    %vm5442 = vweird.f32 %v5273
    %vm5443 = vweird.f32 %v5437
    %vm5444 = vmor %vm5442, %vm5443
    %v5445 = vsel %vm5444, %v5437, %v5441
    %v5446 = vand.u32 2147483647, %v5273
    %vm5447 = vcmp.eq.f32.partialorder %v5446, 8.507059e+37
    %v5448 = vand.u32 %v5273, 2147483648
    %v5449 = vor.u32 1.1754944e-38, %v5448
    %v5450 = vsel %vm5447, %v5449, %v5445
    %v5451 = vmul.f32 1.0, %v5450
    %v5452 = vrcp.pop %v5274
    %v5453 = vmul.f32 %v5274, %v5452
    %v5454 = vsub.f32 1.0, %v5453
    %v5455 = vmul.f32 %v5452, %v5454
    %v5456 = vadd.f32 %v5452, %v5455
    %vm5457 = vweird.f32 %v5274
    %vm5458 = vweird.f32 %v5452
    %vm5459 = vmor %vm5457, %vm5458
    %v5460 = vsel %vm5459, %v5452, %v5456
    %v5461 = vand.u32 2147483647, %v5274
    %vm5462 = vcmp.eq.f32.partialorder %v5461, 8.507059e+37
    %v5463 = vand.u32 %v5274, 2147483648
    %v5464 = vor.u32 1.1754944e-38, %v5463
    %v5465 = vsel %vm5462, %v5464, %v5460
    %v5466 = vmul.f32 1.0, %v5465
    %v5467 = vrcp.pop %v5275
    %v5468 = vmul.f32 %v5275, %v5467
    %v5469 = vsub.f32 1.0, %v5468
    %v5470 = vmul.f32 %v5467, %v5469
    %v5471 = vadd.f32 %v5467, %v5470
    %vm5472 = vweird.f32 %v5275
    %vm5473 = vweird.f32 %v5467
    %vm5474 = vmor %vm5472, %vm5473
    %v5475 = vsel %vm5474, %v5467, %v5471
    %v5476 = vand.u32 2147483647, %v5275
    %vm5477 = vcmp.eq.f32.partialorder %v5476, 8.507059e+37
    %v5478 = vand.u32 %v5275, 2147483648
    %v5479 = vor.u32 1.1754944e-38, %v5478
    %v5480 = vsel %vm5477, %v5479, %v5475
    %v5481 = vmul.f32 1.0, %v5480
    %v5482 = vrcp.pop %v5276
    %v5483 = vmul.f32 %v5276, %v5482
    %v5484 = vsub.f32 1.0, %v5483
    %v5485 = vmul.f32 %v5482, %v5484
    %v5486 = vadd.f32 %v5482, %v5485
    %vm5487 = vweird.f32 %v5276
    %vm5488 = vweird.f32 %v5482
    %vm5489 = vmor %vm5487, %vm5488
    %v5490 = vsel %vm5489, %v5482, %v5486
    %v5491 = vand.u32 2147483647, %v5276
    %vm5492 = vcmp.eq.f32.partialorder %v5491, 8.507059e+37
    %v5493 = vand.u32 %v5276, 2147483648
    %v5494 = vor.u32 1.1754944e-38, %v5493
    %v5495 = vsel %vm5492, %v5494, %v5490
    %v5496 = vmul.f32 1.0, %v5495
    %v5497 = vrcp.pop %v5277
    %v5498 = vmul.f32 %v5277, %v5497
    %v5499 = vsub.f32 1.0, %v5498
    %v5500 = vmul.f32 %v5497, %v5499
    %v5501 = vadd.f32 %v5497, %v5500
    %vm5502 = vweird.f32 %v5277
    %vm5503 = vweird.f32 %v5497
    %vm5504 = vmor %vm5502, %vm5503
    %v5505 = vsel %vm5504, %v5497, %v5501
    %v5506 = vand.u32 2147483647, %v5277
    %vm5507 = vcmp.eq.f32.partialorder %v5506, 8.507059e+37
    %v5508 = vand.u32 %v5277, 2147483648
    %v5509 = vor.u32 1.1754944e-38, %v5508
    %v5510 = vsel %vm5507, %v5509, %v5505
    %v5511 = vmul.f32 1.0, %v5510
    %v5512 = vrcp.pop %v5278
    %v5513 = vmul.f32 %v5278, %v5512
    %v5514 = vsub.f32 1.0, %v5513
    %v5515 = vmul.f32 %v5512, %v5514
    %v5516 = vadd.f32 %v5512, %v5515
    %vm5517 = vweird.f32 %v5278
    %vm5518 = vweird.f32 %v5512
    %vm5519 = vmor %vm5517, %vm5518
    %v5520 = vsel %vm5519, %v5512, %v5516
    %v5521 = vand.u32 2147483647, %v5278
    %vm5522 = vcmp.eq.f32.partialorder %v5521, 8.507059e+37
    %v5523 = vand.u32 %v5278, 2147483648
    %v5524 = vor.u32 1.1754944e-38, %v5523
    %v5525 = vsel %vm5522, %v5524, %v5520
    %v5526 = vmul.f32 1.0, %v5525
    %v5527 = vrcp.pop %v5279
    %v5528 = vmul.f32 %v5279, %v5527
    %v5529 = vsub.f32 1.0, %v5528
    %v5530 = vmul.f32 %v5527, %v5529
    %v5531 = vadd.f32 %v5527, %v5530
    %vm5532 = vweird.f32 %v5279
    %vm5533 = vweird.f32 %v5527
    %vm5534 = vmor %vm5532, %vm5533
    %v5535 = vsel %vm5534, %v5527, %v5531
    %v5536 = vand.u32 2147483647, %v5279
    %vm5537 = vcmp.eq.f32.partialorder %v5536, 8.507059e+37
    %v5538 = vand.u32 %v5279, 2147483648
    %v5539 = vor.u32 1.1754944e-38, %v5538
    %v5540 = vsel %vm5537, %v5539, %v5535
    %v5541 = vmul.f32 1.0, %v5540
    %v5542 = vrcp.pop %v5280
    %v5543 = vmul.f32 %v5280, %v5542
    %v5544 = vsub.f32 1.0, %v5543
    %v5545 = vmul.f32 %v5542, %v5544
    %v5546 = vadd.f32 %v5542, %v5545
    %vm5547 = vweird.f32 %v5280
    %vm5548 = vweird.f32 %v5542
    %vm5549 = vmor %vm5547, %vm5548
    %v5550 = vsel %vm5549, %v5542, %v5546
    %v5551 = vand.u32 2147483647, %v5280
    %vm5552 = vcmp.eq.f32.partialorder %v5551, 8.507059e+37
    %v5553 = vand.u32 %v5280, 2147483648
    %v5554 = vor.u32 1.1754944e-38, %v5553
    %v5555 = vsel %vm5552, %v5554, %v5550
    %v5556 = vmul.f32 1.0, %v5555
    %v5557 = vrcp.pop %v5281
    %v5558 = vmul.f32 %v5281, %v5557
    %v5559 = vsub.f32 1.0, %v5558
    %v5560 = vmul.f32 %v5557, %v5559
    %v5561 = vadd.f32 %v5557, %v5560
    %vm5562 = vweird.f32 %v5281
    %vm5563 = vweird.f32 %v5557
    %vm5564 = vmor %vm5562, %vm5563
    %v5565 = vsel %vm5564, %v5557, %v5561
    %v5566 = vand.u32 2147483647, %v5281
    %vm5567 = vcmp.eq.f32.partialorder %v5566, 8.507059e+37
    %v5568 = vand.u32 %v5281, 2147483648
    %v5569 = vor.u32 1.1754944e-38, %v5568
    %v5570 = vsel %vm5567, %v5569, %v5565
    %v5571 = vmul.f32 1.0, %v5570
    %v5572 = vrcp.pop %v5282
    %v5573 = vmul.f32 %v5282, %v5572
    %v5574 = vsub.f32 1.0, %v5573
    %v5575 = vmul.f32 %v5572, %v5574
    %v5576 = vadd.f32 %v5572, %v5575
    %vm5577 = vweird.f32 %v5282
    %vm5578 = vweird.f32 %v5572
    %vm5579 = vmor %vm5577, %vm5578
    %v5580 = vsel %vm5579, %v5572, %v5576
    %v5581 = vand.u32 2147483647, %v5282
    %vm5582 = vcmp.eq.f32.partialorder %v5581, 8.507059e+37
    %v5583 = vand.u32 %v5282, 2147483648
    %v5584 = vor.u32 1.1754944e-38, %v5583
    %v5585 = vsel %vm5582, %v5584, %v5580
    %v5586 = vmul.f32 1.0, %v5585
    %v5587 = vrcp.pop %v5283
    %v5588 = vmul.f32 %v5283, %v5587
    %v5589 = vsub.f32 1.0, %v5588
    %v5590 = vmul.f32 %v5587, %v5589
    %v5591 = vadd.f32 %v5587, %v5590
    %vm5592 = vweird.f32 %v5283
    %vm5593 = vweird.f32 %v5587
    %vm5594 = vmor %vm5592, %vm5593
    %v5595 = vsel %vm5594, %v5587, %v5591
    %v5596 = vand.u32 2147483647, %v5283
    %vm5597 = vcmp.eq.f32.partialorder %v5596, 8.507059e+37
    %v5598 = vand.u32 %v5283, 2147483648
    %v5599 = vor.u32 1.1754944e-38, %v5598
    %v5600 = vsel %vm5597, %v5599, %v5595
    %v5601 = vmul.f32 1.0, %v5600
    %v5602 = vrcp.pop %v5284
    %v5603 = vmul.f32 %v5284, %v5602
    %v5604 = vsub.f32 1.0, %v5603
    %v5605 = vmul.f32 %v5602, %v5604
    %v5606 = vadd.f32 %v5602, %v5605
    %vm5607 = vweird.f32 %v5284
    %vm5608 = vweird.f32 %v5602
    %vm5609 = vmor %vm5607, %vm5608
    %v5610 = vsel %vm5609, %v5602, %v5606
    %v5611 = vand.u32 2147483647, %v5284
    %vm5612 = vcmp.eq.f32.partialorder %v5611, 8.507059e+37
    %v5613 = vand.u32 %v5284, 2147483648
    %v5614 = vor.u32 1.1754944e-38, %v5613
    %v5615 = vsel %vm5612, %v5614, %v5610
    %v5616 = vmul.f32 1.0, %v5615
    %v5617 = vrcp.pop %v5285
    %v5618 = vmul.f32 %v5285, %v5617
    %v5619 = vsub.f32 1.0, %v5618
    %v5620 = vmul.f32 %v5617, %v5619
    %v5621 = vadd.f32 %v5617, %v5620
    %vm5622 = vweird.f32 %v5285
    %vm5623 = vweird.f32 %v5617
    %vm5624 = vmor %vm5622, %vm5623
    %v5625 = vsel %vm5624, %v5617, %v5621
    %v5626 = vand.u32 2147483647, %v5285
    %vm5627 = vcmp.eq.f32.partialorder %v5626, 8.507059e+37
    %v5628 = vand.u32 %v5285, 2147483648
    %v5629 = vor.u32 1.1754944e-38, %v5628
    %v5630 = vsel %vm5627, %v5629, %v5625
    %v5631 = vmul.f32 1.0, %v5630
    %v5632 = vrcp.pop %v5286
    %v5633 = vmul.f32 %v5286, %v5632
    %v5634 = vsub.f32 1.0, %v5633
    %v5635 = vmul.f32 %v5632, %v5634
    %v5636 = vadd.f32 %v5632, %v5635
    %vm5637 = vweird.f32 %v5286
    %vm5638 = vweird.f32 %v5632
    %vm5639 = vmor %vm5637, %vm5638
    %v5640 = vsel %vm5639, %v5632, %v5636
    %v5641 = vand.u32 2147483647, %v5286
    %vm5642 = vcmp.eq.f32.partialorder %v5641, 8.507059e+37
    %v5643 = vand.u32 %v5286, 2147483648
    %v5644 = vor.u32 1.1754944e-38, %v5643
    %v5645 = vsel %vm5642, %v5644, %v5640
    %v5646 = vmul.f32 1.0, %v5645
    %v5647 = vtanh.pop %v4594
    %v5648 = vtanh.pop %v4598
    %v5649 = vtanh.pop %v4602
    %v5650 = vtanh.pop %v4606
    %v5651 = vtanh.pop %v4610
    %v5652 = vtanh.pop %v4614
    %v5653 = vtanh.pop %v4618
    %v5654 = vtanh.pop %v4622
    %v5655 = vmul.f32 %v5316, %v3309
    %v5656 = vmul.f32 %v5361, %v3310
    %v5657 = vmul.f32 %v5406, %v3311
    %v5658 = vmul.f32 %v5451, %v3312
    %v5659 = vmul.f32 %v5496, %v3313
    %v5660 = vmul.f32 %v5541, %v3314
    %v5661 = vmul.f32 %v5586, %v3315
    %v5662 = vmul.f32 %v5631, %v3316
    %v5663 = vmul.f32 %v5301, %v5647
    %v5664 = vmul.f32 %v5346, %v5648
    %v5665 = vmul.f32 %v5391, %v5649
    %v5666 = vmul.f32 %v5436, %v5650
    %v5667 = vmul.f32 %v5481, %v5651
    %v5668 = vmul.f32 %v5526, %v5652
    %v5669 = vmul.f32 %v5571, %v5653
    %v5670 = vmul.f32 %v5616, %v5654
    %v5671 = vadd.f32 %v5655, %v5663
    %v5672 = vadd.f32 %v5656, %v5664
    %v5673 = vadd.f32 %v5657, %v5665
    %v5674 = vadd.f32 %v5658, %v5666
    %v5675 = vadd.f32 %v5659, %v5667
    %v5676 = vadd.f32 %v5660, %v5668
    %v5677 = vadd.f32 %v5661, %v5669
    %v5678 = vadd.f32 %v5662, %v5670
    %v5679 = vtanh.pop %v5671
    %v5680 = vtanh.pop %v5672
    %v5681 = vtanh.pop %v5673
    %v5682 = vtanh.pop %v5674
    %v5683 = vtanh.pop %v5675
    %v5684 = vtanh.pop %v5676
    %v5685 = vtanh.pop %v5677
    %v5686 = vtanh.pop %v5678
    %v5687 = vmul.f32 %v5331, %v5679
    %v5688 = vmul.f32 %v5376, %v5680
    %v5689 = vmul.f32 %v5421, %v5681
    %v5690 = vmul.f32 %v5466, %v5682
    %v5691 = vmul.f32 %v5511, %v5683
    %v5692 = vmul.f32 %v5556, %v5684
    %v5693 = vmul.f32 %v5601, %v5685
    %v5694 = vmul.f32 %v5646, %v5686
    %5695 = vst [vmem:[#allocation3 + $0x40] sm:$0xff] %v5687
    %5696 = vst [vmem:[#allocation3 + $0x48] sm:$0xff] %v5688
    %5697 = vst [vmem:[#allocation3 + $0x50] sm:$0xff] %v5689
    %5698 = vst [vmem:[#allocation3 + $0x58] sm:$0xff] %v5690
    %5699 = vst [vmem:[#allocation3 + $0x60] sm:$0xff] %v5691
    %5700 = vst [vmem:[#allocation3 + $0x68] sm:$0xff] %v5692
    %5701 = vst [vmem:[#allocation3 + $0x70] sm:$0xff] %v5693
    %5702 = vst [vmem:[#allocation3 + $0x78] sm:$0xff] %v5694
    %v5703 = vpack.c.bf16 %v5184, %v5183
    %v5704 = vpack.c.bf16 %v5688, %v5687
    %v5705 = vpack.c.bf16 %v5186, %v5185
    %v5706 = vpack.c.bf16 %v5690, %v5689
    %v5707 = vpack.c.bf16 %v5188, %v5187
    %v5708 = vpack.c.bf16 %v5692, %v5691
    %v5709 = vpack.c.bf16 %v5190, %v5189
    %v5710 = vpack.c.bf16 %v5694, %v5693
    %v5711 = vld [vmem:[#allocation9] sm:$0xff]
    %v5712 = vld [vmem:[#allocation9 + $0x8] sm:$0xff]
    %v5713 = vld [vmem:[#allocation9 + $0x10] sm:$0xff]
    %v5714 = vld [vmem:[#allocation9 + $0x18] sm:$0xff]
    %v5715 = vld [vmem:[#allocation9 + $0x20] sm:$0xff]
    %v5716 = vld [vmem:[#allocation9 + $0x28] sm:$0xff]
    %v5717 = vld [vmem:[#allocation9 + $0x30] sm:$0xff]
    %v5718 = vld [vmem:[#allocation9 + $0x38] sm:$0xff]
    %v5719 = vld [vmem:[#allocation9 + $0x40] sm:$0xff]
    %v5720 = vld [vmem:[#allocation9 + $0x48] sm:$0xff]
    %v5721 = vld [vmem:[#allocation9 + $0x50] sm:$0xff]
    %v5722 = vld [vmem:[#allocation9 + $0x58] sm:$0xff]
    %v5723 = vld [vmem:[#allocation9 + $0x60] sm:$0xff]
    %v5724 = vld [vmem:[#allocation9 + $0x68] sm:$0xff]
    %v5725 = vld [vmem:[#allocation9 + $0x70] sm:$0xff]
    %v5726 = vld [vmem:[#allocation9 + $0x78] sm:$0xff]
    %v5727 = vld [vmem:[#allocation9 + $0x80] sm:$0xff]
    %v5728 = vld [vmem:[#allocation9 + $0x88] sm:$0xff]
    %v5729 = vld [vmem:[#allocation9 + $0x90] sm:$0xff]
    %v5730 = vld [vmem:[#allocation9 + $0x98] sm:$0xff]
    %v5731 = vld [vmem:[#allocation9 + $0xa0] sm:$0xff]
    %v5732 = vld [vmem:[#allocation9 + $0xa8] sm:$0xff]
    %v5733 = vld [vmem:[#allocation9 + $0xb0] sm:$0xff]
    %v5734 = vld [vmem:[#allocation9 + $0xb8] sm:$0xff]
    %v5735 = vld [vmem:[#allocation9 + $0xc0] sm:$0xff]
    %v5736 = vld [vmem:[#allocation9 + $0xc8] sm:$0xff]
    %v5737 = vld [vmem:[#allocation9 + $0xd0] sm:$0xff]
    %v5738 = vld [vmem:[#allocation9 + $0xd8] sm:$0xff]
    %v5739 = vld [vmem:[#allocation9 + $0xe0] sm:$0xff]
    %v5740 = vld [vmem:[#allocation9 + $0xe8] sm:$0xff]
    %v5741 = vld [vmem:[#allocation9 + $0xf0] sm:$0xff]
    %v5742 = vld [vmem:[#allocation9 + $0xf8] sm:$0xff]
    %v5743 = vld [vmem:[#allocation9 + $0x100] sm:$0xff]
    %v5744 = vld [vmem:[#allocation9 + $0x108] sm:$0xff]
    %v5745 = vld [vmem:[#allocation9 + $0x110] sm:$0xff]
    %v5746 = vld [vmem:[#allocation9 + $0x118] sm:$0xff]
    %v5747 = vld [vmem:[#allocation9 + $0x120] sm:$0xff]
    %v5748 = vld [vmem:[#allocation9 + $0x128] sm:$0xff]
    %v5749 = vld [vmem:[#allocation9 + $0x130] sm:$0xff]
    %v5750 = vld [vmem:[#allocation9 + $0x138] sm:$0xff]
    %v5751 = vld [vmem:[#allocation9 + $0x140] sm:$0xff]
    %v5752 = vld [vmem:[#allocation9 + $0x148] sm:$0xff]
    %v5753 = vld [vmem:[#allocation9 + $0x150] sm:$0xff]
    %v5754 = vld [vmem:[#allocation9 + $0x158] sm:$0xff]
    %v5755 = vld [vmem:[#allocation9 + $0x160] sm:$0xff]
    %v5756 = vld [vmem:[#allocation9 + $0x168] sm:$0xff]
    %v5757 = vld [vmem:[#allocation9 + $0x170] sm:$0xff]
    %v5758 = vld [vmem:[#allocation9 + $0x178] sm:$0xff]
    %v5759 = vld [vmem:[#allocation9 + $0x180] sm:$0xff]
    %v5760 = vld [vmem:[#allocation9 + $0x188] sm:$0xff]
    %v5761 = vld [vmem:[#allocation9 + $0x190] sm:$0xff]
    %v5762 = vld [vmem:[#allocation9 + $0x198] sm:$0xff]
    %v5763 = vld [vmem:[#allocation9 + $0x1a0] sm:$0xff]
    %v5764 = vld [vmem:[#allocation9 + $0x1a8] sm:$0xff]
    %v5765 = vld [vmem:[#allocation9 + $0x1b0] sm:$0xff]
    %v5766 = vld [vmem:[#allocation9 + $0x1b8] sm:$0xff]
    %v5767 = vld [vmem:[#allocation9 + $0x1c0] sm:$0xff]
    %v5768 = vld [vmem:[#allocation9 + $0x1c8] sm:$0xff]
    %v5769 = vld [vmem:[#allocation9 + $0x1d0] sm:$0xff]
    %v5770 = vld [vmem:[#allocation9 + $0x1d8] sm:$0xff]
    %v5771 = vld [vmem:[#allocation9 + $0x1e0] sm:$0xff]
    %v5772 = vld [vmem:[#allocation9 + $0x1e8] sm:$0xff]
    %v5773 = vld [vmem:[#allocation9 + $0x1f0] sm:$0xff]
    %v5774 = vld [vmem:[#allocation9 + $0x1f8] sm:$0xff]
    %v5775 = vld [vmem:[#allocation9 + $0x200] sm:$0xff]
    %v5776 = vld [vmem:[#allocation9 + $0x208] sm:$0xff]
    %v5777 = vld [vmem:[#allocation9 + $0x210] sm:$0xff]
    %v5778 = vld [vmem:[#allocation9 + $0x218] sm:$0xff]
    %v5779 = vld [vmem:[#allocation9 + $0x220] sm:$0xff]
    %v5780 = vld [vmem:[#allocation9 + $0x228] sm:$0xff]
    %v5781 = vld [vmem:[#allocation9 + $0x230] sm:$0xff]
    %v5782 = vld [vmem:[#allocation9 + $0x238] sm:$0xff]
    %v5783 = vld [vmem:[#allocation9 + $0x240] sm:$0xff]
    %v5784 = vld [vmem:[#allocation9 + $0x248] sm:$0xff]
    %v5785 = vld [vmem:[#allocation9 + $0x250] sm:$0xff]
    %v5786 = vld [vmem:[#allocation9 + $0x258] sm:$0xff]
    %v5787 = vld [vmem:[#allocation9 + $0x260] sm:$0xff]
    %v5788 = vld [vmem:[#allocation9 + $0x268] sm:$0xff]
    %v5789 = vld [vmem:[#allocation9 + $0x270] sm:$0xff]
    %v5790 = vld [vmem:[#allocation9 + $0x278] sm:$0xff]
    %v5791 = vld [vmem:[#allocation9 + $0x280] sm:$0xff]
    %v5792 = vld [vmem:[#allocation9 + $0x288] sm:$0xff]
    %v5793 = vld [vmem:[#allocation9 + $0x290] sm:$0xff]
    %v5794 = vld [vmem:[#allocation9 + $0x298] sm:$0xff]
    %v5795 = vld [vmem:[#allocation9 + $0x2a0] sm:$0xff]
    %v5796 = vld [vmem:[#allocation9 + $0x2a8] sm:$0xff]
    %v5797 = vld [vmem:[#allocation9 + $0x2b0] sm:$0xff]
    %v5798 = vld [vmem:[#allocation9 + $0x2b8] sm:$0xff]
    %v5799 = vld [vmem:[#allocation9 + $0x2c0] sm:$0xff]
    %v5800 = vld [vmem:[#allocation9 + $0x2c8] sm:$0xff]
    %v5801 = vld [vmem:[#allocation9 + $0x2d0] sm:$0xff]
    %v5802 = vld [vmem:[#allocation9 + $0x2d8] sm:$0xff]
    %v5803 = vld [vmem:[#allocation9 + $0x2e0] sm:$0xff]
    %v5804 = vld [vmem:[#allocation9 + $0x2e8] sm:$0xff]
    %v5805 = vld [vmem:[#allocation9 + $0x2f0] sm:$0xff]
    %v5806 = vld [vmem:[#allocation9 + $0x2f8] sm:$0xff]
    %v5807 = vld [vmem:[#allocation9 + $0x300] sm:$0xff]
    %v5808 = vld [vmem:[#allocation9 + $0x308] sm:$0xff]
    %v5809 = vld [vmem:[#allocation9 + $0x310] sm:$0xff]
    %v5810 = vld [vmem:[#allocation9 + $0x318] sm:$0xff]
    %v5811 = vld [vmem:[#allocation9 + $0x320] sm:$0xff]
    %v5812 = vld [vmem:[#allocation9 + $0x328] sm:$0xff]
    %v5813 = vld [vmem:[#allocation9 + $0x330] sm:$0xff]
    %v5814 = vld [vmem:[#allocation9 + $0x338] sm:$0xff]
    %v5815 = vld [vmem:[#allocation9 + $0x340] sm:$0xff]
    %v5816 = vld [vmem:[#allocation9 + $0x348] sm:$0xff]
    %v5817 = vld [vmem:[#allocation9 + $0x350] sm:$0xff]
    %v5818 = vld [vmem:[#allocation9 + $0x358] sm:$0xff]
    %v5819 = vld [vmem:[#allocation9 + $0x360] sm:$0xff]
    %v5820 = vld [vmem:[#allocation9 + $0x368] sm:$0xff]
    %v5821 = vld [vmem:[#allocation9 + $0x370] sm:$0xff]
    %v5822 = vld [vmem:[#allocation9 + $0x378] sm:$0xff]
    %v5823 = vld [vmem:[#allocation9 + $0x380] sm:$0xff]
    %v5824 = vld [vmem:[#allocation9 + $0x388] sm:$0xff]
    %v5825 = vld [vmem:[#allocation9 + $0x390] sm:$0xff]
    %v5826 = vld [vmem:[#allocation9 + $0x398] sm:$0xff]
    %v5827 = vld [vmem:[#allocation9 + $0x3a0] sm:$0xff]
    %v5828 = vld [vmem:[#allocation9 + $0x3a8] sm:$0xff]
    %v5829 = vld [vmem:[#allocation9 + $0x3b0] sm:$0xff]
    %v5830 = vld [vmem:[#allocation9 + $0x3b8] sm:$0xff]
    %v5831 = vld [vmem:[#allocation9 + $0x3c0] sm:$0xff]
    %v5832 = vld [vmem:[#allocation9 + $0x3c8] sm:$0xff]
    %v5833 = vld [vmem:[#allocation9 + $0x3d0] sm:$0xff]
    %v5834 = vld [vmem:[#allocation9 + $0x3d8] sm:$0xff]
    %v5835 = vld [vmem:[#allocation9 + $0x3e0] sm:$0xff]
    %v5836 = vld [vmem:[#allocation9 + $0x3e8] sm:$0xff]
    %v5837 = vld [vmem:[#allocation9 + $0x3f0] sm:$0xff]
    %v5838 = vld [vmem:[#allocation9 + $0x3f8] sm:$0xff]
    %v5967 = vunpack.c.l.b16 %v5711
    %v5968 = vunpack.c.h.b16 %v5711
    %v5969 = vunpack.c.l.b16 %v5712
    %v5970 = vunpack.c.h.b16 %v5712
    %v5971 = vunpack.c.l.b16 %v5713
    %v5972 = vunpack.c.h.b16 %v5713
    %v5973 = vunpack.c.l.b16 %v5714
    %v5974 = vunpack.c.h.b16 %v5714
    %v5975 = vunpack.c.l.b16 %v5715
    %v5976 = vunpack.c.h.b16 %v5715
    %v5977 = vunpack.c.l.b16 %v5716
    %v5978 = vunpack.c.h.b16 %v5716
    %v5979 = vunpack.c.l.b16 %v5717
    %v5980 = vunpack.c.h.b16 %v5717
    %v5981 = vunpack.c.l.b16 %v5718
    %v5982 = vunpack.c.h.b16 %v5718
    %v5983 = vunpack.c.l.b16 %v5719
    %v5984 = vunpack.c.h.b16 %v5719
    %v5985 = vunpack.c.l.b16 %v5720
    %v5986 = vunpack.c.h.b16 %v5720
    %v5987 = vunpack.c.l.b16 %v5721
    %v5988 = vunpack.c.h.b16 %v5721
    %v5989 = vunpack.c.l.b16 %v5722
    %v5990 = vunpack.c.h.b16 %v5722
    %v5991 = vunpack.c.l.b16 %v5723
    %v5992 = vunpack.c.h.b16 %v5723
    %v5993 = vunpack.c.l.b16 %v5724
    %v5994 = vunpack.c.h.b16 %v5724
    %v5995 = vunpack.c.l.b16 %v5725
    %v5996 = vunpack.c.h.b16 %v5725
    %v5997 = vunpack.c.l.b16 %v5726
    %v5998 = vunpack.c.h.b16 %v5726
    %v5999 = vunpack.c.l.b16 %v5727
    %v6000 = vunpack.c.h.b16 %v5727
    %v6001 = vunpack.c.l.b16 %v5728
    %v6002 = vunpack.c.h.b16 %v5728
    %v6003 = vunpack.c.l.b16 %v5729
    %v6004 = vunpack.c.h.b16 %v5729
    %v6005 = vunpack.c.l.b16 %v5730
    %v6006 = vunpack.c.h.b16 %v5730
    %v6007 = vunpack.c.l.b16 %v5731
    %v6008 = vunpack.c.h.b16 %v5731
    %v6009 = vunpack.c.l.b16 %v5732
    %v6010 = vunpack.c.h.b16 %v5732
    %v6011 = vunpack.c.l.b16 %v5733
    %v6012 = vunpack.c.h.b16 %v5733
    %v6013 = vunpack.c.l.b16 %v5734
    %v6014 = vunpack.c.h.b16 %v5734
    %v6015 = vunpack.c.l.b16 %v5735
    %v6016 = vunpack.c.h.b16 %v5735
    %v6017 = vunpack.c.l.b16 %v5736
    %v6018 = vunpack.c.h.b16 %v5736
    %v6019 = vunpack.c.l.b16 %v5737
    %v6020 = vunpack.c.h.b16 %v5737
    %v6021 = vunpack.c.l.b16 %v5738
    %v6022 = vunpack.c.h.b16 %v5738
    %v6023 = vunpack.c.l.b16 %v5739
    %v6024 = vunpack.c.h.b16 %v5739
    %v6025 = vunpack.c.l.b16 %v5740
    %v6026 = vunpack.c.h.b16 %v5740
    %v6027 = vunpack.c.l.b16 %v5741
    %v6028 = vunpack.c.h.b16 %v5741
    %v6029 = vunpack.c.l.b16 %v5742
    %v6030 = vunpack.c.h.b16 %v5742
    %v6031 = vunpack.c.l.b16 %v5743
    %v6032 = vunpack.c.h.b16 %v5743
    %v6033 = vunpack.c.l.b16 %v5744
    %v6034 = vunpack.c.h.b16 %v5744
    %v6035 = vunpack.c.l.b16 %v5745
    %v6036 = vunpack.c.h.b16 %v5745
    %v6037 = vunpack.c.l.b16 %v5746
    %v6038 = vunpack.c.h.b16 %v5746
    %v6039 = vunpack.c.l.b16 %v5747
    %v6040 = vunpack.c.h.b16 %v5747
    %v6041 = vunpack.c.l.b16 %v5748
    %v6042 = vunpack.c.h.b16 %v5748
    %v6043 = vunpack.c.l.b16 %v5749
    %v6044 = vunpack.c.h.b16 %v5749
    %v6045 = vunpack.c.l.b16 %v5750
    %v6046 = vunpack.c.h.b16 %v5750
    %v6047 = vunpack.c.l.b16 %v5751
    %v6048 = vunpack.c.h.b16 %v5751
    %v6049 = vunpack.c.l.b16 %v5752
    %v6050 = vunpack.c.h.b16 %v5752
    %v6051 = vunpack.c.l.b16 %v5753
    %v6052 = vunpack.c.h.b16 %v5753
    %v6053 = vunpack.c.l.b16 %v5754
    %v6054 = vunpack.c.h.b16 %v5754
    %v6055 = vunpack.c.l.b16 %v5755
    %v6056 = vunpack.c.h.b16 %v5755
    %v6057 = vunpack.c.l.b16 %v5756
    %v6058 = vunpack.c.h.b16 %v5756
    %v6059 = vunpack.c.l.b16 %v5757
    %v6060 = vunpack.c.h.b16 %v5757
    %v6061 = vunpack.c.l.b16 %v5758
    %v6062 = vunpack.c.h.b16 %v5758
    %v6063 = vunpack.c.l.b16 %v5759
    %v6064 = vunpack.c.h.b16 %v5759
    %v6065 = vunpack.c.l.b16 %v5760
    %v6066 = vunpack.c.h.b16 %v5760
    %v6067 = vunpack.c.l.b16 %v5761
    %v6068 = vunpack.c.h.b16 %v5761
    %v6069 = vunpack.c.l.b16 %v5762
    %v6070 = vunpack.c.h.b16 %v5762
    %v6071 = vunpack.c.l.b16 %v5763
    %v6072 = vunpack.c.h.b16 %v5763
    %v6073 = vunpack.c.l.b16 %v5764
    %v6074 = vunpack.c.h.b16 %v5764
    %v6075 = vunpack.c.l.b16 %v5765
    %v6076 = vunpack.c.h.b16 %v5765
    %v6077 = vunpack.c.l.b16 %v5766
    %v6078 = vunpack.c.h.b16 %v5766
    %v6079 = vunpack.c.l.b16 %v5767
    %v6080 = vunpack.c.h.b16 %v5767
    %v6081 = vunpack.c.l.b16 %v5768
    %v6082 = vunpack.c.h.b16 %v5768
    %v6083 = vunpack.c.l.b16 %v5769
    %v6084 = vunpack.c.h.b16 %v5769
    %v6085 = vunpack.c.l.b16 %v5770
    %v6086 = vunpack.c.h.b16 %v5770
    %v6087 = vunpack.c.l.b16 %v5771
    %v6088 = vunpack.c.h.b16 %v5771
    %v6089 = vunpack.c.l.b16 %v5772
    %v6090 = vunpack.c.h.b16 %v5772
    %v6091 = vunpack.c.l.b16 %v5773
    %v6092 = vunpack.c.h.b16 %v5773
    %v6093 = vunpack.c.l.b16 %v5774
    %v6094 = vunpack.c.h.b16 %v5774
    %v6095 = vunpack.c.l.b16 %v5775
    %v6096 = vunpack.c.h.b16 %v5775
    %v6097 = vunpack.c.l.b16 %v5776
    %v6098 = vunpack.c.h.b16 %v5776
    %v6099 = vunpack.c.l.b16 %v5777
    %v6100 = vunpack.c.h.b16 %v5777
    %v6101 = vunpack.c.l.b16 %v5778
    %v6102 = vunpack.c.h.b16 %v5778
    %v6103 = vunpack.c.l.b16 %v5779
    %v6104 = vunpack.c.h.b16 %v5779
    %v6105 = vunpack.c.l.b16 %v5780
    %v6106 = vunpack.c.h.b16 %v5780
    %v6107 = vunpack.c.l.b16 %v5781
    %v6108 = vunpack.c.h.b16 %v5781
    %v6109 = vunpack.c.l.b16 %v5782
    %v6110 = vunpack.c.h.b16 %v5782
    %v6111 = vunpack.c.l.b16 %v5783
    %v6112 = vunpack.c.h.b16 %v5783
    %v6113 = vunpack.c.l.b16 %v5784
    %v6114 = vunpack.c.h.b16 %v5784
    %v6115 = vunpack.c.l.b16 %v5785
    %v6116 = vunpack.c.h.b16 %v5785
    %v6117 = vunpack.c.l.b16 %v5786
    %v6118 = vunpack.c.h.b16 %v5786
    %v6119 = vunpack.c.l.b16 %v5787
    %v6120 = vunpack.c.h.b16 %v5787
    %v6121 = vunpack.c.l.b16 %v5788
    %v6122 = vunpack.c.h.b16 %v5788
    %v6123 = vunpack.c.l.b16 %v5789
    %v6124 = vunpack.c.h.b16 %v5789
    %v6125 = vunpack.c.l.b16 %v5790
    %v6126 = vunpack.c.h.b16 %v5790
    %v6127 = vunpack.c.l.b16 %v5791
    %v6128 = vunpack.c.h.b16 %v5791
    %v6129 = vunpack.c.l.b16 %v5792
    %v6130 = vunpack.c.h.b16 %v5792
    %v6131 = vunpack.c.l.b16 %v5793
    %v6132 = vunpack.c.h.b16 %v5793
    %v6133 = vunpack.c.l.b16 %v5794
    %v6134 = vunpack.c.h.b16 %v5794
    %v6135 = vunpack.c.l.b16 %v5795
    %v6136 = vunpack.c.h.b16 %v5795
    %v6137 = vunpack.c.l.b16 %v5796
    %v6138 = vunpack.c.h.b16 %v5796
    %v6139 = vunpack.c.l.b16 %v5797
    %v6140 = vunpack.c.h.b16 %v5797
    %v6141 = vunpack.c.l.b16 %v5798
    %v6142 = vunpack.c.h.b16 %v5798
    %v6143 = vunpack.c.l.b16 %v5799
    %v6144 = vunpack.c.h.b16 %v5799
    %v6145 = vunpack.c.l.b16 %v5800
    %v6146 = vunpack.c.h.b16 %v5800
    %v6147 = vunpack.c.l.b16 %v5801
    %v6148 = vunpack.c.h.b16 %v5801
    %v6149 = vunpack.c.l.b16 %v5802
    %v6150 = vunpack.c.h.b16 %v5802
    %v6151 = vunpack.c.l.b16 %v5803
    %v6152 = vunpack.c.h.b16 %v5803
    %v6153 = vunpack.c.l.b16 %v5804
    %v6154 = vunpack.c.h.b16 %v5804
    %v6155 = vunpack.c.l.b16 %v5805
    %v6156 = vunpack.c.h.b16 %v5805
    %v6157 = vunpack.c.l.b16 %v5806
    %v6158 = vunpack.c.h.b16 %v5806
    %v6159 = vunpack.c.l.b16 %v5807
    %v6160 = vunpack.c.h.b16 %v5807
    %v6161 = vunpack.c.l.b16 %v5808
    %v6162 = vunpack.c.h.b16 %v5808
    %v6163 = vunpack.c.l.b16 %v5809
    %v6164 = vunpack.c.h.b16 %v5809
    %v6165 = vunpack.c.l.b16 %v5810
    %v6166 = vunpack.c.h.b16 %v5810
    %v6167 = vunpack.c.l.b16 %v5811
    %v6168 = vunpack.c.h.b16 %v5811
    %v6169 = vunpack.c.l.b16 %v5812
    %v6170 = vunpack.c.h.b16 %v5812
    %v6171 = vunpack.c.l.b16 %v5813
    %v6172 = vunpack.c.h.b16 %v5813
    %v6173 = vunpack.c.l.b16 %v5814
    %v6174 = vunpack.c.h.b16 %v5814
    %v6175 = vunpack.c.l.b16 %v5815
    %v6176 = vunpack.c.h.b16 %v5815
    %v6177 = vunpack.c.l.b16 %v5816
    %v6178 = vunpack.c.h.b16 %v5816
    %v6179 = vunpack.c.l.b16 %v5817
    %v6180 = vunpack.c.h.b16 %v5817
    %v6181 = vunpack.c.l.b16 %v5818
    %v6182 = vunpack.c.h.b16 %v5818
    %v6183 = vunpack.c.l.b16 %v5819
    %v6184 = vunpack.c.h.b16 %v5819
    %v6185 = vunpack.c.l.b16 %v5820
    %v6186 = vunpack.c.h.b16 %v5820
    %v6187 = vunpack.c.l.b16 %v5821
    %v6188 = vunpack.c.h.b16 %v5821
    %v6189 = vunpack.c.l.b16 %v5822
    %v6190 = vunpack.c.h.b16 %v5822
    %v6191 = vunpack.c.l.b16 %v5823
    %v6192 = vunpack.c.h.b16 %v5823
    %v6193 = vunpack.c.l.b16 %v5824
    %v6194 = vunpack.c.h.b16 %v5824
    %v6195 = vunpack.c.l.b16 %v5825
    %v6196 = vunpack.c.h.b16 %v5825
    %v6197 = vunpack.c.l.b16 %v5826
    %v6198 = vunpack.c.h.b16 %v5826
    %v6199 = vunpack.c.l.b16 %v5827
    %v6200 = vunpack.c.h.b16 %v5827
    %v6201 = vunpack.c.l.b16 %v5828
    %v6202 = vunpack.c.h.b16 %v5828
    %v6203 = vunpack.c.l.b16 %v5829
    %v6204 = vunpack.c.h.b16 %v5829
    %v6205 = vunpack.c.l.b16 %v5830
    %v6206 = vunpack.c.h.b16 %v5830
    %v6207 = vunpack.c.l.b16 %v5831
    %v6208 = vunpack.c.h.b16 %v5831
    %v6209 = vunpack.c.l.b16 %v5832
    %v6210 = vunpack.c.h.b16 %v5832
    %v6211 = vunpack.c.l.b16 %v5833
    %v6212 = vunpack.c.h.b16 %v5833
    %v6213 = vunpack.c.l.b16 %v5834
    %v6214 = vunpack.c.h.b16 %v5834
    %v6215 = vunpack.c.l.b16 %v5835
    %v6216 = vunpack.c.h.b16 %v5835
    %v6217 = vunpack.c.l.b16 %v5836
    %v6218 = vunpack.c.h.b16 %v5836
    %v6219 = vunpack.c.l.b16 %v5837
    %v6220 = vunpack.c.h.b16 %v5837
    %v6221 = vunpack.c.l.b16 %v5838
    %v6222 = vunpack.c.h.b16 %v5838
    %v6223 = vpack.c.b16 %v5975, %v5967
    %v6224 = vpack.c.b16 %v5976, %v5968
    %v6225 = vpack.c.b16 %v5977, %v5969
    %v6226 = vpack.c.b16 %v5978, %v5970
    %v6227 = vpack.c.b16 %v5979, %v5971
    %v6228 = vpack.c.b16 %v5980, %v5972
    %v6229 = vpack.c.b16 %v5981, %v5973
    %v6230 = vpack.c.b16 %v5982, %v5974
    %v6231 = vpack.c.b16 %v5991, %v5983
    %v6232 = vpack.c.b16 %v5992, %v5984
    %v6233 = vpack.c.b16 %v5993, %v5985
    %v6234 = vpack.c.b16 %v5994, %v5986
    %v6235 = vpack.c.b16 %v5995, %v5987
    %v6236 = vpack.c.b16 %v5996, %v5988
    %v6237 = vpack.c.b16 %v5997, %v5989
    %v6238 = vpack.c.b16 %v5998, %v5990
    %v6239 = vpack.c.b16 %v6007, %v5999
    %v6240 = vpack.c.b16 %v6008, %v6000
    %v6241 = vpack.c.b16 %v6009, %v6001
    %v6242 = vpack.c.b16 %v6010, %v6002
    %v6243 = vpack.c.b16 %v6011, %v6003
    %v6244 = vpack.c.b16 %v6012, %v6004
    %v6245 = vpack.c.b16 %v6013, %v6005
    %v6246 = vpack.c.b16 %v6014, %v6006
    %v6247 = vpack.c.b16 %v6023, %v6015
    %v6248 = vpack.c.b16 %v6024, %v6016
    %v6249 = vpack.c.b16 %v6025, %v6017
    %v6250 = vpack.c.b16 %v6026, %v6018
    %v6251 = vpack.c.b16 %v6027, %v6019
    %v6252 = vpack.c.b16 %v6028, %v6020
    %v6253 = vpack.c.b16 %v6029, %v6021
    %v6254 = vpack.c.b16 %v6030, %v6022
    %v6255 = vpack.c.b16 %v6039, %v6031
    %v6256 = vpack.c.b16 %v6040, %v6032
    %v6257 = vpack.c.b16 %v6041, %v6033
    %v6258 = vpack.c.b16 %v6042, %v6034
    %v6259 = vpack.c.b16 %v6043, %v6035
    %v6260 = vpack.c.b16 %v6044, %v6036
    %v6261 = vpack.c.b16 %v6045, %v6037
    %v6262 = vpack.c.b16 %v6046, %v6038
    %v6263 = vpack.c.b16 %v6055, %v6047
    %v6264 = vpack.c.b16 %v6056, %v6048
    %v6265 = vpack.c.b16 %v6057, %v6049
    %v6266 = vpack.c.b16 %v6058, %v6050
    %v6267 = vpack.c.b16 %v6059, %v6051
    %v6268 = vpack.c.b16 %v6060, %v6052
    %v6269 = vpack.c.b16 %v6061, %v6053
    %v6270 = vpack.c.b16 %v6062, %v6054
    %v6271 = vpack.c.b16 %v6071, %v6063
    %v6272 = vpack.c.b16 %v6072, %v6064
    %v6273 = vpack.c.b16 %v6073, %v6065
    %v6274 = vpack.c.b16 %v6074, %v6066
    %v6275 = vpack.c.b16 %v6075, %v6067
    %v6276 = vpack.c.b16 %v6076, %v6068
    %v6277 = vpack.c.b16 %v6077, %v6069
    %v6278 = vpack.c.b16 %v6078, %v6070
    %v6279 = vpack.c.b16 %v6087, %v6079
    %v6280 = vpack.c.b16 %v6088, %v6080
    %v6281 = vpack.c.b16 %v6089, %v6081
    %v6282 = vpack.c.b16 %v6090, %v6082
    %v6283 = vpack.c.b16 %v6091, %v6083
    %v6284 = vpack.c.b16 %v6092, %v6084
    %v6285 = vpack.c.b16 %v6093, %v6085
    %v6286 = vpack.c.b16 %v6094, %v6086
    %v6287 = vpack.c.b16 %v6103, %v6095
    %v6288 = vpack.c.b16 %v6104, %v6096
    %v6289 = vpack.c.b16 %v6105, %v6097
    %v6290 = vpack.c.b16 %v6106, %v6098
    %v6291 = vpack.c.b16 %v6107, %v6099
    %v6292 = vpack.c.b16 %v6108, %v6100
    %v6293 = vpack.c.b16 %v6109, %v6101
    %v6294 = vpack.c.b16 %v6110, %v6102
    %v6295 = vpack.c.b16 %v6119, %v6111
    %v6296 = vpack.c.b16 %v6120, %v6112
    %v6297 = vpack.c.b16 %v6121, %v6113
    %v6298 = vpack.c.b16 %v6122, %v6114
    %v6299 = vpack.c.b16 %v6123, %v6115
    %v6300 = vpack.c.b16 %v6124, %v6116
    %v6301 = vpack.c.b16 %v6125, %v6117
    %v6302 = vpack.c.b16 %v6126, %v6118
    %v6303 = vpack.c.b16 %v6135, %v6127
    %v6304 = vpack.c.b16 %v6136, %v6128
    %v6305 = vpack.c.b16 %v6137, %v6129
    %v6306 = vpack.c.b16 %v6138, %v6130
    %v6307 = vpack.c.b16 %v6139, %v6131
    %v6308 = vpack.c.b16 %v6140, %v6132
    %v6309 = vpack.c.b16 %v6141, %v6133
    %v6310 = vpack.c.b16 %v6142, %v6134
    %v6311 = vpack.c.b16 %v6151, %v6143
    %v6312 = vpack.c.b16 %v6152, %v6144
    %v6313 = vpack.c.b16 %v6153, %v6145
    %v6314 = vpack.c.b16 %v6154, %v6146
    %v6315 = vpack.c.b16 %v6155, %v6147
    %v6316 = vpack.c.b16 %v6156, %v6148
    %v6317 = vpack.c.b16 %v6157, %v6149
    %v6318 = vpack.c.b16 %v6158, %v6150
    %v6319 = vpack.c.b16 %v6167, %v6159
    %v6320 = vpack.c.b16 %v6168, %v6160
    %v6321 = vpack.c.b16 %v6169, %v6161
    %v6322 = vpack.c.b16 %v6170, %v6162
    %v6323 = vpack.c.b16 %v6171, %v6163
    %v6324 = vpack.c.b16 %v6172, %v6164
    %v6325 = vpack.c.b16 %v6173, %v6165
    %v6326 = vpack.c.b16 %v6174, %v6166
    %v6327 = vpack.c.b16 %v6183, %v6175
    %v6328 = vpack.c.b16 %v6184, %v6176
    %v6329 = vpack.c.b16 %v6185, %v6177
    %v6330 = vpack.c.b16 %v6186, %v6178
    %v6331 = vpack.c.b16 %v6187, %v6179
    %v6332 = vpack.c.b16 %v6188, %v6180
    %v6333 = vpack.c.b16 %v6189, %v6181
    %v6334 = vpack.c.b16 %v6190, %v6182
    %v6335 = vpack.c.b16 %v6199, %v6191
    %v6336 = vpack.c.b16 %v6200, %v6192
    %v6337 = vpack.c.b16 %v6201, %v6193
    %v6338 = vpack.c.b16 %v6202, %v6194
    %v6339 = vpack.c.b16 %v6203, %v6195
    %v6340 = vpack.c.b16 %v6204, %v6196
    %v6341 = vpack.c.b16 %v6205, %v6197
    %v6342 = vpack.c.b16 %v6206, %v6198
    %v6343 = vpack.c.b16 %v6215, %v6207
    %v6344 = vpack.c.b16 %v6216, %v6208
    %v6345 = vpack.c.b16 %v6217, %v6209
    %v6346 = vpack.c.b16 %v6218, %v6210
    %v6347 = vpack.c.b16 %v6219, %v6211
    %v6348 = vpack.c.b16 %v6220, %v6212
    %v6349 = vpack.c.b16 %v6221, %v6213
    %v6350 = vpack.c.b16 %v6222, %v6214
    %6479 = vmatpush.bf16.msra.mxu0 %v6279
    %6480 = vmatpush.bf16.msra.mxu0 %v6271
    %6481 = vmatpush.bf16.msra.mxu0 %v6263
    %6482 = vmatpush.bf16.msra.mxu0 %v6255
    %6483 = vmatpush.bf16.msra.mxu0 %v6247
    %6484 = vmatpush.bf16.msra.mxu0 %v6239
    %6485 = vmatpush.bf16.msra.mxu0 %v6231
    %6486 = vmatpush.bf16.msra.mxu0 %v6223
    %6487 = vmatmul.bf16.gmra.mxu0 %v5703
    %v6488 = vpop.f32.mrf.mxu0
    %v6489 = vadd.f32 0.0, %v6488
    %v6490 = vpop.f32.mrf.mxu0
    %v6491 = vadd.f32 0.0, %v6490
    %6492 = vmatmul.bf16.gmra.mxu0 %v5705
    %v6493 = vpop.f32.mrf.mxu0
    %v6494 = vadd.f32 0.0, %v6493
    %v6495 = vpop.f32.mrf.mxu0
    %v6496 = vadd.f32 0.0, %v6495
    %6497 = vmatmul.bf16.gmra.mxu0 %v5707
    %v6498 = vpop.f32.mrf.mxu0
    %v6499 = vadd.f32 0.0, %v6498
    %v6500 = vpop.f32.mrf.mxu0
    %v6501 = vadd.f32 0.0, %v6500
    %6502 = vmatmul.bf16.gmra.mxu0 %v5709
    %v6503 = vpop.f32.mrf.mxu0
    %v6504 = vadd.f32 0.0, %v6503
    %v6505 = vpop.f32.mrf.mxu0
    %v6506 = vadd.f32 0.0, %v6505
    %6507 = vdwg.mxu0
    %6508 = vmatpush.bf16.msra.mxu0 %v6343
    %6509 = vmatpush.bf16.msra.mxu0 %v6335
    %6510 = vmatpush.bf16.msra.mxu0 %v6327
    %6511 = vmatpush.bf16.msra.mxu0 %v6319
    %6512 = vmatpush.bf16.msra.mxu0 %v6311
    %6513 = vmatpush.bf16.msra.mxu0 %v6303
    %6514 = vmatpush.bf16.msra.mxu0 %v6295
    %6515 = vmatpush.bf16.msra.mxu0 %v6287
    %6516 = vmatmul.bf16.gmra.mxu0 %v5704
    %v6517 = vpop.f32.mrf.mxu0
    %v6518 = vadd.f32 %v6489, %v6517
    %v6519 = vpop.f32.mrf.mxu0
    %v6520 = vadd.f32 %v6491, %v6519
    %6521 = vmatmul.bf16.gmra.mxu0 %v5706
    %v6522 = vpop.f32.mrf.mxu0
    %v6523 = vadd.f32 %v6494, %v6522
    %v6524 = vpop.f32.mrf.mxu0
    %v6525 = vadd.f32 %v6496, %v6524
    %6526 = vmatmul.bf16.gmra.mxu0 %v5708
    %v6527 = vpop.f32.mrf.mxu0
    %v6528 = vadd.f32 %v6499, %v6527
    %v6529 = vpop.f32.mrf.mxu0
    %v6530 = vadd.f32 %v6501, %v6529
    %6531 = vmatmul.bf16.gmra.mxu0 %v5710
    %v6532 = vpop.f32.mrf.mxu0
    %v6533 = vadd.f32 %v6504, %v6532
    %v6534 = vpop.f32.mrf.mxu0
    %v6535 = vadd.f32 %v6506, %v6534
    %6536 = vdwg.mxu0
    %6537 = vmatpush.bf16.msra.mxu0 %v6280
    %6538 = vmatpush.bf16.msra.mxu0 %v6272
    %6539 = vmatpush.bf16.msra.mxu0 %v6264
    %6540 = vmatpush.bf16.msra.mxu0 %v6256
    %6541 = vmatpush.bf16.msra.mxu0 %v6248
    %6542 = vmatpush.bf16.msra.mxu0 %v6240
    %6543 = vmatpush.bf16.msra.mxu0 %v6232
    %6544 = vmatpush.bf16.msra.mxu0 %v6224
    %6545 = vmatmul.bf16.gmra.mxu0 %v5703
    %v6546 = vpop.f32.mrf.mxu0
    %v6547 = vadd.f32 0.0, %v6546
    %v6548 = vpop.f32.mrf.mxu0
    %v6549 = vadd.f32 0.0, %v6548
    %6550 = vmatmul.bf16.gmra.mxu0 %v5705
    %v6551 = vpop.f32.mrf.mxu0
    %v6552 = vadd.f32 0.0, %v6551
    %v6553 = vpop.f32.mrf.mxu0
    %v6554 = vadd.f32 0.0, %v6553
    %6555 = vmatmul.bf16.gmra.mxu0 %v5707
    %v6556 = vpop.f32.mrf.mxu0
    %v6557 = vadd.f32 0.0, %v6556
    %v6558 = vpop.f32.mrf.mxu0
    %v6559 = vadd.f32 0.0, %v6558
    %6560 = vmatmul.bf16.gmra.mxu0 %v5709
    %v6561 = vpop.f32.mrf.mxu0
    %v6562 = vadd.f32 0.0, %v6561
    %v6563 = vpop.f32.mrf.mxu0
    %v6564 = vadd.f32 0.0, %v6563
    %6565 = vdwg.mxu0
    %6566 = vmatpush.bf16.msra.mxu0 %v6344
    %6567 = vmatpush.bf16.msra.mxu0 %v6336
    %6568 = vmatpush.bf16.msra.mxu0 %v6328
    %6569 = vmatpush.bf16.msra.mxu0 %v6320
    %6570 = vmatpush.bf16.msra.mxu0 %v6312
    %6571 = vmatpush.bf16.msra.mxu0 %v6304
    %6572 = vmatpush.bf16.msra.mxu0 %v6296
    %6573 = vmatpush.bf16.msra.mxu0 %v6288
    %6574 = vmatmul.bf16.gmra.mxu0 %v5704
    %v6575 = vpop.f32.mrf.mxu0
    %v6576 = vadd.f32 %v6547, %v6575
    %v6577 = vpop.f32.mrf.mxu0
    %v6578 = vadd.f32 %v6549, %v6577
    %6579 = vmatmul.bf16.gmra.mxu0 %v5706
    %v6580 = vpop.f32.mrf.mxu0
    %v6581 = vadd.f32 %v6552, %v6580
    %v6582 = vpop.f32.mrf.mxu0
    %v6583 = vadd.f32 %v6554, %v6582
    %6584 = vmatmul.bf16.gmra.mxu0 %v5708
    %v6585 = vpop.f32.mrf.mxu0
    %v6586 = vadd.f32 %v6557, %v6585
    %v6587 = vpop.f32.mrf.mxu0
    %v6588 = vadd.f32 %v6559, %v6587
    %6589 = vmatmul.bf16.gmra.mxu0 %v5710
    %v6590 = vpop.f32.mrf.mxu0
    %v6591 = vadd.f32 %v6562, %v6590
    %v6592 = vpop.f32.mrf.mxu0
    %v6593 = vadd.f32 %v6564, %v6592
    %6594 = vdwg.mxu0
    %6595 = vmatpush.bf16.msra.mxu0 %v6281
    %6596 = vmatpush.bf16.msra.mxu0 %v6273
    %6597 = vmatpush.bf16.msra.mxu0 %v6265
    %6598 = vmatpush.bf16.msra.mxu0 %v6257
    %6599 = vmatpush.bf16.msra.mxu0 %v6249
    %6600 = vmatpush.bf16.msra.mxu0 %v6241
    %6601 = vmatpush.bf16.msra.mxu0 %v6233
    %6602 = vmatpush.bf16.msra.mxu0 %v6225
    %6603 = vmatmul.bf16.gmra.mxu0 %v5703
    %v6604 = vpop.f32.mrf.mxu0
    %v6605 = vadd.f32 0.0, %v6604
    %v6606 = vpop.f32.mrf.mxu0
    %v6607 = vadd.f32 0.0, %v6606
    %6608 = vmatmul.bf16.gmra.mxu0 %v5705
    %v6609 = vpop.f32.mrf.mxu0
    %v6610 = vadd.f32 0.0, %v6609
    %v6611 = vpop.f32.mrf.mxu0
    %v6612 = vadd.f32 0.0, %v6611
    %6613 = vmatmul.bf16.gmra.mxu0 %v5707
    %v6614 = vpop.f32.mrf.mxu0
    %v6615 = vadd.f32 0.0, %v6614
    %v6616 = vpop.f32.mrf.mxu0
    %v6617 = vadd.f32 0.0, %v6616
    %6618 = vmatmul.bf16.gmra.mxu0 %v5709
    %v6619 = vpop.f32.mrf.mxu0
    %v6620 = vadd.f32 0.0, %v6619
    %v6621 = vpop.f32.mrf.mxu0
    %v6622 = vadd.f32 0.0, %v6621
    %6623 = vdwg.mxu0
    %6624 = vmatpush.bf16.msra.mxu0 %v6345
    %6625 = vmatpush.bf16.msra.mxu0 %v6337
    %6626 = vmatpush.bf16.msra.mxu0 %v6329
    %6627 = vmatpush.bf16.msra.mxu0 %v6321
    %6628 = vmatpush.bf16.msra.mxu0 %v6313
    %6629 = vmatpush.bf16.msra.mxu0 %v6305
    %6630 = vmatpush.bf16.msra.mxu0 %v6297
    %6631 = vmatpush.bf16.msra.mxu0 %v6289
    %6632 = vmatmul.bf16.gmra.mxu0 %v5704
    %v6633 = vpop.f32.mrf.mxu0
    %v6634 = vadd.f32 %v6605, %v6633
    %v6635 = vpop.f32.mrf.mxu0
    %v6636 = vadd.f32 %v6607, %v6635
    %6637 = vmatmul.bf16.gmra.mxu0 %v5706
    %v6638 = vpop.f32.mrf.mxu0
    %v6639 = vadd.f32 %v6610, %v6638
    %v6640 = vpop.f32.mrf.mxu0
    %v6641 = vadd.f32 %v6612, %v6640
    %6642 = vmatmul.bf16.gmra.mxu0 %v5708
    %v6643 = vpop.f32.mrf.mxu0
    %v6644 = vadd.f32 %v6615, %v6643
    %v6645 = vpop.f32.mrf.mxu0
    %v6646 = vadd.f32 %v6617, %v6645
    %6647 = vmatmul.bf16.gmra.mxu0 %v5710
    %v6648 = vpop.f32.mrf.mxu0
    %v6649 = vadd.f32 %v6620, %v6648
    %v6650 = vpop.f32.mrf.mxu0
    %v6651 = vadd.f32 %v6622, %v6650
    %6652 = vdwg.mxu0
    %6653 = vmatpush.bf16.msra.mxu0 %v6282
    %6654 = vmatpush.bf16.msra.mxu0 %v6274
    %6655 = vmatpush.bf16.msra.mxu0 %v6266
    %6656 = vmatpush.bf16.msra.mxu0 %v6258
    %6657 = vmatpush.bf16.msra.mxu0 %v6250
    %6658 = vmatpush.bf16.msra.mxu0 %v6242
    %6659 = vmatpush.bf16.msra.mxu0 %v6234
    %6660 = vmatpush.bf16.msra.mxu0 %v6226
    %6661 = vmatmul.bf16.gmra.mxu0 %v5703
    %v6662 = vpop.f32.mrf.mxu0
    %v6663 = vadd.f32 0.0, %v6662
    %v6664 = vpop.f32.mrf.mxu0
    %v6665 = vadd.f32 0.0, %v6664
    %6666 = vmatmul.bf16.gmra.mxu0 %v5705
    %v6667 = vpop.f32.mrf.mxu0
    %v6668 = vadd.f32 0.0, %v6667
    %v6669 = vpop.f32.mrf.mxu0
    %v6670 = vadd.f32 0.0, %v6669
    %6671 = vmatmul.bf16.gmra.mxu0 %v5707
    %v6672 = vpop.f32.mrf.mxu0
    %v6673 = vadd.f32 0.0, %v6672
    %v6674 = vpop.f32.mrf.mxu0
    %v6675 = vadd.f32 0.0, %v6674
    %6676 = vmatmul.bf16.gmra.mxu0 %v5709
    %v6677 = vpop.f32.mrf.mxu0
    %v6678 = vadd.f32 0.0, %v6677
    %v6679 = vpop.f32.mrf.mxu0
    %v6680 = vadd.f32 0.0, %v6679
    %6681 = vdwg.mxu0
    %6682 = vmatpush.bf16.msra.mxu0 %v6346
    %6683 = vmatpush.bf16.msra.mxu0 %v6338
    %6684 = vmatpush.bf16.msra.mxu0 %v6330
    %6685 = vmatpush.bf16.msra.mxu0 %v6322
    %6686 = vmatpush.bf16.msra.mxu0 %v6314
    %6687 = vmatpush.bf16.msra.mxu0 %v6306
    %6688 = vmatpush.bf16.msra.mxu0 %v6298
    %6689 = vmatpush.bf16.msra.mxu0 %v6290
    %6690 = vmatmul.bf16.gmra.mxu0 %v5704
    %v6691 = vpop.f32.mrf.mxu0
    %v6692 = vadd.f32 %v6663, %v6691
    %v6693 = vpop.f32.mrf.mxu0
    %v6694 = vadd.f32 %v6665, %v6693
    %6695 = vmatmul.bf16.gmra.mxu0 %v5706
    %v6696 = vpop.f32.mrf.mxu0
    %v6697 = vadd.f32 %v6668, %v6696
    %v6698 = vpop.f32.mrf.mxu0
    %v6699 = vadd.f32 %v6670, %v6698
    %6700 = vmatmul.bf16.gmra.mxu0 %v5708
    %v6701 = vpop.f32.mrf.mxu0
    %v6702 = vadd.f32 %v6673, %v6701
    %v6703 = vpop.f32.mrf.mxu0
    %v6704 = vadd.f32 %v6675, %v6703
    %6705 = vmatmul.bf16.gmra.mxu0 %v5710
    %v6706 = vpop.f32.mrf.mxu0
    %v6707 = vadd.f32 %v6678, %v6706
    %v6708 = vpop.f32.mrf.mxu0
    %v6709 = vadd.f32 %v6680, %v6708
    %6710 = vdwg.mxu0
    %6711 = vmatpush.bf16.msra.mxu0 %v6283
    %6712 = vmatpush.bf16.msra.mxu0 %v6275
    %6713 = vmatpush.bf16.msra.mxu0 %v6267
    %6714 = vmatpush.bf16.msra.mxu0 %v6259
    %6715 = vmatpush.bf16.msra.mxu0 %v6251
    %6716 = vmatpush.bf16.msra.mxu0 %v6243
    %6717 = vmatpush.bf16.msra.mxu0 %v6235
    %6718 = vmatpush.bf16.msra.mxu0 %v6227
    %6719 = vmatmul.bf16.gmra.mxu0 %v5703
    %v6720 = vpop.f32.mrf.mxu0
    %v6721 = vadd.f32 0.0, %v6720
    %v6722 = vpop.f32.mrf.mxu0
    %v6723 = vadd.f32 0.0, %v6722
    %6724 = vmatmul.bf16.gmra.mxu0 %v5705
    %v6725 = vpop.f32.mrf.mxu0
    %v6726 = vadd.f32 0.0, %v6725
    %v6727 = vpop.f32.mrf.mxu0
    %v6728 = vadd.f32 0.0, %v6727
    %6729 = vmatmul.bf16.gmra.mxu0 %v5707
    %v6730 = vpop.f32.mrf.mxu0
    %v6731 = vadd.f32 0.0, %v6730
    %v6732 = vpop.f32.mrf.mxu0
    %v6733 = vadd.f32 0.0, %v6732
    %6734 = vmatmul.bf16.gmra.mxu0 %v5709
    %v6735 = vpop.f32.mrf.mxu0
    %v6736 = vadd.f32 0.0, %v6735
    %v6737 = vpop.f32.mrf.mxu0
    %v6738 = vadd.f32 0.0, %v6737
    %6739 = vdwg.mxu0
    %6740 = vmatpush.bf16.msra.mxu0 %v6347
    %6741 = vmatpush.bf16.msra.mxu0 %v6339
    %6742 = vmatpush.bf16.msra.mxu0 %v6331
    %6743 = vmatpush.bf16.msra.mxu0 %v6323
    %6744 = vmatpush.bf16.msra.mxu0 %v6315
    %6745 = vmatpush.bf16.msra.mxu0 %v6307
    %6746 = vmatpush.bf16.msra.mxu0 %v6299
    %6747 = vmatpush.bf16.msra.mxu0 %v6291
    %6748 = vmatmul.bf16.gmra.mxu0 %v5704
    %v6749 = vpop.f32.mrf.mxu0
    %v6750 = vadd.f32 %v6721, %v6749
    %v6751 = vpop.f32.mrf.mxu0
    %v6752 = vadd.f32 %v6723, %v6751
    %6753 = vmatmul.bf16.gmra.mxu0 %v5706
    %v6754 = vpop.f32.mrf.mxu0
    %v6755 = vadd.f32 %v6726, %v6754
    %v6756 = vpop.f32.mrf.mxu0
    %v6757 = vadd.f32 %v6728, %v6756
    %6758 = vmatmul.bf16.gmra.mxu0 %v5708
    %v6759 = vpop.f32.mrf.mxu0
    %v6760 = vadd.f32 %v6731, %v6759
    %v6761 = vpop.f32.mrf.mxu0
    %v6762 = vadd.f32 %v6733, %v6761
    %6763 = vmatmul.bf16.gmra.mxu0 %v5710
    %v6764 = vpop.f32.mrf.mxu0
    %v6765 = vadd.f32 %v6736, %v6764
    %v6766 = vpop.f32.mrf.mxu0
    %v6767 = vadd.f32 %v6738, %v6766
    %6768 = vdwg.mxu0
    %6769 = vmatpush.bf16.msra.mxu0 %v6284
    %6770 = vmatpush.bf16.msra.mxu0 %v6276
    %6771 = vmatpush.bf16.msra.mxu0 %v6268
    %6772 = vmatpush.bf16.msra.mxu0 %v6260
    %6773 = vmatpush.bf16.msra.mxu0 %v6252
    %6774 = vmatpush.bf16.msra.mxu0 %v6244
    %6775 = vmatpush.bf16.msra.mxu0 %v6236
    %6776 = vmatpush.bf16.msra.mxu0 %v6228
    %6777 = vmatmul.bf16.gmra.mxu0 %v5703
    %v6778 = vpop.f32.mrf.mxu0
    %v6779 = vadd.f32 0.0, %v6778
    %v6780 = vpop.f32.mrf.mxu0
    %v6781 = vadd.f32 0.0, %v6780
    %6782 = vmatmul.bf16.gmra.mxu0 %v5705
    %v6783 = vpop.f32.mrf.mxu0
    %v6784 = vadd.f32 0.0, %v6783
    %v6785 = vpop.f32.mrf.mxu0
    %v6786 = vadd.f32 0.0, %v6785
    %6787 = vmatmul.bf16.gmra.mxu0 %v5707
    %v6788 = vpop.f32.mrf.mxu0
    %v6789 = vadd.f32 0.0, %v6788
    %v6790 = vpop.f32.mrf.mxu0
    %v6791 = vadd.f32 0.0, %v6790
    %6792 = vmatmul.bf16.gmra.mxu0 %v5709
    %v6793 = vpop.f32.mrf.mxu0
    %v6794 = vadd.f32 0.0, %v6793
    %v6795 = vpop.f32.mrf.mxu0
    %v6796 = vadd.f32 0.0, %v6795
    %6797 = vdwg.mxu0
    %6798 = vmatpush.bf16.msra.mxu0 %v6348
    %6799 = vmatpush.bf16.msra.mxu0 %v6340
    %6800 = vmatpush.bf16.msra.mxu0 %v6332
    %6801 = vmatpush.bf16.msra.mxu0 %v6324
    %6802 = vmatpush.bf16.msra.mxu0 %v6316
    %6803 = vmatpush.bf16.msra.mxu0 %v6308
    %6804 = vmatpush.bf16.msra.mxu0 %v6300
    %6805 = vmatpush.bf16.msra.mxu0 %v6292
    %6806 = vmatmul.bf16.gmra.mxu0 %v5704
    %v6807 = vpop.f32.mrf.mxu0
    %v6808 = vadd.f32 %v6779, %v6807
    %v6809 = vpop.f32.mrf.mxu0
    %v6810 = vadd.f32 %v6781, %v6809
    %6811 = vmatmul.bf16.gmra.mxu0 %v5706
    %v6812 = vpop.f32.mrf.mxu0
    %v6813 = vadd.f32 %v6784, %v6812
    %v6814 = vpop.f32.mrf.mxu0
    %v6815 = vadd.f32 %v6786, %v6814
    %6816 = vmatmul.bf16.gmra.mxu0 %v5708
    %v6817 = vpop.f32.mrf.mxu0
    %v6818 = vadd.f32 %v6789, %v6817
    %v6819 = vpop.f32.mrf.mxu0
    %v6820 = vadd.f32 %v6791, %v6819
    %6821 = vmatmul.bf16.gmra.mxu0 %v5710
    %v6822 = vpop.f32.mrf.mxu0
    %v6823 = vadd.f32 %v6794, %v6822
    %v6824 = vpop.f32.mrf.mxu0
    %v6825 = vadd.f32 %v6796, %v6824
    %6826 = vdwg.mxu0
    %6827 = vmatpush.bf16.msra.mxu0 %v6285
    %6828 = vmatpush.bf16.msra.mxu0 %v6277
    %6829 = vmatpush.bf16.msra.mxu0 %v6269
    %6830 = vmatpush.bf16.msra.mxu0 %v6261
    %6831 = vmatpush.bf16.msra.mxu0 %v6253
    %6832 = vmatpush.bf16.msra.mxu0 %v6245
    %6833 = vmatpush.bf16.msra.mxu0 %v6237
    %6834 = vmatpush.bf16.msra.mxu0 %v6229
    %6835 = vmatmul.bf16.gmra.mxu0 %v5703
    %v6836 = vpop.f32.mrf.mxu0
    %v6837 = vadd.f32 0.0, %v6836
    %v6838 = vpop.f32.mrf.mxu0
    %v6839 = vadd.f32 0.0, %v6838
    %6840 = vmatmul.bf16.gmra.mxu0 %v5705
    %v6841 = vpop.f32.mrf.mxu0
    %v6842 = vadd.f32 0.0, %v6841
    %v6843 = vpop.f32.mrf.mxu0
    %v6844 = vadd.f32 0.0, %v6843
    %6845 = vmatmul.bf16.gmra.mxu0 %v5707
    %v6846 = vpop.f32.mrf.mxu0
    %v6847 = vadd.f32 0.0, %v6846
    %v6848 = vpop.f32.mrf.mxu0
    %v6849 = vadd.f32 0.0, %v6848
    %6850 = vmatmul.bf16.gmra.mxu0 %v5709
    %v6851 = vpop.f32.mrf.mxu0
    %v6852 = vadd.f32 0.0, %v6851
    %v6853 = vpop.f32.mrf.mxu0
    %v6854 = vadd.f32 0.0, %v6853
    %6855 = vdwg.mxu0
    %6856 = vmatpush.bf16.msra.mxu0 %v6349
    %6857 = vmatpush.bf16.msra.mxu0 %v6341
    %6858 = vmatpush.bf16.msra.mxu0 %v6333
    %6859 = vmatpush.bf16.msra.mxu0 %v6325
    %6860 = vmatpush.bf16.msra.mxu0 %v6317
    %6861 = vmatpush.bf16.msra.mxu0 %v6309
    %6862 = vmatpush.bf16.msra.mxu0 %v6301
    %6863 = vmatpush.bf16.msra.mxu0 %v6293
    %6864 = vmatmul.bf16.gmra.mxu0 %v5704
    %v6865 = vpop.f32.mrf.mxu0
    %v6866 = vadd.f32 %v6837, %v6865
    %v6867 = vpop.f32.mrf.mxu0
    %v6868 = vadd.f32 %v6839, %v6867
    %6869 = vmatmul.bf16.gmra.mxu0 %v5706
    %v6870 = vpop.f32.mrf.mxu0
    %v6871 = vadd.f32 %v6842, %v6870
    %v6872 = vpop.f32.mrf.mxu0
    %v6873 = vadd.f32 %v6844, %v6872
    %6874 = vmatmul.bf16.gmra.mxu0 %v5708
    %v6875 = vpop.f32.mrf.mxu0
    %v6876 = vadd.f32 %v6847, %v6875
    %v6877 = vpop.f32.mrf.mxu0
    %v6878 = vadd.f32 %v6849, %v6877
    %6879 = vmatmul.bf16.gmra.mxu0 %v5710
    %v6880 = vpop.f32.mrf.mxu0
    %v6881 = vadd.f32 %v6852, %v6880
    %v6882 = vpop.f32.mrf.mxu0
    %v6883 = vadd.f32 %v6854, %v6882
    %6884 = vdwg.mxu0
    %6885 = vmatpush.bf16.msra.mxu0 %v6286
    %6886 = vmatpush.bf16.msra.mxu0 %v6278
    %6887 = vmatpush.bf16.msra.mxu0 %v6270
    %6888 = vmatpush.bf16.msra.mxu0 %v6262
    %6889 = vmatpush.bf16.msra.mxu0 %v6254
    %6890 = vmatpush.bf16.msra.mxu0 %v6246
    %6891 = vmatpush.bf16.msra.mxu0 %v6238
    %6892 = vmatpush.bf16.msra.mxu0 %v6230
    %6893 = vmatmul.bf16.gmra.mxu0 %v5703
    %v6894 = vpop.f32.mrf.mxu0
    %v6895 = vadd.f32 0.0, %v6894
    %v6896 = vpop.f32.mrf.mxu0
    %v6897 = vadd.f32 0.0, %v6896
    %6898 = vmatmul.bf16.gmra.mxu0 %v5705
    %v6899 = vpop.f32.mrf.mxu0
    %v6900 = vadd.f32 0.0, %v6899
    %v6901 = vpop.f32.mrf.mxu0
    %v6902 = vadd.f32 0.0, %v6901
    %6903 = vmatmul.bf16.gmra.mxu0 %v5707
    %v6904 = vpop.f32.mrf.mxu0
    %v6905 = vadd.f32 0.0, %v6904
    %v6906 = vpop.f32.mrf.mxu0
    %v6907 = vadd.f32 0.0, %v6906
    %6908 = vmatmul.bf16.gmra.mxu0 %v5709
    %v6909 = vpop.f32.mrf.mxu0
    %v6910 = vadd.f32 0.0, %v6909
    %v6911 = vpop.f32.mrf.mxu0
    %v6912 = vadd.f32 0.0, %v6911
    %6913 = vdwg.mxu0
    %6914 = vmatpush.bf16.msra.mxu0 %v6350
    %6915 = vmatpush.bf16.msra.mxu0 %v6342
    %6916 = vmatpush.bf16.msra.mxu0 %v6334
    %6917 = vmatpush.bf16.msra.mxu0 %v6326
    %6918 = vmatpush.bf16.msra.mxu0 %v6318
    %6919 = vmatpush.bf16.msra.mxu0 %v6310
    %6920 = vmatpush.bf16.msra.mxu0 %v6302
    %6921 = vmatpush.bf16.msra.mxu0 %v6294
    %6922 = vmatmul.bf16.gmra.mxu0 %v5704
    %v6923 = vpop.f32.mrf.mxu0
    %v6924 = vadd.f32 %v6895, %v6923
    %v6925 = vpop.f32.mrf.mxu0
    %v6926 = vadd.f32 %v6897, %v6925
    %6927 = vmatmul.bf16.gmra.mxu0 %v5706
    %v6928 = vpop.f32.mrf.mxu0
    %v6929 = vadd.f32 %v6900, %v6928
    %v6930 = vpop.f32.mrf.mxu0
    %v6931 = vadd.f32 %v6902, %v6930
    %6932 = vmatmul.bf16.gmra.mxu0 %v5708
    %v6933 = vpop.f32.mrf.mxu0
    %v6934 = vadd.f32 %v6905, %v6933
    %v6935 = vpop.f32.mrf.mxu0
    %v6936 = vadd.f32 %v6907, %v6935
    %6937 = vmatmul.bf16.gmra.mxu0 %v5710
    %v6938 = vpop.f32.mrf.mxu0
    %v6939 = vadd.f32 %v6910, %v6938
    %v6940 = vpop.f32.mrf.mxu0
    %v6941 = vadd.f32 %v6912, %v6940
    %6942 = vdwg.mxu0
    %v6943 = vld [vmem:[#allocation11] sm:$0xf]
    %v6945 = vperm.slane %v6943, 0
    %v6946 = vperm.slane %v6943, 1
    %v6947 = vperm.slane %v6943, 2
    %v6948 = vperm.slane %v6943, 3
    %v6953 = vadd.f32 %v6750, %v6945
    %v6954 = vadd.f32 %v6808, %v6946
    %v6955 = vadd.f32 %v6866, %v6947
    %v6956 = vadd.f32 %v6924, %v6948
    %v6957 = vadd.f32 %v6752, %v6945
    %v6958 = vadd.f32 %v6810, %v6946
    %v6959 = vadd.f32 %v6868, %v6947
    %v6960 = vadd.f32 %v6926, %v6948
    %v6961 = vadd.f32 %v6755, %v6945
    %v6962 = vadd.f32 %v6813, %v6946
    %v6963 = vadd.f32 %v6871, %v6947
    %v6964 = vadd.f32 %v6929, %v6948
    %v6965 = vadd.f32 %v6757, %v6945
    %v6966 = vadd.f32 %v6815, %v6946
    %v6967 = vadd.f32 %v6873, %v6947
    %v6968 = vadd.f32 %v6931, %v6948
    %v6969 = vadd.f32 %v6760, %v6945
    %v6970 = vadd.f32 %v6818, %v6946
    %v6971 = vadd.f32 %v6876, %v6947
    %v6972 = vadd.f32 %v6934, %v6948
    %v6973 = vadd.f32 %v6762, %v6945
    %v6974 = vadd.f32 %v6820, %v6946
    %v6975 = vadd.f32 %v6878, %v6947
    %v6976 = vadd.f32 %v6936, %v6948
    %v6977 = vadd.f32 %v6765, %v6945
    %v6978 = vadd.f32 %v6823, %v6946
    %v6979 = vadd.f32 %v6881, %v6947
    %v6980 = vadd.f32 %v6939, %v6948
    %v6981 = vadd.f32 %v6767, %v6945
    %v6982 = vadd.f32 %v6825, %v6946
    %v6983 = vadd.f32 %v6883, %v6947
    %v6984 = vadd.f32 %v6941, %v6948
    %v6985 = vld [vmem:[#allocation2] sm:$0xff]
    %v6986 = vld [vmem:[#allocation2 + $0x8] sm:$0xff]
    %v6987 = vld [vmem:[#allocation2 + $0x10] sm:$0xff]
    %v6988 = vld [vmem:[#allocation2 + $0x18] sm:$0xff]
    %v6989 = vld [vmem:[#allocation2 + $0x20] sm:$0xff]
    %v6990 = vld [vmem:[#allocation2 + $0x28] sm:$0xff]
    %v6991 = vld [vmem:[#allocation2 + $0x30] sm:$0xff]
    %v6992 = vld [vmem:[#allocation2 + $0x38] sm:$0xff]
    %v6993 = vld [vmem:[#allocation2 + $0x40] sm:$0xff]
    %v6994 = vld [vmem:[#allocation2 + $0x48] sm:$0xff]
    %v6995 = vld [vmem:[#allocation2 + $0x50] sm:$0xff]
    %v6996 = vld [vmem:[#allocation2 + $0x58] sm:$0xff]
    %v6997 = vld [vmem:[#allocation2 + $0x60] sm:$0xff]
    %v6998 = vld [vmem:[#allocation2 + $0x68] sm:$0xff]
    %v6999 = vld [vmem:[#allocation2 + $0x70] sm:$0xff]
    %v7000 = vld [vmem:[#allocation2 + $0x78] sm:$0xff]
    %v7001 = vld [vmem:[#allocation2 + $0x80] sm:$0xff]
    %v7002 = vld [vmem:[#allocation2 + $0x88] sm:$0xff]
    %v7003 = vld [vmem:[#allocation2 + $0x90] sm:$0xff]
    %v7004 = vld [vmem:[#allocation2 + $0x98] sm:$0xff]
    %v7005 = vld [vmem:[#allocation2 + $0xa0] sm:$0xff]
    %v7006 = vld [vmem:[#allocation2 + $0xa8] sm:$0xff]
    %v7007 = vld [vmem:[#allocation2 + $0xb0] sm:$0xff]
    %v7008 = vld [vmem:[#allocation2 + $0xb8] sm:$0xff]
    %v7009 = vld [vmem:[#allocation2 + $0xc0] sm:$0xff]
    %v7010 = vld [vmem:[#allocation2 + $0xc8] sm:$0xff]
    %v7011 = vld [vmem:[#allocation2 + $0xd0] sm:$0xff]
    %v7012 = vld [vmem:[#allocation2 + $0xd8] sm:$0xff]
    %v7013 = vld [vmem:[#allocation2 + $0xe0] sm:$0xff]
    %v7014 = vld [vmem:[#allocation2 + $0xe8] sm:$0xff]
    %v7015 = vld [vmem:[#allocation2 + $0xf0] sm:$0xff]
    %v7016 = vld [vmem:[#allocation2 + $0xf8] sm:$0xff]
    %v7017 = vadd.f32 %v6985, %v6518
    %v7018 = vadd.f32 %v6986, %v6576
    %v7019 = vadd.f32 %v6987, %v6634
    %v7020 = vadd.f32 %v6988, %v6692
    %v7021 = vadd.f32 %v6989, %v6520
    %v7022 = vadd.f32 %v6990, %v6578
    %v7023 = vadd.f32 %v6991, %v6636
    %v7024 = vadd.f32 %v6992, %v6694
    %v7025 = vadd.f32 %v6993, %v6523
    %v7026 = vadd.f32 %v6994, %v6581
    %v7027 = vadd.f32 %v6995, %v6639
    %v7028 = vadd.f32 %v6996, %v6697
    %v7029 = vadd.f32 %v6997, %v6525
    %v7030 = vadd.f32 %v6998, %v6583
    %v7031 = vadd.f32 %v6999, %v6641
    %v7032 = vadd.f32 %v7000, %v6699
    %v7033 = vadd.f32 %v7001, %v6528
    %v7034 = vadd.f32 %v7002, %v6586
    %v7035 = vadd.f32 %v7003, %v6644
    %v7036 = vadd.f32 %v7004, %v6702
    %v7037 = vadd.f32 %v7005, %v6530
    %v7038 = vadd.f32 %v7006, %v6588
    %v7039 = vadd.f32 %v7007, %v6646
    %v7040 = vadd.f32 %v7008, %v6704
    %v7041 = vadd.f32 %v7009, %v6533
    %v7042 = vadd.f32 %v7010, %v6591
    %v7043 = vadd.f32 %v7011, %v6649
    %v7044 = vadd.f32 %v7012, %v6707
    %v7045 = vadd.f32 %v7013, %v6535
    %v7046 = vadd.f32 %v7014, %v6593
    %v7047 = vadd.f32 %v7015, %v6651
    %v7048 = vadd.f32 %v7016, %v6709
    %v7049 = vxor.u32 %v7017, 2147483648
    %v7050 = vxor.u32 %v7018, 2147483648
    %v7051 = vxor.u32 %v7019, 2147483648
    %v7052 = vxor.u32 %v7021, 2147483648
    %v7053 = vxor.u32 %v7022, 2147483648
    %v7054 = vxor.u32 %v7023, 2147483648
    %v7055 = vxor.u32 %v7025, 2147483648
    %v7056 = vxor.u32 %v7026, 2147483648
    %v7057 = vxor.u32 %v7027, 2147483648
    %v7058 = vxor.u32 %v7029, 2147483648
    %v7059 = vxor.u32 %v7030, 2147483648
    %v7060 = vxor.u32 %v7031, 2147483648
    %v7061 = vxor.u32 %v7033, 2147483648
    %v7062 = vxor.u32 %v7034, 2147483648
    %v7063 = vxor.u32 %v7035, 2147483648
    %v7064 = vxor.u32 %v7037, 2147483648
    %v7065 = vxor.u32 %v7038, 2147483648
    %v7066 = vxor.u32 %v7039, 2147483648
    %v7067 = vxor.u32 %v7041, 2147483648
    %v7068 = vxor.u32 %v7042, 2147483648
    %v7069 = vxor.u32 %v7043, 2147483648
    %v7070 = vxor.u32 %v7045, 2147483648
    %v7071 = vxor.u32 %v7046, 2147483648
    %v7072 = vxor.u32 %v7047, 2147483648
    %v7073 = vmul.f32 %v7049, 1.442695
    %v7074 = vpow.pop %v7073
    %v7075 = vmul.f32 %v7050, 1.442695
    %v7076 = vpow.pop %v7075
    %v7077 = vmul.f32 %v7051, 1.442695
    %v7078 = vpow.pop %v7077
    %v7079 = vmul.f32 %v7052, 1.442695
    %v7080 = vpow.pop %v7079
    %v7081 = vmul.f32 %v7053, 1.442695
    %v7082 = vpow.pop %v7081
    %v7083 = vmul.f32 %v7054, 1.442695
    %v7084 = vpow.pop %v7083
    %v7085 = vmul.f32 %v7055, 1.442695
    %v7086 = vpow.pop %v7085
    %v7087 = vmul.f32 %v7056, 1.442695
    %v7088 = vpow.pop %v7087
    %v7089 = vmul.f32 %v7057, 1.442695
    %v7090 = vpow.pop %v7089
    %v7091 = vmul.f32 %v7058, 1.442695
    %v7092 = vpow.pop %v7091
    %v7093 = vmul.f32 %v7059, 1.442695
    %v7094 = vpow.pop %v7093
    %v7095 = vmul.f32 %v7060, 1.442695
    %v7096 = vpow.pop %v7095
    %v7097 = vmul.f32 %v7061, 1.442695
    %v7098 = vpow.pop %v7097
    %v7099 = vmul.f32 %v7062, 1.442695
    %v7100 = vpow.pop %v7099
    %v7101 = vmul.f32 %v7063, 1.442695
    %v7102 = vpow.pop %v7101
    %v7103 = vmul.f32 %v7064, 1.442695
    %v7104 = vpow.pop %v7103
    %v7105 = vmul.f32 %v7065, 1.442695
    %v7106 = vpow.pop %v7105
    %v7107 = vmul.f32 %v7066, 1.442695
    %v7108 = vpow.pop %v7107
    %v7109 = vmul.f32 %v7067, 1.442695
    %v7110 = vpow.pop %v7109
    %v7111 = vmul.f32 %v7068, 1.442695
    %v7112 = vpow.pop %v7111
    %v7113 = vmul.f32 %v7069, 1.442695
    %v7114 = vpow.pop %v7113
    %v7115 = vmul.f32 %v7070, 1.442695
    %v7116 = vpow.pop %v7115
    %v7117 = vmul.f32 %v7071, 1.442695
    %v7118 = vpow.pop %v7117
    %v7119 = vmul.f32 %v7072, 1.442695
    %v7120 = vpow.pop %v7119
    %v7121 = vadd.f32 %v7074, 1.0
    %v7122 = vadd.f32 %v7076, 1.0
    %v7123 = vadd.f32 %v7078, 1.0
    %v7124 = vadd.f32 %v7080, 1.0
    %v7125 = vadd.f32 %v7082, 1.0
    %v7126 = vadd.f32 %v7084, 1.0
    %v7127 = vadd.f32 %v7086, 1.0
    %v7128 = vadd.f32 %v7088, 1.0
    %v7129 = vadd.f32 %v7090, 1.0
    %v7130 = vadd.f32 %v7092, 1.0
    %v7131 = vadd.f32 %v7094, 1.0
    %v7132 = vadd.f32 %v7096, 1.0
    %v7133 = vadd.f32 %v7098, 1.0
    %v7134 = vadd.f32 %v7100, 1.0
    %v7135 = vadd.f32 %v7102, 1.0
    %v7136 = vadd.f32 %v7104, 1.0
    %v7137 = vadd.f32 %v7106, 1.0
    %v7138 = vadd.f32 %v7108, 1.0
    %v7139 = vadd.f32 %v7110, 1.0
    %v7140 = vadd.f32 %v7112, 1.0
    %v7141 = vadd.f32 %v7114, 1.0
    %v7142 = vadd.f32 %v7116, 1.0
    %v7143 = vadd.f32 %v7118, 1.0
    %v7144 = vadd.f32 %v7120, 1.0
    %v7145 = vrcp.pop %v7121
    %v7146 = vmul.f32 %v7121, %v7145
    %v7147 = vsub.f32 1.0, %v7146
    %v7148 = vmul.f32 %v7145, %v7147
    %v7149 = vadd.f32 %v7145, %v7148
    %vm7150 = vweird.f32 %v7121
    %vm7151 = vweird.f32 %v7145
    %vm7152 = vmor %vm7150, %vm7151
    %v7153 = vsel %vm7152, %v7145, %v7149
    %v7154 = vand.u32 2147483647, %v7121
    %vm7155 = vcmp.eq.f32.partialorder %v7154, 8.507059e+37
    %v7156 = vand.u32 %v7121, 2147483648
    %v7157 = vor.u32 1.1754944e-38, %v7156
    %v7158 = vsel %vm7155, %v7157, %v7153
    %v7159 = vmul.f32 1.0, %v7158
    %v7160 = vrcp.pop %v7122
    %v7161 = vmul.f32 %v7122, %v7160
    %v7162 = vsub.f32 1.0, %v7161
    %v7163 = vmul.f32 %v7160, %v7162
    %v7164 = vadd.f32 %v7160, %v7163
    %vm7165 = vweird.f32 %v7122
    %vm7166 = vweird.f32 %v7160
    %vm7167 = vmor %vm7165, %vm7166
    %v7168 = vsel %vm7167, %v7160, %v7164
    %v7169 = vand.u32 2147483647, %v7122
    %vm7170 = vcmp.eq.f32.partialorder %v7169, 8.507059e+37
    %v7171 = vand.u32 %v7122, 2147483648
    %v7172 = vor.u32 1.1754944e-38, %v7171
    %v7173 = vsel %vm7170, %v7172, %v7168
    %v7174 = vmul.f32 1.0, %v7173
    %v7175 = vrcp.pop %v7123
    %v7176 = vmul.f32 %v7123, %v7175
    %v7177 = vsub.f32 1.0, %v7176
    %v7178 = vmul.f32 %v7175, %v7177
    %v7179 = vadd.f32 %v7175, %v7178
    %vm7180 = vweird.f32 %v7123
    %vm7181 = vweird.f32 %v7175
    %vm7182 = vmor %vm7180, %vm7181
    %v7183 = vsel %vm7182, %v7175, %v7179
    %v7184 = vand.u32 2147483647, %v7123
    %vm7185 = vcmp.eq.f32.partialorder %v7184, 8.507059e+37
    %v7186 = vand.u32 %v7123, 2147483648
    %v7187 = vor.u32 1.1754944e-38, %v7186
    %v7188 = vsel %vm7185, %v7187, %v7183
    %v7189 = vmul.f32 1.0, %v7188
    %v7190 = vrcp.pop %v7124
    %v7191 = vmul.f32 %v7124, %v7190
    %v7192 = vsub.f32 1.0, %v7191
    %v7193 = vmul.f32 %v7190, %v7192
    %v7194 = vadd.f32 %v7190, %v7193
    %vm7195 = vweird.f32 %v7124
    %vm7196 = vweird.f32 %v7190
    %vm7197 = vmor %vm7195, %vm7196
    %v7198 = vsel %vm7197, %v7190, %v7194
    %v7199 = vand.u32 2147483647, %v7124
    %vm7200 = vcmp.eq.f32.partialorder %v7199, 8.507059e+37
    %v7201 = vand.u32 %v7124, 2147483648
    %v7202 = vor.u32 1.1754944e-38, %v7201
    %v7203 = vsel %vm7200, %v7202, %v7198
    %v7204 = vmul.f32 1.0, %v7203
    %v7205 = vrcp.pop %v7125
    %v7206 = vmul.f32 %v7125, %v7205
    %v7207 = vsub.f32 1.0, %v7206
    %v7208 = vmul.f32 %v7205, %v7207
    %v7209 = vadd.f32 %v7205, %v7208
    %vm7210 = vweird.f32 %v7125
    %vm7211 = vweird.f32 %v7205
    %vm7212 = vmor %vm7210, %vm7211
    %v7213 = vsel %vm7212, %v7205, %v7209
    %v7214 = vand.u32 2147483647, %v7125
    %vm7215 = vcmp.eq.f32.partialorder %v7214, 8.507059e+37
    %v7216 = vand.u32 %v7125, 2147483648
    %v7217 = vor.u32 1.1754944e-38, %v7216
    %v7218 = vsel %vm7215, %v7217, %v7213
    %v7219 = vmul.f32 1.0, %v7218
    %v7220 = vrcp.pop %v7126
    %v7221 = vmul.f32 %v7126, %v7220
    %v7222 = vsub.f32 1.0, %v7221
    %v7223 = vmul.f32 %v7220, %v7222
    %v7224 = vadd.f32 %v7220, %v7223
    %vm7225 = vweird.f32 %v7126
    %vm7226 = vweird.f32 %v7220
    %vm7227 = vmor %vm7225, %vm7226
    %v7228 = vsel %vm7227, %v7220, %v7224
    %v7229 = vand.u32 2147483647, %v7126
    %vm7230 = vcmp.eq.f32.partialorder %v7229, 8.507059e+37
    %v7231 = vand.u32 %v7126, 2147483648
    %v7232 = vor.u32 1.1754944e-38, %v7231
    %v7233 = vsel %vm7230, %v7232, %v7228
    %v7234 = vmul.f32 1.0, %v7233
    %v7235 = vrcp.pop %v7127
    %v7236 = vmul.f32 %v7127, %v7235
    %v7237 = vsub.f32 1.0, %v7236
    %v7238 = vmul.f32 %v7235, %v7237
    %v7239 = vadd.f32 %v7235, %v7238
    %vm7240 = vweird.f32 %v7127
    %vm7241 = vweird.f32 %v7235
    %vm7242 = vmor %vm7240, %vm7241
    %v7243 = vsel %vm7242, %v7235, %v7239
    %v7244 = vand.u32 2147483647, %v7127
    %vm7245 = vcmp.eq.f32.partialorder %v7244, 8.507059e+37
    %v7246 = vand.u32 %v7127, 2147483648
    %v7247 = vor.u32 1.1754944e-38, %v7246
    %v7248 = vsel %vm7245, %v7247, %v7243
    %v7249 = vmul.f32 1.0, %v7248
    %v7250 = vrcp.pop %v7128
    %v7251 = vmul.f32 %v7128, %v7250
    %v7252 = vsub.f32 1.0, %v7251
    %v7253 = vmul.f32 %v7250, %v7252
    %v7254 = vadd.f32 %v7250, %v7253
    %vm7255 = vweird.f32 %v7128
    %vm7256 = vweird.f32 %v7250
    %vm7257 = vmor %vm7255, %vm7256
    %v7258 = vsel %vm7257, %v7250, %v7254
    %v7259 = vand.u32 2147483647, %v7128
    %vm7260 = vcmp.eq.f32.partialorder %v7259, 8.507059e+37
    %v7261 = vand.u32 %v7128, 2147483648
    %v7262 = vor.u32 1.1754944e-38, %v7261
    %v7263 = vsel %vm7260, %v7262, %v7258
    %v7264 = vmul.f32 1.0, %v7263
    %v7265 = vrcp.pop %v7129
    %v7266 = vmul.f32 %v7129, %v7265
    %v7267 = vsub.f32 1.0, %v7266
    %v7268 = vmul.f32 %v7265, %v7267
    %v7269 = vadd.f32 %v7265, %v7268
    %vm7270 = vweird.f32 %v7129
    %vm7271 = vweird.f32 %v7265
    %vm7272 = vmor %vm7270, %vm7271
    %v7273 = vsel %vm7272, %v7265, %v7269
    %v7274 = vand.u32 2147483647, %v7129
    %vm7275 = vcmp.eq.f32.partialorder %v7274, 8.507059e+37
    %v7276 = vand.u32 %v7129, 2147483648
    %v7277 = vor.u32 1.1754944e-38, %v7276
    %v7278 = vsel %vm7275, %v7277, %v7273
    %v7279 = vmul.f32 1.0, %v7278
    %v7280 = vrcp.pop %v7130
    %v7281 = vmul.f32 %v7130, %v7280
    %v7282 = vsub.f32 1.0, %v7281
    %v7283 = vmul.f32 %v7280, %v7282
    %v7284 = vadd.f32 %v7280, %v7283
    %vm7285 = vweird.f32 %v7130
    %vm7286 = vweird.f32 %v7280
    %vm7287 = vmor %vm7285, %vm7286
    %v7288 = vsel %vm7287, %v7280, %v7284
    %v7289 = vand.u32 2147483647, %v7130
    %vm7290 = vcmp.eq.f32.partialorder %v7289, 8.507059e+37
    %v7291 = vand.u32 %v7130, 2147483648
    %v7292 = vor.u32 1.1754944e-38, %v7291
    %v7293 = vsel %vm7290, %v7292, %v7288
    %v7294 = vmul.f32 1.0, %v7293
    %v7295 = vrcp.pop %v7131
    %v7296 = vmul.f32 %v7131, %v7295
    %v7297 = vsub.f32 1.0, %v7296
    %v7298 = vmul.f32 %v7295, %v7297
    %v7299 = vadd.f32 %v7295, %v7298
    %vm7300 = vweird.f32 %v7131
    %vm7301 = vweird.f32 %v7295
    %vm7302 = vmor %vm7300, %vm7301
    %v7303 = vsel %vm7302, %v7295, %v7299
    %v7304 = vand.u32 2147483647, %v7131
    %vm7305 = vcmp.eq.f32.partialorder %v7304, 8.507059e+37
    %v7306 = vand.u32 %v7131, 2147483648
    %v7307 = vor.u32 1.1754944e-38, %v7306
    %v7308 = vsel %vm7305, %v7307, %v7303
    %v7309 = vmul.f32 1.0, %v7308
    %v7310 = vrcp.pop %v7132
    %v7311 = vmul.f32 %v7132, %v7310
    %v7312 = vsub.f32 1.0, %v7311
    %v7313 = vmul.f32 %v7310, %v7312
    %v7314 = vadd.f32 %v7310, %v7313
    %vm7315 = vweird.f32 %v7132
    %vm7316 = vweird.f32 %v7310
    %vm7317 = vmor %vm7315, %vm7316
    %v7318 = vsel %vm7317, %v7310, %v7314
    %v7319 = vand.u32 2147483647, %v7132
    %vm7320 = vcmp.eq.f32.partialorder %v7319, 8.507059e+37
    %v7321 = vand.u32 %v7132, 2147483648
    %v7322 = vor.u32 1.1754944e-38, %v7321
    %v7323 = vsel %vm7320, %v7322, %v7318
    %v7324 = vmul.f32 1.0, %v7323
    %v7325 = vrcp.pop %v7133
    %v7326 = vmul.f32 %v7133, %v7325
    %v7327 = vsub.f32 1.0, %v7326
    %v7328 = vmul.f32 %v7325, %v7327
    %v7329 = vadd.f32 %v7325, %v7328
    %vm7330 = vweird.f32 %v7133
    %vm7331 = vweird.f32 %v7325
    %vm7332 = vmor %vm7330, %vm7331
    %v7333 = vsel %vm7332, %v7325, %v7329
    %v7334 = vand.u32 2147483647, %v7133
    %vm7335 = vcmp.eq.f32.partialorder %v7334, 8.507059e+37
    %v7336 = vand.u32 %v7133, 2147483648
    %v7337 = vor.u32 1.1754944e-38, %v7336
    %v7338 = vsel %vm7335, %v7337, %v7333
    %v7339 = vmul.f32 1.0, %v7338
    %v7340 = vrcp.pop %v7134
    %v7341 = vmul.f32 %v7134, %v7340
    %v7342 = vsub.f32 1.0, %v7341
    %v7343 = vmul.f32 %v7340, %v7342
    %v7344 = vadd.f32 %v7340, %v7343
    %vm7345 = vweird.f32 %v7134
    %vm7346 = vweird.f32 %v7340
    %vm7347 = vmor %vm7345, %vm7346
    %v7348 = vsel %vm7347, %v7340, %v7344
    %v7349 = vand.u32 2147483647, %v7134
    %vm7350 = vcmp.eq.f32.partialorder %v7349, 8.507059e+37
    %v7351 = vand.u32 %v7134, 2147483648
    %v7352 = vor.u32 1.1754944e-38, %v7351
    %v7353 = vsel %vm7350, %v7352, %v7348
    %v7354 = vmul.f32 1.0, %v7353
    %v7355 = vrcp.pop %v7135
    %v7356 = vmul.f32 %v7135, %v7355
    %v7357 = vsub.f32 1.0, %v7356
    %v7358 = vmul.f32 %v7355, %v7357
    %v7359 = vadd.f32 %v7355, %v7358
    %vm7360 = vweird.f32 %v7135
    %vm7361 = vweird.f32 %v7355
    %vm7362 = vmor %vm7360, %vm7361
    %v7363 = vsel %vm7362, %v7355, %v7359
    %v7364 = vand.u32 2147483647, %v7135
    %vm7365 = vcmp.eq.f32.partialorder %v7364, 8.507059e+37
    %v7366 = vand.u32 %v7135, 2147483648
    %v7367 = vor.u32 1.1754944e-38, %v7366
    %v7368 = vsel %vm7365, %v7367, %v7363
    %v7369 = vmul.f32 1.0, %v7368
    %v7370 = vrcp.pop %v7136
    %v7371 = vmul.f32 %v7136, %v7370
    %v7372 = vsub.f32 1.0, %v7371
    %v7373 = vmul.f32 %v7370, %v7372
    %v7374 = vadd.f32 %v7370, %v7373
    %vm7375 = vweird.f32 %v7136
    %vm7376 = vweird.f32 %v7370
    %vm7377 = vmor %vm7375, %vm7376
    %v7378 = vsel %vm7377, %v7370, %v7374
    %v7379 = vand.u32 2147483647, %v7136
    %vm7380 = vcmp.eq.f32.partialorder %v7379, 8.507059e+37
    %v7381 = vand.u32 %v7136, 2147483648
    %v7382 = vor.u32 1.1754944e-38, %v7381
    %v7383 = vsel %vm7380, %v7382, %v7378
    %v7384 = vmul.f32 1.0, %v7383
    %v7385 = vrcp.pop %v7137
    %v7386 = vmul.f32 %v7137, %v7385
    %v7387 = vsub.f32 1.0, %v7386
    %v7388 = vmul.f32 %v7385, %v7387
    %v7389 = vadd.f32 %v7385, %v7388
    %vm7390 = vweird.f32 %v7137
    %vm7391 = vweird.f32 %v7385
    %vm7392 = vmor %vm7390, %vm7391
    %v7393 = vsel %vm7392, %v7385, %v7389
    %v7394 = vand.u32 2147483647, %v7137
    %vm7395 = vcmp.eq.f32.partialorder %v7394, 8.507059e+37
    %v7396 = vand.u32 %v7137, 2147483648
    %v7397 = vor.u32 1.1754944e-38, %v7396
    %v7398 = vsel %vm7395, %v7397, %v7393
    %v7399 = vmul.f32 1.0, %v7398
    %v7400 = vrcp.pop %v7138
    %v7401 = vmul.f32 %v7138, %v7400
    %v7402 = vsub.f32 1.0, %v7401
    %v7403 = vmul.f32 %v7400, %v7402
    %v7404 = vadd.f32 %v7400, %v7403
    %vm7405 = vweird.f32 %v7138
    %vm7406 = vweird.f32 %v7400
    %vm7407 = vmor %vm7405, %vm7406
    %v7408 = vsel %vm7407, %v7400, %v7404
    %v7409 = vand.u32 2147483647, %v7138
    %vm7410 = vcmp.eq.f32.partialorder %v7409, 8.507059e+37
    %v7411 = vand.u32 %v7138, 2147483648
    %v7412 = vor.u32 1.1754944e-38, %v7411
    %v7413 = vsel %vm7410, %v7412, %v7408
    %v7414 = vmul.f32 1.0, %v7413
    %v7415 = vrcp.pop %v7139
    %v7416 = vmul.f32 %v7139, %v7415
    %v7417 = vsub.f32 1.0, %v7416
    %v7418 = vmul.f32 %v7415, %v7417
    %v7419 = vadd.f32 %v7415, %v7418
    %vm7420 = vweird.f32 %v7139
    %vm7421 = vweird.f32 %v7415
    %vm7422 = vmor %vm7420, %vm7421
    %v7423 = vsel %vm7422, %v7415, %v7419
    %v7424 = vand.u32 2147483647, %v7139
    %vm7425 = vcmp.eq.f32.partialorder %v7424, 8.507059e+37
    %v7426 = vand.u32 %v7139, 2147483648
    %v7427 = vor.u32 1.1754944e-38, %v7426
    %v7428 = vsel %vm7425, %v7427, %v7423
    %v7429 = vmul.f32 1.0, %v7428
    %v7430 = vrcp.pop %v7140
    %v7431 = vmul.f32 %v7140, %v7430
    %v7432 = vsub.f32 1.0, %v7431
    %v7433 = vmul.f32 %v7430, %v7432
    %v7434 = vadd.f32 %v7430, %v7433
    %vm7435 = vweird.f32 %v7140
    %vm7436 = vweird.f32 %v7430
    %vm7437 = vmor %vm7435, %vm7436
    %v7438 = vsel %vm7437, %v7430, %v7434
    %v7439 = vand.u32 2147483647, %v7140
    %vm7440 = vcmp.eq.f32.partialorder %v7439, 8.507059e+37
    %v7441 = vand.u32 %v7140, 2147483648
    %v7442 = vor.u32 1.1754944e-38, %v7441
    %v7443 = vsel %vm7440, %v7442, %v7438
    %v7444 = vmul.f32 1.0, %v7443
    %v7445 = vrcp.pop %v7141
    %v7446 = vmul.f32 %v7141, %v7445
    %v7447 = vsub.f32 1.0, %v7446
    %v7448 = vmul.f32 %v7445, %v7447
    %v7449 = vadd.f32 %v7445, %v7448
    %vm7450 = vweird.f32 %v7141
    %vm7451 = vweird.f32 %v7445
    %vm7452 = vmor %vm7450, %vm7451
    %v7453 = vsel %vm7452, %v7445, %v7449
    %v7454 = vand.u32 2147483647, %v7141
    %vm7455 = vcmp.eq.f32.partialorder %v7454, 8.507059e+37
    %v7456 = vand.u32 %v7141, 2147483648
    %v7457 = vor.u32 1.1754944e-38, %v7456
    %v7458 = vsel %vm7455, %v7457, %v7453
    %v7459 = vmul.f32 1.0, %v7458
    %v7460 = vrcp.pop %v7142
    %v7461 = vmul.f32 %v7142, %v7460
    %v7462 = vsub.f32 1.0, %v7461
    %v7463 = vmul.f32 %v7460, %v7462
    %v7464 = vadd.f32 %v7460, %v7463
    %vm7465 = vweird.f32 %v7142
    %vm7466 = vweird.f32 %v7460
    %vm7467 = vmor %vm7465, %vm7466
    %v7468 = vsel %vm7467, %v7460, %v7464
    %v7469 = vand.u32 2147483647, %v7142
    %vm7470 = vcmp.eq.f32.partialorder %v7469, 8.507059e+37
    %v7471 = vand.u32 %v7142, 2147483648
    %v7472 = vor.u32 1.1754944e-38, %v7471
    %v7473 = vsel %vm7470, %v7472, %v7468
    %v7474 = vmul.f32 1.0, %v7473
    %v7475 = vrcp.pop %v7143
    %v7476 = vmul.f32 %v7143, %v7475
    %v7477 = vsub.f32 1.0, %v7476
    %v7478 = vmul.f32 %v7475, %v7477
    %v7479 = vadd.f32 %v7475, %v7478
    %vm7480 = vweird.f32 %v7143
    %vm7481 = vweird.f32 %v7475
    %vm7482 = vmor %vm7480, %vm7481
    %v7483 = vsel %vm7482, %v7475, %v7479
    %v7484 = vand.u32 2147483647, %v7143
    %vm7485 = vcmp.eq.f32.partialorder %v7484, 8.507059e+37
    %v7486 = vand.u32 %v7143, 2147483648
    %v7487 = vor.u32 1.1754944e-38, %v7486
    %v7488 = vsel %vm7485, %v7487, %v7483
    %v7489 = vmul.f32 1.0, %v7488
    %v7490 = vrcp.pop %v7144
    %v7491 = vmul.f32 %v7144, %v7490
    %v7492 = vsub.f32 1.0, %v7491
    %v7493 = vmul.f32 %v7490, %v7492
    %v7494 = vadd.f32 %v7490, %v7493
    %vm7495 = vweird.f32 %v7144
    %vm7496 = vweird.f32 %v7490
    %vm7497 = vmor %vm7495, %vm7496
    %v7498 = vsel %vm7497, %v7490, %v7494
    %v7499 = vand.u32 2147483647, %v7144
    %vm7500 = vcmp.eq.f32.partialorder %v7499, 8.507059e+37
    %v7501 = vand.u32 %v7144, 2147483648
    %v7502 = vor.u32 1.1754944e-38, %v7501
    %v7503 = vsel %vm7500, %v7502, %v7498
    %v7504 = vmul.f32 1.0, %v7503
    %v7505 = vtanh.pop %v7020
    %v7506 = vtanh.pop %v7024
    %v7507 = vtanh.pop %v7028
    %v7508 = vtanh.pop %v7032
    %v7509 = vtanh.pop %v7036
    %v7510 = vtanh.pop %v7040
    %v7511 = vtanh.pop %v7044
    %v7512 = vtanh.pop %v7048
    %v7513 = vmul.f32 %v7174, %v5167
    %v7514 = vmul.f32 %v7219, %v5168
    %v7515 = vmul.f32 %v7264, %v5169
    %v7516 = vmul.f32 %v7309, %v5170
    %v7517 = vmul.f32 %v7354, %v5171
    %v7518 = vmul.f32 %v7399, %v5172
    %v7519 = vmul.f32 %v7444, %v5173
    %v7520 = vmul.f32 %v7489, %v5174
    %v7521 = vmul.f32 %v7159, %v7505
    %v7522 = vmul.f32 %v7204, %v7506
    %v7523 = vmul.f32 %v7249, %v7507
    %v7524 = vmul.f32 %v7294, %v7508
    %v7525 = vmul.f32 %v7339, %v7509
    %v7526 = vmul.f32 %v7384, %v7510
    %v7527 = vmul.f32 %v7429, %v7511
    %v7528 = vmul.f32 %v7474, %v7512
    %v7529 = vadd.f32 %v7513, %v7521
    %v7530 = vadd.f32 %v7514, %v7522
    %v7531 = vadd.f32 %v7515, %v7523
    %v7532 = vadd.f32 %v7516, %v7524
    %v7533 = vadd.f32 %v7517, %v7525
    %v7534 = vadd.f32 %v7518, %v7526
    %v7535 = vadd.f32 %v7519, %v7527
    %v7536 = vadd.f32 %v7520, %v7528
    %v7537 = vtanh.pop %v7529
    %v7538 = vtanh.pop %v7530
    %v7539 = vtanh.pop %v7531
    %v7540 = vtanh.pop %v7532
    %v7541 = vtanh.pop %v7533
    %v7542 = vtanh.pop %v7534
    %v7543 = vtanh.pop %v7535
    %v7544 = vtanh.pop %v7536
    %v7545 = vmul.f32 %v7189, %v7537
    %v7546 = vmul.f32 %v7234, %v7538
    %v7547 = vmul.f32 %v7279, %v7539
    %v7548 = vmul.f32 %v7324, %v7540
    %v7549 = vmul.f32 %v7369, %v7541
    %v7550 = vmul.f32 %v7414, %v7542
    %v7551 = vmul.f32 %v7459, %v7543
    %v7552 = vmul.f32 %v7504, %v7544
    %v7553 = vxor.u32 %v6953, 2147483648
    %v7554 = vxor.u32 %v6954, 2147483648
    %v7555 = vxor.u32 %v6955, 2147483648
    %v7556 = vxor.u32 %v6957, 2147483648
    %v7557 = vxor.u32 %v6958, 2147483648
    %v7558 = vxor.u32 %v6959, 2147483648
    %v7559 = vxor.u32 %v6961, 2147483648
    %v7560 = vxor.u32 %v6962, 2147483648
    %v7561 = vxor.u32 %v6963, 2147483648
    %v7562 = vxor.u32 %v6965, 2147483648
    %v7563 = vxor.u32 %v6966, 2147483648
    %v7564 = vxor.u32 %v6967, 2147483648
    %v7565 = vxor.u32 %v6969, 2147483648
    %v7566 = vxor.u32 %v6970, 2147483648
    %v7567 = vxor.u32 %v6971, 2147483648
    %v7568 = vxor.u32 %v6973, 2147483648
    %v7569 = vxor.u32 %v6974, 2147483648
    %v7570 = vxor.u32 %v6975, 2147483648
    %v7571 = vxor.u32 %v6977, 2147483648
    %v7572 = vxor.u32 %v6978, 2147483648
    %v7573 = vxor.u32 %v6979, 2147483648
    %v7574 = vxor.u32 %v6981, 2147483648
    %v7575 = vxor.u32 %v6982, 2147483648
    %v7576 = vxor.u32 %v6983, 2147483648
    %v7577 = vmul.f32 %v7553, 1.442695
    %v7578 = vpow.pop %v7577
    %v7579 = vmul.f32 %v7554, 1.442695
    %v7580 = vpow.pop %v7579
    %v7581 = vmul.f32 %v7555, 1.442695
    %v7582 = vpow.pop %v7581
    %v7583 = vmul.f32 %v7556, 1.442695
    %v7584 = vpow.pop %v7583
    %v7585 = vmul.f32 %v7557, 1.442695
    %v7586 = vpow.pop %v7585
    %v7587 = vmul.f32 %v7558, 1.442695
    %v7588 = vpow.pop %v7587
    %v7589 = vmul.f32 %v7559, 1.442695
    %v7590 = vpow.pop %v7589
    %v7591 = vmul.f32 %v7560, 1.442695
    %v7592 = vpow.pop %v7591
    %v7593 = vmul.f32 %v7561, 1.442695
    %v7594 = vpow.pop %v7593
    %v7595 = vmul.f32 %v7562, 1.442695
    %v7596 = vpow.pop %v7595
    %v7597 = vmul.f32 %v7563, 1.442695
    %v7598 = vpow.pop %v7597
    %v7599 = vmul.f32 %v7564, 1.442695
    %v7600 = vpow.pop %v7599
    %v7601 = vmul.f32 %v7565, 1.442695
    %v7602 = vpow.pop %v7601
    %v7603 = vmul.f32 %v7566, 1.442695
    %v7604 = vpow.pop %v7603
    %v7605 = vmul.f32 %v7567, 1.442695
    %v7606 = vpow.pop %v7605
    %v7607 = vmul.f32 %v7568, 1.442695
    %v7608 = vpow.pop %v7607
    %v7609 = vmul.f32 %v7569, 1.442695
    %v7610 = vpow.pop %v7609
    %v7611 = vmul.f32 %v7570, 1.442695
    %v7612 = vpow.pop %v7611
    %v7613 = vmul.f32 %v7571, 1.442695
    %v7614 = vpow.pop %v7613
    %v7615 = vmul.f32 %v7572, 1.442695
    %v7616 = vpow.pop %v7615
    %v7617 = vmul.f32 %v7573, 1.442695
    %v7618 = vpow.pop %v7617
    %v7619 = vmul.f32 %v7574, 1.442695
    %v7620 = vpow.pop %v7619
    %v7621 = vmul.f32 %v7575, 1.442695
    %v7622 = vpow.pop %v7621
    %v7623 = vmul.f32 %v7576, 1.442695
    %v7624 = vpow.pop %v7623
    %v7625 = vadd.f32 %v7578, 1.0
    %v7626 = vadd.f32 %v7580, 1.0
    %v7627 = vadd.f32 %v7582, 1.0
    %v7628 = vadd.f32 %v7584, 1.0
    %v7629 = vadd.f32 %v7586, 1.0
    %v7630 = vadd.f32 %v7588, 1.0
    %v7631 = vadd.f32 %v7590, 1.0
    %v7632 = vadd.f32 %v7592, 1.0
    %v7633 = vadd.f32 %v7594, 1.0
    %v7634 = vadd.f32 %v7596, 1.0
    %v7635 = vadd.f32 %v7598, 1.0
    %v7636 = vadd.f32 %v7600, 1.0
    %v7637 = vadd.f32 %v7602, 1.0
    %v7638 = vadd.f32 %v7604, 1.0
    %v7639 = vadd.f32 %v7606, 1.0
    %v7640 = vadd.f32 %v7608, 1.0
    %v7641 = vadd.f32 %v7610, 1.0
    %v7642 = vadd.f32 %v7612, 1.0
    %v7643 = vadd.f32 %v7614, 1.0
    %v7644 = vadd.f32 %v7616, 1.0
    %v7645 = vadd.f32 %v7618, 1.0
    %v7646 = vadd.f32 %v7620, 1.0
    %v7647 = vadd.f32 %v7622, 1.0
    %v7648 = vadd.f32 %v7624, 1.0
    %v7649 = vrcp.pop %v7625
    %v7650 = vmul.f32 %v7625, %v7649
    %v7651 = vsub.f32 1.0, %v7650
    %v7652 = vmul.f32 %v7649, %v7651
    %v7653 = vadd.f32 %v7649, %v7652
    %vm7654 = vweird.f32 %v7625
    %vm7655 = vweird.f32 %v7649
    %vm7656 = vmor %vm7654, %vm7655
    %v7657 = vsel %vm7656, %v7649, %v7653
    %v7658 = vand.u32 2147483647, %v7625
    %vm7659 = vcmp.eq.f32.partialorder %v7658, 8.507059e+37
    %v7660 = vand.u32 %v7625, 2147483648
    %v7661 = vor.u32 1.1754944e-38, %v7660
    %v7662 = vsel %vm7659, %v7661, %v7657
    %v7663 = vmul.f32 1.0, %v7662
    %v7664 = vrcp.pop %v7626
    %v7665 = vmul.f32 %v7626, %v7664
    %v7666 = vsub.f32 1.0, %v7665
    %v7667 = vmul.f32 %v7664, %v7666
    %v7668 = vadd.f32 %v7664, %v7667
    %vm7669 = vweird.f32 %v7626
    %vm7670 = vweird.f32 %v7664
    %vm7671 = vmor %vm7669, %vm7670
    %v7672 = vsel %vm7671, %v7664, %v7668
    %v7673 = vand.u32 2147483647, %v7626
    %vm7674 = vcmp.eq.f32.partialorder %v7673, 8.507059e+37
    %v7675 = vand.u32 %v7626, 2147483648
    %v7676 = vor.u32 1.1754944e-38, %v7675
    %v7677 = vsel %vm7674, %v7676, %v7672
    %v7678 = vmul.f32 1.0, %v7677
    %v7679 = vrcp.pop %v7627
    %v7680 = vmul.f32 %v7627, %v7679
    %v7681 = vsub.f32 1.0, %v7680
    %v7682 = vmul.f32 %v7679, %v7681
    %v7683 = vadd.f32 %v7679, %v7682
    %vm7684 = vweird.f32 %v7627
    %vm7685 = vweird.f32 %v7679
    %vm7686 = vmor %vm7684, %vm7685
    %v7687 = vsel %vm7686, %v7679, %v7683
    %v7688 = vand.u32 2147483647, %v7627
    %vm7689 = vcmp.eq.f32.partialorder %v7688, 8.507059e+37
    %v7690 = vand.u32 %v7627, 2147483648
    %v7691 = vor.u32 1.1754944e-38, %v7690
    %v7692 = vsel %vm7689, %v7691, %v7687
    %v7693 = vmul.f32 1.0, %v7692
    %v7694 = vrcp.pop %v7628
    %v7695 = vmul.f32 %v7628, %v7694
    %v7696 = vsub.f32 1.0, %v7695
    %v7697 = vmul.f32 %v7694, %v7696
    %v7698 = vadd.f32 %v7694, %v7697
    %vm7699 = vweird.f32 %v7628
    %vm7700 = vweird.f32 %v7694
    %vm7701 = vmor %vm7699, %vm7700
    %v7702 = vsel %vm7701, %v7694, %v7698
    %v7703 = vand.u32 2147483647, %v7628
    %vm7704 = vcmp.eq.f32.partialorder %v7703, 8.507059e+37
    %v7705 = vand.u32 %v7628, 2147483648
    %v7706 = vor.u32 1.1754944e-38, %v7705
    %v7707 = vsel %vm7704, %v7706, %v7702
    %v7708 = vmul.f32 1.0, %v7707
    %v7709 = vrcp.pop %v7629
    %v7710 = vmul.f32 %v7629, %v7709
    %v7711 = vsub.f32 1.0, %v7710
    %v7712 = vmul.f32 %v7709, %v7711
    %v7713 = vadd.f32 %v7709, %v7712
    %vm7714 = vweird.f32 %v7629
    %vm7715 = vweird.f32 %v7709
    %vm7716 = vmor %vm7714, %vm7715
    %v7717 = vsel %vm7716, %v7709, %v7713
    %v7718 = vand.u32 2147483647, %v7629
    %vm7719 = vcmp.eq.f32.partialorder %v7718, 8.507059e+37
    %v7720 = vand.u32 %v7629, 2147483648
    %v7721 = vor.u32 1.1754944e-38, %v7720
    %v7722 = vsel %vm7719, %v7721, %v7717
    %v7723 = vmul.f32 1.0, %v7722
    %v7724 = vrcp.pop %v7630
    %v7725 = vmul.f32 %v7630, %v7724
    %v7726 = vsub.f32 1.0, %v7725
    %v7727 = vmul.f32 %v7724, %v7726
    %v7728 = vadd.f32 %v7724, %v7727
    %vm7729 = vweird.f32 %v7630
    %vm7730 = vweird.f32 %v7724
    %vm7731 = vmor %vm7729, %vm7730
    %v7732 = vsel %vm7731, %v7724, %v7728
    %v7733 = vand.u32 2147483647, %v7630
    %vm7734 = vcmp.eq.f32.partialorder %v7733, 8.507059e+37
    %v7735 = vand.u32 %v7630, 2147483648
    %v7736 = vor.u32 1.1754944e-38, %v7735
    %v7737 = vsel %vm7734, %v7736, %v7732
    %v7738 = vmul.f32 1.0, %v7737
    %v7739 = vrcp.pop %v7631
    %v7740 = vmul.f32 %v7631, %v7739
    %v7741 = vsub.f32 1.0, %v7740
    %v7742 = vmul.f32 %v7739, %v7741
    %v7743 = vadd.f32 %v7739, %v7742
    %vm7744 = vweird.f32 %v7631
    %vm7745 = vweird.f32 %v7739
    %vm7746 = vmor %vm7744, %vm7745
    %v7747 = vsel %vm7746, %v7739, %v7743
    %v7748 = vand.u32 2147483647, %v7631
    %vm7749 = vcmp.eq.f32.partialorder %v7748, 8.507059e+37
    %v7750 = vand.u32 %v7631, 2147483648
    %v7751 = vor.u32 1.1754944e-38, %v7750
    %v7752 = vsel %vm7749, %v7751, %v7747
    %v7753 = vmul.f32 1.0, %v7752
    %v7754 = vrcp.pop %v7632
    %v7755 = vmul.f32 %v7632, %v7754
    %v7756 = vsub.f32 1.0, %v7755
    %v7757 = vmul.f32 %v7754, %v7756
    %v7758 = vadd.f32 %v7754, %v7757
    %vm7759 = vweird.f32 %v7632
    %vm7760 = vweird.f32 %v7754
    %vm7761 = vmor %vm7759, %vm7760
    %v7762 = vsel %vm7761, %v7754, %v7758
    %v7763 = vand.u32 2147483647, %v7632
    %vm7764 = vcmp.eq.f32.partialorder %v7763, 8.507059e+37
    %v7765 = vand.u32 %v7632, 2147483648
    %v7766 = vor.u32 1.1754944e-38, %v7765
    %v7767 = vsel %vm7764, %v7766, %v7762
    %v7768 = vmul.f32 1.0, %v7767
    %v7769 = vrcp.pop %v7633
    %v7770 = vmul.f32 %v7633, %v7769
    %v7771 = vsub.f32 1.0, %v7770
    %v7772 = vmul.f32 %v7769, %v7771
    %v7773 = vadd.f32 %v7769, %v7772
    %vm7774 = vweird.f32 %v7633
    %vm7775 = vweird.f32 %v7769
    %vm7776 = vmor %vm7774, %vm7775
    %v7777 = vsel %vm7776, %v7769, %v7773
    %v7778 = vand.u32 2147483647, %v7633
    %vm7779 = vcmp.eq.f32.partialorder %v7778, 8.507059e+37
    %v7780 = vand.u32 %v7633, 2147483648
    %v7781 = vor.u32 1.1754944e-38, %v7780
    %v7782 = vsel %vm7779, %v7781, %v7777
    %v7783 = vmul.f32 1.0, %v7782
    %v7784 = vrcp.pop %v7634
    %v7785 = vmul.f32 %v7634, %v7784
    %v7786 = vsub.f32 1.0, %v7785
    %v7787 = vmul.f32 %v7784, %v7786
    %v7788 = vadd.f32 %v7784, %v7787
    %vm7789 = vweird.f32 %v7634
    %vm7790 = vweird.f32 %v7784
    %vm7791 = vmor %vm7789, %vm7790
    %v7792 = vsel %vm7791, %v7784, %v7788
    %v7793 = vand.u32 2147483647, %v7634
    %vm7794 = vcmp.eq.f32.partialorder %v7793, 8.507059e+37
    %v7795 = vand.u32 %v7634, 2147483648
    %v7796 = vor.u32 1.1754944e-38, %v7795
    %v7797 = vsel %vm7794, %v7796, %v7792
    %v7798 = vmul.f32 1.0, %v7797
    %v7799 = vrcp.pop %v7635
    %v7800 = vmul.f32 %v7635, %v7799
    %v7801 = vsub.f32 1.0, %v7800
    %v7802 = vmul.f32 %v7799, %v7801
    %v7803 = vadd.f32 %v7799, %v7802
    %vm7804 = vweird.f32 %v7635
    %vm7805 = vweird.f32 %v7799
    %vm7806 = vmor %vm7804, %vm7805
    %v7807 = vsel %vm7806, %v7799, %v7803
    %v7808 = vand.u32 2147483647, %v7635
    %vm7809 = vcmp.eq.f32.partialorder %v7808, 8.507059e+37
    %v7810 = vand.u32 %v7635, 2147483648
    %v7811 = vor.u32 1.1754944e-38, %v7810
    %v7812 = vsel %vm7809, %v7811, %v7807
    %v7813 = vmul.f32 1.0, %v7812
    %v7814 = vrcp.pop %v7636
    %v7815 = vmul.f32 %v7636, %v7814
    %v7816 = vsub.f32 1.0, %v7815
    %v7817 = vmul.f32 %v7814, %v7816
    %v7818 = vadd.f32 %v7814, %v7817
    %vm7819 = vweird.f32 %v7636
    %vm7820 = vweird.f32 %v7814
    %vm7821 = vmor %vm7819, %vm7820
    %v7822 = vsel %vm7821, %v7814, %v7818
    %v7823 = vand.u32 2147483647, %v7636
    %vm7824 = vcmp.eq.f32.partialorder %v7823, 8.507059e+37
    %v7825 = vand.u32 %v7636, 2147483648
    %v7826 = vor.u32 1.1754944e-38, %v7825
    %v7827 = vsel %vm7824, %v7826, %v7822
    %v7828 = vmul.f32 1.0, %v7827
    %v7829 = vrcp.pop %v7637
    %v7830 = vmul.f32 %v7637, %v7829
    %v7831 = vsub.f32 1.0, %v7830
    %v7832 = vmul.f32 %v7829, %v7831
    %v7833 = vadd.f32 %v7829, %v7832
    %vm7834 = vweird.f32 %v7637
    %vm7835 = vweird.f32 %v7829
    %vm7836 = vmor %vm7834, %vm7835
    %v7837 = vsel %vm7836, %v7829, %v7833
    %v7838 = vand.u32 2147483647, %v7637
    %vm7839 = vcmp.eq.f32.partialorder %v7838, 8.507059e+37
    %v7840 = vand.u32 %v7637, 2147483648
    %v7841 = vor.u32 1.1754944e-38, %v7840
    %v7842 = vsel %vm7839, %v7841, %v7837
    %v7843 = vmul.f32 1.0, %v7842
    %v7844 = vrcp.pop %v7638
    %v7845 = vmul.f32 %v7638, %v7844
    %v7846 = vsub.f32 1.0, %v7845
    %v7847 = vmul.f32 %v7844, %v7846
    %v7848 = vadd.f32 %v7844, %v7847
    %vm7849 = vweird.f32 %v7638
    %vm7850 = vweird.f32 %v7844
    %vm7851 = vmor %vm7849, %vm7850
    %v7852 = vsel %vm7851, %v7844, %v7848
    %v7853 = vand.u32 2147483647, %v7638
    %vm7854 = vcmp.eq.f32.partialorder %v7853, 8.507059e+37
    %v7855 = vand.u32 %v7638, 2147483648
    %v7856 = vor.u32 1.1754944e-38, %v7855
    %v7857 = vsel %vm7854, %v7856, %v7852
    %v7858 = vmul.f32 1.0, %v7857
    %v7859 = vrcp.pop %v7639
    %v7860 = vmul.f32 %v7639, %v7859
    %v7861 = vsub.f32 1.0, %v7860
    %v7862 = vmul.f32 %v7859, %v7861
    %v7863 = vadd.f32 %v7859, %v7862
    %vm7864 = vweird.f32 %v7639
    %vm7865 = vweird.f32 %v7859
    %vm7866 = vmor %vm7864, %vm7865
    %v7867 = vsel %vm7866, %v7859, %v7863
    %v7868 = vand.u32 2147483647, %v7639
    %vm7869 = vcmp.eq.f32.partialorder %v7868, 8.507059e+37
    %v7870 = vand.u32 %v7639, 2147483648
    %v7871 = vor.u32 1.1754944e-38, %v7870
    %v7872 = vsel %vm7869, %v7871, %v7867
    %v7873 = vmul.f32 1.0, %v7872
    %v7874 = vrcp.pop %v7640
    %v7875 = vmul.f32 %v7640, %v7874
    %v7876 = vsub.f32 1.0, %v7875
    %v7877 = vmul.f32 %v7874, %v7876
    %v7878 = vadd.f32 %v7874, %v7877
    %vm7879 = vweird.f32 %v7640
    %vm7880 = vweird.f32 %v7874
    %vm7881 = vmor %vm7879, %vm7880
    %v7882 = vsel %vm7881, %v7874, %v7878
    %v7883 = vand.u32 2147483647, %v7640
    %vm7884 = vcmp.eq.f32.partialorder %v7883, 8.507059e+37
    %v7885 = vand.u32 %v7640, 2147483648
    %v7886 = vor.u32 1.1754944e-38, %v7885
    %v7887 = vsel %vm7884, %v7886, %v7882
    %v7888 = vmul.f32 1.0, %v7887
    %v7889 = vrcp.pop %v7641
    %v7890 = vmul.f32 %v7641, %v7889
    %v7891 = vsub.f32 1.0, %v7890
    %v7892 = vmul.f32 %v7889, %v7891
    %v7893 = vadd.f32 %v7889, %v7892
    %vm7894 = vweird.f32 %v7641
    %vm7895 = vweird.f32 %v7889
    %vm7896 = vmor %vm7894, %vm7895
    %v7897 = vsel %vm7896, %v7889, %v7893
    %v7898 = vand.u32 2147483647, %v7641
    %vm7899 = vcmp.eq.f32.partialorder %v7898, 8.507059e+37
    %v7900 = vand.u32 %v7641, 2147483648
    %v7901 = vor.u32 1.1754944e-38, %v7900
    %v7902 = vsel %vm7899, %v7901, %v7897
    %v7903 = vmul.f32 1.0, %v7902
    %v7904 = vrcp.pop %v7642
    %v7905 = vmul.f32 %v7642, %v7904
    %v7906 = vsub.f32 1.0, %v7905
    %v7907 = vmul.f32 %v7904, %v7906
    %v7908 = vadd.f32 %v7904, %v7907
    %vm7909 = vweird.f32 %v7642
    %vm7910 = vweird.f32 %v7904
    %vm7911 = vmor %vm7909, %vm7910
    %v7912 = vsel %vm7911, %v7904, %v7908
    %v7913 = vand.u32 2147483647, %v7642
    %vm7914 = vcmp.eq.f32.partialorder %v7913, 8.507059e+37
    %v7915 = vand.u32 %v7642, 2147483648
    %v7916 = vor.u32 1.1754944e-38, %v7915
    %v7917 = vsel %vm7914, %v7916, %v7912
    %v7918 = vmul.f32 1.0, %v7917
    %v7919 = vrcp.pop %v7643
    %v7920 = vmul.f32 %v7643, %v7919
    %v7921 = vsub.f32 1.0, %v7920
    %v7922 = vmul.f32 %v7919, %v7921
    %v7923 = vadd.f32 %v7919, %v7922
    %vm7924 = vweird.f32 %v7643
    %vm7925 = vweird.f32 %v7919
    %vm7926 = vmor %vm7924, %vm7925
    %v7927 = vsel %vm7926, %v7919, %v7923
    %v7928 = vand.u32 2147483647, %v7643
    %vm7929 = vcmp.eq.f32.partialorder %v7928, 8.507059e+37
    %v7930 = vand.u32 %v7643, 2147483648
    %v7931 = vor.u32 1.1754944e-38, %v7930
    %v7932 = vsel %vm7929, %v7931, %v7927
    %v7933 = vmul.f32 1.0, %v7932
    %v7934 = vrcp.pop %v7644
    %v7935 = vmul.f32 %v7644, %v7934
    %v7936 = vsub.f32 1.0, %v7935
    %v7937 = vmul.f32 %v7934, %v7936
    %v7938 = vadd.f32 %v7934, %v7937
    %vm7939 = vweird.f32 %v7644
    %vm7940 = vweird.f32 %v7934
    %vm7941 = vmor %vm7939, %vm7940
    %v7942 = vsel %vm7941, %v7934, %v7938
    %v7943 = vand.u32 2147483647, %v7644
    %vm7944 = vcmp.eq.f32.partialorder %v7943, 8.507059e+37
    %v7945 = vand.u32 %v7644, 2147483648
    %v7946 = vor.u32 1.1754944e-38, %v7945
    %v7947 = vsel %vm7944, %v7946, %v7942
    %v7948 = vmul.f32 1.0, %v7947
    %v7949 = vrcp.pop %v7645
    %v7950 = vmul.f32 %v7645, %v7949
    %v7951 = vsub.f32 1.0, %v7950
    %v7952 = vmul.f32 %v7949, %v7951
    %v7953 = vadd.f32 %v7949, %v7952
    %vm7954 = vweird.f32 %v7645
    %vm7955 = vweird.f32 %v7949
    %vm7956 = vmor %vm7954, %vm7955
    %v7957 = vsel %vm7956, %v7949, %v7953
    %v7958 = vand.u32 2147483647, %v7645
    %vm7959 = vcmp.eq.f32.partialorder %v7958, 8.507059e+37
    %v7960 = vand.u32 %v7645, 2147483648
    %v7961 = vor.u32 1.1754944e-38, %v7960
    %v7962 = vsel %vm7959, %v7961, %v7957
    %v7963 = vmul.f32 1.0, %v7962
    %v7964 = vrcp.pop %v7646
    %v7965 = vmul.f32 %v7646, %v7964
    %v7966 = vsub.f32 1.0, %v7965
    %v7967 = vmul.f32 %v7964, %v7966
    %v7968 = vadd.f32 %v7964, %v7967
    %vm7969 = vweird.f32 %v7646
    %vm7970 = vweird.f32 %v7964
    %vm7971 = vmor %vm7969, %vm7970
    %v7972 = vsel %vm7971, %v7964, %v7968
    %v7973 = vand.u32 2147483647, %v7646
    %vm7974 = vcmp.eq.f32.partialorder %v7973, 8.507059e+37
    %v7975 = vand.u32 %v7646, 2147483648
    %v7976 = vor.u32 1.1754944e-38, %v7975
    %v7977 = vsel %vm7974, %v7976, %v7972
    %v7978 = vmul.f32 1.0, %v7977
    %v7979 = vrcp.pop %v7647
    %v7980 = vmul.f32 %v7647, %v7979
    %v7981 = vsub.f32 1.0, %v7980
    %v7982 = vmul.f32 %v7979, %v7981
    %v7983 = vadd.f32 %v7979, %v7982
    %vm7984 = vweird.f32 %v7647
    %vm7985 = vweird.f32 %v7979
    %vm7986 = vmor %vm7984, %vm7985
    %v7987 = vsel %vm7986, %v7979, %v7983
    %v7988 = vand.u32 2147483647, %v7647
    %vm7989 = vcmp.eq.f32.partialorder %v7988, 8.507059e+37
    %v7990 = vand.u32 %v7647, 2147483648
    %v7991 = vor.u32 1.1754944e-38, %v7990
    %v7992 = vsel %vm7989, %v7991, %v7987
    %v7993 = vmul.f32 1.0, %v7992
    %v7994 = vrcp.pop %v7648
    %v7995 = vmul.f32 %v7648, %v7994
    %v7996 = vsub.f32 1.0, %v7995
    %v7997 = vmul.f32 %v7994, %v7996
    %v7998 = vadd.f32 %v7994, %v7997
    %vm7999 = vweird.f32 %v7648
    %vm8000 = vweird.f32 %v7994
    %vm8001 = vmor %vm7999, %vm8000
    %v8002 = vsel %vm8001, %v7994, %v7998
    %v8003 = vand.u32 2147483647, %v7648
    %vm8004 = vcmp.eq.f32.partialorder %v8003, 8.507059e+37
    %v8005 = vand.u32 %v7648, 2147483648
    %v8006 = vor.u32 1.1754944e-38, %v8005
    %v8007 = vsel %vm8004, %v8006, %v8002
    %v8008 = vmul.f32 1.0, %v8007
    %v8009 = vtanh.pop %v6956
    %v8010 = vtanh.pop %v6960
    %v8011 = vtanh.pop %v6964
    %v8012 = vtanh.pop %v6968
    %v8013 = vtanh.pop %v6972
    %v8014 = vtanh.pop %v6976
    %v8015 = vtanh.pop %v6980
    %v8016 = vtanh.pop %v6984
    %v8017 = vmul.f32 %v7678, %v5671
    %v8018 = vmul.f32 %v7723, %v5672
    %v8019 = vmul.f32 %v7768, %v5673
    %v8020 = vmul.f32 %v7813, %v5674
    %v8021 = vmul.f32 %v7858, %v5675
    %v8022 = vmul.f32 %v7903, %v5676
    %v8023 = vmul.f32 %v7948, %v5677
    %v8024 = vmul.f32 %v7993, %v5678
    %v8025 = vmul.f32 %v7663, %v8009
    %v8026 = vmul.f32 %v7708, %v8010
    %v8027 = vmul.f32 %v7753, %v8011
    %v8028 = vmul.f32 %v7798, %v8012
    %v8029 = vmul.f32 %v7843, %v8013
    %v8030 = vmul.f32 %v7888, %v8014
    %v8031 = vmul.f32 %v7933, %v8015
    %v8032 = vmul.f32 %v7978, %v8016
    %v8033 = vadd.f32 %v8017, %v8025
    %v8034 = vadd.f32 %v8018, %v8026
    %v8035 = vadd.f32 %v8019, %v8027
    %v8036 = vadd.f32 %v8020, %v8028
    %v8037 = vadd.f32 %v8021, %v8029
    %v8038 = vadd.f32 %v8022, %v8030
    %v8039 = vadd.f32 %v8023, %v8031
    %v8040 = vadd.f32 %v8024, %v8032
    %v8041 = vtanh.pop %v8033
    %v8042 = vtanh.pop %v8034
    %v8043 = vtanh.pop %v8035
    %v8044 = vtanh.pop %v8036
    %v8045 = vtanh.pop %v8037
    %v8046 = vtanh.pop %v8038
    %v8047 = vtanh.pop %v8039
    %v8048 = vtanh.pop %v8040
    %v8049 = vmul.f32 %v7693, %v8041
    %v8050 = vmul.f32 %v7738, %v8042
    %v8051 = vmul.f32 %v7783, %v8043
    %v8052 = vmul.f32 %v7828, %v8044
    %v8053 = vmul.f32 %v7873, %v8045
    %v8054 = vmul.f32 %v7918, %v8046
    %v8055 = vmul.f32 %v7963, %v8047
    %v8056 = vmul.f32 %v8008, %v8048
    %8057 = vst [vmem:[#allocation3 + $0x80] sm:$0xff] %v8049
    %8058 = vst [vmem:[#allocation3 + $0x88] sm:$0xff] %v8050
    %8059 = vst [vmem:[#allocation3 + $0x90] sm:$0xff] %v8051
    %8060 = vst [vmem:[#allocation3 + $0x98] sm:$0xff] %v8052
    %8061 = vst [vmem:[#allocation3 + $0xa0] sm:$0xff] %v8053
    %8062 = vst [vmem:[#allocation3 + $0xa8] sm:$0xff] %v8054
    %8063 = vst [vmem:[#allocation3 + $0xb0] sm:$0xff] %v8055
    %8064 = vst [vmem:[#allocation3 + $0xb8] sm:$0xff] %v8056
    %v8065 = vpack.c.bf16 %v7546, %v7545
    %v8066 = vpack.c.bf16 %v8050, %v8049
    %v8067 = vpack.c.bf16 %v7548, %v7547
    %v8068 = vpack.c.bf16 %v8052, %v8051
    %v8069 = vpack.c.bf16 %v7550, %v7549
    %v8070 = vpack.c.bf16 %v8054, %v8053
    %v8071 = vpack.c.bf16 %v7552, %v7551
    %v8072 = vpack.c.bf16 %v8056, %v8055
    %v8073 = vld [vmem:[#allocation9 + $0x10] sm:$0xff]
    %v8074 = vld [vmem:[#allocation9 + $0x18] sm:$0xff]
    %v8075 = vld [vmem:[#allocation9 + $0x30] sm:$0xff]
    %v8076 = vld [vmem:[#allocation9 + $0x38] sm:$0xff]
    %v8077 = vld [vmem:[#allocation9 + $0x50] sm:$0xff]
    %v8078 = vld [vmem:[#allocation9 + $0x58] sm:$0xff]
    %v8079 = vld [vmem:[#allocation9 + $0x70] sm:$0xff]
    %v8080 = vld [vmem:[#allocation9 + $0x78] sm:$0xff]
    %v8081 = vld [vmem:[#allocation9 + $0x90] sm:$0xff]
    %v8082 = vld [vmem:[#allocation9 + $0x98] sm:$0xff]
    %v8083 = vld [vmem:[#allocation9 + $0xb0] sm:$0xff]
    %v8084 = vld [vmem:[#allocation9 + $0xb8] sm:$0xff]
    %v8085 = vld [vmem:[#allocation9 + $0xd0] sm:$0xff]
    %v8086 = vld [vmem:[#allocation9 + $0xd8] sm:$0xff]
    %v8087 = vld [vmem:[#allocation9 + $0xf0] sm:$0xff]
    %v8088 = vld [vmem:[#allocation9 + $0xf8] sm:$0xff]
    %v8089 = vld [vmem:[#allocation9 + $0x110] sm:$0xff]
    %v8090 = vld [vmem:[#allocation9 + $0x118] sm:$0xff]
    %v8091 = vld [vmem:[#allocation9 + $0x130] sm:$0xff]
    %v8092 = vld [vmem:[#allocation9 + $0x138] sm:$0xff]
    %v8093 = vld [vmem:[#allocation9 + $0x150] sm:$0xff]
    %v8094 = vld [vmem:[#allocation9 + $0x158] sm:$0xff]
    %v8095 = vld [vmem:[#allocation9 + $0x170] sm:$0xff]
    %v8096 = vld [vmem:[#allocation9 + $0x178] sm:$0xff]
    %v8097 = vld [vmem:[#allocation9 + $0x190] sm:$0xff]
    %v8098 = vld [vmem:[#allocation9 + $0x198] sm:$0xff]
    %v8099 = vld [vmem:[#allocation9 + $0x1b0] sm:$0xff]
    %v8100 = vld [vmem:[#allocation9 + $0x1b8] sm:$0xff]
    %v8101 = vld [vmem:[#allocation9 + $0x1d0] sm:$0xff]
    %v8102 = vld [vmem:[#allocation9 + $0x1d8] sm:$0xff]
    %v8103 = vld [vmem:[#allocation9 + $0x1f0] sm:$0xff]
    %v8104 = vld [vmem:[#allocation9 + $0x1f8] sm:$0xff]
    %v8105 = vld [vmem:[#allocation9 + $0x210] sm:$0xff]
    %v8106 = vld [vmem:[#allocation9 + $0x218] sm:$0xff]
    %v8107 = vld [vmem:[#allocation9 + $0x230] sm:$0xff]
    %v8108 = vld [vmem:[#allocation9 + $0x238] sm:$0xff]
    %v8109 = vld [vmem:[#allocation9 + $0x250] sm:$0xff]
    %v8110 = vld [vmem:[#allocation9 + $0x258] sm:$0xff]
    %v8111 = vld [vmem:[#allocation9 + $0x270] sm:$0xff]
    %v8112 = vld [vmem:[#allocation9 + $0x278] sm:$0xff]
    %v8113 = vld [vmem:[#allocation9 + $0x290] sm:$0xff]
    %v8114 = vld [vmem:[#allocation9 + $0x298] sm:$0xff]
    %v8115 = vld [vmem:[#allocation9 + $0x2b0] sm:$0xff]
    %v8116 = vld [vmem:[#allocation9 + $0x2b8] sm:$0xff]
    %v8117 = vld [vmem:[#allocation9 + $0x2d0] sm:$0xff]
    %v8118 = vld [vmem:[#allocation9 + $0x2d8] sm:$0xff]
    %v8119 = vld [vmem:[#allocation9 + $0x2f0] sm:$0xff]
    %v8120 = vld [vmem:[#allocation9 + $0x2f8] sm:$0xff]
    %v8121 = vld [vmem:[#allocation9 + $0x310] sm:$0xff]
    %v8122 = vld [vmem:[#allocation9 + $0x318] sm:$0xff]
    %v8123 = vld [vmem:[#allocation9 + $0x330] sm:$0xff]
    %v8124 = vld [vmem:[#allocation9 + $0x338] sm:$0xff]
    %v8125 = vld [vmem:[#allocation9 + $0x350] sm:$0xff]
    %v8126 = vld [vmem:[#allocation9 + $0x358] sm:$0xff]
    %v8127 = vld [vmem:[#allocation9 + $0x370] sm:$0xff]
    %v8128 = vld [vmem:[#allocation9 + $0x378] sm:$0xff]
    %v8129 = vld [vmem:[#allocation9 + $0x390] sm:$0xff]
    %v8130 = vld [vmem:[#allocation9 + $0x398] sm:$0xff]
    %v8131 = vld [vmem:[#allocation9 + $0x3b0] sm:$0xff]
    %v8132 = vld [vmem:[#allocation9 + $0x3b8] sm:$0xff]
    %v8133 = vld [vmem:[#allocation9 + $0x3d0] sm:$0xff]
    %v8134 = vld [vmem:[#allocation9 + $0x3d8] sm:$0xff]
    %v8135 = vld [vmem:[#allocation9 + $0x3f0] sm:$0xff]
    %v8136 = vld [vmem:[#allocation9 + $0x3f8] sm:$0xff]
    %v8137 = vld [vmem:[#allocation11] sm:$0xf]
    %v8139 = vperm.slane %v8137, 0
    %v8140 = vperm.slane %v8137, 1
    %v8141 = vperm.slane %v8137, 2
    %v8142 = vperm.slane %v8137, 3
    %v8211 = vunpack.c.l.b16 %v8073
    %v8212 = vunpack.c.h.b16 %v8073
    %v8213 = vunpack.c.l.b16 %v8074
    %v8214 = vunpack.c.h.b16 %v8074
    %v8215 = vunpack.c.l.b16 %v8075
    %v8216 = vunpack.c.h.b16 %v8075
    %v8217 = vunpack.c.l.b16 %v8076
    %v8218 = vunpack.c.h.b16 %v8076
    %v8219 = vunpack.c.l.b16 %v8077
    %v8220 = vunpack.c.h.b16 %v8077
    %v8221 = vunpack.c.l.b16 %v8078
    %v8222 = vunpack.c.h.b16 %v8078
    %v8223 = vunpack.c.l.b16 %v8079
    %v8224 = vunpack.c.h.b16 %v8079
    %v8225 = vunpack.c.l.b16 %v8080
    %v8226 = vunpack.c.h.b16 %v8080
    %v8227 = vunpack.c.l.b16 %v8081
    %v8228 = vunpack.c.h.b16 %v8081
    %v8229 = vunpack.c.l.b16 %v8082
    %v8230 = vunpack.c.h.b16 %v8082
    %v8231 = vunpack.c.l.b16 %v8083
    %v8232 = vunpack.c.h.b16 %v8083
    %v8233 = vunpack.c.l.b16 %v8084
    %v8234 = vunpack.c.h.b16 %v8084
    %v8235 = vunpack.c.l.b16 %v8085
    %v8236 = vunpack.c.h.b16 %v8085
    %v8237 = vunpack.c.l.b16 %v8086
    %v8238 = vunpack.c.h.b16 %v8086
    %v8239 = vunpack.c.l.b16 %v8087
    %v8240 = vunpack.c.h.b16 %v8087
    %v8241 = vunpack.c.l.b16 %v8088
    %v8242 = vunpack.c.h.b16 %v8088
    %v8243 = vunpack.c.l.b16 %v8089
    %v8244 = vunpack.c.h.b16 %v8089
    %v8245 = vunpack.c.l.b16 %v8090
    %v8246 = vunpack.c.h.b16 %v8090
    %v8247 = vunpack.c.l.b16 %v8091
    %v8248 = vunpack.c.h.b16 %v8091
    %v8249 = vunpack.c.l.b16 %v8092
    %v8250 = vunpack.c.h.b16 %v8092
    %v8251 = vunpack.c.l.b16 %v8093
    %v8252 = vunpack.c.h.b16 %v8093
    %v8253 = vunpack.c.l.b16 %v8094
    %v8254 = vunpack.c.h.b16 %v8094
    %v8255 = vunpack.c.l.b16 %v8095
    %v8256 = vunpack.c.h.b16 %v8095
    %v8257 = vunpack.c.l.b16 %v8096
    %v8258 = vunpack.c.h.b16 %v8096
    %v8259 = vunpack.c.l.b16 %v8097
    %v8260 = vunpack.c.h.b16 %v8097
    %v8261 = vunpack.c.l.b16 %v8098
    %v8262 = vunpack.c.h.b16 %v8098
    %v8263 = vunpack.c.l.b16 %v8099
    %v8264 = vunpack.c.h.b16 %v8099
    %v8265 = vunpack.c.l.b16 %v8100
    %v8266 = vunpack.c.h.b16 %v8100
    %v8267 = vunpack.c.l.b16 %v8101
    %v8268 = vunpack.c.h.b16 %v8101
    %v8269 = vunpack.c.l.b16 %v8102
    %v8270 = vunpack.c.h.b16 %v8102
    %v8271 = vunpack.c.l.b16 %v8103
    %v8272 = vunpack.c.h.b16 %v8103
    %v8273 = vunpack.c.l.b16 %v8104
    %v8274 = vunpack.c.h.b16 %v8104
    %v8275 = vunpack.c.l.b16 %v8105
    %v8276 = vunpack.c.h.b16 %v8105
    %v8277 = vunpack.c.l.b16 %v8106
    %v8278 = vunpack.c.h.b16 %v8106
    %v8279 = vunpack.c.l.b16 %v8107
    %v8280 = vunpack.c.h.b16 %v8107
    %v8281 = vunpack.c.l.b16 %v8108
    %v8282 = vunpack.c.h.b16 %v8108
    %v8283 = vunpack.c.l.b16 %v8109
    %v8284 = vunpack.c.h.b16 %v8109
    %v8285 = vunpack.c.l.b16 %v8110
    %v8286 = vunpack.c.h.b16 %v8110
    %v8287 = vunpack.c.l.b16 %v8111
    %v8288 = vunpack.c.h.b16 %v8111
    %v8289 = vunpack.c.l.b16 %v8112
    %v8290 = vunpack.c.h.b16 %v8112
    %v8291 = vunpack.c.l.b16 %v8113
    %v8292 = vunpack.c.h.b16 %v8113
    %v8293 = vunpack.c.l.b16 %v8114
    %v8294 = vunpack.c.h.b16 %v8114
    %v8295 = vunpack.c.l.b16 %v8115
    %v8296 = vunpack.c.h.b16 %v8115
    %v8297 = vunpack.c.l.b16 %v8116
    %v8298 = vunpack.c.h.b16 %v8116
    %v8299 = vunpack.c.l.b16 %v8117
    %v8300 = vunpack.c.h.b16 %v8117
    %v8301 = vunpack.c.l.b16 %v8118
    %v8302 = vunpack.c.h.b16 %v8118
    %v8303 = vunpack.c.l.b16 %v8119
    %v8304 = vunpack.c.h.b16 %v8119
    %v8305 = vunpack.c.l.b16 %v8120
    %v8306 = vunpack.c.h.b16 %v8120
    %v8307 = vunpack.c.l.b16 %v8121
    %v8308 = vunpack.c.h.b16 %v8121
    %v8309 = vunpack.c.l.b16 %v8122
    %v8310 = vunpack.c.h.b16 %v8122
    %v8311 = vunpack.c.l.b16 %v8123
    %v8312 = vunpack.c.h.b16 %v8123
    %v8313 = vunpack.c.l.b16 %v8124
    %v8314 = vunpack.c.h.b16 %v8124
    %v8315 = vunpack.c.l.b16 %v8125
    %v8316 = vunpack.c.h.b16 %v8125
    %v8317 = vunpack.c.l.b16 %v8126
    %v8318 = vunpack.c.h.b16 %v8126
    %v8319 = vunpack.c.l.b16 %v8127
    %v8320 = vunpack.c.h.b16 %v8127
    %v8321 = vunpack.c.l.b16 %v8128
    %v8322 = vunpack.c.h.b16 %v8128
    %v8323 = vunpack.c.l.b16 %v8129
    %v8324 = vunpack.c.h.b16 %v8129
    %v8325 = vunpack.c.l.b16 %v8130
    %v8326 = vunpack.c.h.b16 %v8130
    %v8327 = vunpack.c.l.b16 %v8131
    %v8328 = vunpack.c.h.b16 %v8131
    %v8329 = vunpack.c.l.b16 %v8132
    %v8330 = vunpack.c.h.b16 %v8132
    %v8331 = vunpack.c.l.b16 %v8133
    %v8332 = vunpack.c.h.b16 %v8133
    %v8333 = vunpack.c.l.b16 %v8134
    %v8334 = vunpack.c.h.b16 %v8134
    %v8335 = vunpack.c.l.b16 %v8135
    %v8336 = vunpack.c.h.b16 %v8135
    %v8337 = vunpack.c.l.b16 %v8136
    %v8338 = vunpack.c.h.b16 %v8136
    %v8339 = vpack.c.b16 %v8215, %v8211
    %v8340 = vpack.c.b16 %v8216, %v8212
    %v8341 = vpack.c.b16 %v8217, %v8213
    %v8342 = vpack.c.b16 %v8218, %v8214
    %v8343 = vpack.c.b16 %v8223, %v8219
    %v8344 = vpack.c.b16 %v8224, %v8220
    %v8345 = vpack.c.b16 %v8225, %v8221
    %v8346 = vpack.c.b16 %v8226, %v8222
    %v8347 = vpack.c.b16 %v8231, %v8227
    %v8348 = vpack.c.b16 %v8232, %v8228
    %v8349 = vpack.c.b16 %v8233, %v8229
    %v8350 = vpack.c.b16 %v8234, %v8230
    %v8351 = vpack.c.b16 %v8239, %v8235
    %v8352 = vpack.c.b16 %v8240, %v8236
    %v8353 = vpack.c.b16 %v8241, %v8237
    %v8354 = vpack.c.b16 %v8242, %v8238
    %v8355 = vpack.c.b16 %v8247, %v8243
    %v8356 = vpack.c.b16 %v8248, %v8244
    %v8357 = vpack.c.b16 %v8249, %v8245
    %v8358 = vpack.c.b16 %v8250, %v8246
    %v8359 = vpack.c.b16 %v8255, %v8251
    %v8360 = vpack.c.b16 %v8256, %v8252
    %v8361 = vpack.c.b16 %v8257, %v8253
    %v8362 = vpack.c.b16 %v8258, %v8254
    %v8363 = vpack.c.b16 %v8263, %v8259
    %v8364 = vpack.c.b16 %v8264, %v8260
    %v8365 = vpack.c.b16 %v8265, %v8261
    %v8366 = vpack.c.b16 %v8266, %v8262
    %v8367 = vpack.c.b16 %v8271, %v8267
    %v8368 = vpack.c.b16 %v8272, %v8268
    %v8369 = vpack.c.b16 %v8273, %v8269
    %v8370 = vpack.c.b16 %v8274, %v8270
    %v8371 = vpack.c.b16 %v8279, %v8275
    %v8372 = vpack.c.b16 %v8280, %v8276
    %v8373 = vpack.c.b16 %v8281, %v8277
    %v8374 = vpack.c.b16 %v8282, %v8278
    %v8375 = vpack.c.b16 %v8287, %v8283
    %v8376 = vpack.c.b16 %v8288, %v8284
    %v8377 = vpack.c.b16 %v8289, %v8285
    %v8378 = vpack.c.b16 %v8290, %v8286
    %v8379 = vpack.c.b16 %v8295, %v8291
    %v8380 = vpack.c.b16 %v8296, %v8292
    %v8381 = vpack.c.b16 %v8297, %v8293
    %v8382 = vpack.c.b16 %v8298, %v8294
    %v8383 = vpack.c.b16 %v8303, %v8299
    %v8384 = vpack.c.b16 %v8304, %v8300
    %v8385 = vpack.c.b16 %v8305, %v8301
    %v8386 = vpack.c.b16 %v8306, %v8302
    %v8387 = vpack.c.b16 %v8311, %v8307
    %v8388 = vpack.c.b16 %v8312, %v8308
    %v8389 = vpack.c.b16 %v8313, %v8309
    %v8390 = vpack.c.b16 %v8314, %v8310
    %v8391 = vpack.c.b16 %v8319, %v8315
    %v8392 = vpack.c.b16 %v8320, %v8316
    %v8393 = vpack.c.b16 %v8321, %v8317
    %v8394 = vpack.c.b16 %v8322, %v8318
    %v8395 = vpack.c.b16 %v8327, %v8323
    %v8396 = vpack.c.b16 %v8328, %v8324
    %v8397 = vpack.c.b16 %v8329, %v8325
    %v8398 = vpack.c.b16 %v8330, %v8326
    %v8399 = vpack.c.b16 %v8335, %v8331
    %v8400 = vpack.c.b16 %v8336, %v8332
    %v8401 = vpack.c.b16 %v8337, %v8333
    %v8402 = vpack.c.b16 %v8338, %v8334
    %8467 = vmatpush.bf16.msra.mxu0 %v8367
    %8468 = vmatpush.bf16.msra.mxu0 %v8363
    %8469 = vmatpush.bf16.msra.mxu0 %v8359
    %8470 = vmatpush.bf16.msra.mxu0 %v8355
    %8471 = vmatpush.bf16.msra.mxu0 %v8351
    %8472 = vmatpush.bf16.msra.mxu0 %v8347
    %8473 = vmatpush.bf16.msra.mxu0 %v8343
    %8474 = vmatpush.bf16.msra.mxu0 %v8339
    %8475 = vmatmul.bf16.gmra.mxu0 %v8065
    %v8476 = vpop.f32.mrf.mxu0
    %v8477 = vadd.f32 %v8139, %v8476
    %v8478 = vpop.f32.mrf.mxu0
    %v8479 = vadd.f32 %v8139, %v8478
    %8480 = vmatmul.bf16.gmra.mxu0 %v8067
    %v8481 = vpop.f32.mrf.mxu0
    %v8482 = vadd.f32 %v8139, %v8481
    %v8483 = vpop.f32.mrf.mxu0
    %v8484 = vadd.f32 %v8139, %v8483
    %8485 = vmatmul.bf16.gmra.mxu0 %v8069
    %v8486 = vpop.f32.mrf.mxu0
    %v8487 = vadd.f32 %v8139, %v8486
    %v8488 = vpop.f32.mrf.mxu0
    %v8489 = vadd.f32 %v8139, %v8488
    %8490 = vmatmul.bf16.gmra.mxu0 %v8071
    %v8491 = vpop.f32.mrf.mxu0
    %v8492 = vadd.f32 %v8139, %v8491
    %v8493 = vpop.f32.mrf.mxu0
    %v8494 = vadd.f32 %v8139, %v8493
    %8495 = vdwg.mxu0
    %8496 = vmatpush.bf16.msra.mxu0 %v8399
    %8497 = vmatpush.bf16.msra.mxu0 %v8395
    %8498 = vmatpush.bf16.msra.mxu0 %v8391
    %8499 = vmatpush.bf16.msra.mxu0 %v8387
    %8500 = vmatpush.bf16.msra.mxu0 %v8383
    %8501 = vmatpush.bf16.msra.mxu0 %v8379
    %8502 = vmatpush.bf16.msra.mxu0 %v8375
    %8503 = vmatpush.bf16.msra.mxu0 %v8371
    %8504 = vmatmul.bf16.gmra.mxu0 %v8066
    %v8505 = vpop.f32.mrf.mxu0
    %v8506 = vadd.f32 %v8477, %v8505
    %v8507 = vpop.f32.mrf.mxu0
    %v8508 = vadd.f32 %v8479, %v8507
    %8509 = vmatmul.bf16.gmra.mxu0 %v8068
    %v8510 = vpop.f32.mrf.mxu0
    %v8511 = vadd.f32 %v8482, %v8510
    %v8512 = vpop.f32.mrf.mxu0
    %v8513 = vadd.f32 %v8484, %v8512
    %8514 = vmatmul.bf16.gmra.mxu0 %v8070
    %v8515 = vpop.f32.mrf.mxu0
    %v8516 = vadd.f32 %v8487, %v8515
    %v8517 = vpop.f32.mrf.mxu0
    %v8518 = vadd.f32 %v8489, %v8517
    %8519 = vmatmul.bf16.gmra.mxu0 %v8072
    %v8520 = vpop.f32.mrf.mxu0
    %v8521 = vadd.f32 %v8492, %v8520
    %v8522 = vpop.f32.mrf.mxu0
    %v8523 = vadd.f32 %v8494, %v8522
    %8524 = vdwg.mxu0
    %8525 = vmatpush.bf16.msra.mxu0 %v8368
    %8526 = vmatpush.bf16.msra.mxu0 %v8364
    %8527 = vmatpush.bf16.msra.mxu0 %v8360
    %8528 = vmatpush.bf16.msra.mxu0 %v8356
    %8529 = vmatpush.bf16.msra.mxu0 %v8352
    %8530 = vmatpush.bf16.msra.mxu0 %v8348
    %8531 = vmatpush.bf16.msra.mxu0 %v8344
    %8532 = vmatpush.bf16.msra.mxu0 %v8340
    %8533 = vmatmul.bf16.gmra.mxu0 %v8065
    %v8534 = vpop.f32.mrf.mxu0
    %v8535 = vadd.f32 %v8140, %v8534
    %v8536 = vpop.f32.mrf.mxu0
    %v8537 = vadd.f32 %v8140, %v8536
    %8538 = vmatmul.bf16.gmra.mxu0 %v8067
    %v8539 = vpop.f32.mrf.mxu0
    %v8540 = vadd.f32 %v8140, %v8539
    %v8541 = vpop.f32.mrf.mxu0
    %v8542 = vadd.f32 %v8140, %v8541
    %8543 = vmatmul.bf16.gmra.mxu0 %v8069
    %v8544 = vpop.f32.mrf.mxu0
    %v8545 = vadd.f32 %v8140, %v8544
    %v8546 = vpop.f32.mrf.mxu0
    %v8547 = vadd.f32 %v8140, %v8546
    %8548 = vmatmul.bf16.gmra.mxu0 %v8071
    %v8549 = vpop.f32.mrf.mxu0
    %v8550 = vadd.f32 %v8140, %v8549
    %v8551 = vpop.f32.mrf.mxu0
    %v8552 = vadd.f32 %v8140, %v8551
    %8553 = vdwg.mxu0
    %8554 = vmatpush.bf16.msra.mxu0 %v8400
    %8555 = vmatpush.bf16.msra.mxu0 %v8396
    %8556 = vmatpush.bf16.msra.mxu0 %v8392
    %8557 = vmatpush.bf16.msra.mxu0 %v8388
    %8558 = vmatpush.bf16.msra.mxu0 %v8384
    %8559 = vmatpush.bf16.msra.mxu0 %v8380
    %8560 = vmatpush.bf16.msra.mxu0 %v8376
    %8561 = vmatpush.bf16.msra.mxu0 %v8372
    %8562 = vmatmul.bf16.gmra.mxu0 %v8066
    %v8563 = vpop.f32.mrf.mxu0
    %v8564 = vadd.f32 %v8535, %v8563
    %v8565 = vpop.f32.mrf.mxu0
    %v8566 = vadd.f32 %v8537, %v8565
    %8567 = vmatmul.bf16.gmra.mxu0 %v8068
    %v8568 = vpop.f32.mrf.mxu0
    %v8569 = vadd.f32 %v8540, %v8568
    %v8570 = vpop.f32.mrf.mxu0
    %v8571 = vadd.f32 %v8542, %v8570
    %8572 = vmatmul.bf16.gmra.mxu0 %v8070
    %v8573 = vpop.f32.mrf.mxu0
    %v8574 = vadd.f32 %v8545, %v8573
    %v8575 = vpop.f32.mrf.mxu0
    %v8576 = vadd.f32 %v8547, %v8575
    %8577 = vmatmul.bf16.gmra.mxu0 %v8072
    %v8578 = vpop.f32.mrf.mxu0
    %v8579 = vadd.f32 %v8550, %v8578
    %v8580 = vpop.f32.mrf.mxu0
    %v8581 = vadd.f32 %v8552, %v8580
    %8582 = vdwg.mxu0
    %8583 = vmatpush.bf16.msra.mxu0 %v8369
    %8584 = vmatpush.bf16.msra.mxu0 %v8365
    %8585 = vmatpush.bf16.msra.mxu0 %v8361
    %8586 = vmatpush.bf16.msra.mxu0 %v8357
    %8587 = vmatpush.bf16.msra.mxu0 %v8353
    %8588 = vmatpush.bf16.msra.mxu0 %v8349
    %8589 = vmatpush.bf16.msra.mxu0 %v8345
    %8590 = vmatpush.bf16.msra.mxu0 %v8341
    %8591 = vmatmul.bf16.gmra.mxu0 %v8065
    %v8592 = vpop.f32.mrf.mxu0
    %v8593 = vadd.f32 %v8141, %v8592
    %v8594 = vpop.f32.mrf.mxu0
    %v8595 = vadd.f32 %v8141, %v8594
    %8596 = vmatmul.bf16.gmra.mxu0 %v8067
    %v8597 = vpop.f32.mrf.mxu0
    %v8598 = vadd.f32 %v8141, %v8597
    %v8599 = vpop.f32.mrf.mxu0
    %v8600 = vadd.f32 %v8141, %v8599
    %8601 = vmatmul.bf16.gmra.mxu0 %v8069
    %v8602 = vpop.f32.mrf.mxu0
    %v8603 = vadd.f32 %v8141, %v8602
    %v8604 = vpop.f32.mrf.mxu0
    %v8605 = vadd.f32 %v8141, %v8604
    %8606 = vmatmul.bf16.gmra.mxu0 %v8071
    %v8607 = vpop.f32.mrf.mxu0
    %v8608 = vadd.f32 %v8141, %v8607
    %v8609 = vpop.f32.mrf.mxu0
    %v8610 = vadd.f32 %v8141, %v8609
    %8611 = vdwg.mxu0
    %8612 = vmatpush.bf16.msra.mxu0 %v8401
    %8613 = vmatpush.bf16.msra.mxu0 %v8397
    %8614 = vmatpush.bf16.msra.mxu0 %v8393
    %8615 = vmatpush.bf16.msra.mxu0 %v8389
    %8616 = vmatpush.bf16.msra.mxu0 %v8385
    %8617 = vmatpush.bf16.msra.mxu0 %v8381
    %8618 = vmatpush.bf16.msra.mxu0 %v8377
    %8619 = vmatpush.bf16.msra.mxu0 %v8373
    %8620 = vmatmul.bf16.gmra.mxu0 %v8066
    %v8621 = vpop.f32.mrf.mxu0
    %v8622 = vadd.f32 %v8593, %v8621
    %v8623 = vpop.f32.mrf.mxu0
    %v8624 = vadd.f32 %v8595, %v8623
    %8625 = vmatmul.bf16.gmra.mxu0 %v8068
    %v8626 = vpop.f32.mrf.mxu0
    %v8627 = vadd.f32 %v8598, %v8626
    %v8628 = vpop.f32.mrf.mxu0
    %v8629 = vadd.f32 %v8600, %v8628
    %8630 = vmatmul.bf16.gmra.mxu0 %v8070
    %v8631 = vpop.f32.mrf.mxu0
    %v8632 = vadd.f32 %v8603, %v8631
    %v8633 = vpop.f32.mrf.mxu0
    %v8634 = vadd.f32 %v8605, %v8633
    %8635 = vmatmul.bf16.gmra.mxu0 %v8072
    %v8636 = vpop.f32.mrf.mxu0
    %v8637 = vadd.f32 %v8608, %v8636
    %v8638 = vpop.f32.mrf.mxu0
    %v8639 = vadd.f32 %v8610, %v8638
    %8640 = vdwg.mxu0
    %8641 = vmatpush.bf16.msra.mxu0 %v8370
    %8642 = vmatpush.bf16.msra.mxu0 %v8366
    %8643 = vmatpush.bf16.msra.mxu0 %v8362
    %8644 = vmatpush.bf16.msra.mxu0 %v8358
    %8645 = vmatpush.bf16.msra.mxu0 %v8354
    %8646 = vmatpush.bf16.msra.mxu0 %v8350
    %8647 = vmatpush.bf16.msra.mxu0 %v8346
    %8648 = vmatpush.bf16.msra.mxu0 %v8342
    %8649 = vmatmul.bf16.gmra.mxu0 %v8065
    %v8650 = vpop.f32.mrf.mxu0
    %v8651 = vadd.f32 %v8142, %v8650
    %v8652 = vpop.f32.mrf.mxu0
    %v8653 = vadd.f32 %v8142, %v8652
    %8654 = vmatmul.bf16.gmra.mxu0 %v8067
    %v8655 = vpop.f32.mrf.mxu0
    %v8656 = vadd.f32 %v8142, %v8655
    %v8657 = vpop.f32.mrf.mxu0
    %v8658 = vadd.f32 %v8142, %v8657
    %8659 = vmatmul.bf16.gmra.mxu0 %v8069
    %v8660 = vpop.f32.mrf.mxu0
    %v8661 = vadd.f32 %v8142, %v8660
    %v8662 = vpop.f32.mrf.mxu0
    %v8663 = vadd.f32 %v8142, %v8662
    %8664 = vmatmul.bf16.gmra.mxu0 %v8071
    %v8665 = vpop.f32.mrf.mxu0
    %v8666 = vadd.f32 %v8142, %v8665
    %v8667 = vpop.f32.mrf.mxu0
    %v8668 = vadd.f32 %v8142, %v8667
    %8669 = vdwg.mxu0
    %8670 = vmatpush.bf16.msra.mxu0 %v8402
    %8671 = vmatpush.bf16.msra.mxu0 %v8398
    %8672 = vmatpush.bf16.msra.mxu0 %v8394
    %8673 = vmatpush.bf16.msra.mxu0 %v8390
    %8674 = vmatpush.bf16.msra.mxu0 %v8386
    %8675 = vmatpush.bf16.msra.mxu0 %v8382
    %8676 = vmatpush.bf16.msra.mxu0 %v8378
    %8677 = vmatpush.bf16.msra.mxu0 %v8374
    %8678 = vmatmul.bf16.gmra.mxu0 %v8066
    %v8679 = vpop.f32.mrf.mxu0
    %v8680 = vadd.f32 %v8651, %v8679
    %v8681 = vpop.f32.mrf.mxu0
    %v8682 = vadd.f32 %v8653, %v8681
    %8683 = vmatmul.bf16.gmra.mxu0 %v8068
    %v8684 = vpop.f32.mrf.mxu0
    %v8685 = vadd.f32 %v8656, %v8684
    %v8686 = vpop.f32.mrf.mxu0
    %v8687 = vadd.f32 %v8658, %v8686
    %8688 = vmatmul.bf16.gmra.mxu0 %v8070
    %v8689 = vpop.f32.mrf.mxu0
    %v8690 = vadd.f32 %v8661, %v8689
    %v8691 = vpop.f32.mrf.mxu0
    %v8692 = vadd.f32 %v8663, %v8691
    %8693 = vmatmul.bf16.gmra.mxu0 %v8072
    %v8694 = vpop.f32.mrf.mxu0
    %v8695 = vadd.f32 %v8666, %v8694
    %v8696 = vpop.f32.mrf.mxu0
    %v8697 = vadd.f32 %v8668, %v8696
    %8698 = vdwg.mxu0
    %v8699 = vxor.u32 %v8506, 2147483648
    %v8700 = vxor.u32 %v8564, 2147483648
    %v8701 = vxor.u32 %v8622, 2147483648
    %v8702 = vxor.u32 %v8508, 2147483648
    %v8703 = vxor.u32 %v8566, 2147483648
    %v8704 = vxor.u32 %v8624, 2147483648
    %v8705 = vxor.u32 %v8511, 2147483648
    %v8706 = vxor.u32 %v8569, 2147483648
    %v8707 = vxor.u32 %v8627, 2147483648
    %v8708 = vxor.u32 %v8513, 2147483648
    %v8709 = vxor.u32 %v8571, 2147483648
    %v8710 = vxor.u32 %v8629, 2147483648
    %v8711 = vxor.u32 %v8516, 2147483648
    %v8712 = vxor.u32 %v8574, 2147483648
    %v8713 = vxor.u32 %v8632, 2147483648
    %v8714 = vxor.u32 %v8518, 2147483648
    %v8715 = vxor.u32 %v8576, 2147483648
    %v8716 = vxor.u32 %v8634, 2147483648
    %v8717 = vxor.u32 %v8521, 2147483648
    %v8718 = vxor.u32 %v8579, 2147483648
    %v8719 = vxor.u32 %v8637, 2147483648
    %v8720 = vxor.u32 %v8523, 2147483648
    %v8721 = vxor.u32 %v8581, 2147483648
    %v8722 = vxor.u32 %v8639, 2147483648
    %v8723 = vmul.f32 %v8699, 1.442695
    %v8724 = vpow.pop %v8723
    %v8725 = vmul.f32 %v8700, 1.442695
    %v8726 = vpow.pop %v8725
    %v8727 = vmul.f32 %v8701, 1.442695
    %v8728 = vpow.pop %v8727
    %v8729 = vmul.f32 %v8702, 1.442695
    %v8730 = vpow.pop %v8729
    %v8731 = vmul.f32 %v8703, 1.442695
    %v8732 = vpow.pop %v8731
    %v8733 = vmul.f32 %v8704, 1.442695
    %v8734 = vpow.pop %v8733
    %v8735 = vmul.f32 %v8705, 1.442695
    %v8736 = vpow.pop %v8735
    %v8737 = vmul.f32 %v8706, 1.442695
    %v8738 = vpow.pop %v8737
    %v8739 = vmul.f32 %v8707, 1.442695
    %v8740 = vpow.pop %v8739
    %v8741 = vmul.f32 %v8708, 1.442695
    %v8742 = vpow.pop %v8741
    %v8743 = vmul.f32 %v8709, 1.442695
    %v8744 = vpow.pop %v8743
    %v8745 = vmul.f32 %v8710, 1.442695
    %v8746 = vpow.pop %v8745
    %v8747 = vmul.f32 %v8711, 1.442695
    %v8748 = vpow.pop %v8747
    %v8749 = vmul.f32 %v8712, 1.442695
    %v8750 = vpow.pop %v8749
    %v8751 = vmul.f32 %v8713, 1.442695
    %v8752 = vpow.pop %v8751
    %v8753 = vmul.f32 %v8714, 1.442695
    %v8754 = vpow.pop %v8753
    %v8755 = vmul.f32 %v8715, 1.442695
    %v8756 = vpow.pop %v8755
    %v8757 = vmul.f32 %v8716, 1.442695
    %v8758 = vpow.pop %v8757
    %v8759 = vmul.f32 %v8717, 1.442695
    %v8760 = vpow.pop %v8759
    %v8761 = vmul.f32 %v8718, 1.442695
    %v8762 = vpow.pop %v8761
    %v8763 = vmul.f32 %v8719, 1.442695
    %v8764 = vpow.pop %v8763
    %v8765 = vmul.f32 %v8720, 1.442695
    %v8766 = vpow.pop %v8765
    %v8767 = vmul.f32 %v8721, 1.442695
    %v8768 = vpow.pop %v8767
    %v8769 = vmul.f32 %v8722, 1.442695
    %v8770 = vpow.pop %v8769
    %v8771 = vadd.f32 %v8724, 1.0
    %v8772 = vadd.f32 %v8726, 1.0
    %v8773 = vadd.f32 %v8728, 1.0
    %v8774 = vadd.f32 %v8730, 1.0
    %v8775 = vadd.f32 %v8732, 1.0
    %v8776 = vadd.f32 %v8734, 1.0
    %v8777 = vadd.f32 %v8736, 1.0
    %v8778 = vadd.f32 %v8738, 1.0
    %v8779 = vadd.f32 %v8740, 1.0
    %v8780 = vadd.f32 %v8742, 1.0
    %v8781 = vadd.f32 %v8744, 1.0
    %v8782 = vadd.f32 %v8746, 1.0
    %v8783 = vadd.f32 %v8748, 1.0
    %v8784 = vadd.f32 %v8750, 1.0
    %v8785 = vadd.f32 %v8752, 1.0
    %v8786 = vadd.f32 %v8754, 1.0
    %v8787 = vadd.f32 %v8756, 1.0
    %v8788 = vadd.f32 %v8758, 1.0
    %v8789 = vadd.f32 %v8760, 1.0
    %v8790 = vadd.f32 %v8762, 1.0
    %v8791 = vadd.f32 %v8764, 1.0
    %v8792 = vadd.f32 %v8766, 1.0
    %v8793 = vadd.f32 %v8768, 1.0
    %v8794 = vadd.f32 %v8770, 1.0
    %v8795 = vrcp.pop %v8771
    %v8796 = vmul.f32 %v8771, %v8795
    %v8797 = vsub.f32 1.0, %v8796
    %v8798 = vmul.f32 %v8795, %v8797
    %v8799 = vadd.f32 %v8795, %v8798
    %vm8800 = vweird.f32 %v8771
    %vm8801 = vweird.f32 %v8795
    %vm8802 = vmor %vm8800, %vm8801
    %v8803 = vsel %vm8802, %v8795, %v8799
    %v8804 = vand.u32 2147483647, %v8771
    %vm8805 = vcmp.eq.f32.partialorder %v8804, 8.507059e+37
    %v8806 = vand.u32 %v8771, 2147483648
    %v8807 = vor.u32 1.1754944e-38, %v8806
    %v8808 = vsel %vm8805, %v8807, %v8803
    %v8809 = vmul.f32 1.0, %v8808
    %v8810 = vrcp.pop %v8772
    %v8811 = vmul.f32 %v8772, %v8810
    %v8812 = vsub.f32 1.0, %v8811
    %v8813 = vmul.f32 %v8810, %v8812
    %v8814 = vadd.f32 %v8810, %v8813
    %vm8815 = vweird.f32 %v8772
    %vm8816 = vweird.f32 %v8810
    %vm8817 = vmor %vm8815, %vm8816
    %v8818 = vsel %vm8817, %v8810, %v8814
    %v8819 = vand.u32 2147483647, %v8772
    %vm8820 = vcmp.eq.f32.partialorder %v8819, 8.507059e+37
    %v8821 = vand.u32 %v8772, 2147483648
    %v8822 = vor.u32 1.1754944e-38, %v8821
    %v8823 = vsel %vm8820, %v8822, %v8818
    %v8824 = vmul.f32 1.0, %v8823
    %v8825 = vrcp.pop %v8773
    %v8826 = vmul.f32 %v8773, %v8825
    %v8827 = vsub.f32 1.0, %v8826
    %v8828 = vmul.f32 %v8825, %v8827
    %v8829 = vadd.f32 %v8825, %v8828
    %vm8830 = vweird.f32 %v8773
    %vm8831 = vweird.f32 %v8825
    %vm8832 = vmor %vm8830, %vm8831
    %v8833 = vsel %vm8832, %v8825, %v8829
    %v8834 = vand.u32 2147483647, %v8773
    %vm8835 = vcmp.eq.f32.partialorder %v8834, 8.507059e+37
    %v8836 = vand.u32 %v8773, 2147483648
    %v8837 = vor.u32 1.1754944e-38, %v8836
    %v8838 = vsel %vm8835, %v8837, %v8833
    %v8839 = vmul.f32 1.0, %v8838
    %v8840 = vrcp.pop %v8774
    %v8841 = vmul.f32 %v8774, %v8840
    %v8842 = vsub.f32 1.0, %v8841
    %v8843 = vmul.f32 %v8840, %v8842
    %v8844 = vadd.f32 %v8840, %v8843
    %vm8845 = vweird.f32 %v8774
    %vm8846 = vweird.f32 %v8840
    %vm8847 = vmor %vm8845, %vm8846
    %v8848 = vsel %vm8847, %v8840, %v8844
    %v8849 = vand.u32 2147483647, %v8774
    %vm8850 = vcmp.eq.f32.partialorder %v8849, 8.507059e+37
    %v8851 = vand.u32 %v8774, 2147483648
    %v8852 = vor.u32 1.1754944e-38, %v8851
    %v8853 = vsel %vm8850, %v8852, %v8848
    %v8854 = vmul.f32 1.0, %v8853
    %v8855 = vrcp.pop %v8775
    %v8856 = vmul.f32 %v8775, %v8855
    %v8857 = vsub.f32 1.0, %v8856
    %v8858 = vmul.f32 %v8855, %v8857
    %v8859 = vadd.f32 %v8855, %v8858
    %vm8860 = vweird.f32 %v8775
    %vm8861 = vweird.f32 %v8855
    %vm8862 = vmor %vm8860, %vm8861
    %v8863 = vsel %vm8862, %v8855, %v8859
    %v8864 = vand.u32 2147483647, %v8775
    %vm8865 = vcmp.eq.f32.partialorder %v8864, 8.507059e+37
    %v8866 = vand.u32 %v8775, 2147483648
    %v8867 = vor.u32 1.1754944e-38, %v8866
    %v8868 = vsel %vm8865, %v8867, %v8863
    %v8869 = vmul.f32 1.0, %v8868
    %v8870 = vrcp.pop %v8776
    %v8871 = vmul.f32 %v8776, %v8870
    %v8872 = vsub.f32 1.0, %v8871
    %v8873 = vmul.f32 %v8870, %v8872
    %v8874 = vadd.f32 %v8870, %v8873
    %vm8875 = vweird.f32 %v8776
    %vm8876 = vweird.f32 %v8870
    %vm8877 = vmor %vm8875, %vm8876
    %v8878 = vsel %vm8877, %v8870, %v8874
    %v8879 = vand.u32 2147483647, %v8776
    %vm8880 = vcmp.eq.f32.partialorder %v8879, 8.507059e+37
    %v8881 = vand.u32 %v8776, 2147483648
    %v8882 = vor.u32 1.1754944e-38, %v8881
    %v8883 = vsel %vm8880, %v8882, %v8878
    %v8884 = vmul.f32 1.0, %v8883
    %v8885 = vrcp.pop %v8777
    %v8886 = vmul.f32 %v8777, %v8885
    %v8887 = vsub.f32 1.0, %v8886
    %v8888 = vmul.f32 %v8885, %v8887
    %v8889 = vadd.f32 %v8885, %v8888
    %vm8890 = vweird.f32 %v8777
    %vm8891 = vweird.f32 %v8885
    %vm8892 = vmor %vm8890, %vm8891
    %v8893 = vsel %vm8892, %v8885, %v8889
    %v8894 = vand.u32 2147483647, %v8777
    %vm8895 = vcmp.eq.f32.partialorder %v8894, 8.507059e+37
    %v8896 = vand.u32 %v8777, 2147483648
    %v8897 = vor.u32 1.1754944e-38, %v8896
    %v8898 = vsel %vm8895, %v8897, %v8893
    %v8899 = vmul.f32 1.0, %v8898
    %v8900 = vrcp.pop %v8778
    %v8901 = vmul.f32 %v8778, %v8900
    %v8902 = vsub.f32 1.0, %v8901
    %v8903 = vmul.f32 %v8900, %v8902
    %v8904 = vadd.f32 %v8900, %v8903
    %vm8905 = vweird.f32 %v8778
    %vm8906 = vweird.f32 %v8900
    %vm8907 = vmor %vm8905, %vm8906
    %v8908 = vsel %vm8907, %v8900, %v8904
    %v8909 = vand.u32 2147483647, %v8778
    %vm8910 = vcmp.eq.f32.partialorder %v8909, 8.507059e+37
    %v8911 = vand.u32 %v8778, 2147483648
    %v8912 = vor.u32 1.1754944e-38, %v8911
    %v8913 = vsel %vm8910, %v8912, %v8908
    %v8914 = vmul.f32 1.0, %v8913
    %v8915 = vrcp.pop %v8779
    %v8916 = vmul.f32 %v8779, %v8915
    %v8917 = vsub.f32 1.0, %v8916
    %v8918 = vmul.f32 %v8915, %v8917
    %v8919 = vadd.f32 %v8915, %v8918
    %vm8920 = vweird.f32 %v8779
    %vm8921 = vweird.f32 %v8915
    %vm8922 = vmor %vm8920, %vm8921
    %v8923 = vsel %vm8922, %v8915, %v8919
    %v8924 = vand.u32 2147483647, %v8779
    %vm8925 = vcmp.eq.f32.partialorder %v8924, 8.507059e+37
    %v8926 = vand.u32 %v8779, 2147483648
    %v8927 = vor.u32 1.1754944e-38, %v8926
    %v8928 = vsel %vm8925, %v8927, %v8923
    %v8929 = vmul.f32 1.0, %v8928
    %v8930 = vrcp.pop %v8780
    %v8931 = vmul.f32 %v8780, %v8930
    %v8932 = vsub.f32 1.0, %v8931
    %v8933 = vmul.f32 %v8930, %v8932
    %v8934 = vadd.f32 %v8930, %v8933
    %vm8935 = vweird.f32 %v8780
    %vm8936 = vweird.f32 %v8930
    %vm8937 = vmor %vm8935, %vm8936
    %v8938 = vsel %vm8937, %v8930, %v8934
    %v8939 = vand.u32 2147483647, %v8780
    %vm8940 = vcmp.eq.f32.partialorder %v8939, 8.507059e+37
    %v8941 = vand.u32 %v8780, 2147483648
    %v8942 = vor.u32 1.1754944e-38, %v8941
    %v8943 = vsel %vm8940, %v8942, %v8938
    %v8944 = vmul.f32 1.0, %v8943
    %v8945 = vrcp.pop %v8781
    %v8946 = vmul.f32 %v8781, %v8945
    %v8947 = vsub.f32 1.0, %v8946
    %v8948 = vmul.f32 %v8945, %v8947
    %v8949 = vadd.f32 %v8945, %v8948
    %vm8950 = vweird.f32 %v8781
    %vm8951 = vweird.f32 %v8945
    %vm8952 = vmor %vm8950, %vm8951
    %v8953 = vsel %vm8952, %v8945, %v8949
    %v8954 = vand.u32 2147483647, %v8781
    %vm8955 = vcmp.eq.f32.partialorder %v8954, 8.507059e+37
    %v8956 = vand.u32 %v8781, 2147483648
    %v8957 = vor.u32 1.1754944e-38, %v8956
    %v8958 = vsel %vm8955, %v8957, %v8953
    %v8959 = vmul.f32 1.0, %v8958
    %v8960 = vrcp.pop %v8782
    %v8961 = vmul.f32 %v8782, %v8960
    %v8962 = vsub.f32 1.0, %v8961
    %v8963 = vmul.f32 %v8960, %v8962
    %v8964 = vadd.f32 %v8960, %v8963
    %vm8965 = vweird.f32 %v8782
    %vm8966 = vweird.f32 %v8960
    %vm8967 = vmor %vm8965, %vm8966
    %v8968 = vsel %vm8967, %v8960, %v8964
    %v8969 = vand.u32 2147483647, %v8782
    %vm8970 = vcmp.eq.f32.partialorder %v8969, 8.507059e+37
    %v8971 = vand.u32 %v8782, 2147483648
    %v8972 = vor.u32 1.1754944e-38, %v8971
    %v8973 = vsel %vm8970, %v8972, %v8968
    %v8974 = vmul.f32 1.0, %v8973
    %v8975 = vrcp.pop %v8783
    %v8976 = vmul.f32 %v8783, %v8975
    %v8977 = vsub.f32 1.0, %v8976
    %v8978 = vmul.f32 %v8975, %v8977
    %v8979 = vadd.f32 %v8975, %v8978
    %vm8980 = vweird.f32 %v8783
    %vm8981 = vweird.f32 %v8975
    %vm8982 = vmor %vm8980, %vm8981
    %v8983 = vsel %vm8982, %v8975, %v8979
    %v8984 = vand.u32 2147483647, %v8783
    %vm8985 = vcmp.eq.f32.partialorder %v8984, 8.507059e+37
    %v8986 = vand.u32 %v8783, 2147483648
    %v8987 = vor.u32 1.1754944e-38, %v8986
    %v8988 = vsel %vm8985, %v8987, %v8983
    %v8989 = vmul.f32 1.0, %v8988
    %v8990 = vrcp.pop %v8784
    %v8991 = vmul.f32 %v8784, %v8990
    %v8992 = vsub.f32 1.0, %v8991
    %v8993 = vmul.f32 %v8990, %v8992
    %v8994 = vadd.f32 %v8990, %v8993
    %vm8995 = vweird.f32 %v8784
    %vm8996 = vweird.f32 %v8990
    %vm8997 = vmor %vm8995, %vm8996
    %v8998 = vsel %vm8997, %v8990, %v8994
    %v8999 = vand.u32 2147483647, %v8784
    %vm9000 = vcmp.eq.f32.partialorder %v8999, 8.507059e+37
    %v9001 = vand.u32 %v8784, 2147483648
    %v9002 = vor.u32 1.1754944e-38, %v9001
    %v9003 = vsel %vm9000, %v9002, %v8998
    %v9004 = vmul.f32 1.0, %v9003
    %v9005 = vrcp.pop %v8785
    %v9006 = vmul.f32 %v8785, %v9005
    %v9007 = vsub.f32 1.0, %v9006
    %v9008 = vmul.f32 %v9005, %v9007
    %v9009 = vadd.f32 %v9005, %v9008
    %vm9010 = vweird.f32 %v8785
    %vm9011 = vweird.f32 %v9005
    %vm9012 = vmor %vm9010, %vm9011
    %v9013 = vsel %vm9012, %v9005, %v9009
    %v9014 = vand.u32 2147483647, %v8785
    %vm9015 = vcmp.eq.f32.partialorder %v9014, 8.507059e+37
    %v9016 = vand.u32 %v8785, 2147483648
    %v9017 = vor.u32 1.1754944e-38, %v9016
    %v9018 = vsel %vm9015, %v9017, %v9013
    %v9019 = vmul.f32 1.0, %v9018
    %v9020 = vrcp.pop %v8786
    %v9021 = vmul.f32 %v8786, %v9020
    %v9022 = vsub.f32 1.0, %v9021
    %v9023 = vmul.f32 %v9020, %v9022
    %v9024 = vadd.f32 %v9020, %v9023
    %vm9025 = vweird.f32 %v8786
    %vm9026 = vweird.f32 %v9020
    %vm9027 = vmor %vm9025, %vm9026
    %v9028 = vsel %vm9027, %v9020, %v9024
    %v9029 = vand.u32 2147483647, %v8786
    %vm9030 = vcmp.eq.f32.partialorder %v9029, 8.507059e+37
    %v9031 = vand.u32 %v8786, 2147483648
    %v9032 = vor.u32 1.1754944e-38, %v9031
    %v9033 = vsel %vm9030, %v9032, %v9028
    %v9034 = vmul.f32 1.0, %v9033
    %v9035 = vrcp.pop %v8787
    %v9036 = vmul.f32 %v8787, %v9035
    %v9037 = vsub.f32 1.0, %v9036
    %v9038 = vmul.f32 %v9035, %v9037
    %v9039 = vadd.f32 %v9035, %v9038
    %vm9040 = vweird.f32 %v8787
    %vm9041 = vweird.f32 %v9035
    %vm9042 = vmor %vm9040, %vm9041
    %v9043 = vsel %vm9042, %v9035, %v9039
    %v9044 = vand.u32 2147483647, %v8787
    %vm9045 = vcmp.eq.f32.partialorder %v9044, 8.507059e+37
    %v9046 = vand.u32 %v8787, 2147483648
    %v9047 = vor.u32 1.1754944e-38, %v9046
    %v9048 = vsel %vm9045, %v9047, %v9043
    %v9049 = vmul.f32 1.0, %v9048
    %v9050 = vrcp.pop %v8788
    %v9051 = vmul.f32 %v8788, %v9050
    %v9052 = vsub.f32 1.0, %v9051
    %v9053 = vmul.f32 %v9050, %v9052
    %v9054 = vadd.f32 %v9050, %v9053
    %vm9055 = vweird.f32 %v8788
    %vm9056 = vweird.f32 %v9050
    %vm9057 = vmor %vm9055, %vm9056
    %v9058 = vsel %vm9057, %v9050, %v9054
    %v9059 = vand.u32 2147483647, %v8788
    %vm9060 = vcmp.eq.f32.partialorder %v9059, 8.507059e+37
    %v9061 = vand.u32 %v8788, 2147483648
    %v9062 = vor.u32 1.1754944e-38, %v9061
    %v9063 = vsel %vm9060, %v9062, %v9058
    %v9064 = vmul.f32 1.0, %v9063
    %v9065 = vrcp.pop %v8789
    %v9066 = vmul.f32 %v8789, %v9065
    %v9067 = vsub.f32 1.0, %v9066
    %v9068 = vmul.f32 %v9065, %v9067
    %v9069 = vadd.f32 %v9065, %v9068
    %vm9070 = vweird.f32 %v8789
    %vm9071 = vweird.f32 %v9065
    %vm9072 = vmor %vm9070, %vm9071
    %v9073 = vsel %vm9072, %v9065, %v9069
    %v9074 = vand.u32 2147483647, %v8789
    %vm9075 = vcmp.eq.f32.partialorder %v9074, 8.507059e+37
    %v9076 = vand.u32 %v8789, 2147483648
    %v9077 = vor.u32 1.1754944e-38, %v9076
    %v9078 = vsel %vm9075, %v9077, %v9073
    %v9079 = vmul.f32 1.0, %v9078
    %v9080 = vrcp.pop %v8790
    %v9081 = vmul.f32 %v8790, %v9080
    %v9082 = vsub.f32 1.0, %v9081
    %v9083 = vmul.f32 %v9080, %v9082
    %v9084 = vadd.f32 %v9080, %v9083
    %vm9085 = vweird.f32 %v8790
    %vm9086 = vweird.f32 %v9080
    %vm9087 = vmor %vm9085, %vm9086
    %v9088 = vsel %vm9087, %v9080, %v9084
    %v9089 = vand.u32 2147483647, %v8790
    %vm9090 = vcmp.eq.f32.partialorder %v9089, 8.507059e+37
    %v9091 = vand.u32 %v8790, 2147483648
    %v9092 = vor.u32 1.1754944e-38, %v9091
    %v9093 = vsel %vm9090, %v9092, %v9088
    %v9094 = vmul.f32 1.0, %v9093
    %v9095 = vrcp.pop %v8791
    %v9096 = vmul.f32 %v8791, %v9095
    %v9097 = vsub.f32 1.0, %v9096
    %v9098 = vmul.f32 %v9095, %v9097
    %v9099 = vadd.f32 %v9095, %v9098
    %vm9100 = vweird.f32 %v8791
    %vm9101 = vweird.f32 %v9095
    %vm9102 = vmor %vm9100, %vm9101
    %v9103 = vsel %vm9102, %v9095, %v9099
    %v9104 = vand.u32 2147483647, %v8791
    %vm9105 = vcmp.eq.f32.partialorder %v9104, 8.507059e+37
    %v9106 = vand.u32 %v8791, 2147483648
    %v9107 = vor.u32 1.1754944e-38, %v9106
    %v9108 = vsel %vm9105, %v9107, %v9103
    %v9109 = vmul.f32 1.0, %v9108
    %v9110 = vrcp.pop %v8792
    %v9111 = vmul.f32 %v8792, %v9110
    %v9112 = vsub.f32 1.0, %v9111
    %v9113 = vmul.f32 %v9110, %v9112
    %v9114 = vadd.f32 %v9110, %v9113
    %vm9115 = vweird.f32 %v8792
    %vm9116 = vweird.f32 %v9110
    %vm9117 = vmor %vm9115, %vm9116
    %v9118 = vsel %vm9117, %v9110, %v9114
    %v9119 = vand.u32 2147483647, %v8792
    %vm9120 = vcmp.eq.f32.partialorder %v9119, 8.507059e+37
    %v9121 = vand.u32 %v8792, 2147483648
    %v9122 = vor.u32 1.1754944e-38, %v9121
    %v9123 = vsel %vm9120, %v9122, %v9118
    %v9124 = vmul.f32 1.0, %v9123
    %v9125 = vrcp.pop %v8793
    %v9126 = vmul.f32 %v8793, %v9125
    %v9127 = vsub.f32 1.0, %v9126
    %v9128 = vmul.f32 %v9125, %v9127
    %v9129 = vadd.f32 %v9125, %v9128
    %vm9130 = vweird.f32 %v8793
    %vm9131 = vweird.f32 %v9125
    %vm9132 = vmor %vm9130, %vm9131
    %v9133 = vsel %vm9132, %v9125, %v9129
    %v9134 = vand.u32 2147483647, %v8793
    %vm9135 = vcmp.eq.f32.partialorder %v9134, 8.507059e+37
    %v9136 = vand.u32 %v8793, 2147483648
    %v9137 = vor.u32 1.1754944e-38, %v9136
    %v9138 = vsel %vm9135, %v9137, %v9133
    %v9139 = vmul.f32 1.0, %v9138
    %v9140 = vrcp.pop %v8794
    %v9141 = vmul.f32 %v8794, %v9140
    %v9142 = vsub.f32 1.0, %v9141
    %v9143 = vmul.f32 %v9140, %v9142
    %v9144 = vadd.f32 %v9140, %v9143
    %vm9145 = vweird.f32 %v8794
    %vm9146 = vweird.f32 %v9140
    %vm9147 = vmor %vm9145, %vm9146
    %v9148 = vsel %vm9147, %v9140, %v9144
    %v9149 = vand.u32 2147483647, %v8794
    %vm9150 = vcmp.eq.f32.partialorder %v9149, 8.507059e+37
    %v9151 = vand.u32 %v8794, 2147483648
    %v9152 = vor.u32 1.1754944e-38, %v9151
    %v9153 = vsel %vm9150, %v9152, %v9148
    %v9154 = vmul.f32 1.0, %v9153
    %v9155 = vtanh.pop %v8680
    %v9156 = vtanh.pop %v8682
    %v9157 = vtanh.pop %v8685
    %v9158 = vtanh.pop %v8687
    %v9159 = vtanh.pop %v8690
    %v9160 = vtanh.pop %v8692
    %v9161 = vtanh.pop %v8695
    %v9162 = vtanh.pop %v8697
    %v9163 = vmul.f32 %v8824, %v8033
    %v9164 = vmul.f32 %v8869, %v8034
    %v9165 = vmul.f32 %v8914, %v8035
    %v9166 = vmul.f32 %v8959, %v8036
    %v9167 = vmul.f32 %v9004, %v8037
    %v9168 = vmul.f32 %v9049, %v8038
    %v9169 = vmul.f32 %v9094, %v8039
    %v9170 = vmul.f32 %v9139, %v8040
    %v9171 = vmul.f32 %v8809, %v9155
    %v9172 = vmul.f32 %v8854, %v9156
    %v9173 = vmul.f32 %v8899, %v9157
    %v9174 = vmul.f32 %v8944, %v9158
    %v9175 = vmul.f32 %v8989, %v9159
    %v9176 = vmul.f32 %v9034, %v9160
    %v9177 = vmul.f32 %v9079, %v9161
    %v9178 = vmul.f32 %v9124, %v9162
    %v9179 = vadd.f32 %v9163, %v9171
    %v9180 = vadd.f32 %v9164, %v9172
    %v9181 = vadd.f32 %v9165, %v9173
    %v9182 = vadd.f32 %v9166, %v9174
    %v9183 = vadd.f32 %v9167, %v9175
    %v9184 = vadd.f32 %v9168, %v9176
    %v9185 = vadd.f32 %v9169, %v9177
    %v9186 = vadd.f32 %v9170, %v9178
    %v9187 = vtanh.pop %v9179
    %v9188 = vtanh.pop %v9180
    %v9189 = vtanh.pop %v9181
    %v9190 = vtanh.pop %v9182
    %v9191 = vtanh.pop %v9183
    %v9192 = vtanh.pop %v9184
    %v9193 = vtanh.pop %v9185
    %v9194 = vtanh.pop %v9186
    %v9195 = vmul.f32 %v8839, %v9187
    %v9196 = vmul.f32 %v8884, %v9188
    %v9197 = vmul.f32 %v8929, %v9189
    %v9198 = vmul.f32 %v8974, %v9190
    %v9199 = vmul.f32 %v9019, %v9191
    %v9200 = vmul.f32 %v9064, %v9192
    %v9201 = vmul.f32 %v9109, %v9193
    %v9202 = vmul.f32 %v9154, %v9194
    %9203 = vst [vmem:[#allocation3 + $0xc0] sm:$0xff] %v9195
    %9204 = vst [vmem:[#allocation3 + $0xc8] sm:$0xff] %v9196
    %9205 = vst [vmem:[#allocation3 + $0xd0] sm:$0xff] %v9197
    %9206 = vst [vmem:[#allocation3 + $0xd8] sm:$0xff] %v9198
    %9207 = vst [vmem:[#allocation3 + $0xe0] sm:$0xff] %v9199
    %9208 = vst [vmem:[#allocation3 + $0xe8] sm:$0xff] %v9200
    %9209 = vst [vmem:[#allocation3 + $0xf0] sm:$0xff] %v9201
    %9210 = vst [vmem:[#allocation3 + $0xf8] sm:$0xff] %v9202
    %v9211 = vld [vmem:[#allocation3] sm:$0xff]
    %v9212 = vld [vmem:[#allocation3 + $0x8] sm:$0xff]
    %v9213 = vld [vmem:[#allocation3 + $0x10] sm:$0xff]
    %v9214 = vld [vmem:[#allocation3 + $0x18] sm:$0xff]
    %v9215 = vld [vmem:[#allocation3 + $0x20] sm:$0xff]
    %v9216 = vld [vmem:[#allocation3 + $0x28] sm:$0xff]
    %v9217 = vld [vmem:[#allocation3 + $0x30] sm:$0xff]
    %v9218 = vld [vmem:[#allocation3 + $0x38] sm:$0xff]
    %v9219 = vld [vmem:[#allocation3 + $0x40] sm:$0xff]
    %v9220 = vld [vmem:[#allocation3 + $0x48] sm:$0xff]
    %v9221 = vld [vmem:[#allocation3 + $0x50] sm:$0xff]
    %v9222 = vld [vmem:[#allocation3 + $0x58] sm:$0xff]
    %v9223 = vld [vmem:[#allocation3 + $0x60] sm:$0xff]
    %v9224 = vld [vmem:[#allocation3 + $0x68] sm:$0xff]
    %v9225 = vld [vmem:[#allocation3 + $0x70] sm:$0xff]
    %v9226 = vld [vmem:[#allocation3 + $0x78] sm:$0xff]
    %v9227 = vld [vmem:[#allocation3 + $0x80] sm:$0xff]
    %v9228 = vld [vmem:[#allocation3 + $0x88] sm:$0xff]
    %v9229 = vld [vmem:[#allocation3 + $0x90] sm:$0xff]
    %v9230 = vld [vmem:[#allocation3 + $0x98] sm:$0xff]
    %v9231 = vld [vmem:[#allocation3 + $0xa0] sm:$0xff]
    %v9232 = vld [vmem:[#allocation3 + $0xa8] sm:$0xff]
    %v9233 = vld [vmem:[#allocation3 + $0xb0] sm:$0xff]
    %v9234 = vld [vmem:[#allocation3 + $0xb8] sm:$0xff]
    %v9235 = vld [vmem:[#allocation3 + $0xc0] sm:$0xff]
    %v9236 = vld [vmem:[#allocation3 + $0xc8] sm:$0xff]
    %v9237 = vld [vmem:[#allocation3 + $0xd0] sm:$0xff]
    %v9238 = vld [vmem:[#allocation3 + $0xd8] sm:$0xff]
    %v9239 = vld [vmem:[#allocation3 + $0xe0] sm:$0xff]
    %v9240 = vld [vmem:[#allocation3 + $0xe8] sm:$0xff]
    %v9241 = vld [vmem:[#allocation3 + $0xf0] sm:$0xff]
    %v9242 = vld [vmem:[#allocation3 + $0xf8] sm:$0xff]
    %v9243 = vpack.c.bf16 %v9212, %v9211
    %v9244 = vpack.c.bf16 %v9214, %v9213
    %v9245 = vpack.c.bf16 %v9216, %v9215
    %v9246 = vpack.c.bf16 %v9218, %v9217
    %v9247 = vpack.c.bf16 %v9220, %v9219
    %v9248 = vpack.c.bf16 %v9222, %v9221
    %v9249 = vpack.c.bf16 %v9224, %v9223
    %v9250 = vpack.c.bf16 %v9226, %v9225
    %v9251 = vpack.c.bf16 %v9228, %v9227
    %v9252 = vpack.c.bf16 %v9230, %v9229
    %v9253 = vpack.c.bf16 %v9232, %v9231
    %v9254 = vpack.c.bf16 %v9234, %v9233
    %v9255 = vpack.c.bf16 %v9236, %v9235
    %v9256 = vpack.c.bf16 %v9238, %v9237
    %v9257 = vpack.c.bf16 %v9240, %v9239
    %v9258 = vpack.c.bf16 %v9242, %v9241
    %v9259 = vld [vmem:[#allocation12] sm:$0xf]
    %v9260 = vld [vmem:[#allocation12 + $0x4] sm:$0xf]
    %v9261 = vld [vmem:[#allocation12 + $0x8] sm:$0xf]
    %v9262 = vld [vmem:[#allocation12 + $0xc] sm:$0xf]
    %v9263 = vld [vmem:[#allocation12 + $0x10] sm:$0xf]
    %v9264 = vld [vmem:[#allocation12 + $0x14] sm:$0xf]
    %v9265 = vld [vmem:[#allocation12 + $0x18] sm:$0xf]
    %v9266 = vld [vmem:[#allocation12 + $0x1c] sm:$0xf]
    %v9267 = vld [vmem:[#allocation12 + $0x20] sm:$0xf]
    %v9268 = vld [vmem:[#allocation12 + $0x24] sm:$0xf]
    %v9269 = vld [vmem:[#allocation12 + $0x28] sm:$0xf]
    %v9270 = vld [vmem:[#allocation12 + $0x2c] sm:$0xf]
    %v9271 = vld [vmem:[#allocation12 + $0x30] sm:$0xf]
    %v9272 = vld [vmem:[#allocation12 + $0x34] sm:$0xf]
    %v9273 = vld [vmem:[#allocation12 + $0x38] sm:$0xf]
    %v9274 = vld [vmem:[#allocation12 + $0x3c] sm:$0xf]
    %v9275 = vld [vmem:[%s6] sm:$0x1]
    %v9277 = vperm.slane %v9275, 0
    %v9295 = vunpack.c.l.b16 %v9259
    %v9296 = vunpack.c.l.b16 %v9260
    %v9297 = vunpack.c.l.b16 %v9261
    %v9298 = vunpack.c.l.b16 %v9262
    %v9299 = vunpack.c.l.b16 %v9263
    %v9300 = vunpack.c.l.b16 %v9264
    %v9301 = vunpack.c.l.b16 %v9265
    %v9302 = vunpack.c.l.b16 %v9266
    %v9303 = vunpack.c.l.b16 %v9267
    %v9304 = vunpack.c.l.b16 %v9268
    %v9305 = vunpack.c.l.b16 %v9269
    %v9306 = vunpack.c.l.b16 %v9270
    %v9307 = vunpack.c.l.b16 %v9271
    %v9308 = vunpack.c.l.b16 %v9272
    %v9309 = vunpack.c.l.b16 %v9273
    %v9310 = vunpack.c.l.b16 %v9274
    %v9311 = vpack.c.b16 %v9296, %v9295
    %v9312 = vpack.c.b16 %v9298, %v9297
    %v9313 = vpack.c.b16 %v9300, %v9299
    %v9314 = vpack.c.b16 %v9302, %v9301
    %v9315 = vpack.c.b16 %v9304, %v9303
    %v9316 = vpack.c.b16 %v9306, %v9305
    %v9317 = vpack.c.b16 %v9308, %v9307
    %v9318 = vpack.c.b16 %v9310, %v9309
    %9327 = vmatpush.bf16.msra.mxu0 %v9318
    %9328 = vmatpush.bf16.msra.mxu0 %v9317
    %9329 = vmatpush.bf16.msra.mxu0 %v9316
    %9330 = vmatpush.bf16.msra.mxu0 %v9315
    %9331 = vmatpush.bf16.msra.mxu0 %v9314
    %9332 = vmatpush.bf16.msra.mxu0 %v9313
    %9333 = vmatpush.bf16.msra.mxu0 %v9312
    %9334 = vmatpush.bf16.msra.mxu0 %v9311
    %9335 = vmatmul.bf16.gmra.mxu0 %v9243
    %v9336 = vpop.f32.mrf.mxu0
    %v9337 = vadd.f32 %v9277, %v9336
    %v9338 = vpop.f32.mrf.mxu0
    %v9339 = vadd.f32 %v9277, %v9338
    %9340 = vmatmul.bf16.gmra.mxu0 %v9244
    %v9341 = vpop.f32.mrf.mxu0
    %v9342 = vadd.f32 %v9277, %v9341
    %v9343 = vpop.f32.mrf.mxu0
    %v9344 = vadd.f32 %v9277, %v9343
    %9345 = vmatmul.bf16.gmra.mxu0 %v9245
    %v9346 = vpop.f32.mrf.mxu0
    %v9347 = vadd.f32 %v9277, %v9346
    %v9348 = vpop.f32.mrf.mxu0
    %v9349 = vadd.f32 %v9277, %v9348
    %9350 = vmatmul.bf16.gmra.mxu0 %v9246
    %v9351 = vpop.f32.mrf.mxu0
    %v9352 = vadd.f32 %v9277, %v9351
    %v9353 = vpop.f32.mrf.mxu0
    %v9354 = vadd.f32 %v9277, %v9353
    %9355 = vmatmul.bf16.gmra.mxu0 %v9247
    %v9356 = vpop.f32.mrf.mxu0
    %v9357 = vadd.f32 %v9277, %v9356
    %v9358 = vpop.f32.mrf.mxu0
    %v9359 = vadd.f32 %v9277, %v9358
    %9360 = vmatmul.bf16.gmra.mxu0 %v9248
    %v9361 = vpop.f32.mrf.mxu0
    %v9362 = vadd.f32 %v9277, %v9361
    %v9363 = vpop.f32.mrf.mxu0
    %v9364 = vadd.f32 %v9277, %v9363
    %9365 = vmatmul.bf16.gmra.mxu0 %v9249
    %v9366 = vpop.f32.mrf.mxu0
    %v9367 = vadd.f32 %v9277, %v9366
    %v9368 = vpop.f32.mrf.mxu0
    %v9369 = vadd.f32 %v9277, %v9368
    %9370 = vmatmul.bf16.gmra.mxu0 %v9250
    %v9371 = vpop.f32.mrf.mxu0
    %v9372 = vadd.f32 %v9277, %v9371
    %v9373 = vpop.f32.mrf.mxu0
    %v9374 = vadd.f32 %v9277, %v9373
    %9375 = vmatmul.bf16.gmra.mxu0 %v9251
    %v9376 = vpop.f32.mrf.mxu0
    %v9377 = vadd.f32 %v9277, %v9376
    %v9378 = vpop.f32.mrf.mxu0
    %v9379 = vadd.f32 %v9277, %v9378
    %9380 = vmatmul.bf16.gmra.mxu0 %v9252
    %v9381 = vpop.f32.mrf.mxu0
    %v9382 = vadd.f32 %v9277, %v9381
    %v9383 = vpop.f32.mrf.mxu0
    %v9384 = vadd.f32 %v9277, %v9383
    %9385 = vmatmul.bf16.gmra.mxu0 %v9253
    %v9386 = vpop.f32.mrf.mxu0
    %v9387 = vadd.f32 %v9277, %v9386
    %v9388 = vpop.f32.mrf.mxu0
    %v9389 = vadd.f32 %v9277, %v9388
    %9390 = vmatmul.bf16.gmra.mxu0 %v9254
    %v9391 = vpop.f32.mrf.mxu0
    %v9392 = vadd.f32 %v9277, %v9391
    %v9393 = vpop.f32.mrf.mxu0
    %v9394 = vadd.f32 %v9277, %v9393
    %9395 = vmatmul.bf16.gmra.mxu0 %v9255
    %v9396 = vpop.f32.mrf.mxu0
    %v9397 = vadd.f32 %v9277, %v9396
    %v9398 = vpop.f32.mrf.mxu0
    %v9399 = vadd.f32 %v9277, %v9398
    %9400 = vmatmul.bf16.gmra.mxu0 %v9256
    %v9401 = vpop.f32.mrf.mxu0
    %v9402 = vadd.f32 %v9277, %v9401
    %v9403 = vpop.f32.mrf.mxu0
    %v9404 = vadd.f32 %v9277, %v9403
    %9405 = vmatmul.bf16.gmra.mxu0 %v9257
    %v9406 = vpop.f32.mrf.mxu0
    %v9407 = vadd.f32 %v9277, %v9406
    %v9408 = vpop.f32.mrf.mxu0
    %v9409 = vadd.f32 %v9277, %v9408
    %9410 = vmatmul.bf16.gmra.mxu0 %v9258
    %v9411 = vpop.f32.mrf.mxu0
    %v9412 = vadd.f32 %v9277, %v9411
    %v9413 = vpop.f32.mrf.mxu0
    %v9414 = vadd.f32 %v9277, %v9413
    %9415 = vdwg.mxu0
    %9416 = vst [vmem:[%s7] sm:$0xff] %v9337
    %9417 = vst [vmem:[%s7 + $0x8] sm:$0xff] %v9339
    %9418 = vst [vmem:[%s7 + $0x10] sm:$0xff] %v9342
    %9419 = vst [vmem:[%s7 + $0x18] sm:$0xff] %v9344
    %9420 = vst [vmem:[%s7 + $0x20] sm:$0xff] %v9347
    %9421 = vst [vmem:[%s7 + $0x28] sm:$0xff] %v9349
    %9422 = vst [vmem:[%s7 + $0x30] sm:$0xff] %v9352
    %9423 = vst [vmem:[%s7 + $0x38] sm:$0xff] %v9354
    %9424 = vst [vmem:[%s7 + $0x40] sm:$0xff] %v9357
    %9425 = vst [vmem:[%s7 + $0x48] sm:$0xff] %v9359
    %9426 = vst [vmem:[%s7 + $0x50] sm:$0xff] %v9362
    %9427 = vst [vmem:[%s7 + $0x58] sm:$0xff] %v9364
    %9428 = vst [vmem:[%s7 + $0x60] sm:$0xff] %v9367
    %9429 = vst [vmem:[%s7 + $0x68] sm:$0xff] %v9369
    %9430 = vst [vmem:[%s7 + $0x70] sm:$0xff] %v9372
    %9431 = vst [vmem:[%s7 + $0x78] sm:$0xff] %v9374
    %9432 = vst [vmem:[%s7 + $0x80] sm:$0xff] %v9377
    %9433 = vst [vmem:[%s7 + $0x88] sm:$0xff] %v9379
    %9434 = vst [vmem:[%s7 + $0x90] sm:$0xff] %v9382
    %9435 = vst [vmem:[%s7 + $0x98] sm:$0xff] %v9384
    %9436 = vst [vmem:[%s7 + $0xa0] sm:$0xff] %v9387
    %9437 = vst [vmem:[%s7 + $0xa8] sm:$0xff] %v9389
    %9438 = vst [vmem:[%s7 + $0xb0] sm:$0xff] %v9392
    %9439 = vst [vmem:[%s7 + $0xb8] sm:$0xff] %v9394
    %9440 = vst [vmem:[%s7 + $0xc0] sm:$0xff] %v9397
    %9441 = vst [vmem:[%s7 + $0xc8] sm:$0xff] %v9399
    %9442 = vst [vmem:[%s7 + $0xd0] sm:$0xff] %v9402
    %9443 = vst [vmem:[%s7 + $0xd8] sm:$0xff] %v9404
    %9444 = vst [vmem:[%s7 + $0xe0] sm:$0xff] %v9407
    %9445 = vst [vmem:[%s7 + $0xe8] sm:$0xff] %v9409
    %9446 = vst [vmem:[%s7 + $0xf0] sm:$0xff] %v9412
    %9447 = vst [vmem:[%s7 + $0xf8] sm:$0xff] %v9414
    // Predicated region
    $region54: #{decoder_forward.1} parent=1 // pred_check
      _
    $region55: #{decoder_forward.1} parent=1 // pred_check_branch
      %9449 = sbr.rel (0) target = $region57
    $region56: #{decoder_forward.1} parent=1 // pred_region
      _
    $region57: #{decoder_forward.1} parent=1 // pred_fallthru
      _
    // Predicated region
    $region58: #{decoder_forward.1} parent=1 // pred_check
      _
    $region59: #{decoder_forward.1} parent=1 // pred_check_branch
      %9451 = sbr.rel (0) target = $region61
    $region60: #{decoder_forward.1} parent=1 // pred_region
      _
    $region61: #{decoder_forward.1} parent=1 // pred_fallthru
      _
    %9452 = vsyncpa [#allocation5], 1
    %9453 = vsyncpa [#allocation7], 1
    %9454 = vsyncpa [#allocation10], 1
    %9455 = vsyncpa [#allocation13], 1

</llo_original>
